<compile_context>
chip_gen: v6e
topology: v6e:2x2x1
jax: 0.10.0
libtpu: 0.0.40
codegen_flags: <defaults>
</compile_context>

<pallas_src>
import functools
import math
import random

import numpy as np
import jax
import jax.numpy as jnp
from jax.experimental import pallas as pl
from jax.experimental.pallas import tpu as pltpu


# ----------------------------------------------------------------------------
# Fused transformer-encoder + seq-max kernel
# ----------------------------------------------------------------------------

def _transformer_kernel(q_ref, kv_ref,
                        wqkv_ref, bqkv_ref, wo_ref, bo_ref,
                        w1_ref, b1_ref, w2_ref, b2_ref,
                        ln1g_ref, ln1b_ref, ln2g_ref, ln2b_ref,
                        out_ref, *, nhead, num_layers, eps=1e-5):
    Nb, S, D = q_ref.shape
    M = Nb * S
    Dh = D // nhead
    scale = 1.0 / math.sqrt(Dh)

    def _ln(x, g, b):
        mu = jnp.mean(x, axis=-1, keepdims=True)
        var = jnp.mean(jnp.square(x - mu), axis=-1, keepdims=True)
        return (x - mu) * jax.lax.rsqrt(var + eps) * g + b

    def _attention(q2, k2, v2):
        # (M, D) -> (Nb, S, D); per-head batched einsums (batch dim = Nb).
        q3 = q2.reshape(Nb, S, D)
        k3 = k2.reshape(Nb, S, D)
        v3 = v2.reshape(Nb, S, D)
        heads = []
        for h in range(nhead):
            lo, hi = h * Dh, (h + 1) * Dh
            qh = q3[:, :, lo:hi]
            kh = k3[:, :, lo:hi]
            vh = v3[:, :, lo:hi]
            s = jnp.einsum('nqd,nkd->nqk', qh, kh,
                           preferred_element_type=jnp.float32) * scale
            m = jnp.max(s, axis=-1, keepdims=True)
            p = jnp.exp(s - m)
            p = p * pl.reciprocal(jnp.sum(p, axis=-1, keepdims=True), approx=True)
            heads.append(jnp.einsum('nqk,nkd->nqd', p, vh,
                                    preferred_element_type=jnp.float32))
        return jnp.concatenate(heads, axis=-1).reshape(M, D)

    x_q = q_ref[...].reshape(M, D)
    x_kv = kv_ref[...].reshape(M, D)

    for l in range(num_layers):
        wqkv = wqkv_ref[l]             # (D, 3D), pre-transposed + concatenated
        bqkv = bqkv_ref[l]             # (1, 3D)
        qkv_q = jnp.dot(x_q, wqkv, preferred_element_type=jnp.float32) + bqkv
        if l == 0:
            qkv_kv = jnp.dot(x_kv, wqkv, preferred_element_type=jnp.float32) + bqkv
        else:
            qkv_kv = qkv_q             # deeper layers self-attend
        a = _attention(qkv_q[:, :D], qkv_kv[:, D:2 * D], qkv_kv[:, 2 * D:])
        a = jnp.dot(a, wo_ref[l], preferred_element_type=jnp.float32) + bo_ref[l]
        x = _ln(x_q + a, ln1g_ref[l], ln1b_ref[l])
        ff = jnp.maximum(
            jnp.dot(x, w1_ref[l], preferred_element_type=jnp.float32) + b1_ref[l], 0.0)
        ff = jnp.dot(ff, w2_ref[l], preferred_element_type=jnp.float32) + b2_ref[l]
        x = _ln(x + ff, ln2g_ref[l], ln2b_ref[l])
        x_q = x
        x_kv = x

    # seq-max pooling (torch .max(dim=1, keepdim=True)) folded into the kernel.
    out_ref[...] = jnp.max(x_q.reshape(Nb, S, D), axis=1, keepdims=True).astype(out_ref.dtype)


def transformer_fused(q0, kv0, p, nhead, num_layers):
    """q0/kv0: (N, S, D).  Returns pooled (N, D)."""
    N, S, D = q0.shape
    bb = N // 2 if (N % 2 == 0 and N >= 2) else N     # 2 batch blocks -> v7x 2-TC sharding
    grid = (N // bb,)

    act_spec = pl.BlockSpec((bb, S, D), lambda i: (i, 0, 0))
    out_spec = pl.BlockSpec((bb, 1, D), lambda i: (i, 0, 0))

    def wspec(a):
        nd = a.ndim
        return pl.BlockSpec(a.shape, lambda i, _nd=nd: (0,) * _nd)

    weight_arrays = [p["wqkv"], p["bqkv"], p["wo"], p["bo"],
                     p["w1"], p["b1"], p["w2"], p["b2"],
                     p["ln1_g"], p["ln1_b"], p["ln2_g"], p["ln2_b"]]

    out = pl.pallas_call(
        functools.partial(_transformer_kernel, nhead=nhead, num_layers=num_layers),
        out_shape=jax.ShapeDtypeStruct((N, 1, D), jnp.float32),
        grid=grid,
        in_specs=[act_spec, act_spec] + [wspec(a) for a in weight_arrays],
        out_specs=out_spec,
        compiler_params=pltpu.CompilerParams(dimension_semantics=("parallel",)),
    )(q0, kv0, *weight_arrays)
    return out.reshape(N, D)


# ----------------------------------------------------------------------------
# Fused PRM head kernel (fc1 -> relu -> fc2 -> relu -> log_softmax)
# ----------------------------------------------------------------------------

def _prm_kernel(x_ref, w1_ref, b1_ref, w2_ref, b2_ref, o_ref):
    h = jnp.maximum(
        jnp.dot(x_ref[...], w1_ref[...], preferred_element_type=jnp.float32) + b1_ref[...], 0.0)
    z = jnp.maximum(
        jnp.dot(h, w2_ref[...], preferred_element_type=jnp.float32) + b2_ref[...], 0.0)
    m = jnp.max(z, axis=1, keepdims=True)
    zs = z - m
    lse = jnp.log(jnp.sum(jnp.exp(zs), axis=1, keepdims=True))
    o_ref[...] = (zs - lse).astype(o_ref.dtype)


def prm_fused(x, p):
    """x: (M, D) -> log_softmax(relu(fc2(relu(fc1(x)))), dim=1)."""
    M, D = x.shape
    H = p["prm_w1"].shape[1]
    C = p["prm_w2"].shape[1]
    return pl.pallas_call(
        _prm_kernel,
        out_shape=jax.ShapeDtypeStruct((M, C), jnp.float32),
        in_specs=[pl.BlockSpec((M, D), lambda: (0, 0)),
                  pl.BlockSpec((D, H), lambda: (0, 0)),
                  pl.BlockSpec((1, H), lambda: (0, 0)),
                  pl.BlockSpec((H, C), lambda: (0, 0)),
                  pl.BlockSpec((1, C), lambda: (0, 0))],
        out_specs=pl.BlockSpec((M, C), lambda: (0, 0)),
    )(x, p["prm_w1"], p["prm_b1"], p["prm_w2"], p["prm_b2"])


# ----------------------------------------------------------------------------
# SCL cosine-similarity kernels
# ----------------------------------------------------------------------------

def _cosine_kernel(a_ref, b_ref, o_ref):
    a = a_ref[...]
    b = b_ref[...]
    an = a / jnp.maximum(jnp.sqrt(jnp.sum(a * a, axis=1, keepdims=True)), 1e-12)
    bn = b / jnp.maximum(jnp.sqrt(jnp.sum(b * b, axis=1, keepdims=True)), 1e-12)
    o_ref[...] = jnp.dot(an, bn.T, preferred_element_type=jnp.float32).astype(o_ref.dtype)


def cosine_similarity_matrix(a, b):
    """F.normalize(a) @ F.normalize(b).T  -- used only for the padded prototype loss."""
    n1, D = a.shape
    n2 = b.shape[0]
    return pl.pallas_call(
        _cosine_kernel,
        out_shape=jax.ShapeDtypeStruct((n1, n2), jnp.float32),
        in_specs=[pl.BlockSpec((n1, D), lambda: (0, 0)),
                  pl.BlockSpec((n2, D), lambda: (0, 0))],
        out_specs=pl.BlockSpec((n1, n2), lambda: (0, 0)),
    )(a, b)


def _gram_kernel(x_ref, o_ref):
    x = x_ref[...]
    xn = x / jnp.maximum(jnp.sqrt(jnp.sum(x * x, axis=1, keepdims=True)), 1e-12)
    o_ref[...] = jnp.dot(xn, xn.T, preferred_element_type=jnp.float32).astype(o_ref.dtype)


def gram_matrix(x):
    """Full normalized gram matrix: one launch provides all 4 equal-size SCL
    cosine matrices (in-in, out-out, in-out, out-in) as slices."""
    n, D = x.shape
    return pl.pallas_call(
        _gram_kernel,
        out_shape=jax.ShapeDtypeStruct((n, n), jnp.float32),
        in_specs=[pl.BlockSpec((n, D), lambda: (0, 0))],
        out_specs=pl.BlockSpec((n, n), lambda: (0, 0)),
    )(x)


# ----------------------------------------------------------------------------
# Loss glue (plain JAX, runs inside the single jit)
# ----------------------------------------------------------------------------

def scl_loss(inrep_1, inrep_2, label_1, label_2=None, temperature=0.1, cos=None):
    """Faithful port of SCL.forward; `cos` optionally provides a precomputed
    cosine-similarity matrix (only used when no batch padding is needed)."""
    if label_2 is None:
        n = int(label_1.shape[0])
        if cos is None:
            cos = cosine_similarity_matrix(inrep_1, inrep_2)
        diag = jnp.diag(cos)
        cos_diag = jnp.diag(diag)
        if n == 1:
            cos_l = jnp.zeros((1,), jnp.float32)
        else:
            mid_mat = (label_1[:, None] == label_1[None, :]).astype(jnp.float32)
            cos = (cos - cos_diag) / temperature
            eye = jnp.eye(n, dtype=jnp.float32)          # mid_diag
            mid_mat = mid_mat - eye
            cos = jnp.where(eye > 0, -jnp.inf, cos)
            sm = jax.nn.softmax(cos, axis=1)
            cos_l = jnp.log(jnp.clip(sm + eye, 1e-10, 1e10)) * mid_mat
            cos_l = jnp.sum(cos_l, axis=1) / (jnp.sum(mid_mat, axis=1) + 1e-10)
    else:
        bs_1, bs_2 = int(inrep_1.shape[0]), int(inrep_2.shape[0])
        if bs_1 < bs_2:
            inrep_2 = inrep_2[:bs_1]
            label_2 = label_2[:bs_1]
            cos = None
        elif bs_2 < bs_1:
            cos = None
            while bs_2 < bs_1:
                ra = random.randint(0, int(inrep_2.shape[0]) - 1)
                inrep_2 = jnp.concatenate([inrep_2, inrep_2[ra:ra + 1]], axis=0)
                label_2 = jnp.concatenate([label_2, label_2[ra:ra + 1]], axis=0)
                bs_2 = int(inrep_2.shape[0])
        if cos is None:
            cos = cosine_similarity_matrix(inrep_1, inrep_2)
        cos = cos / temperature
        # mid_mat[i, j] = (label_1[j] == label_2[i]) -- exact reference
        # (label_1_mat.t().eq(label_2_mat)) transposed-mask semantics.
        mid_mat = (label_1[None, :] == label_2[:, None]).astype(jnp.float32)
        sm = jax.nn.softmax(cos, axis=1)
        cos_l = jnp.log(jnp.clip(sm, 1e-10, 1e10)) * mid_mat
        cos_l = jnp.sum(cos_l, axis=1) / (jnp.sum(mid_mat, axis=1) + 1e-10)
    return -jnp.mean(cos_l, axis=0)


def compute_label_centroids(embeddings, labels, unique_vals):
    cents = []
    for v in unique_vals:
        m = (labels == v).astype(embeddings.dtype)
        cents.append(jnp.sum(embeddings * m[:, None], axis=0) / jnp.sum(m))
    return jnp.stack(cents), jnp.asarray(unique_vals, dtype=labels.dtype)


def assign_labels_to_unlabelled(centroids, x):
    d = jnp.sqrt(jnp.sum(jnp.square(x[:, None, :] - centroids[None, :, :]), axis=-1))
    return jnp.argmin(d, axis=1)


def kl_div_batchmean(log_input, target):
    pointwise = target * (jnp.where(target > 0, jnp.log(target), 0.0) - log_input)
    return jnp.sum(pointwise) / log_input.shape[0]


def nll_loss(log_probs, labels):
    picked = jnp.take_along_axis(log_probs, labels[:, None].astype(jnp.int32), axis=1)
    return -jnp.mean(picked)


# ----------------------------------------------------------------------------
# Net forward (single jit for the whole device path)
# ----------------------------------------------------------------------------

def net_forward(params, nhead, num_layers, in_x_seq, in_y, out_x_seq,
                alpha=(0.5, 0.5), beta=(0.5, 0.5), gama=(0.5, 0.0, 0.5)):
    in_y_np = np.asarray(in_y)
    unique_vals = tuple(int(v) for v in np.unique(in_y_np))
    two_classes = len(unique_vals) == 2
    B = int(in_x_seq.shape[0])

    @jax.jit
    def core(params, in_seq, in_y_d, out_seq):
        # Batch the three transformer passes (in, out, cross) into one kernel call.
        q0 = jnp.concatenate([in_seq, out_seq, in_seq], axis=0)    # queries
        kv0 = jnp.concatenate([in_seq, out_seq, out_seq], axis=0)  # keys/values
        pooled = transformer_fused(q0, kv0, params, nhead, num_layers)   # (3B, D)
        in_x = pooled[:B]
        out_x = pooled[B:2 * B]
        cross_attn_out = pooled[2 * B:]

        # Batch the two PRM passes into one kernel call.
        preds = prm_fused(jnp.concatenate([in_x, cross_attn_out], axis=0), params)
        in_pred = preds[:B]
        cross_pred_out = preds[B:]

        # One gram kernel gives all four equal-size SCL cosine matrices.
        gram = gram_matrix(jnp.concatenate([in_x, out_x], axis=0))   # (2B, 2B)
        cos_in_in = gram[:B, :B]
        cos_out_out = gram[B:, B:]
        cos_in_out = gram[:B, B:]
        cos_out_in = gram[B:, :B]

        prototype_cl_loss = jnp.float32(0.0)
        out_pseudo_labels = None
        if two_classes:
            in_centroids, centroid_labels = compute_label_centroids(in_x, in_y_d, unique_vals)
            out_pseudo_labels = assign_labels_to_unlabelled(in_centroids, out_x)
            prototype_cl_loss = scl_loss(out_x, in_centroids,
                                         out_pseudo_labels, centroid_labels)
        # TODO(synk): like the reference, out_pseudo_labels is undefined unless in_y has
        # exactly two classes; the toy input always satisfies this.

        in_cl_loss = scl_loss(in_x, in_x, in_y_d, cos=cos_in_in)
        out_cl_loss = scl_loss(out_x, out_x, out_pseudo_labels, cos=cos_out_out)
        cross_cl_loss1 = scl_loss(in_x, out_x, in_y_d, out_pseudo_labels, cos=cos_in_out)
        cross_cl_loss2 = scl_loss(out_x, in_x, out_pseudo_labels, in_y_d, cos=cos_out_in)

        # Matches F.kl_div(F.log_softmax(in_pred), F.softmax(cross_pred_out)):
        # in_pred is already log-probs; log_softmax is idempotent on log-probs.
        kl_loss = kl_div_batchmean(jax.nn.log_softmax(in_pred, axis=1),
                                   jax.nn.softmax(cross_pred_out, axis=1))

        intro_cl_loss = alpha[0] * in_cl_loss + alpha[1] * out_cl_loss
        cross_cl_loss = cross_cl_loss1 + cross_cl_loss2 + prototype_cl_loss
        all_cl_loss = beta[0] * intro_cl_loss + beta[1] * cross_cl_loss
        ce_loss = nll_loss(in_pred, in_y_d)
        all_loss = gama[0] * ce_loss + gama[1] * all_cl_loss + gama[2] * kl_loss

        losses = {
            'ce_loss': ce_loss,
            'intro-cl-in-loss': in_cl_loss,
            'intro-cl-out-loss': out_cl_loss,
            'cross-cl-in-loss': cross_cl_loss1,
            'cross-cl-out-loss': cross_cl_loss2,
            'prototype-cl-loss': prototype_cl_loss,
            'kl-loss': kl_loss,
            'all-loss': all_loss,
        }
        return in_pred, all_loss, all_cl_loss, losses

    in_pred, all_loss, all_cl_loss, losses = core(
        params, in_x_seq, jnp.asarray(in_y).astype(jnp.int32), out_x_seq)

    # Single host transfer for all diagnostics (prints outside the jitted region).
    losses_host = jax.device_get(losses)
    all_cl_host = jax.device_get(all_cl_loss)
    print('Visualisation of all losses:')
    print(losses_host['ce_loss'], all_cl_host, losses_host['kl-loss'])

    loss_things = {k: np.asarray(v) for k, v in losses_host.items()}
    return in_pred, all_loss, loss_things


# ----------------------------------------------------------------------------
# Deterministic parameter initialization (PyTorch nn.Linear-style) + packing
# ----------------------------------------------------------------------------

def _linear_init(key, out_f, in_f):
    k1, k2 = jax.random.split(key)
    bound = 1.0 / math.sqrt(in_f)
    w = jax.random.uniform(k1, (out_f, in_f), jnp.float32, -bound, bound)
    b = jax.random.uniform(k2, (out_f,), jnp.float32, -bound, bound)
    return w, b


def init_params(key, d_model, nhead, num_layers, dim_feedforward=64,
                prm_hidden=256, num_classes=2):
    layers = []
    for _ in range(num_layers):
        ks = jax.random.split(key, 7)
        key = ks[0]
        wq, bq = _linear_init(ks[1], d_model, d_model)
        wk, bk = _linear_init(ks[2], d_model, d_model)
        wv, bv = _linear_init(ks[3], d_model, d_model)
        wo, bo = _linear_init(ks[4], d_model, d_model)
        w1, b1 = _linear_init(ks[5], dim_feedforward, d_model)
        w2, b2 = _linear_init(ks[6], d_model, dim_feedforward)
        layers.append(dict(
            wq=wq, bq=bq, wk=wk, bk=bk, wv=wv, bv=bv, wo=wo, bo=bo,
            w1=w1, b1=b1, w2=w2, b2=b2,
            ln1_g=jnp.ones((d_model,), jnp.float32),
            ln1_b=jnp.zeros((d_model,), jnp.float32),
            ln2_g=jnp.ones((d_model,), jnp.float32),
            ln2_b=jnp.zeros((d_model,), jnp.float32)))
    k1, k2 = jax.random.split(key)
    fc1_w, fc1_b = _linear_init(k1, prm_hidden, d_model)
    fc2_w, fc2_b = _linear_init(k2, num_classes, prm_hidden)
    return dict(layers=layers,
                prm=dict(fc1_w=fc1_w, fc1_b=fc1_b, fc2_w=fc2_w, fc2_b=fc2_b))


def prepare_params(raw):
    """Pre-transpose / pre-concatenate weights once into kernel layout."""
    layers = raw["layers"]

    def stack(fn):
        return jnp.stack([fn(l) for l in layers], axis=0)

    prm = raw["prm"]
    return dict(
        wqkv=stack(lambda l: jnp.concatenate([l["wq"].T, l["wk"].T, l["wv"].T], axis=1)),
        bqkv=stack(lambda l: jnp.concatenate([l["bq"], l["bk"], l["bv"]])[None, :]),
        wo=stack(lambda l: l["wo"].T),
        bo=stack(lambda l: l["bo"][None, :]),
        w1=stack(lambda l: l["w1"].T),
        b1=stack(lambda l: l["b1"][None, :]),
        w2=stack(lambda l: l["w2"].T),
        b2=stack(lambda l: l["b2"][None, :]),
        ln1_g=stack(lambda l: l["ln1_g"][None, :]),
        ln1_b=stack(lambda l: l["ln1_b"][None, :]),
        ln2_g=stack(lambda l: l["ln2_g"][None, :]),
        ln2_b=stack(lambda l: l["ln2_b"][None, :]),
        prm_w1=prm["fc1_w"].T,
        prm_b1=prm["fc1_b"][None, :],
        prm_w2=prm["fc2_w"].T,
        prm_b2=prm["fc2_b"][None, :],
    )


# ----------------------------------------------------------------------------
# Main
# ----------------------------------------------------------------------------

if __name__ == "__main__":
    random.seed(0)

    B, S, D_MODEL, NHEAD, NUM_LAYERS = 4, 8, 32, 4, 2

    key = jax.random.PRNGKey(0)
    k_p, k_in, k_out = jax.random.split(key, 3)

    raw_params = init_params(k_p, D_MODEL, NHEAD, NUM_LAYERS)
    params = prepare_params(raw_params)

    in_x = jax.random.normal(k_in, (B, S, D_MODEL), jnp.float32)    # in_data.x
    out_x = jax.random.normal(k_out, (B, S, D_MODEL), jnp.float32)  # out_data.x
    in_y = jnp.array([0, 1, 0, 1], jnp.int32)                       # in_data.y (both classes)

    in_pred, all_loss, loss_things = net_forward(
        params, NHEAD, NUM_LAYERS, in_x, in_y, out_x)

    jax.block_until_ready(in_pred)
    jax.block_until_ready(all_loss)
    assert in_pred.shape == (B, 2)
    assert np.isfinite(np.asarray(all_loss))

    print("KERNEL_OK")
</pallas_src>

<mosaic_0001>
module attributes {stable_mosaic.version = 11 : i64} {
  func.func @_transformer_kernel(%arg0: i32, %arg1: memref<6x8x32xf32, #tpu.memory_space<vmem>>, %arg2: memref<6x8x32xf32, #tpu.memory_space<vmem>>, %arg3: memref<2x32x96xf32, #tpu.memory_space<vmem>>, %arg4: memref<2x1x96xf32, #tpu.memory_space<vmem>>, %arg5: memref<2x32x32xf32, #tpu.memory_space<vmem>>, %arg6: memref<2x1x32xf32, #tpu.memory_space<vmem>>, %arg7: memref<2x32x64xf32, #tpu.memory_space<vmem>>, %arg8: memref<2x1x64xf32, #tpu.memory_space<vmem>>, %arg9: memref<2x64x32xf32, #tpu.memory_space<vmem>>, %arg10: memref<2x1x32xf32, #tpu.memory_space<vmem>>, %arg11: memref<2x1x32xf32, #tpu.memory_space<vmem>>, %arg12: memref<2x1x32xf32, #tpu.memory_space<vmem>>, %arg13: memref<2x1x32xf32, #tpu.memory_space<vmem>>, %arg14: memref<2x1x32xf32, #tpu.memory_space<vmem>>, %arg15: memref<6x1x32xf32, #tpu.memory_space<vmem>>) attributes {dimension_semantics = [#tpu.dimension_semantics<parallel>], iteration_bounds = array<i64: 2>, scalar_prefetch = 0 : i64, scratch_operands = 0 : i64, tpu.core_type = #tpu.core_type<tc>, window_params = [{transform_indices = @transform_0, window_bounds = array<i64: 6, 8, 32>}, {transform_indices = @transform_1, window_bounds = array<i64: 6, 8, 32>}, {pipeline_mode = #tpu.pipeline_mode<synchronous>, transform_indices = @transform_2, window_bounds = array<i64: 2, 32, 96>}, {pipeline_mode = #tpu.pipeline_mode<synchronous>, transform_indices = @transform_3, window_bounds = array<i64: 2, 1, 96>}, {pipeline_mode = #tpu.pipeline_mode<synchronous>, transform_indices = @transform_4, window_bounds = array<i64: 2, 32, 32>}, {pipeline_mode = #tpu.pipeline_mode<synchronous>, transform_indices = @transform_5, window_bounds = array<i64: 2, 1, 32>}, {pipeline_mode = #tpu.pipeline_mode<synchronous>, transform_indices = @transform_6, window_bounds = array<i64: 2, 32, 64>}, {pipeline_mode = #tpu.pipeline_mode<synchronous>, transform_indices = @transform_7, window_bounds = array<i64: 2, 1, 64>}, {pipeline_mode = #tpu.pipeline_mode<synchronous>, transform_indices = @transform_8, window_bounds = array<i64: 2, 64, 32>}, {pipeline_mode = #tpu.pipeline_mode<synchronous>, transform_indices = @transform_9, window_bounds = array<i64: 2, 1, 32>}, {pipeline_mode = #tpu.pipeline_mode<synchronous>, transform_indices = @transform_10, window_bounds = array<i64: 2, 1, 32>}, {pipeline_mode = #tpu.pipeline_mode<synchronous>, transform_indices = @transform_11, window_bounds = array<i64: 2, 1, 32>}, {pipeline_mode = #tpu.pipeline_mode<synchronous>, transform_indices = @transform_12, window_bounds = array<i64: 2, 1, 32>}, {pipeline_mode = #tpu.pipeline_mode<synchronous>, transform_indices = @transform_13, window_bounds = array<i64: 2, 1, 32>}, {transform_indices = @transform_14, window_bounds = array<i64: 6, 1, 32>}]} {
    %c0 = arith.constant 0 : index
    %c0_0 = arith.constant 0 : index
    %c0_1 = arith.constant 0 : index
    %0 = vector.load %arg1[%c0, %c0_0, %c0_1] : memref<6x8x32xf32, #tpu.memory_space<vmem>>, vector<6x8x32xf32>
    %1 = vector.shape_cast %0 : vector<6x8x32xf32> to vector<48x32xf32>
    %c0_2 = arith.constant 0 : index
    %c0_3 = arith.constant 0 : index
    %c0_4 = arith.constant 0 : index
    %2 = vector.load %arg2[%c0_2, %c0_3, %c0_4] : memref<6x8x32xf32, #tpu.memory_space<vmem>>, vector<6x8x32xf32>
    %3 = vector.shape_cast %2 : vector<6x8x32xf32> to vector<48x32xf32>
    %c0_5 = arith.constant 0 : index
    %c0_6 = arith.constant 0 : index
    %c0_7 = arith.constant 0 : index
    %4 = vector.load %arg3[%c0_5, %c0_6, %c0_7] : memref<2x32x96xf32, #tpu.memory_space<vmem>>, vector<1x32x96xf32>
    %5 = vector.shape_cast %4 : vector<1x32x96xf32> to vector<32x96xf32>
    %c0_8 = arith.constant 0 : index
    %c0_9 = arith.constant 0 : index
    %c0_10 = arith.constant 0 : index
    %6 = vector.load %arg4[%c0_8, %c0_9, %c0_10] : memref<2x1x96xf32, #tpu.memory_space<vmem>>, vector<1x1x96xf32>
    %7 = vector.shape_cast %6 : vector<1x1x96xf32> to vector<1x96xf32>
    %cst = arith.constant dense<0.000000e+00> : vector<48x96xf32>
    %8 = tpu.matmul %1, %5, %cst {dimension_numbers = #tpu.dot_dimension_numbers<[1], [0], [0], [1], [0, 0, 1, 1], [], []>} : vector<48x32xf32>, vector<32x96xf32>, vector<48x96xf32> -> vector<48x96xf32>
    %9 = vector.broadcast %7 : vector<1x96xf32> to vector<48x96xf32>
    %10 = arith.addf %8, %9 : vector<48x96xf32>
    %cst_11 = arith.constant dense<0.000000e+00> : vector<48x96xf32>
    %11 = tpu.matmul %3, %5, %cst_11 {dimension_numbers = #tpu.dot_dimension_numbers<[1], [0], [0], [1], [0, 0, 1, 1], [], []>} : vector<48x32xf32>, vector<32x96xf32>, vector<48x96xf32> -> vector<48x96xf32>
    %12 = vector.broadcast %7 : vector<1x96xf32> to vector<48x96xf32>
    %13 = arith.addf %11, %12 : vector<48x96xf32>
    %14 = vector.extract_strided_slice %10 {offsets = [0, 0], sizes = [48, 32], strides = [1, 1]} : vector<48x96xf32> to vector<48x32xf32>
    %15 = vector.extract_strided_slice %13 {offsets = [0, 32], sizes = [48, 32], strides = [1, 1]} : vector<48x96xf32> to vector<48x32xf32>
    %16 = vector.extract_strided_slice %13 {offsets = [0, 64], sizes = [48, 32], strides = [1, 1]} : vector<48x96xf32> to vector<48x32xf32>
    %17 = vector.shape_cast %14 : vector<48x32xf32> to vector<6x8x32xf32>
    %18 = vector.shape_cast %15 : vector<48x32xf32> to vector<6x8x32xf32>
    %19 = vector.shape_cast %16 : vector<48x32xf32> to vector<6x8x32xf32>
    %20 = vector.extract_strided_slice %17 {offsets = [0, 0, 0], sizes = [6, 8, 8], strides = [1, 1, 1]} : vector<6x8x32xf32> to vector<6x8x8xf32>
    %21 = vector.extract_strided_slice %18 {offsets = [0, 0, 0], sizes = [6, 8, 8], strides = [1, 1, 1]} : vector<6x8x32xf32> to vector<6x8x8xf32>
    %22 = vector.extract_strided_slice %19 {offsets = [0, 0, 0], sizes = [6, 8, 8], strides = [1, 1, 1]} : vector<6x8x32xf32> to vector<6x8x8xf32>
    "tpu.trace_start"() <{level = 10 : i32, message = "nqd,nkd->nqk"}> : () -> ()
    %cst_12 = arith.constant dense<0.000000e+00> : vector<6x8x8xf32>
    %23 = tpu.matmul %20, %21, %cst_12 {dimension_numbers = #tpu.dot_dimension_numbers<[2], [2], [1], [1], [0, 0, 0, 1, 1, 1], [0], [0]>} : vector<6x8x8xf32>, vector<6x8x8xf32>, vector<6x8x8xf32> -> vector<6x8x8xf32>
    "tpu.trace_stop"() : () -> ()
    %cst_13 = arith.constant 0.353553385 : f32
    %24 = vector.broadcast %cst_13 : f32 to vector<6x8x8xf32>
    %25 = arith.mulf %23, %24 : vector<6x8x8xf32>
    %cst_14 = arith.constant dense<0xFF800000> : vector<6x8xf32>
    %26 = vector.multi_reduction <maximumf>, %25, %cst_14 [2] : vector<6x8x8xf32> to vector<6x8xf32>
    %27 = vector.shape_cast %26 : vector<6x8xf32> to vector<6x8x1xf32>
    %28 = vector.broadcast %27 : vector<6x8x1xf32> to vector<6x8x8xf32>
    %29 = arith.subf %25, %28 : vector<6x8x8xf32>
    %30 = math.exp %29 : vector<6x8x8xf32>
    %cst_15 = arith.constant dense<0.000000e+00> : vector<6x8xf32>
    %31 = vector.multi_reduction <add>, %30, %cst_15 [2] : vector<6x8x8xf32> to vector<6x8xf32>
    %32 = vector.shape_cast %31 : vector<6x8xf32> to vector<6x8x1xf32>
    %33 = tpu.reciprocal %32 {approx = true} : vector<6x8x1xf32> -> vector<6x8x1xf32>
    %34 = vector.broadcast %33 : vector<6x8x1xf32> to vector<6x8x8xf32>
    %35 = arith.mulf %30, %34 : vector<6x8x8xf32>
    "tpu.trace_start"() <{level = 10 : i32, message = "nqk,nkd->nqd"}> : () -> ()
    %cst_16 = arith.constant dense<0.000000e+00> : vector<6x8x8xf32>
    %36 = tpu.matmul %35, %22, %cst_16 {dimension_numbers = #tpu.dot_dimension_numbers<[2], [1], [1], [2], [0, 0, 0, 1, 1, 2], [0], [0]>} : vector<6x8x8xf32>, vector<6x8x8xf32>, vector<6x8x8xf32> -> vector<6x8x8xf32>
    "tpu.trace_stop"() : () -> ()
    %37 = vector.extract_strided_slice %17 {offsets = [0, 0, 8], sizes = [6, 8, 8], strides = [1, 1, 1]} : vector<6x8x32xf32> to vector<6x8x8xf32>
    %38 = vector.extract_strided_slice %18 {offsets = [0, 0, 8], sizes = [6, 8, 8], strides = [1, 1, 1]} : vector<6x8x32xf32> to vector<6x8x8xf32>
    %39 = vector.extract_strided_slice %19 {offsets = [0, 0, 8], sizes = [6, 8, 8], strides = [1, 1, 1]} : vector<6x8x32xf32> to vector<6x8x8xf32>
    "tpu.trace_start"() <{level = 10 : i32, message = "nqd,nkd->nqk"}> : () -> ()
    %cst_17 = arith.constant dense<0.000000e+00> : vector<6x8x8xf32>
    %40 = tpu.matmul %37, %38, %cst_17 {dimension_numbers = #tpu.dot_dimension_numbers<[2], [2], [1], [1], [0, 0, 0, 1, 1, 1], [0], [0]>} : vector<6x8x8xf32>, vector<6x8x8xf32>, vector<6x8x8xf32> -> vector<6x8x8xf32>
    "tpu.trace_stop"() : () -> ()
    %cst_18 = arith.constant 0.353553385 : f32
    %41 = vector.broadcast %cst_18 : f32 to vector<6x8x8xf32>
    %42 = arith.mulf %40, %41 : vector<6x8x8xf32>
    %cst_19 = arith.constant dense<0xFF800000> : vector<6x8xf32>
    %43 = vector.multi_reduction <maximumf>, %42, %cst_19 [2] : vector<6x8x8xf32> to vector<6x8xf32>
    %44 = vector.shape_cast %43 : vector<6x8xf32> to vector<6x8x1xf32>
    %45 = vector.broadcast %44 : vector<6x8x1xf32> to vector<6x8x8xf32>
    %46 = arith.subf %42, %45 : vector<6x8x8xf32>
    %47 = math.exp %46 : vector<6x8x8xf32>
    %cst_20 = arith.constant dense<0.000000e+00> : vector<6x8xf32>
    %48 = vector.multi_reduction <add>, %47, %cst_20 [2] : vector<6x8x8xf32> to vector<6x8xf32>
    %49 = vector.shape_cast %48 : vector<6x8xf32> to vector<6x8x1xf32>
    %50 = tpu.reciprocal %49 {approx = true} : vector<6x8x1xf32> -> vector<6x8x1xf32>
    %51 = vector.broadcast %50 : vector<6x8x1xf32> to vector<6x8x8xf32>
    %52 = arith.mulf %47, %51 : vector<6x8x8xf32>
    "tpu.trace_start"() <{level = 10 : i32, message = "nqk,nkd->nqd"}> : () -> ()
    %cst_21 = arith.constant dense<0.000000e+00> : vector<6x8x8xf32>
    %53 = tpu.matmul %52, %39, %cst_21 {dimension_numbers = #tpu.dot_dimension_numbers<[2], [1], [1], [2], [0, 0, 0, 1, 1, 2], [0], [0]>} : vector<6x8x8xf32>, vector<6x8x8xf32>, vector<6x8x8xf32> -> vector<6x8x8xf32>
    "tpu.trace_stop"() : () -> ()
    %54 = vector.extract_strided_slice %17 {offsets = [0, 0, 16], sizes = [6, 8, 8], strides = [1, 1, 1]} : vector<6x8x32xf32> to vector<6x8x8xf32>
    %55 = vector.extract_strided_slice %18 {offsets = [0, 0, 16], sizes = [6, 8, 8], strides = [1, 1, 1]} : vector<6x8x32xf32> to vector<6x8x8xf32>
    %56 = vector.extract_strided_slice %19 {offsets = [0, 0, 16], sizes = [6, 8, 8], strides = [1, 1, 1]} : vector<6x8x32xf32> to vector<6x8x8xf32>
    "tpu.trace_start"() <{level = 10 : i32, message = "nqd,nkd->nqk"}> : () -> ()
    %cst_22 = arith.constant dense<0.000000e+00> : vector<6x8x8xf32>
    %57 = tpu.matmul %54, %55, %cst_22 {dimension_numbers = #tpu.dot_dimension_numbers<[2], [2], [1], [1], [0, 0, 0, 1, 1, 1], [0], [0]>} : vector<6x8x8xf32>, vector<6x8x8xf32>, vector<6x8x8xf32> -> vector<6x8x8xf32>
    "tpu.trace_stop"() : () -> ()
    %cst_23 = arith.constant 0.353553385 : f32
    %58 = vector.broadcast %cst_23 : f32 to vector<6x8x8xf32>
    %59 = arith.mulf %57, %58 : vector<6x8x8xf32>
    %cst_24 = arith.constant dense<0xFF800000> : vector<6x8xf32>
    %60 = vector.multi_reduction <maximumf>, %59, %cst_24 [2] : vector<6x8x8xf32> to vector<6x8xf32>
    %61 = vector.shape_cast %60 : vector<6x8xf32> to vector<6x8x1xf32>
    %62 = vector.broadcast %61 : vector<6x8x1xf32> to vector<6x8x8xf32>
    %63 = arith.subf %59, %62 : vector<6x8x8xf32>
    %64 = math.exp %63 : vector<6x8x8xf32>
    %cst_25 = arith.constant dense<0.000000e+00> : vector<6x8xf32>
    %65 = vector.multi_reduction <add>, %64, %cst_25 [2] : vector<6x8x8xf32> to vector<6x8xf32>
    %66 = vector.shape_cast %65 : vector<6x8xf32> to vector<6x8x1xf32>
    %67 = tpu.reciprocal %66 {approx = true} : vector<6x8x1xf32> -> vector<6x8x1xf32>
    %68 = vector.broadcast %67 : vector<6x8x1xf32> to vector<6x8x8xf32>
    %69 = arith.mulf %64, %68 : vector<6x8x8xf32>
    "tpu.trace_start"() <{level = 10 : i32, message = "nqk,nkd->nqd"}> : () -> ()
    %cst_26 = arith.constant dense<0.000000e+00> : vector<6x8x8xf32>
    %70 = tpu.matmul %69, %56, %cst_26 {dimension_numbers = #tpu.dot_dimension_numbers<[2], [1], [1], [2], [0, 0, 0, 1, 1, 2], [0], [0]>} : vector<6x8x8xf32>, vector<6x8x8xf32>, vector<6x8x8xf32> -> vector<6x8x8xf32>
    "tpu.trace_stop"() : () -> ()
    %71 = vector.extract_strided_slice %17 {offsets = [0, 0, 24], sizes = [6, 8, 8], strides = [1, 1, 1]} : vector<6x8x32xf32> to vector<6x8x8xf32>
    %72 = vector.extract_strided_slice %18 {offsets = [0, 0, 24], sizes = [6, 8, 8], strides = [1, 1, 1]} : vector<6x8x32xf32> to vector<6x8x8xf32>
    %73 = vector.extract_strided_slice %19 {offsets = [0, 0, 24], sizes = [6, 8, 8], strides = [1, 1, 1]} : vector<6x8x32xf32> to vector<6x8x8xf32>
    "tpu.trace_start"() <{level = 10 : i32, message = "nqd,nkd->nqk"}> : () -> ()
    %cst_27 = arith.constant dense<0.000000e+00> : vector<6x8x8xf32>
    %74 = tpu.matmul %71, %72, %cst_27 {dimension_numbers = #tpu.dot_dimension_numbers<[2], [2], [1], [1], [0, 0, 0, 1, 1, 1], [0], [0]>} : vector<6x8x8xf32>, vector<6x8x8xf32>, vector<6x8x8xf32> -> vector<6x8x8xf32>
    "tpu.trace_stop"() : () -> ()
    %cst_28 = arith.constant 0.353553385 : f32
    %75 = vector.broadcast %cst_28 : f32 to vector<6x8x8xf32>
    %76 = arith.mulf %74, %75 : vector<6x8x8xf32>
    %cst_29 = arith.constant dense<0xFF800000> : vector<6x8xf32>
    %77 = vector.multi_reduction <maximumf>, %76, %cst_29 [2] : vector<6x8x8xf32> to vector<6x8xf32>
    %78 = vector.shape_cast %77 : vector<6x8xf32> to vector<6x8x1xf32>
    %79 = vector.broadcast %78 : vector<6x8x1xf32> to vector<6x8x8xf32>
    %80 = arith.subf %76, %79 : vector<6x8x8xf32>
    %81 = math.exp %80 : vector<6x8x8xf32>
    %cst_30 = arith.constant dense<0.000000e+00> : vector<6x8xf32>
    %82 = vector.multi_reduction <add>, %81, %cst_30 [2] : vector<6x8x8xf32> to vector<6x8xf32>
    %83 = vector.shape_cast %82 : vector<6x8xf32> to vector<6x8x1xf32>
    %84 = tpu.reciprocal %83 {approx = true} : vector<6x8x1xf32> -> vector<6x8x1xf32>
    %85 = vector.broadcast %84 : vector<6x8x1xf32> to vector<6x8x8xf32>
    %86 = arith.mulf %81, %85 : vector<6x8x8xf32>
    "tpu.trace_start"() <{level = 10 : i32, message = "nqk,nkd->nqd"}> : () -> ()
    %cst_31 = arith.constant dense<0.000000e+00> : vector<6x8x8xf32>
    %87 = tpu.matmul %86, %73, %cst_31 {dimension_numbers = #tpu.dot_dimension_numbers<[2], [1], [1], [2], [0, 0, 0, 1, 1, 2], [0], [0]>} : vector<6x8x8xf32>, vector<6x8x8xf32>, vector<6x8x8xf32> -> vector<6x8x8xf32>
    "tpu.trace_stop"() : () -> ()
    %88 = tpu.concatenate %36, %53, %70, %87 in 2 : vector<6x8x8xf32>, vector<6x8x8xf32>, vector<6x8x8xf32>, vector<6x8x8xf32> -> vector<6x8x32xf32>
    %89 = vector.shape_cast %88 : vector<6x8x32xf32> to vector<48x32xf32>
    %c0_32 = arith.constant 0 : index
    %c0_33 = arith.constant 0 : index
    %c0_34 = arith.constant 0 : index
    %90 = vector.load %arg5[%c0_32, %c0_33, %c0_34] : memref<2x32x32xf32, #tpu.memory_space<vmem>>, vector<1x32x32xf32>
    %91 = vector.shape_cast %90 : vector<1x32x32xf32> to vector<32x32xf32>
    %cst_35 = arith.constant dense<0.000000e+00> : vector<48x32xf32>
    %92 = tpu.matmul %89, %91, %cst_35 {dimension_numbers = #tpu.dot_dimension_numbers<[1], [0], [0], [1], [0, 0, 1, 1], [], []>} : vector<48x32xf32>, vector<32x32xf32>, vector<48x32xf32> -> vector<48x32xf32>
    %c0_36 = arith.constant 0 : index
    %c0_37 = arith.constant 0 : index
    %c0_38 = arith.constant 0 : index
    %93 = vector.load %arg6[%c0_36, %c0_37, %c0_38] : memref<2x1x32xf32, #tpu.memory_space<vmem>>, vector<1x1x32xf32>
    %94 = vector.shape_cast %93 : vector<1x1x32xf32> to vector<1x32xf32>
    %95 = vector.broadcast %94 : vector<1x32xf32> to vector<48x32xf32>
    %96 = arith.addf %92, %95 : vector<48x32xf32>
    %97 = arith.addf %1, %96 : vector<48x32xf32>
    %c0_39 = arith.constant 0 : index
    %c0_40 = arith.constant 0 : index
    %c0_41 = arith.constant 0 : index
    %98 = vector.load %arg11[%c0_39, %c0_40, %c0_41] : memref<2x1x32xf32, #tpu.memory_space<vmem>>, vector<1x1x32xf32>
    %99 = vector.shape_cast %98 : vector<1x1x32xf32> to vector<1x32xf32>
    %c0_42 = arith.constant 0 : index
    %c0_43 = arith.constant 0 : index
    %c0_44 = arith.constant 0 : index
    %100 = vector.load %arg12[%c0_42, %c0_43, %c0_44] : memref<2x1x32xf32, #tpu.memory_space<vmem>>, vector<1x1x32xf32>
    %101 = vector.shape_cast %100 : vector<1x1x32xf32> to vector<1x32xf32>
    %cst_45 = arith.constant dense<0.000000e+00> : vector<48xf32>
    %102 = vector.multi_reduction <add>, %97, %cst_45 [1] : vector<48x32xf32> to vector<48xf32>
    %103 = vector.shape_cast %102 : vector<48xf32> to vector<48x1xf32>
    %cst_46 = arith.constant 3.200000e+01 : f32
    %104 = vector.broadcast %cst_46 : f32 to vector<48x1xf32>
    %105 = arith.divf %103, %104 : vector<48x1xf32>
    %106 = vector.broadcast %105 : vector<48x1xf32> to vector<48x32xf32>
    %107 = arith.subf %97, %106 : vector<48x32xf32>
    %108 = arith.mulf %107, %107 : vector<48x32xf32>
    %cst_47 = arith.constant dense<0.000000e+00> : vector<48xf32>
    %109 = vector.multi_reduction <add>, %108, %cst_47 [1] : vector<48x32xf32> to vector<48xf32>
    %110 = vector.shape_cast %109 : vector<48xf32> to vector<48x1xf32>
    %cst_48 = arith.constant 3.200000e+01 : f32
    %111 = vector.broadcast %cst_48 : f32 to vector<48x1xf32>
    %112 = arith.divf %110, %111 : vector<48x1xf32>
    %113 = vector.broadcast %105 : vector<48x1xf32> to vector<48x32xf32>
    %114 = arith.subf %97, %113 : vector<48x32xf32>
    %cst_49 = arith.constant 9.99999974E-6 : f32
    %115 = vector.broadcast %cst_49 : f32 to vector<48x1xf32>
    %116 = arith.addf %112, %115 : vector<48x1xf32>
    %117 = math.rsqrt %116 : vector<48x1xf32>
    %118 = vector.broadcast %117 : vector<48x1xf32> to vector<48x32xf32>
    %119 = arith.mulf %114, %118 : vector<48x32xf32>
    %120 = vector.broadcast %99 : vector<1x32xf32> to vector<48x32xf32>
    %121 = arith.mulf %119, %120 : vector<48x32xf32>
    %122 = vector.broadcast %101 : vector<1x32xf32> to vector<48x32xf32>
    %123 = arith.addf %121, %122 : vector<48x32xf32>
    %c0_50 = arith.constant 0 : index
    %c0_51 = arith.constant 0 : index
    %c0_52 = arith.constant 0 : index
    %124 = vector.load %arg7[%c0_50, %c0_51, %c0_52] : memref<2x32x64xf32, #tpu.memory_space<vmem>>, vector<1x32x64xf32>
    %125 = vector.shape_cast %124 : vector<1x32x64xf32> to vector<32x64xf32>
    %cst_53 = arith.constant dense<0.000000e+00> : vector<48x64xf32>
    %126 = tpu.matmul %123, %125, %cst_53 {dimension_numbers = #tpu.dot_dimension_numbers<[1], [0], [0], [1], [0, 0, 1, 1], [], []>} : vector<48x32xf32>, vector<32x64xf32>, vector<48x64xf32> -> vector<48x64xf32>
    %c0_54 = arith.constant 0 : index
    %c0_55 = arith.constant 0 : index
    %c0_56 = arith.constant 0 : index
    %127 = vector.load %arg8[%c0_54, %c0_55, %c0_56] : memref<2x1x64xf32, #tpu.memory_space<vmem>>, vector<1x1x64xf32>
    %128 = vector.shape_cast %127 : vector<1x1x64xf32> to vector<1x64xf32>
    %129 = vector.broadcast %128 : vector<1x64xf32> to vector<48x64xf32>
    %130 = arith.addf %126, %129 : vector<48x64xf32>
    %cst_57 = arith.constant 0.000000e+00 : f32
    %131 = vector.broadcast %cst_57 : f32 to vector<48x64xf32>
    %132 = arith.maximumf %130, %131 : vector<48x64xf32>
    %c0_58 = arith.constant 0 : index
    %c0_59 = arith.constant 0 : index
    %c0_60 = arith.constant 0 : index
    %133 = vector.load %arg9[%c0_58, %c0_59, %c0_60] : memref<2x64x32xf32, #tpu.memory_space<vmem>>, vector<1x64x32xf32>
    %134 = vector.shape_cast %133 : vector<1x64x32xf32> to vector<64x32xf32>
    %cst_61 = arith.constant dense<0.000000e+00> : vector<48x32xf32>
    %135 = tpu.matmul %132, %134, %cst_61 {dimension_numbers = #tpu.dot_dimension_numbers<[1], [0], [0], [1], [0, 0, 1, 1], [], []>} : vector<48x64xf32>, vector<64x32xf32>, vector<48x32xf32> -> vector<48x32xf32>
    %c0_62 = arith.constant 0 : index
    %c0_63 = arith.constant 0 : index
    %c0_64 = arith.constant 0 : index
    %136 = vector.load %arg10[%c0_62, %c0_63, %c0_64] : memref<2x1x32xf32, #tpu.memory_space<vmem>>, vector<1x1x32xf32>
    %137 = vector.shape_cast %136 : vector<1x1x32xf32> to vector<1x32xf32>
    %138 = vector.broadcast %137 : vector<1x32xf32> to vector<48x32xf32>
    %139 = arith.addf %135, %138 : vector<48x32xf32>
    %140 = arith.addf %123, %139 : vector<48x32xf32>
    %c0_65 = arith.constant 0 : index
    %c0_66 = arith.constant 0 : index
    %c0_67 = arith.constant 0 : index
    %141 = vector.load %arg13[%c0_65, %c0_66, %c0_67] : memref<2x1x32xf32, #tpu.memory_space<vmem>>, vector<1x1x32xf32>
    %142 = vector.shape_cast %141 : vector<1x1x32xf32> to vector<1x32xf32>
    %c0_68 = arith.constant 0 : index
    %c0_69 = arith.constant 0 : index
    %c0_70 = arith.constant 0 : index
    %143 = vector.load %arg14[%c0_68, %c0_69, %c0_70] : memref<2x1x32xf32, #tpu.memory_space<vmem>>, vector<1x1x32xf32>
    %144 = vector.shape_cast %143 : vector<1x1x32xf32> to vector<1x32xf32>
    %cst_71 = arith.constant dense<0.000000e+00> : vector<48xf32>
    %145 = vector.multi_reduction <add>, %140, %cst_71 [1] : vector<48x32xf32> to vector<48xf32>
    %146 = vector.shape_cast %145 : vector<48xf32> to vector<48x1xf32>
    %cst_72 = arith.constant 3.200000e+01 : f32
    %147 = vector.broadcast %cst_72 : f32 to vector<48x1xf32>
    %148 = arith.divf %146, %147 : vector<48x1xf32>
    %149 = vector.broadcast %148 : vector<48x1xf32> to vector<48x32xf32>
    %150 = arith.subf %140, %149 : vector<48x32xf32>
    %151 = arith.mulf %150, %150 : vector<48x32xf32>
    %cst_73 = arith.constant dense<0.000000e+00> : vector<48xf32>
    %152 = vector.multi_reduction <add>, %151, %cst_73 [1] : vector<48x32xf32> to vector<48xf32>
    %153 = vector.shape_cast %152 : vector<48xf32> to vector<48x1xf32>
    %cst_74 = arith.constant 3.200000e+01 : f32
    %154 = vector.broadcast %cst_74 : f32 to vector<48x1xf32>
    %155 = arith.divf %153, %154 : vector<48x1xf32>
    %156 = vector.broadcast %148 : vector<48x1xf32> to vector<48x32xf32>
    %157 = arith.subf %140, %156 : vector<48x32xf32>
    %cst_75 = arith.constant 9.99999974E-6 : f32
    %158 = vector.broadcast %cst_75 : f32 to vector<48x1xf32>
    %159 = arith.addf %155, %158 : vector<48x1xf32>
    %160 = math.rsqrt %159 : vector<48x1xf32>
    %161 = vector.broadcast %160 : vector<48x1xf32> to vector<48x32xf32>
    %162 = arith.mulf %157, %161 : vector<48x32xf32>
    %163 = vector.broadcast %142 : vector<1x32xf32> to vector<48x32xf32>
    %164 = arith.mulf %162, %163 : vector<48x32xf32>
    %165 = vector.broadcast %144 : vector<1x32xf32> to vector<48x32xf32>
    %166 = arith.addf %164, %165 : vector<48x32xf32>
    %c1 = arith.constant 1 : index
    %c0_76 = arith.constant 0 : index
    %c0_77 = arith.constant 0 : index
    %167 = vector.load %arg3[%c1, %c0_76, %c0_77] : memref<2x32x96xf32, #tpu.memory_space<vmem>>, vector<1x32x96xf32>
    %168 = vector.shape_cast %167 : vector<1x32x96xf32> to vector<32x96xf32>
    %c1_78 = arith.constant 1 : index
    %c0_79 = arith.constant 0 : index
    %c0_80 = arith.constant 0 : index
    %169 = vector.load %arg4[%c1_78, %c0_79, %c0_80] : memref<2x1x96xf32, #tpu.memory_space<vmem>>, vector<1x1x96xf32>
    %170 = vector.shape_cast %169 : vector<1x1x96xf32> to vector<1x96xf32>
    %cst_81 = arith.constant dense<0.000000e+00> : vector<48x96xf32>
    %171 = tpu.matmul %166, %168, %cst_81 {dimension_numbers = #tpu.dot_dimension_numbers<[1], [0], [0], [1], [0, 0, 1, 1], [], []>} : vector<48x32xf32>, vector<32x96xf32>, vector<48x96xf32> -> vector<48x96xf32>
    %172 = vector.broadcast %170 : vector<1x96xf32> to vector<48x96xf32>
    %173 = arith.addf %171, %172 : vector<48x96xf32>
    %174 = vector.extract_strided_slice %173 {offsets = [0, 0], sizes = [48, 32], strides = [1, 1]} : vector<48x96xf32> to vector<48x32xf32>
    %175 = vector.extract_strided_slice %173 {offsets = [0, 32], sizes = [48, 32], strides = [1, 1]} : vector<48x96xf32> to vector<48x32xf32>
    %176 = vector.extract_strided_slice %173 {offsets = [0, 64], sizes = [48, 32], strides = [1, 1]} : vector<48x96xf32> to vector<48x32xf32>
    %177 = vector.shape_cast %174 : vector<48x32xf32> to vector<6x8x32xf32>
    %178 = vector.shape_cast %175 : vector<48x32xf32> to vector<6x8x32xf32>
    %179 = vector.shape_cast %176 : vector<48x32xf32> to vector<6x8x32xf32>
    %180 = vector.extract_strided_slice %177 {offsets = [0, 0, 0], sizes = [6, 8, 8], strides = [1, 1, 1]} : vector<6x8x32xf32> to vector<6x8x8xf32>
    %181 = vector.extract_strided_slice %178 {offsets = [0, 0, 0], sizes = [6, 8, 8], strides = [1, 1, 1]} : vector<6x8x32xf32> to vector<6x8x8xf32>
    %182 = vector.extract_strided_slice %179 {offsets = [0, 0, 0], sizes = [6, 8, 8], strides = [1, 1, 1]} : vector<6x8x32xf32> to vector<6x8x8xf32>
    "tpu.trace_start"() <{level = 10 : i32, message = "nqd,nkd->nqk"}> : () -> ()
    %cst_82 = arith.constant dense<0.000000e+00> : vector<6x8x8xf32>
    %183 = tpu.matmul %180, %181, %cst_82 {dimension_numbers = #tpu.dot_dimension_numbers<[2], [2], [1], [1], [0, 0, 0, 1, 1, 1], [0], [0]>} : vector<6x8x8xf32>, vector<6x8x8xf32>, vector<6x8x8xf32> -> vector<6x8x8xf32>
    "tpu.trace_stop"() : () -> ()
    %cst_83 = arith.constant 0.353553385 : f32
    %184 = vector.broadcast %cst_83 : f32 to vector<6x8x8xf32>
    %185 = arith.mulf %183, %184 : vector<6x8x8xf32>
    %cst_84 = arith.constant dense<0xFF800000> : vector<6x8xf32>
    %186 = vector.multi_reduction <maximumf>, %185, %cst_84 [2] : vector<6x8x8xf32> to vector<6x8xf32>
    %187 = vector.shape_cast %186 : vector<6x8xf32> to vector<6x8x1xf32>
    %188 = vector.broadcast %187 : vector<6x8x1xf32> to vector<6x8x8xf32>
    %189 = arith.subf %185, %188 : vector<6x8x8xf32>
    %190 = math.exp %189 : vector<6x8x8xf32>
    %cst_85 = arith.constant dense<0.000000e+00> : vector<6x8xf32>
    %191 = vector.multi_reduction <add>, %190, %cst_85 [2] : vector<6x8x8xf32> to vector<6x8xf32>
    %192 = vector.shape_cast %191 : vector<6x8xf32> to vector<6x8x1xf32>
    %193 = tpu.reciprocal %192 {approx = true} : vector<6x8x1xf32> -> vector<6x8x1xf32>
    %194 = vector.broadcast %193 : vector<6x8x1xf32> to vector<6x8x8xf32>
    %195 = arith.mulf %190, %194 : vector<6x8x8xf32>
    "tpu.trace_start"() <{level = 10 : i32, message = "nqk,nkd->nqd"}> : () -> ()
    %cst_86 = arith.constant dense<0.000000e+00> : vector<6x8x8xf32>
    %196 = tpu.matmul %195, %182, %cst_86 {dimension_numbers = #tpu.dot_dimension_numbers<[2], [1], [1], [2], [0, 0, 0, 1, 1, 2], [0], [0]>} : vector<6x8x8xf32>, vector<6x8x8xf32>, vector<6x8x8xf32> -> vector<6x8x8xf32>
    "tpu.trace_stop"() : () -> ()
    %197 = vector.extract_strided_slice %177 {offsets = [0, 0, 8], sizes = [6, 8, 8], strides = [1, 1, 1]} : vector<6x8x32xf32> to vector<6x8x8xf32>
    %198 = vector.extract_strided_slice %178 {offsets = [0, 0, 8], sizes = [6, 8, 8], strides = [1, 1, 1]} : vector<6x8x32xf32> to vector<6x8x8xf32>
    %199 = vector.extract_strided_slice %179 {offsets = [0, 0, 8], sizes = [6, 8, 8], strides = [1, 1, 1]} : vector<6x8x32xf32> to vector<6x8x8xf32>
    "tpu.trace_start"() <{level = 10 : i32, message = "nqd,nkd->nqk"}> : () -> ()
    %cst_87 = arith.constant dense<0.000000e+00> : vector<6x8x8xf32>
    %200 = tpu.matmul %197, %198, %cst_87 {dimension_numbers = #tpu.dot_dimension_numbers<[2], [2], [1], [1], [0, 0, 0, 1, 1, 1], [0], [0]>} : vector<6x8x8xf32>, vector<6x8x8xf32>, vector<6x8x8xf32> -> vector<6x8x8xf32>
    "tpu.trace_stop"() : () -> ()
    %cst_88 = arith.constant 0.353553385 : f32
    %201 = vector.broadcast %cst_88 : f32 to vector<6x8x8xf32>
    %202 = arith.mulf %200, %201 : vector<6x8x8xf32>
    %cst_89 = arith.constant dense<0xFF800000> : vector<6x8xf32>
    %203 = vector.multi_reduction <maximumf>, %202, %cst_89 [2] : vector<6x8x8xf32> to vector<6x8xf32>
    %204 = vector.shape_cast %203 : vector<6x8xf32> to vector<6x8x1xf32>
    %205 = vector.broadcast %204 : vector<6x8x1xf32> to vector<6x8x8xf32>
    %206 = arith.subf %202, %205 : vector<6x8x8xf32>
    %207 = math.exp %206 : vector<6x8x8xf32>
    %cst_90 = arith.constant dense<0.000000e+00> : vector<6x8xf32>
    %208 = vector.multi_reduction <add>, %207, %cst_90 [2] : vector<6x8x8xf32> to vector<6x8xf32>
    %209 = vector.shape_cast %208 : vector<6x8xf32> to vector<6x8x1xf32>
    %210 = tpu.reciprocal %209 {approx = true} : vector<6x8x1xf32> -> vector<6x8x1xf32>
    %211 = vector.broadcast %210 : vector<6x8x1xf32> to vector<6x8x8xf32>
    %212 = arith.mulf %207, %211 : vector<6x8x8xf32>
    "tpu.trace_start"() <{level = 10 : i32, message = "nqk,nkd->nqd"}> : () -> ()
    %cst_91 = arith.constant dense<0.000000e+00> : vector<6x8x8xf32>
    %213 = tpu.matmul %212, %199, %cst_91 {dimension_numbers = #tpu.dot_dimension_numbers<[2], [1], [1], [2], [0, 0, 0, 1, 1, 2], [0], [0]>} : vector<6x8x8xf32>, vector<6x8x8xf32>, vector<6x8x8xf32> -> vector<6x8x8xf32>
    "tpu.trace_stop"() : () -> ()
    %214 = vector.extract_strided_slice %177 {offsets = [0, 0, 16], sizes = [6, 8, 8], strides = [1, 1, 1]} : vector<6x8x32xf32> to vector<6x8x8xf32>
    %215 = vector.extract_strided_slice %178 {offsets = [0, 0, 16], sizes = [6, 8, 8], strides = [1, 1, 1]} : vector<6x8x32xf32> to vector<6x8x8xf32>
    %216 = vector.extract_strided_slice %179 {offsets = [0, 0, 16], sizes = [6, 8, 8], strides = [1, 1, 1]} : vector<6x8x32xf32> to vector<6x8x8xf32>
    "tpu.trace_start"() <{level = 10 : i32, message = "nqd,nkd->nqk"}> : () -> ()
    %cst_92 = arith.constant dense<0.000000e+00> : vector<6x8x8xf32>
    %217 = tpu.matmul %214, %215, %cst_92 {dimension_numbers = #tpu.dot_dimension_numbers<[2], [2], [1], [1], [0, 0, 0, 1, 1, 1], [0], [0]>} : vector<6x8x8xf32>, vector<6x8x8xf32>, vector<6x8x8xf32> -> vector<6x8x8xf32>
    "tpu.trace_stop"() : () -> ()
    %cst_93 = arith.constant 0.353553385 : f32
    %218 = vector.broadcast %cst_93 : f32 to vector<6x8x8xf32>
    %219 = arith.mulf %217, %218 : vector<6x8x8xf32>
    %cst_94 = arith.constant dense<0xFF800000> : vector<6x8xf32>
    %220 = vector.multi_reduction <maximumf>, %219, %cst_94 [2] : vector<6x8x8xf32> to vector<6x8xf32>
    %221 = vector.shape_cast %220 : vector<6x8xf32> to vector<6x8x1xf32>
    %222 = vector.broadcast %221 : vector<6x8x1xf32> to vector<6x8x8xf32>
    %223 = arith.subf %219, %222 : vector<6x8x8xf32>
    %224 = math.exp %223 : vector<6x8x8xf32>
    %cst_95 = arith.constant dense<0.000000e+00> : vector<6x8xf32>
    %225 = vector.multi_reduction <add>, %224, %cst_95 [2] : vector<6x8x8xf32> to vector<6x8xf32>
    %226 = vector.shape_cast %225 : vector<6x8xf32> to vector<6x8x1xf32>
    %227 = tpu.reciprocal %226 {approx = true} : vector<6x8x1xf32> -> vector<6x8x1xf32>
    %228 = vector.broadcast %227 : vector<6x8x1xf32> to vector<6x8x8xf32>
    %229 = arith.mulf %224, %228 : vector<6x8x8xf32>
    "tpu.trace_start"() <{level = 10 : i32, message = "nqk,nkd->nqd"}> : () -> ()
    %cst_96 = arith.constant dense<0.000000e+00> : vector<6x8x8xf32>
    %230 = tpu.matmul %229, %216, %cst_96 {dimension_numbers = #tpu.dot_dimension_numbers<[2], [1], [1], [2], [0, 0, 0, 1, 1, 2], [0], [0]>} : vector<6x8x8xf32>, vector<6x8x8xf32>, vector<6x8x8xf32> -> vector<6x8x8xf32>
    "tpu.trace_stop"() : () -> ()
    %231 = vector.extract_strided_slice %177 {offsets = [0, 0, 24], sizes = [6, 8, 8], strides = [1, 1, 1]} : vector<6x8x32xf32> to vector<6x8x8xf32>
    %232 = vector.extract_strided_slice %178 {offsets = [0, 0, 24], sizes = [6, 8, 8], strides = [1, 1, 1]} : vector<6x8x32xf32> to vector<6x8x8xf32>
    %233 = vector.extract_strided_slice %179 {offsets = [0, 0, 24], sizes = [6, 8, 8], strides = [1, 1, 1]} : vector<6x8x32xf32> to vector<6x8x8xf32>
    "tpu.trace_start"() <{level = 10 : i32, message = "nqd,nkd->nqk"}> : () -> ()
    %cst_97 = arith.constant dense<0.000000e+00> : vector<6x8x8xf32>
    %234 = tpu.matmul %231, %232, %cst_97 {dimension_numbers = #tpu.dot_dimension_numbers<[2], [2], [1], [1], [0, 0, 0, 1, 1, 1], [0], [0]>} : vector<6x8x8xf32>, vector<6x8x8xf32>, vector<6x8x8xf32> -> vector<6x8x8xf32>
    "tpu.trace_stop"() : () -> ()
    %cst_98 = arith.constant 0.353553385 : f32
    %235 = vector.broadcast %cst_98 : f32 to vector<6x8x8xf32>
    %236 = arith.mulf %234, %235 : vector<6x8x8xf32>
    %cst_99 = arith.constant dense<0xFF800000> : vector<6x8xf32>
    %237 = vector.multi_reduction <maximumf>, %236, %cst_99 [2] : vector<6x8x8xf32> to vector<6x8xf32>
    %238 = vector.shape_cast %237 : vector<6x8xf32> to vector<6x8x1xf32>
    %239 = vector.broadcast %238 : vector<6x8x1xf32> to vector<6x8x8xf32>
    %240 = arith.subf %236, %239 : vector<6x8x8xf32>
    %241 = math.exp %240 : vector<6x8x8xf32>
    %cst_100 = arith.constant dense<0.000000e+00> : vector<6x8xf32>
    %242 = vector.multi_reduction <add>, %241, %cst_100 [2] : vector<6x8x8xf32> to vector<6x8xf32>
    %243 = vector.shape_cast %242 : vector<6x8xf32> to vector<6x8x1xf32>
    %244 = tpu.reciprocal %243 {approx = true} : vector<6x8x1xf32> -> vector<6x8x1xf32>
    %245 = vector.broadcast %244 : vector<6x8x1xf32> to vector<6x8x8xf32>
    %246 = arith.mulf %241, %245 : vector<6x8x8xf32>
    "tpu.trace_start"() <{level = 10 : i32, message = "nqk,nkd->nqd"}> : () -> ()
    %cst_101 = arith.constant dense<0.000000e+00> : vector<6x8x8xf32>
    %247 = tpu.matmul %246, %233, %cst_101 {dimension_numbers = #tpu.dot_dimension_numbers<[2], [1], [1], [2], [0, 0, 0, 1, 1, 2], [0], [0]>} : vector<6x8x8xf32>, vector<6x8x8xf32>, vector<6x8x8xf32> -> vector<6x8x8xf32>
    "tpu.trace_stop"() : () -> ()
    %248 = tpu.concatenate %196, %213, %230, %247 in 2 : vector<6x8x8xf32>, vector<6x8x8xf32>, vector<6x8x8xf32>, vector<6x8x8xf32> -> vector<6x8x32xf32>
    %249 = vector.shape_cast %248 : vector<6x8x32xf32> to vector<48x32xf32>
    %c1_102 = arith.constant 1 : index
    %c0_103 = arith.constant 0 : index
    %c0_104 = arith.constant 0 : index
    %250 = vector.load %arg5[%c1_102, %c0_103, %c0_104] : memref<2x32x32xf32, #tpu.memory_space<vmem>>, vector<1x32x32xf32>
    %251 = vector.shape_cast %250 : vector<1x32x32xf32> to vector<32x32xf32>
    %cst_105 = arith.constant dense<0.000000e+00> : vector<48x32xf32>
    %252 = tpu.matmul %249, %251, %cst_105 {dimension_numbers = #tpu.dot_dimension_numbers<[1], [0], [0], [1], [0, 0, 1, 1], [], []>} : vector<48x32xf32>, vector<32x32xf32>, vector<48x32xf32> -> vector<48x32xf32>
    %c1_106 = arith.constant 1 : index
    %c0_107 = arith.constant 0 : index
    %c0_108 = arith.constant 0 : index
    %253 = vector.load %arg6[%c1_106, %c0_107, %c0_108] : memref<2x1x32xf32, #tpu.memory_space<vmem>>, vector<1x1x32xf32>
    %254 = vector.shape_cast %253 : vector<1x1x32xf32> to vector<1x32xf32>
    %255 = vector.broadcast %254 : vector<1x32xf32> to vector<48x32xf32>
    %256 = arith.addf %252, %255 : vector<48x32xf32>
    %257 = arith.addf %166, %256 : vector<48x32xf32>
    %c1_109 = arith.constant 1 : index
    %c0_110 = arith.constant 0 : index
    %c0_111 = arith.constant 0 : index
    %258 = vector.load %arg11[%c1_109, %c0_110, %c0_111] : memref<2x1x32xf32, #tpu.memory_space<vmem>>, vector<1x1x32xf32>
    %259 = vector.shape_cast %258 : vector<1x1x32xf32> to vector<1x32xf32>
    %c1_112 = arith.constant 1 : index
    %c0_113 = arith.constant 0 : index
    %c0_114 = arith.constant 0 : index
    %260 = vector.load %arg12[%c1_112, %c0_113, %c0_114] : memref<2x1x32xf32, #tpu.memory_space<vmem>>, vector<1x1x32xf32>
    %261 = vector.shape_cast %260 : vector<1x1x32xf32> to vector<1x32xf32>
    %cst_115 = arith.constant dense<0.000000e+00> : vector<48xf32>
    %262 = vector.multi_reduction <add>, %257, %cst_115 [1] : vector<48x32xf32> to vector<48xf32>
    %263 = vector.shape_cast %262 : vector<48xf32> to vector<48x1xf32>
    %cst_116 = arith.constant 3.200000e+01 : f32
    %264 = vector.broadcast %cst_116 : f32 to vector<48x1xf32>
    %265 = arith.divf %263, %264 : vector<48x1xf32>
    %266 = vector.broadcast %265 : vector<48x1xf32> to vector<48x32xf32>
    %267 = arith.subf %257, %266 : vector<48x32xf32>
    %268 = arith.mulf %267, %267 : vector<48x32xf32>
    %cst_117 = arith.constant dense<0.000000e+00> : vector<48xf32>
    %269 = vector.multi_reduction <add>, %268, %cst_117 [1] : vector<48x32xf32> to vector<48xf32>
    %270 = vector.shape_cast %269 : vector<48xf32> to vector<48x1xf32>
    %cst_118 = arith.constant 3.200000e+01 : f32
    %271 = vector.broadcast %cst_118 : f32 to vector<48x1xf32>
    %272 = arith.divf %270, %271 : vector<48x1xf32>
    %273 = vector.broadcast %265 : vector<48x1xf32> to vector<48x32xf32>
    %274 = arith.subf %257, %273 : vector<48x32xf32>
    %cst_119 = arith.constant 9.99999974E-6 : f32
    %275 = vector.broadcast %cst_119 : f32 to vector<48x1xf32>
    %276 = arith.addf %272, %275 : vector<48x1xf32>
    %277 = math.rsqrt %276 : vector<48x1xf32>
    %278 = vector.broadcast %277 : vector<48x1xf32> to vector<48x32xf32>
    %279 = arith.mulf %274, %278 : vector<48x32xf32>
    %280 = vector.broadcast %259 : vector<1x32xf32> to vector<48x32xf32>
    %281 = arith.mulf %279, %280 : vector<48x32xf32>
    %282 = vector.broadcast %261 : vector<1x32xf32> to vector<48x32xf32>
    %283 = arith.addf %281, %282 : vector<48x32xf32>
    %c1_120 = arith.constant 1 : index
    %c0_121 = arith.constant 0 : index
    %c0_122 = arith.constant 0 : index
    %284 = vector.load %arg7[%c1_120, %c0_121, %c0_122] : memref<2x32x64xf32, #tpu.memory_space<vmem>>, vector<1x32x64xf32>
    %285 = vector.shape_cast %284 : vector<1x32x64xf32> to vector<32x64xf32>
    %cst_123 = arith.constant dense<0.000000e+00> : vector<48x64xf32>
    %286 = tpu.matmul %283, %285, %cst_123 {dimension_numbers = #tpu.dot_dimension_numbers<[1], [0], [0], [1], [0, 0, 1, 1], [], []>} : vector<48x32xf32>, vector<32x64xf32>, vector<48x64xf32> -> vector<48x64xf32>
    %c1_124 = arith.constant 1 : index
    %c0_125 = arith.constant 0 : index
    %c0_126 = arith.constant 0 : index
    %287 = vector.load %arg8[%c1_124, %c0_125, %c0_126] : memref<2x1x64xf32, #tpu.memory_space<vmem>>, vector<1x1x64xf32>
    %288 = vector.shape_cast %287 : vector<1x1x64xf32> to vector<1x64xf32>
    %289 = vector.broadcast %288 : vector<1x64xf32> to vector<48x64xf32>
    %290 = arith.addf %286, %289 : vector<48x64xf32>
    %cst_127 = arith.constant 0.000000e+00 : f32
    %291 = vector.broadcast %cst_127 : f32 to vector<48x64xf32>
    %292 = arith.maximumf %290, %291 : vector<48x64xf32>
    %c1_128 = arith.constant 1 : index
    %c0_129 = arith.constant 0 : index
    %c0_130 = arith.constant 0 : index
    %293 = vector.load %arg9[%c1_128, %c0_129, %c0_130] : memref<2x64x32xf32, #tpu.memory_space<vmem>>, vector<1x64x32xf32>
    %294 = vector.shape_cast %293 : vector<1x64x32xf32> to vector<64x32xf32>
    %cst_131 = arith.constant dense<0.000000e+00> : vector<48x32xf32>
    %295 = tpu.matmul %292, %294, %cst_131 {dimension_numbers = #tpu.dot_dimension_numbers<[1], [0], [0], [1], [0, 0, 1, 1], [], []>} : vector<48x64xf32>, vector<64x32xf32>, vector<48x32xf32> -> vector<48x32xf32>
    %c1_132 = arith.constant 1 : index
    %c0_133 = arith.constant 0 : index
    %c0_134 = arith.constant 0 : index
    %296 = vector.load %arg10[%c1_132, %c0_133, %c0_134] : memref<2x1x32xf32, #tpu.memory_space<vmem>>, vector<1x1x32xf32>
    %297 = vector.shape_cast %296 : vector<1x1x32xf32> to vector<1x32xf32>
    %298 = vector.broadcast %297 : vector<1x32xf32> to vector<48x32xf32>
    %299 = arith.addf %295, %298 : vector<48x32xf32>
    %300 = arith.addf %283, %299 : vector<48x32xf32>
    %c1_135 = arith.constant 1 : index
    %c0_136 = arith.constant 0 : index
    %c0_137 = arith.constant 0 : index
    %301 = vector.load %arg13[%c1_135, %c0_136, %c0_137] : memref<2x1x32xf32, #tpu.memory_space<vmem>>, vector<1x1x32xf32>
    %302 = vector.shape_cast %301 : vector<1x1x32xf32> to vector<1x32xf32>
    %c1_138 = arith.constant 1 : index
    %c0_139 = arith.constant 0 : index
    %c0_140 = arith.constant 0 : index
    %303 = vector.load %arg14[%c1_138, %c0_139, %c0_140] : memref<2x1x32xf32, #tpu.memory_space<vmem>>, vector<1x1x32xf32>
    %304 = vector.shape_cast %303 : vector<1x1x32xf32> to vector<1x32xf32>
    %cst_141 = arith.constant dense<0.000000e+00> : vector<48xf32>
    %305 = vector.multi_reduction <add>, %300, %cst_141 [1] : vector<48x32xf32> to vector<48xf32>
    %306 = vector.shape_cast %305 : vector<48xf32> to vector<48x1xf32>
    %cst_142 = arith.constant 3.200000e+01 : f32
    %307 = vector.broadcast %cst_142 : f32 to vector<48x1xf32>
    %308 = arith.divf %306, %307 : vector<48x1xf32>
    %309 = vector.broadcast %308 : vector<48x1xf32> to vector<48x32xf32>
    %310 = arith.subf %300, %309 : vector<48x32xf32>
    %311 = arith.mulf %310, %310 : vector<48x32xf32>
    %cst_143 = arith.constant dense<0.000000e+00> : vector<48xf32>
    %312 = vector.multi_reduction <add>, %311, %cst_143 [1] : vector<48x32xf32> to vector<48xf32>
    %313 = vector.shape_cast %312 : vector<48xf32> to vector<48x1xf32>
    %cst_144 = arith.constant 3.200000e+01 : f32
    %314 = vector.broadcast %cst_144 : f32 to vector<48x1xf32>
    %315 = arith.divf %313, %314 : vector<48x1xf32>
    %316 = vector.broadcast %308 : vector<48x1xf32> to vector<48x32xf32>
    %317 = arith.subf %300, %316 : vector<48x32xf32>
    %cst_145 = arith.constant 9.99999974E-6 : f32
    %318 = vector.broadcast %cst_145 : f32 to vector<48x1xf32>
    %319 = arith.addf %315, %318 : vector<48x1xf32>
    %320 = math.rsqrt %319 : vector<48x1xf32>
    %321 = vector.broadcast %320 : vector<48x1xf32> to vector<48x32xf32>
    %322 = arith.mulf %317, %321 : vector<48x32xf32>
    %323 = vector.broadcast %302 : vector<1x32xf32> to vector<48x32xf32>
    %324 = arith.mulf %322, %323 : vector<48x32xf32>
    %325 = vector.broadcast %304 : vector<1x32xf32> to vector<48x32xf32>
    %326 = arith.addf %324, %325 : vector<48x32xf32>
    %327 = vector.shape_cast %326 : vector<48x32xf32> to vector<6x8x32xf32>
    %cst_146 = arith.constant dense<0xFF800000> : vector<6x32xf32>
    %328 = vector.multi_reduction <maximumf>, %327, %cst_146 [1] : vector<6x8x32xf32> to vector<6x32xf32>
    %329 = vector.shape_cast %328 : vector<6x32xf32> to vector<6x1x32xf32>
    %c0_147 = arith.constant 0 : index
    %c0_148 = arith.constant 0 : index
    %c0_149 = arith.constant 0 : index
    %330 = vector.load %arg15[%c0_147, %c0_148, %c0_149] : memref<6x1x32xf32, #tpu.memory_space<vmem>>, vector<6x1x32xf32>
    tpu.vector_store %arg15[%c0_147, %c0_148, %c0_149], %329 {strides = array<i32>} : memref<6x1x32xf32, #tpu.memory_space<vmem>>, vector<6x1x32xf32>,
    return
  }
  func.func @transform_0(%arg0: i32) -> (i32, i32, i32) {
    %c0_i32 = arith.constant 0 : i32
    %c0_i32_0 = arith.constant 0 : i32
    %c0_i32_1 = arith.constant 0 : i32
    return %arg0, %c0_i32, %c0_i32_0 : i32, i32, i32
  }
  func.func @transform_1(%arg0: i32) -> (i32, i32, i32) {
    %c0_i32 = arith.constant 0 : i32
    %c0_i32_0 = arith.constant 0 : i32
    %c0_i32_1 = arith.constant 0 : i32
    return %arg0, %c0_i32, %c0_i32_0 : i32, i32, i32
  }
  func.func @transform_2(%arg0: i32) -> (i32, i32, i32) {
    %c0_i32 = arith.constant 0 : i32
    %c0_i32_0 = arith.constant 0 : i32
    %c0_i32_1 = arith.constant 0 : i32
    %c0_i32_2 = arith.constant 0 : i32
    return %c0_i32, %c0_i32_0, %c0_i32_1 : i32, i32, i32
  }
  func.func @transform_3(%arg0: i32) -> (i32, i32, i32) {
    %c0_i32 = arith.constant 0 : i32
    %c0_i32_0 = arith.constant 0 : i32
    %c0_i32_1 = arith.constant 0 : i32
    %c0_i32_2 = arith.constant 0 : i32
    return %c0_i32, %c0_i32_0, %c0_i32_1 : i32, i32, i32
  }
  func.func @transform_4(%arg0: i32) -> (i32, i32, i32) {
    %c0_i32 = arith.constant 0 : i32
    %c0_i32_0 = arith.constant 0 : i32
    %c0_i32_1 = arith.constant 0 : i32
    %c0_i32_2 = arith.constant 0 : i32
    return %c0_i32, %c0_i32_0, %c0_i32_1 : i32, i32, i32
  }
  func.func @transform_5(%arg0: i32) -> (i32, i32, i32) {
    %c0_i32 = arith.constant 0 : i32
    %c0_i32_0 = arith.constant 0 : i32
    %c0_i32_1 = arith.constant 0 : i32
    %c0_i32_2 = arith.constant 0 : i32
    return %c0_i32, %c0_i32_0, %c0_i32_1 : i32, i32, i32
  }
  func.func @transform_6(%arg0: i32) -> (i32, i32, i32) {
    %c0_i32 = arith.constant 0 : i32
    %c0_i32_0 = arith.constant 0 : i32
    %c0_i32_1 = arith.constant 0 : i32
    %c0_i32_2 = arith.constant 0 : i32
    return %c0_i32, %c0_i32_0, %c0_i32_1 : i32, i32, i32
  }
  func.func @transform_7(%arg0: i32) -> (i32, i32, i32) {
    %c0_i32 = arith.constant 0 : i32
    %c0_i32_0 = arith.constant 0 : i32
    %c0_i32_1 = arith.constant 0 : i32
    %c0_i32_2 = arith.constant 0 : i32
    return %c0_i32, %c0_i32_0, %c0_i32_1 : i32, i32, i32
  }
  func.func @transform_8(%arg0: i32) -> (i32, i32, i32) {
    %c0_i32 = arith.constant 0 : i32
    %c0_i32_0 = arith.constant 0 : i32
    %c0_i32_1 = arith.constant 0 : i32
    %c0_i32_2 = arith.constant 0 : i32
    return %c0_i32, %c0_i32_0, %c0_i32_1 : i32, i32, i32
  }
  func.func @transform_9(%arg0: i32) -> (i32, i32, i32) {
    %c0_i32 = arith.constant 0 : i32
    %c0_i32_0 = arith.constant 0 : i32
    %c0_i32_1 = arith.constant 0 : i32
    %c0_i32_2 = arith.constant 0 : i32
    return %c0_i32, %c0_i32_0, %c0_i32_1 : i32, i32, i32
  }
  func.func @transform_10(%arg0: i32) -> (i32, i32, i32) {
    %c0_i32 = arith.constant 0 : i32
    %c0_i32_0 = arith.constant 0 : i32
    %c0_i32_1 = arith.constant 0 : i32
    %c0_i32_2 = arith.constant 0 : i32
    return %c0_i32, %c0_i32_0, %c0_i32_1 : i32, i32, i32
  }
  func.func @transform_11(%arg0: i32) -> (i32, i32, i32) {
    %c0_i32 = arith.constant 0 : i32
    %c0_i32_0 = arith.constant 0 : i32
    %c0_i32_1 = arith.constant 0 : i32
    %c0_i32_2 = arith.constant 0 : i32
    return %c0_i32, %c0_i32_0, %c0_i32_1 : i32, i32, i32
  }
  func.func @transform_12(%arg0: i32) -> (i32, i32, i32) {
    %c0_i32 = arith.constant 0 : i32
    %c0_i32_0 = arith.constant 0 : i32
    %c0_i32_1 = arith.constant 0 : i32
    %c0_i32_2 = arith.constant 0 : i32
    return %c0_i32, %c0_i32_0, %c0_i32_1 : i32, i32, i32
  }
  func.func @transform_13(%arg0: i32) -> (i32, i32, i32) {
    %c0_i32 = arith.constant 0 : i32
    %c0_i32_0 = arith.constant 0 : i32
    %c0_i32_1 = arith.constant 0 : i32
    %c0_i32_2 = arith.constant 0 : i32
    return %c0_i32, %c0_i32_0, %c0_i32_1 : i32, i32, i32
  }
  func.func @transform_14(%arg0: i32) -> (i32, i32, i32) {
    %c0_i32 = arith.constant 0 : i32
    %c0_i32_0 = arith.constant 0 : i32
    %c0_i32_1 = arith.constant 0 : i32
    return %arg0, %c0_i32, %c0_i32_0 : i32, i32, i32
  }
}

module attributes {stable_mosaic.version = 11 : i64} {
  func.func @_prm_kernel(%arg0: memref<8x32xf32, #tpu.memory_space<vmem>>, %arg1: memref<32x256xf32, #tpu.memory_space<vmem>>, %arg2: memref<1x256xf32, #tpu.memory_space<vmem>>, %arg3: memref<256x2xf32, #tpu.memory_space<vmem>>, %arg4: memref<1x2xf32, #tpu.memory_space<vmem>>, %arg5: memref<8x2xf32, #tpu.memory_space<vmem>>) attributes {dimension_semantics = [], scalar_prefetch = 0 : i64, scratch_operands = 0 : i64, tpu.core_type = #tpu.core_type<tc>} {
    %c0 = arith.constant 0 : index
    %c0_0 = arith.constant 0 : index
    %0 = vector.load %arg0[%c0, %c0_0] : memref<8x32xf32, #tpu.memory_space<vmem>>, vector<8x32xf32>
    %c0_1 = arith.constant 0 : index
    %c0_2 = arith.constant 0 : index
    %1 = vector.load %arg1[%c0_1, %c0_2] : memref<32x256xf32, #tpu.memory_space<vmem>>, vector<32x256xf32>
    %cst = arith.constant dense<0.000000e+00> : vector<8x256xf32>
    %2 = tpu.matmul %0, %1, %cst {dimension_numbers = #tpu.dot_dimension_numbers<[1], [0], [0], [1], [0, 0, 1, 1], [], []>} : vector<8x32xf32>, vector<32x256xf32>, vector<8x256xf32> -> vector<8x256xf32>
    %c0_3 = arith.constant 0 : index
    %c0_4 = arith.constant 0 : index
    %3 = vector.load %arg2[%c0_3, %c0_4] : memref<1x256xf32, #tpu.memory_space<vmem>>, vector<1x256xf32>
    %4 = vector.broadcast %3 : vector<1x256xf32> to vector<8x256xf32>
    %5 = arith.addf %2, %4 : vector<8x256xf32>
    %cst_5 = arith.constant 0.000000e+00 : f32
    %6 = vector.broadcast %cst_5 : f32 to vector<8x256xf32>
    %7 = arith.maximumf %5, %6 : vector<8x256xf32>
    %c0_6 = arith.constant 0 : index
    %c0_7 = arith.constant 0 : index
    %8 = vector.load %arg3[%c0_6, %c0_7] : memref<256x2xf32, #tpu.memory_space<vmem>>, vector<256x2xf32>
    %cst_8 = arith.constant dense<0.000000e+00> : vector<8x2xf32>
    %9 = tpu.matmul %7, %8, %cst_8 {dimension_numbers = #tpu.dot_dimension_numbers<[1], [0], [0], [1], [0, 0, 1, 1], [], []>} : vector<8x256xf32>, vector<256x2xf32>, vector<8x2xf32> -> vector<8x2xf32>
    %c0_9 = arith.constant 0 : index
    %c0_10 = arith.constant 0 : index
    %10 = vector.load %arg4[%c0_9, %c0_10] : memref<1x2xf32, #tpu.memory_space<vmem>>, vector<1x2xf32>
    %11 = vector.broadcast %10 : vector<1x2xf32> to vector<8x2xf32>
    %12 = arith.addf %9, %11 : vector<8x2xf32>
    %cst_11 = arith.constant 0.000000e+00 : f32
    %13 = vector.broadcast %cst_11 : f32 to vector<8x2xf32>
    %14 = arith.maximumf %12, %13 : vector<8x2xf32>
    %cst_12 = arith.constant dense<0xFF800000> : vector<8xf32>
    %15 = vector.multi_reduction <maximumf>, %14, %cst_12 [1] : vector<8x2xf32> to vector<8xf32>
    %16 = vector.shape_cast %15 : vector<8xf32> to vector<8x1xf32>
    %17 = vector.broadcast %16 : vector<8x1xf32> to vector<8x2xf32>
    %18 = arith.subf %14, %17 : vector<8x2xf32>
    %19 = math.exp %18 : vector<8x2xf32>
    %cst_13 = arith.constant dense<0.000000e+00> : vector<8xf32>
    %20 = vector.multi_reduction <add>, %19, %cst_13 [1] : vector<8x2xf32> to vector<8xf32>
    %21 = vector.shape_cast %20 : vector<8xf32> to vector<8x1xf32>
    %22 = math.log %21 : vector<8x1xf32>
    %23 = vector.broadcast %22 : vector<8x1xf32> to vector<8x2xf32>
    %24 = arith.subf %18, %23 : vector<8x2xf32>
    %c0_14 = arith.constant 0 : index
    %c0_15 = arith.constant 0 : index
    %25 = vector.load %arg5[%c0_14, %c0_15] : memref<8x2xf32, #tpu.memory_space<vmem>>, vector<8x2xf32>
    tpu.vector_store %arg5[%c0_14, %c0_15], %24 {strides = array<i32>} : memref<8x2xf32, #tpu.memory_space<vmem>>, vector<8x2xf32>,
    return
  }
}

module attributes {stable_mosaic.version = 11 : i64} {
  func.func @_cosine_kernel(%arg0: memref<4x32xf32, #tpu.memory_space<vmem>>, %arg1: memref<4x32xf32, #tpu.memory_space<vmem>>, %arg2: memref<4x4xf32, #tpu.memory_space<vmem>>) attributes {dimension_semantics = [], scalar_prefetch = 0 : i64, scratch_operands = 0 : i64, tpu.core_type = #tpu.core_type<tc>} {
    %c0 = arith.constant 0 : index
    %c0_0 = arith.constant 0 : index
    %0 = vector.load %arg0[%c0, %c0_0] : memref<4x32xf32, #tpu.memory_space<vmem>>, vector<4x32xf32>
    %c0_1 = arith.constant 0 : index
    %c0_2 = arith.constant 0 : index
    %1 = vector.load %arg1[%c0_1, %c0_2] : memref<4x32xf32, #tpu.memory_space<vmem>>, vector<4x32xf32>
    %2 = arith.mulf %0, %0 : vector<4x32xf32>
    %cst = arith.constant dense<0.000000e+00> : vector<4xf32>
    %3 = vector.multi_reduction <add>, %2, %cst [1] : vector<4x32xf32> to vector<4xf32>
    %4 = vector.shape_cast %3 : vector<4xf32> to vector<4x1xf32>
    %5 = math.sqrt %4 : vector<4x1xf32>
    %cst_3 = arith.constant 9.99999996E-13 : f32
    %6 = vector.broadcast %cst_3 : f32 to vector<4x1xf32>
    %7 = arith.maximumf %5, %6 : vector<4x1xf32>
    %8 = vector.broadcast %7 : vector<4x1xf32> to vector<4x32xf32>
    %9 = arith.divf %0, %8 : vector<4x32xf32>
    %10 = arith.mulf %1, %1 : vector<4x32xf32>
    %cst_4 = arith.constant dense<0.000000e+00> : vector<4xf32>
    %11 = vector.multi_reduction <add>, %10, %cst_4 [1] : vector<4x32xf32> to vector<4xf32>
    %12 = vector.shape_cast %11 : vector<4xf32> to vector<4x1xf32>
    %13 = math.sqrt %12 : vector<4x1xf32>
    %cst_5 = arith.constant 9.99999996E-13 : f32
    %14 = vector.broadcast %cst_5 : f32 to vector<4x1xf32>
    %15 = arith.maximumf %13, %14 : vector<4x1xf32>
    %16 = vector.broadcast %15 : vector<4x1xf32> to vector<4x32xf32>
    %17 = arith.divf %1, %16 : vector<4x32xf32>
    %18 = tpu.transpose %17, [1, 0] : vector<4x32xf32> -> vector<32x4xf32>
    %cst_6 = arith.constant dense<0.000000e+00> : vector<4x4xf32>
    %19 = tpu.matmul %9, %18, %cst_6 {dimension_numbers = #tpu.dot_dimension_numbers<[1], [0], [0], [1], [0, 0, 1, 1], [], []>} : vector<4x32xf32>, vector<32x4xf32>, vector<4x4xf32> -> vector<4x4xf32>
    %c0_7 = arith.constant 0 : index
    %c0_8 = arith.constant 0 : index
    %20 = vector.load %arg2[%c0_7, %c0_8] : memref<4x4xf32, #tpu.memory_space<vmem>>, vector<4x4xf32>
    tpu.vector_store %arg2[%c0_7, %c0_8], %19 {strides = array<i32>} : memref<4x4xf32, #tpu.memory_space<vmem>>, vector<4x4xf32>,
    return
  }
}

module attributes {stable_mosaic.version = 11 : i64} {
  func.func @_gram_kernel(%arg0: memref<8x32xf32, #tpu.memory_space<vmem>>, %arg1: memref<8x8xf32, #tpu.memory_space<vmem>>) attributes {dimension_semantics = [], scalar_prefetch = 0 : i64, scratch_operands = 0 : i64, tpu.core_type = #tpu.core_type<tc>} {
    %c0 = arith.constant 0 : index
    %c0_0 = arith.constant 0 : index
    %0 = vector.load %arg0[%c0, %c0_0] : memref<8x32xf32, #tpu.memory_space<vmem>>, vector<8x32xf32>
    %1 = arith.mulf %0, %0 : vector<8x32xf32>
    %cst = arith.constant dense<0.000000e+00> : vector<8xf32>
    %2 = vector.multi_reduction <add>, %1, %cst [1] : vector<8x32xf32> to vector<8xf32>
    %3 = vector.shape_cast %2 : vector<8xf32> to vector<8x1xf32>
    %4 = math.sqrt %3 : vector<8x1xf32>
    %cst_1 = arith.constant 9.99999996E-13 : f32
    %5 = vector.broadcast %cst_1 : f32 to vector<8x1xf32>
    %6 = arith.maximumf %4, %5 : vector<8x1xf32>
    %7 = vector.broadcast %6 : vector<8x1xf32> to vector<8x32xf32>
    %8 = arith.divf %0, %7 : vector<8x32xf32>
    %9 = tpu.transpose %8, [1, 0] : vector<8x32xf32> -> vector<32x8xf32>
    %cst_2 = arith.constant dense<0.000000e+00> : vector<8x8xf32>
    %10 = tpu.matmul %8, %9, %cst_2 {dimension_numbers = #tpu.dot_dimension_numbers<[1], [0], [0], [1], [0, 0, 1, 1], [], []>} : vector<8x32xf32>, vector<32x8xf32>, vector<8x8xf32> -> vector<8x8xf32>
    %c0_3 = arith.constant 0 : index
    %c0_4 = arith.constant 0 : index
    %11 = vector.load %arg1[%c0_3, %c0_4] : memref<8x8xf32, #tpu.memory_space<vmem>>, vector<8x8xf32>
    tpu.vector_store %arg1[%c0_3, %c0_4], %10 {strides = array<i32>} : memref<8x8xf32, #tpu.memory_space<vmem>>, vector<8x8xf32>,
    return
  }
}

</mosaic_0001>

<llo_original>
// kernel: core.5
$region0: #{core.5}
  #allocation0 [shape = 'u32[]', space=smem, size = 0x4, offset = 0x4, fixed_abs, tag = 'smem constant byte address 0x4 - core index']
  #allocation1 [shape = 'u32[144,128]{1,0:T(1,128)}', space=vmem, size = 0x12000, scoped, tag = 'internal scratch']
  %s0 = inlined_call_operand.vmem [shape: f32[8,32], index: 0, kind: input, shape index: {}]
  %s1 = inlined_call_operand.vmem [shape: f32[32,256], index: 1, kind: input, shape index: {}]
  %s2 = inlined_call_operand.vmem [shape: f32[1,256], index: 2, kind: input, shape index: {}]
  %s3 = inlined_call_operand.vmem [shape: f32[256,2], index: 3, kind: input, shape index: {}]
  %s4 = inlined_call_operand.vmem [shape: f32[1,2], index: 4, kind: input, shape index: {}]
  %s5 = inlined_call_operand.vmem [shape: f32[8,2], index: 5, kind: output, shape index: {}]
  %s6 = sld [smem:[#allocation0]]
  $region30: #{core.5} parent=0
    _
  %s8 = ssub.s32 1, %s6
  %s9 = scalar_select 0, %s8, %s6
  // Predicated region
  $region2: #{core.5} parent=0 // pred_check
    _
  $region3: #{core.5} parent=0 // pred_check_branch
    %11 = sbr.rel (0) target = $region5
  $region4: #{core.5} parent=0 // pred_region
    _
  $region5: #{core.5} parent=0 // pred_fallthru
    _
  // Predicated region
  $region6: #{core.5} parent=0 // pred_check
    _
  $region7: #{core.5} parent=0 // pred_check_branch
    %13 = sbr.rel (0) target = $region9
  $region8: #{core.5} parent=0 // pred_region
    _
  $region9: #{core.5} parent=0 // pred_fallthru
    _
  // Predicated region
  $region10: #{core.5} parent=0 // pred_check
    _
  $region11: #{core.5} parent=0 // pred_check_branch
    %15 = sbr.rel (0) target = $region13
  $region12: #{core.5} parent=0 // pred_region
    _
  $region13: #{core.5} parent=0 // pred_fallthru
    _
  // Predicated region
  $region14: #{core.5} parent=0 // pred_check
    _
  $region15: #{core.5} parent=0 // pred_check_branch
    %17 = sbr.rel (0) target = $region17
  $region16: #{core.5} parent=0 // pred_region
    _
  $region17: #{core.5} parent=0 // pred_fallthru
    _
  // Predicated region
  $region18: #{core.5} parent=0 // pred_check
    _
  $region19: #{core.5} parent=0 // pred_check_branch
    %19 = sbr.rel (0) target = $region21
  $region20: #{core.5} parent=0 // pred_region
    _
  $region21: #{core.5} parent=0 // pred_fallthru
    _
  %v20 = vld [vmem:[%s0] sm:$0xff]
  %v21 = vld [vmem:[%s1] sm:$0xff]
  %v22 = vld [vmem:[%s1 + $0x8] sm:$0xff]
  %v23 = vld [vmem:[%s1 + $0x10] sm:$0xff]
  %v24 = vld [vmem:[%s1 + $0x18] sm:$0xff]
  %v25 = vld [vmem:[%s1 + $0x20] sm:$0xff]
  %v26 = vld [vmem:[%s1 + $0x28] sm:$0xff]
  %v27 = vld [vmem:[%s1 + $0x30] sm:$0xff]
  %v28 = vld [vmem:[%s1 + $0x38] sm:$0xff]
  %v29 = vld [vmem:[%s2] sm:$0x3]
  %v31 = vlaneseq
  %v32 = vshrl.u32 %v31, 7
  %v33 = vsub.s32 0, %v32
  %v34 = vrot.slane %v29, %v33
  %v35 = vlaneseq
  %v36 = vshrl.u32 %v35, 7
  %v37 = vsub.s32 1, %v36
  %v38 = vrot.slane %v29, %v37
  %vm41 = vcmask 261120
  %v43 = vsel %vm41, %v20, 0
  %45 = vmatprep.subr.mxu0 0.0
  %46 = vmatpush1.msra.mxu0 0.0
  %47 = vmatprep.subr.mxu0 0.0
  %48 = vmatpush1.msra.mxu0 0.0
  %49 = vmatprep.subr.mxu0 0.0
  %50 = vmatpush1.msra.mxu0 0.0
  %51 = vmatprep.subr.mxu0 0.0
  %52 = vmatpush1.msra.mxu0 0.0
  %53 = vmatprep.subr.mxu0 0.0
  %54 = vmatpush1.msra.mxu0 0.0
  %55 = vmatprep.subr.mxu0 0.0
  %56 = vmatpush1.msra.mxu0 0.0
  %57 = vmatprep.subr.mxu0 0.0
  %58 = vmatpush1.msra.mxu0 0.0
  %59 = vmatprep.subr.mxu0 0.0
  %60 = vmatpush1.msra.mxu0 0.0
  %61 = vmatprep.subr.mxu0 0.0
  %62 = vmatpush1.msra.mxu0 0.0
  %63 = vmatprep.subr.mxu0 0.0
  %64 = vmatpush1.msra.mxu0 0.0
  %65 = vmatprep.subr.mxu0 0.0
  %66 = vmatpush1.msra.mxu0 0.0
  %67 = vmatprep.subr.mxu0 0.0
  %68 = vmatpush1.msra.mxu0 0.0
  %69 = vmatprep.subr.mxu0 %v28
  %70 = vmatpush1.msra.mxu0 %v27
  %71 = vmatprep.subr.mxu0 %v26
  %72 = vmatpush1.msra.mxu0 %v25
  %73 = vmatprep.subr.mxu0 %v24
  %74 = vmatpush1.msra.mxu0 %v23
  %75 = vmatprep.subr.mxu0 %v22
  %76 = vmatpush1.msra.mxu0 %v21
  %77 = vmatprep.subr.mxu0 0.0
  %78 = vmatpush2.msra.mxu0 0.0
  %79 = vmatprep.subr.mxu0 0.0
  %80 = vmatpush2.msra.mxu0 0.0
  %81 = vmatprep.subr.mxu0 0.0
  %82 = vmatpush2.msra.mxu0 0.0
  %83 = vmatprep.subr.mxu0 0.0
  %84 = vmatpush2.msra.mxu0 0.0
  %85 = vmatprep.subr.mxu0 0.0
  %86 = vmatpush2.msra.mxu0 0.0
  %87 = vmatprep.subr.mxu0 0.0
  %88 = vmatpush2.msra.mxu0 0.0
  %89 = vmatprep.subr.mxu0 0.0
  %90 = vmatpush2.msra.mxu0 0.0
  %91 = vmatprep.subr.mxu0 0.0
  %92 = vmatpush2.msra.mxu0 0.0
  %93 = vmatprep.subr.mxu0 0.0
  %94 = vmatpush2.msra.mxu0 0.0
  %95 = vmatprep.subr.mxu0 0.0
  %96 = vmatpush2.msra.mxu0 0.0
  %97 = vmatprep.subr.mxu0 0.0
  %98 = vmatpush2.msra.mxu0 0.0
  %99 = vmatprep.subr.mxu0 0.0
  %100 = vmatpush2.msra.mxu0 0.0
  %101 = vmatprep.subr.mxu0 0.0
  %102 = vmatpush2.msra.mxu0 0.0
  %103 = vmatprep.subr.mxu0 0.0
  %104 = vmatpush2.msra.mxu0 0.0
  %105 = vmatprep.subr.mxu0 0.0
  %106 = vmatpush2.msra.mxu0 0.0
  %107 = vmatprep.subr.mxu0 0.0
  %108 = vmatpush2.msra.mxu0 0.0
  %109 = vmatprep.mubr.f32.mxu0 0.0
  %110 = vmatmul.mubr.f32.gmra.mxu0 %v43
  %v111 = vpop.f32.mrf.mxu0
  %v112 = vadd.f32 %v34, %v111
  %v113 = vpop.f32.mrf.mxu0
  %v114 = vadd.f32 %v38, %v113
  %115 = vdwg.mxu0
  %v116 = vmax.f32 %v112, 0.0
  %v117 = vmax.f32 %v114, 0.0
  %v118 = vld [vmem:[%s3] sm:$0xff]
  %v119 = vld [vmem:[%s3 + $0x8] sm:$0xff]
  %v120 = vld [vmem:[%s3 + $0x10] sm:$0xff]
  %v121 = vld [vmem:[%s3 + $0x18] sm:$0xff]
  %v122 = vld [vmem:[%s3 + $0x20] sm:$0xff]
  %v123 = vld [vmem:[%s3 + $0x28] sm:$0xff]
  %v124 = vld [vmem:[%s3 + $0x30] sm:$0xff]
  %v125 = vld [vmem:[%s3 + $0x38] sm:$0xff]
  %v126 = vld [vmem:[%s3 + $0x40] sm:$0xff]
  %v127 = vld [vmem:[%s3 + $0x48] sm:$0xff]
  %v128 = vld [vmem:[%s3 + $0x50] sm:$0xff]
  %v129 = vld [vmem:[%s3 + $0x58] sm:$0xff]
  %v130 = vld [vmem:[%s3 + $0x60] sm:$0xff]
  %v131 = vld [vmem:[%s3 + $0x68] sm:$0xff]
  %v132 = vld [vmem:[%s3 + $0x70] sm:$0xff]
  %v133 = vld [vmem:[%s3 + $0x78] sm:$0xff]
  %v134 = vld [vmem:[%s3 + $0x80] sm:$0xff]
  %v135 = vld [vmem:[%s3 + $0x88] sm:$0xff]
  %v136 = vld [vmem:[%s3 + $0x90] sm:$0xff]
  %v137 = vld [vmem:[%s3 + $0x98] sm:$0xff]
  %v138 = vld [vmem:[%s3 + $0xa0] sm:$0xff]
  %v139 = vld [vmem:[%s3 + $0xa8] sm:$0xff]
  %v140 = vld [vmem:[%s3 + $0xb0] sm:$0xff]
  %v141 = vld [vmem:[%s3 + $0xb8] sm:$0xff]
  %v142 = vld [vmem:[%s3 + $0xc0] sm:$0xff]
  %v143 = vld [vmem:[%s3 + $0xc8] sm:$0xff]
  %v144 = vld [vmem:[%s3 + $0xd0] sm:$0xff]
  %v145 = vld [vmem:[%s3 + $0xd8] sm:$0xff]
  %v146 = vld [vmem:[%s3 + $0xe0] sm:$0xff]
  %v147 = vld [vmem:[%s3 + $0xe8] sm:$0xff]
  %v148 = vld [vmem:[%s3 + $0xf0] sm:$0xff]
  %v149 = vld [vmem:[%s3 + $0xf8] sm:$0xff]
  %v150 = vld [vmem:[%s4] sm:$0x1]
  %v152 = vlaneseq
  %v153 = vshrl.u32 %v152, 7
  %v154 = vsub.s32 0, %v153
  %v155 = vrot.slane %v150, %v154
  %157 = vmatprep.subr.mxu0 0.0
  %158 = vmatpush1.msra.mxu0 %v133
  %159 = vmatprep.subr.mxu0 0.0
  %160 = vmatpush1.msra.mxu0 %v132
  %161 = vmatprep.subr.mxu0 0.0
  %162 = vmatpush1.msra.mxu0 %v131
  %163 = vmatprep.subr.mxu0 0.0
  %164 = vmatpush1.msra.mxu0 %v130
  %165 = vmatprep.subr.mxu0 0.0
  %166 = vmatpush1.msra.mxu0 %v129
  %167 = vmatprep.subr.mxu0 0.0
  %168 = vmatpush1.msra.mxu0 %v128
  %169 = vmatprep.subr.mxu0 0.0
  %170 = vmatpush1.msra.mxu0 %v127
  %171 = vmatprep.subr.mxu0 0.0
  %172 = vmatpush1.msra.mxu0 %v126
  %173 = vmatprep.subr.mxu0 0.0
  %174 = vmatpush1.msra.mxu0 %v125
  %175 = vmatprep.subr.mxu0 0.0
  %176 = vmatpush1.msra.mxu0 %v124
  %177 = vmatprep.subr.mxu0 0.0
  %178 = vmatpush1.msra.mxu0 %v123
  %179 = vmatprep.subr.mxu0 0.0
  %180 = vmatpush1.msra.mxu0 %v122
  %181 = vmatprep.subr.mxu0 0.0
  %182 = vmatpush1.msra.mxu0 %v121
  %183 = vmatprep.subr.mxu0 0.0
  %184 = vmatpush1.msra.mxu0 %v120
  %185 = vmatprep.subr.mxu0 0.0
  %186 = vmatpush1.msra.mxu0 %v119
  %187 = vmatprep.subr.mxu0 0.0
  %188 = vmatpush1.msra.mxu0 %v118
  %189 = vmatprep.subr.mxu0 0.0
  %190 = vmatpush2.msra.mxu0 %v149
  %191 = vmatprep.subr.mxu0 0.0
  %192 = vmatpush2.msra.mxu0 %v148
  %193 = vmatprep.subr.mxu0 0.0
  %194 = vmatpush2.msra.mxu0 %v147
  %195 = vmatprep.subr.mxu0 0.0
  %196 = vmatpush2.msra.mxu0 %v146
  %197 = vmatprep.subr.mxu0 0.0
  %198 = vmatpush2.msra.mxu0 %v145
  %199 = vmatprep.subr.mxu0 0.0
  %200 = vmatpush2.msra.mxu0 %v144
  %201 = vmatprep.subr.mxu0 0.0
  %202 = vmatpush2.msra.mxu0 %v143
  %203 = vmatprep.subr.mxu0 0.0
  %204 = vmatpush2.msra.mxu0 %v142
  %205 = vmatprep.subr.mxu0 0.0
  %206 = vmatpush2.msra.mxu0 %v141
  %207 = vmatprep.subr.mxu0 0.0
  %208 = vmatpush2.msra.mxu0 %v140
  %209 = vmatprep.subr.mxu0 0.0
  %210 = vmatpush2.msra.mxu0 %v139
  %211 = vmatprep.subr.mxu0 0.0
  %212 = vmatpush2.msra.mxu0 %v138
  %213 = vmatprep.subr.mxu0 0.0
  %214 = vmatpush2.msra.mxu0 %v137
  %215 = vmatprep.subr.mxu0 0.0
  %216 = vmatpush2.msra.mxu0 %v136
  %217 = vmatprep.subr.mxu0 0.0
  %218 = vmatpush2.msra.mxu0 %v135
  %219 = vmatprep.subr.mxu0 0.0
  %220 = vmatpush2.msra.mxu0 %v134
  %221 = vmatprep.mubr.f32.mxu0 %v117
  %222 = vmatmul.mubr.f32.gmra.mxu0 %v116
  %v223 = vpop.f32.mrf.mxu0
  %v224 = vadd.f32 %v155, %v223
  %v225 = vpop.f32.mrf.mxu0
  %226 = vdwg.mxu0
  %v227 = vmax.f32 %v224, 0.0
  %vm228 = vcmask 15360
  %v229 = vsel %vm228, %v227, -inf
  %230 = vmax.xlane.f32.xlu0 %v229
  %v231 = vpop.xlane.xlu0 %230
  %v232 = vsub.f32 %v227, %v231
  %v233 = vmul.f32 %v232, 1.442695
  %v234 = vpow.pop %v233
  %v235 = vsel %vm228, %v234, 0.0
  %236 = vadd.xlane.f32.xlu0 %v235
  %v237 = vpop.xlane.xlu0 %236
  %v238 = vlog2.pop %v237
  %v239 = vmul.f32 %v238, 0.6931472
  %v240 = vsub.f32 %v232, %v239
  %241 = vst.msk [vmem:[%s5] sm:$0xff] %vm228, %v240
  // Predicated region
  $region22: #{core.5} parent=0 // pred_check
    _
  $region23: #{core.5} parent=0 // pred_check_branch
    %243 = sbr.rel (0) target = $region25
  $region24: #{core.5} parent=0 // pred_region
    _
  $region25: #{core.5} parent=0 // pred_fallthru
    _
  // Predicated region
  $region26: #{core.5} parent=0 // pred_check
    _
  $region27: #{core.5} parent=0 // pred_check_branch
    %245 = sbr.rel (0) target = $region29
  $region28: #{core.5} parent=0 // pred_region
    _
  $region29: #{core.5} parent=0 // pred_fallthru
    _

// kernel: core.7
$region0: #{core.7}
  #allocation0 [shape = 'u32[]', space=smem, size = 0x4, offset = 0x4, fixed_abs, tag = 'smem constant byte address 0x4 - core index']
  #allocation1 [shape = 'u32[144,128]{1,0:T(1,128)}', space=vmem, size = 0x12000, scoped, tag = 'internal scratch']
  %s0 = inlined_call_operand.vmem [shape: f32[4,32], index: 0, kind: input, shape index: {}]
  %s1 = inlined_call_operand.vmem [shape: f32[4,32], index: 1, kind: input, shape index: {}]
  %s2 = inlined_call_operand.vmem [shape: f32[4,4], index: 2, kind: output, shape index: {}]
  %s3 = sld [smem:[#allocation0]]
  $region18: #{core.7} parent=0
    _
  %s5 = ssub.s32 1, %s3
  %s6 = scalar_select 0, %s5, %s3
  // Predicated region
  $region2: #{core.7} parent=0 // pred_check
    _
  $region3: #{core.7} parent=0 // pred_check_branch
    %8 = sbr.rel (0) target = $region5
  $region4: #{core.7} parent=0 // pred_region
    _
  $region5: #{core.7} parent=0 // pred_fallthru
    _
  // Predicated region
  $region6: #{core.7} parent=0 // pred_check
    _
  $region7: #{core.7} parent=0 // pred_check_branch
    %10 = sbr.rel (0) target = $region9
  $region8: #{core.7} parent=0 // pred_region
    _
  $region9: #{core.7} parent=0 // pred_fallthru
    _
  %v11 = vld [vmem:[%s0] sm:$0xf]
  %v12 = vld [vmem:[%s1] sm:$0xf]
  %v13 = vmul.f32 %v11, %v11
  %vm14 = vcmask 257024
  %v15 = vsel %vm14, %v13, 0.0
  %16 = vadd.xlane.f32.xlu0 %v15
  %v17 = vpop.xlane.xlu0 %16
  %v18 = vrsqrt.pop %v17
  %v19 = vmul.f32 %v17, %v18
  %vm20 = vcmp.eq.f32.partialorder %v17, inf
  %v21 = vsel %vm20, %v17, %v19
  %vm22 = vcmp.eq.f32.partialorder %v17, 0.0
  %v23 = vand.u32 %v17, 2147483648
  %v24 = vsel %vm22, %v23, %v21
  %v25 = vmax.f32 %v24, 1e-12
  %v26 = vrcp.pop %v25
  %v27 = vmul.f32 %v11, %v26
  %v28 = vmul.f32 %v12, %v12
  %v29 = vsel %vm14, %v28, 0.0
  %30 = vadd.xlane.f32.xlu0 %v29
  %v31 = vpop.xlane.xlu0 %30
  %v32 = vrsqrt.pop %v31
  %v33 = vmul.f32 %v31, %v32
  %vm34 = vcmp.eq.f32.partialorder %v31, inf
  %v35 = vsel %vm34, %v31, %v33
  %vm36 = vcmp.eq.f32.partialorder %v31, 0.0
  %v37 = vand.u32 %v31, 2147483648
  %v38 = vsel %vm36, %v37, %v35
  %v39 = vmax.f32 %v38, 1e-12
  %v40 = vrcp.pop %v39
  %v41 = vmul.f32 %v12, %v40
  %vm42 = vcmask 261120
  %v44 = vsel %vm42, %v27, 0
  %v47 = vsel %vm42, %v41, 0
  %49 = vmatprep.subr.mxu0 0.0
  %50 = vmatpush1.xpose.msra.mxu0 0.0
  %51 = vmatprep.subr.mxu0 0.0
  %52 = vmatpush1.xpose.msra.mxu0 0.0
  %53 = vmatprep.subr.mxu0 0.0
  %54 = vmatpush1.xpose.msra.mxu0 0.0
  %55 = vmatprep.subr.mxu0 0.0
  %56 = vmatpush1.xpose.msra.mxu0 0.0
  %57 = vmatprep.subr.mxu0 0.0
  %58 = vmatpush1.xpose.msra.mxu0 0.0
  %59 = vmatprep.subr.mxu0 0.0
  %60 = vmatpush1.xpose.msra.mxu0 0.0
  %61 = vmatprep.subr.mxu0 0.0
  %62 = vmatpush1.xpose.msra.mxu0 0.0
  %63 = vmatprep.subr.mxu0 0.0
  %64 = vmatpush1.xpose.msra.mxu0 0.0
  %65 = vmatprep.subr.mxu0 0.0
  %66 = vmatpush1.xpose.msra.mxu0 0.0
  %67 = vmatprep.subr.mxu0 0.0
  %68 = vmatpush1.xpose.msra.mxu0 0.0
  %69 = vmatprep.subr.mxu0 0.0
  %70 = vmatpush1.xpose.msra.mxu0 0.0
  %71 = vmatprep.subr.mxu0 0.0
  %72 = vmatpush1.xpose.msra.mxu0 0.0
  %73 = vmatprep.subr.mxu0 0.0
  %74 = vmatpush1.xpose.msra.mxu0 0.0
  %75 = vmatprep.subr.mxu0 0.0
  %76 = vmatpush1.xpose.msra.mxu0 0.0
  %77 = vmatprep.subr.mxu0 0.0
  %78 = vmatpush1.xpose.msra.mxu0 0.0
  %79 = vmatprep.subr.mxu0 0.0
  %80 = vmatpush1.xpose.msra.mxu0 %v47
  %81 = vmatprep.subr.mxu0 0.0
  %82 = vmatpush2.xpose.msra.mxu0 0.0
  %83 = vmatprep.subr.mxu0 0.0
  %84 = vmatpush2.xpose.msra.mxu0 0.0
  %85 = vmatprep.subr.mxu0 0.0
  %86 = vmatpush2.xpose.msra.mxu0 0.0
  %87 = vmatprep.subr.mxu0 0.0
  %88 = vmatpush2.xpose.msra.mxu0 0.0
  %89 = vmatprep.subr.mxu0 0.0
  %90 = vmatpush2.xpose.msra.mxu0 0.0
  %91 = vmatprep.subr.mxu0 0.0
  %92 = vmatpush2.xpose.msra.mxu0 0.0
  %93 = vmatprep.subr.mxu0 0.0
  %94 = vmatpush2.xpose.msra.mxu0 0.0
  %95 = vmatprep.subr.mxu0 0.0
  %96 = vmatpush2.xpose.msra.mxu0 0.0
  %97 = vmatprep.subr.mxu0 0.0
  %98 = vmatpush2.xpose.msra.mxu0 0.0
  %99 = vmatprep.subr.mxu0 0.0
  %100 = vmatpush2.xpose.msra.mxu0 0.0
  %101 = vmatprep.subr.mxu0 0.0
  %102 = vmatpush2.xpose.msra.mxu0 0.0
  %103 = vmatprep.subr.mxu0 0.0
  %104 = vmatpush2.xpose.msra.mxu0 0.0
  %105 = vmatprep.subr.mxu0 0.0
  %106 = vmatpush2.xpose.msra.mxu0 0.0
  %107 = vmatprep.subr.mxu0 0.0
  %108 = vmatpush2.xpose.msra.mxu0 0.0
  %109 = vmatprep.subr.mxu0 0.0
  %110 = vmatpush2.xpose.msra.mxu0 0.0
  %111 = vmatprep.subr.mxu0 0.0
  %112 = vmatpush2.xpose.msra.mxu0 0.0
  %113 = vmatprep.mubr.f32.mxu0 0.0
  %114 = vmatmul.mubr.f32.gmra.mxu0 %v44
  %v115 = vpop.f32.mrf.mxu0
  %v116 = vadd.f32 0.0, %v115
  %v117 = vpop.f32.mrf.mxu0
  %118 = vdwg.mxu0
  %vm119 = vcmask 27648
  %120 = vst.msk [vmem:[%s2] sm:$0xf] %vm119, %v116
  // Predicated region
  $region10: #{core.7} parent=0 // pred_check
    _
  $region11: #{core.7} parent=0 // pred_check_branch
    %122 = sbr.rel (0) target = $region13
  $region12: #{core.7} parent=0 // pred_region
    _
  $region13: #{core.7} parent=0 // pred_fallthru
    _
  // Predicated region
  $region14: #{core.7} parent=0 // pred_check
    _
  $region15: #{core.7} parent=0 // pred_check_branch
    %124 = sbr.rel (0) target = $region17
  $region16: #{core.7} parent=0 // pred_region
    _
  $region17: #{core.7} parent=0 // pred_fallthru
    _

// kernel: core.6
$region0: #{core.6}
  #allocation0 [shape = 'u32[]', space=smem, size = 0x4, offset = 0x4, fixed_abs, tag = 'smem constant byte address 0x4 - core index']
  #allocation1 [shape = 'u32[144,128]{1,0:T(1,128)}', space=vmem, size = 0x12000, scoped, tag = 'internal scratch']
  %s0 = inlined_call_operand.vmem [shape: f32[8,32], index: 0, kind: input, shape index: {}]
  %s1 = inlined_call_operand.vmem [shape: f32[8,8], index: 1, kind: output, shape index: {}]
  %s2 = sld [smem:[#allocation0]]
  $region14: #{core.6} parent=0
    _
  %s4 = ssub.s32 1, %s2
  %s5 = scalar_select 0, %s4, %s2
  // Predicated region
  $region2: #{core.6} parent=0 // pred_check
    _
  $region3: #{core.6} parent=0 // pred_check_branch
    %7 = sbr.rel (0) target = $region5
  $region4: #{core.6} parent=0 // pred_region
    _
  $region5: #{core.6} parent=0 // pred_fallthru
    _
  %v8 = vld [vmem:[%s0] sm:$0xff]
  %v9 = vmul.f32 %v8, %v8
  %vm10 = vcmask 261120
  %v11 = vsel %vm10, %v9, 0.0
  %12 = vadd.xlane.f32.xlu0 %v11
  %v13 = vpop.xlane.xlu0 %12
  %v14 = vrsqrt.pop %v13
  %v15 = vmul.f32 %v13, %v14
  %vm16 = vcmp.eq.f32.partialorder %v13, inf
  %v17 = vsel %vm16, %v13, %v15
  %vm18 = vcmp.eq.f32.partialorder %v13, 0.0
  %v19 = vand.u32 %v13, 2147483648
  %v20 = vsel %vm18, %v19, %v17
  %v21 = vmax.f32 %v20, 1e-12
  %v22 = vrcp.pop %v21
  %v23 = vmul.f32 %v8, %v22
  %v25 = vsel %vm10, %v23, 0
  %27 = vmatprep.subr.mxu0 0.0
  %28 = vmatpush1.xpose.msra.mxu0 0.0
  %29 = vmatprep.subr.mxu0 0.0
  %30 = vmatpush1.xpose.msra.mxu0 0.0
  %31 = vmatprep.subr.mxu0 0.0
  %32 = vmatpush1.xpose.msra.mxu0 0.0
  %33 = vmatprep.subr.mxu0 0.0
  %34 = vmatpush1.xpose.msra.mxu0 0.0
  %35 = vmatprep.subr.mxu0 0.0
  %36 = vmatpush1.xpose.msra.mxu0 0.0
  %37 = vmatprep.subr.mxu0 0.0
  %38 = vmatpush1.xpose.msra.mxu0 0.0
  %39 = vmatprep.subr.mxu0 0.0
  %40 = vmatpush1.xpose.msra.mxu0 0.0
  %41 = vmatprep.subr.mxu0 0.0
  %42 = vmatpush1.xpose.msra.mxu0 0.0
  %43 = vmatprep.subr.mxu0 0.0
  %44 = vmatpush1.xpose.msra.mxu0 0.0
  %45 = vmatprep.subr.mxu0 0.0
  %46 = vmatpush1.xpose.msra.mxu0 0.0
  %47 = vmatprep.subr.mxu0 0.0
  %48 = vmatpush1.xpose.msra.mxu0 0.0
  %49 = vmatprep.subr.mxu0 0.0
  %50 = vmatpush1.xpose.msra.mxu0 0.0
  %51 = vmatprep.subr.mxu0 0.0
  %52 = vmatpush1.xpose.msra.mxu0 0.0
  %53 = vmatprep.subr.mxu0 0.0
  %54 = vmatpush1.xpose.msra.mxu0 0.0
  %55 = vmatprep.subr.mxu0 0.0
  %56 = vmatpush1.xpose.msra.mxu0 0.0
  %57 = vmatprep.subr.mxu0 0.0
  %58 = vmatpush1.xpose.msra.mxu0 %v25
  %59 = vmatprep.subr.mxu0 0.0
  %60 = vmatpush2.xpose.msra.mxu0 0.0
  %61 = vmatprep.subr.mxu0 0.0
  %62 = vmatpush2.xpose.msra.mxu0 0.0
  %63 = vmatprep.subr.mxu0 0.0
  %64 = vmatpush2.xpose.msra.mxu0 0.0
  %65 = vmatprep.subr.mxu0 0.0
  %66 = vmatpush2.xpose.msra.mxu0 0.0
  %67 = vmatprep.subr.mxu0 0.0
  %68 = vmatpush2.xpose.msra.mxu0 0.0
  %69 = vmatprep.subr.mxu0 0.0
  %70 = vmatpush2.xpose.msra.mxu0 0.0
  %71 = vmatprep.subr.mxu0 0.0
  %72 = vmatpush2.xpose.msra.mxu0 0.0
  %73 = vmatprep.subr.mxu0 0.0
  %74 = vmatpush2.xpose.msra.mxu0 0.0
  %75 = vmatprep.subr.mxu0 0.0
  %76 = vmatpush2.xpose.msra.mxu0 0.0
  %77 = vmatprep.subr.mxu0 0.0
  %78 = vmatpush2.xpose.msra.mxu0 0.0
  %79 = vmatprep.subr.mxu0 0.0
  %80 = vmatpush2.xpose.msra.mxu0 0.0
  %81 = vmatprep.subr.mxu0 0.0
  %82 = vmatpush2.xpose.msra.mxu0 0.0
  %83 = vmatprep.subr.mxu0 0.0
  %84 = vmatpush2.xpose.msra.mxu0 0.0
  %85 = vmatprep.subr.mxu0 0.0
  %86 = vmatpush2.xpose.msra.mxu0 0.0
  %87 = vmatprep.subr.mxu0 0.0
  %88 = vmatpush2.xpose.msra.mxu0 0.0
  %89 = vmatprep.subr.mxu0 0.0
  %90 = vmatpush2.xpose.msra.mxu0 0.0
  %91 = vmatprep.mubr.f32.mxu0 0.0
  %92 = vmatmul.mubr.f32.gmra.mxu0 %v25
  %v93 = vpop.f32.mrf.mxu0
  %v94 = vadd.f32 0.0, %v93
  %v95 = vpop.f32.mrf.mxu0
  %96 = vdwg.mxu0
  %vm97 = vcmask 64512
  %98 = vst.msk [vmem:[%s1] sm:$0xff] %vm97, %v94
  // Predicated region
  $region6: #{core.6} parent=0 // pred_check
    _
  $region7: #{core.6} parent=0 // pred_check_branch
    %100 = sbr.rel (0) target = $region9
  $region8: #{core.6} parent=0 // pred_region
    _
  $region9: #{core.6} parent=0 // pred_fallthru
    _
  // Predicated region
  $region10: #{core.6} parent=0 // pred_check
    _
  $region11: #{core.6} parent=0 // pred_check_branch
    %102 = sbr.rel (0) target = $region13
  $region12: #{core.6} parent=0 // pred_region
    _
  $region13: #{core.6} parent=0 // pred_fallthru
    _

// kernel: core.4
$region0: #{core.4}
  #allocation0 [shape = 'u32[]', space=smem, size = 0x4, offset = 0x4, fixed_abs, tag = 'smem constant byte address 0x4 - core index']
  #allocation1 [shape = 'u32[144,128]{1,0:T(1,128)}', space=vmem, size = 0x12000, scoped, tag = 'internal scratch']
  %s0 = inlined_call_operand.vmem [shape: f32[12,8,32], index: 0, kind: input, shape index: {}]
  %s1 = inlined_call_operand.vmem [shape: f32[12,8,32], index: 1, kind: input, shape index: {}]
  %s2 = inlined_call_operand.vmem [shape: f32[2,32,96], index: 2, kind: input, shape index: {}]
  %s3 = inlined_call_operand.vmem [shape: f32[2,1,96], index: 3, kind: input, shape index: {}]
  %s4 = inlined_call_operand.vmem [shape: f32[2,32,32], index: 4, kind: input, shape index: {}]
  %s5 = inlined_call_operand.vmem [shape: f32[2,1,32], index: 5, kind: input, shape index: {}]
  %s6 = inlined_call_operand.vmem [shape: f32[2,32,64], index: 6, kind: input, shape index: {}]
  %s7 = inlined_call_operand.vmem [shape: f32[2,1,64], index: 7, kind: input, shape index: {}]
  %s8 = inlined_call_operand.vmem [shape: f32[2,64,32], index: 8, kind: input, shape index: {}]
  %s9 = inlined_call_operand.vmem [shape: f32[2,1,32], index: 9, kind: input, shape index: {}]
  %s10 = inlined_call_operand.vmem [shape: f32[2,1,32], index: 10, kind: input, shape index: {}]
  %s11 = inlined_call_operand.vmem [shape: f32[2,1,32], index: 11, kind: input, shape index: {}]
  %s12 = inlined_call_operand.vmem [shape: f32[2,1,32], index: 12, kind: input, shape index: {}]
  %s13 = inlined_call_operand.vmem [shape: f32[2,1,32], index: 13, kind: input, shape index: {}]
  %s14 = inlined_call_operand.vmem [shape: f32[12,1,32], index: 14, kind: output, shape index: {}]
  %s15 = sld [smem:[#allocation0]]
  $region89: #{core.4} parent=0
    _
  %s17 = ssub.s32 1, %s15
  %s18 = scalar_select 0, %s17, %s15
  loop: start=0, step=1, limit=4
  $region2: #{core.4} parent=0 // loop_pre_header
    _
  $region3: #{core.4} parent=0 // loop_header
    %s20 = sphi 0, %s24
    %p21 = scmp.ge.s32.totalorder %s20, 4
    %s30 = sphi 0, %s32
    %s33 = sphi 0, %s30
    %s34 = sphi 0, %s33
    %s50 = sphi 0, %s34
    %s56 = sphi 0, %s58
    %s59 = sphi 0, %s56
    %s60 = sphi 0, %s59
    %s76 = sphi 0, %s60
    %s80 = sphi 0, %s80
    %s82 = sphi 0, %s80
    %s83 = sphi 0, %s82
    %s97 = sphi 0, %s83
    %s101 = sphi 0, %s101
    %s103 = sphi 0, %s101
    %s104 = sphi 0, %s103
    %s118 = sphi 0, %s104
    %s122 = sphi 0, %s122
    %s124 = sphi 0, %s122
    %s125 = sphi 0, %s124
    %s139 = sphi 0, %s125
    %s143 = sphi 0, %s143
    %s145 = sphi 0, %s143
    %s146 = sphi 0, %s145
    %s160 = sphi 0, %s146
    %s164 = sphi 0, %s164
    %s166 = sphi 0, %s164
    %s167 = sphi 0, %s166
    %s181 = sphi 0, %s167
    %s185 = sphi 0, %s185
    %s187 = sphi 0, %s185
    %s188 = sphi 0, %s187
    %s202 = sphi 0, %s188
    %s206 = sphi 0, %s206
    %s208 = sphi 0, %s206
    %s209 = sphi 0, %s208
    %s223 = sphi 0, %s209
    %s227 = sphi 0, %s227
    %s229 = sphi 0, %s227
    %s230 = sphi 0, %s229
    %s244 = sphi 0, %s230
    %s248 = sphi 0, %s248
    %s250 = sphi 0, %s248
    %s251 = sphi 0, %s250
    %s265 = sphi 0, %s251
    %s269 = sphi 0, %s269
    %s271 = sphi 0, %s269
    %s272 = sphi 0, %s271
    %s286 = sphi 0, %s272
    %s290 = sphi 0, %s290
    %s292 = sphi 0, %s290
    %s293 = sphi 0, %s292
    %s307 = sphi 0, %s293
    %s311 = sphi 0, %s311
    %s313 = sphi 0, %s311
    %s314 = sphi 0, %s313
    %s328 = sphi 0, %s314
    %s334 = sphi 0, %s336
    %s337 = sphi 0, %s334
    %s338 = sphi 0, %s337
    %s354 = sphi 0, %s338
  $region4: #{core.4} parent=0 // loop_header_branch
    %23 = sbr.rel (%p21) target = $region8
  $region5: #{core.4} parent=0 // loop_body
    %s25 = ssub.s32 %s20, 1
    %s26 = ssub.s32 %s20, 2
    %s27 = sadd.s32 %s20, 1
    %s28 = ssub.s32 %s20, %s27
    %p29 = scmp.eq.s32.totalorder %s28, 0
    %s31 = sadd.s32 %s30, 1
    %s32 = scalar_select %p29, %s30, %s31
    %p35 = pneg %p29
    %p36 = scmp.eq.s32.totalorder %s20, 1
    %p37 = por %p35, %p36
    %p38 = scmp.ne.s32.totalorder %s30, %s33
    %p39 = scmp.eq.s32.totalorder %s20, 0
    %p40 = por %p38, %p39
    %p41 = scmp.ne.s32.totalorder %s30, %s33
    %p42 = scmp.eq.s32.totalorder %s25, 1
    %p43 = por %p41, %p42
    %p44 = scmp.ne.s32.totalorder %s33, %s34
    %p45 = scmp.eq.s32.totalorder %s25, 0
    %p46 = por %p44, %p45
    %p47 = scmp.ne.s32.totalorder %s33, %s34
    %p48 = scmp.eq.s32.totalorder %s26, 1
    %p49 = por %p47, %p48
    %p51 = scmp.ne.s32.totalorder %s34, %s50
    %p52 = scmp.eq.s32.totalorder %s26, 0
    %p53 = por %p51, %p52
    %s54 = ssub.s32 %s20, %s27
    %p55 = scmp.eq.s32.totalorder %s54, 0
    %s57 = sadd.s32 %s56, 1
    %s58 = scalar_select %p55, %s56, %s57
    %p61 = pneg %p55
    %p62 = scmp.eq.s32.totalorder %s20, 1
    %p63 = por %p61, %p62
    %p64 = scmp.ne.s32.totalorder %s56, %s59
    %p65 = scmp.eq.s32.totalorder %s20, 0
    %p66 = por %p64, %p65
    %p67 = scmp.ne.s32.totalorder %s56, %s59
    %p68 = scmp.eq.s32.totalorder %s25, 1
    %p69 = por %p67, %p68
    %p70 = scmp.ne.s32.totalorder %s59, %s60
    %p71 = scmp.eq.s32.totalorder %s25, 0
    %p72 = por %p70, %p71
    %p73 = scmp.ne.s32.totalorder %s59, %s60
    %p74 = scmp.eq.s32.totalorder %s26, 1
    %p75 = por %p73, %p74
    %p77 = scmp.ne.s32.totalorder %s60, %s76
    %p78 = scmp.eq.s32.totalorder %s26, 0
    %p79 = por %p77, %p78
    %s81 = sadd.s32 %s80, 1
    %p84 = scmp.eq.s32.totalorder %s20, 1
    %p85 = scmp.ne.s32.totalorder %s80, %s82
    %p86 = scmp.eq.s32.totalorder %s20, 0
    %p87 = por %p85, %p86
    %p88 = scmp.ne.s32.totalorder %s80, %s82
    %p89 = scmp.eq.s32.totalorder %s25, 1
    %p90 = por %p88, %p89
    %p91 = scmp.ne.s32.totalorder %s82, %s83
    %p92 = scmp.eq.s32.totalorder %s25, 0
    %p93 = por %p91, %p92
    %p94 = scmp.ne.s32.totalorder %s82, %s83
    %p95 = scmp.eq.s32.totalorder %s26, 1
    %p96 = por %p94, %p95
    %p98 = scmp.ne.s32.totalorder %s83, %s97
    %p99 = scmp.eq.s32.totalorder %s26, 0
    %p100 = por %p98, %p99
    %s102 = sadd.s32 %s101, 1
    %p105 = scmp.eq.s32.totalorder %s20, 1
    %p106 = scmp.ne.s32.totalorder %s101, %s103
    %p107 = scmp.eq.s32.totalorder %s20, 0
    %p108 = por %p106, %p107
    %p109 = scmp.ne.s32.totalorder %s101, %s103
    %p110 = scmp.eq.s32.totalorder %s25, 1
    %p111 = por %p109, %p110
    %p112 = scmp.ne.s32.totalorder %s103, %s104
    %p113 = scmp.eq.s32.totalorder %s25, 0
    %p114 = por %p112, %p113
    %p115 = scmp.ne.s32.totalorder %s103, %s104
    %p116 = scmp.eq.s32.totalorder %s26, 1
    %p117 = por %p115, %p116
    %p119 = scmp.ne.s32.totalorder %s104, %s118
    %p120 = scmp.eq.s32.totalorder %s26, 0
    %p121 = por %p119, %p120
    %s123 = sadd.s32 %s122, 1
    %p126 = scmp.eq.s32.totalorder %s20, 1
    %p127 = scmp.ne.s32.totalorder %s122, %s124
    %p128 = scmp.eq.s32.totalorder %s20, 0
    %p129 = por %p127, %p128
    %p130 = scmp.ne.s32.totalorder %s122, %s124
    %p131 = scmp.eq.s32.totalorder %s25, 1
    %p132 = por %p130, %p131
    %p133 = scmp.ne.s32.totalorder %s124, %s125
    %p134 = scmp.eq.s32.totalorder %s25, 0
    %p135 = por %p133, %p134
    %p136 = scmp.ne.s32.totalorder %s124, %s125
    %p137 = scmp.eq.s32.totalorder %s26, 1
    %p138 = por %p136, %p137
    %p140 = scmp.ne.s32.totalorder %s125, %s139
    %p141 = scmp.eq.s32.totalorder %s26, 0
    %p142 = por %p140, %p141
    %s144 = sadd.s32 %s143, 1
    %p147 = scmp.eq.s32.totalorder %s20, 1
    %p148 = scmp.ne.s32.totalorder %s143, %s145
    %p149 = scmp.eq.s32.totalorder %s20, 0
    %p150 = por %p148, %p149
    %p151 = scmp.ne.s32.totalorder %s143, %s145
    %p152 = scmp.eq.s32.totalorder %s25, 1
    %p153 = por %p151, %p152
    %p154 = scmp.ne.s32.totalorder %s145, %s146
    %p155 = scmp.eq.s32.totalorder %s25, 0
    %p156 = por %p154, %p155
    %p157 = scmp.ne.s32.totalorder %s145, %s146
    %p158 = scmp.eq.s32.totalorder %s26, 1
    %p159 = por %p157, %p158
    %p161 = scmp.ne.s32.totalorder %s146, %s160
    %p162 = scmp.eq.s32.totalorder %s26, 0
    %p163 = por %p161, %p162
    %s165 = sadd.s32 %s164, 1
    %p168 = scmp.eq.s32.totalorder %s20, 1
    %p169 = scmp.ne.s32.totalorder %s164, %s166
    %p170 = scmp.eq.s32.totalorder %s20, 0
    %p171 = por %p169, %p170
    %p172 = scmp.ne.s32.totalorder %s164, %s166
    %p173 = scmp.eq.s32.totalorder %s25, 1
    %p174 = por %p172, %p173
    %p175 = scmp.ne.s32.totalorder %s166, %s167
    %p176 = scmp.eq.s32.totalorder %s25, 0
    %p177 = por %p175, %p176
    %p178 = scmp.ne.s32.totalorder %s166, %s167
    %p179 = scmp.eq.s32.totalorder %s26, 1
    %p180 = por %p178, %p179
    %p182 = scmp.ne.s32.totalorder %s167, %s181
    %p183 = scmp.eq.s32.totalorder %s26, 0
    %p184 = por %p182, %p183
    %s186 = sadd.s32 %s185, 1
    %p189 = scmp.eq.s32.totalorder %s20, 1
    %p190 = scmp.ne.s32.totalorder %s185, %s187
    %p191 = scmp.eq.s32.totalorder %s20, 0
    %p192 = por %p190, %p191
    %p193 = scmp.ne.s32.totalorder %s185, %s187
    %p194 = scmp.eq.s32.totalorder %s25, 1
    %p195 = por %p193, %p194
    %p196 = scmp.ne.s32.totalorder %s187, %s188
    %p197 = scmp.eq.s32.totalorder %s25, 0
    %p198 = por %p196, %p197
    %p199 = scmp.ne.s32.totalorder %s187, %s188
    %p200 = scmp.eq.s32.totalorder %s26, 1
    %p201 = por %p199, %p200
    %p203 = scmp.ne.s32.totalorder %s188, %s202
    %p204 = scmp.eq.s32.totalorder %s26, 0
    %p205 = por %p203, %p204
    %s207 = sadd.s32 %s206, 1
    %p210 = scmp.eq.s32.totalorder %s20, 1
    %p211 = scmp.ne.s32.totalorder %s206, %s208
    %p212 = scmp.eq.s32.totalorder %s20, 0
    %p213 = por %p211, %p212
    %p214 = scmp.ne.s32.totalorder %s206, %s208
    %p215 = scmp.eq.s32.totalorder %s25, 1
    %p216 = por %p214, %p215
    %p217 = scmp.ne.s32.totalorder %s208, %s209
    %p218 = scmp.eq.s32.totalorder %s25, 0
    %p219 = por %p217, %p218
    %p220 = scmp.ne.s32.totalorder %s208, %s209
    %p221 = scmp.eq.s32.totalorder %s26, 1
    %p222 = por %p220, %p221
    %p224 = scmp.ne.s32.totalorder %s209, %s223
    %p225 = scmp.eq.s32.totalorder %s26, 0
    %p226 = por %p224, %p225
    %s228 = sadd.s32 %s227, 1
    %p231 = scmp.eq.s32.totalorder %s20, 1
    %p232 = scmp.ne.s32.totalorder %s227, %s229
    %p233 = scmp.eq.s32.totalorder %s20, 0
    %p234 = por %p232, %p233
    %p235 = scmp.ne.s32.totalorder %s227, %s229
    %p236 = scmp.eq.s32.totalorder %s25, 1
    %p237 = por %p235, %p236
    %p238 = scmp.ne.s32.totalorder %s229, %s230
    %p239 = scmp.eq.s32.totalorder %s25, 0
    %p240 = por %p238, %p239
    %p241 = scmp.ne.s32.totalorder %s229, %s230
    %p242 = scmp.eq.s32.totalorder %s26, 1
    %p243 = por %p241, %p242
    %p245 = scmp.ne.s32.totalorder %s230, %s244
    %p246 = scmp.eq.s32.totalorder %s26, 0
    %p247 = por %p245, %p246
    %s249 = sadd.s32 %s248, 1
    %p252 = scmp.eq.s32.totalorder %s20, 1
    %p253 = scmp.ne.s32.totalorder %s248, %s250
    %p254 = scmp.eq.s32.totalorder %s20, 0
    %p255 = por %p253, %p254
    %p256 = scmp.ne.s32.totalorder %s248, %s250
    %p257 = scmp.eq.s32.totalorder %s25, 1
    %p258 = por %p256, %p257
    %p259 = scmp.ne.s32.totalorder %s250, %s251
    %p260 = scmp.eq.s32.totalorder %s25, 0
    %p261 = por %p259, %p260
    %p262 = scmp.ne.s32.totalorder %s250, %s251
    %p263 = scmp.eq.s32.totalorder %s26, 1
    %p264 = por %p262, %p263
    %p266 = scmp.ne.s32.totalorder %s251, %s265
    %p267 = scmp.eq.s32.totalorder %s26, 0
    %p268 = por %p266, %p267
    %s270 = sadd.s32 %s269, 1
    %p273 = scmp.eq.s32.totalorder %s20, 1
    %p274 = scmp.ne.s32.totalorder %s269, %s271
    %p275 = scmp.eq.s32.totalorder %s20, 0
    %p276 = por %p274, %p275
    %p277 = scmp.ne.s32.totalorder %s269, %s271
    %p278 = scmp.eq.s32.totalorder %s25, 1
    %p279 = por %p277, %p278
    %p280 = scmp.ne.s32.totalorder %s271, %s272
    %p281 = scmp.eq.s32.totalorder %s25, 0
    %p282 = por %p280, %p281
    %p283 = scmp.ne.s32.totalorder %s271, %s272
    %p284 = scmp.eq.s32.totalorder %s26, 1
    %p285 = por %p283, %p284
    %p287 = scmp.ne.s32.totalorder %s272, %s286
    %p288 = scmp.eq.s32.totalorder %s26, 0
    %p289 = por %p287, %p288
    %s291 = sadd.s32 %s290, 1
    %p294 = scmp.eq.s32.totalorder %s20, 1
    %p295 = scmp.ne.s32.totalorder %s290, %s292
    %p296 = scmp.eq.s32.totalorder %s20, 0
    %p297 = por %p295, %p296
    %p298 = scmp.ne.s32.totalorder %s290, %s292
    %p299 = scmp.eq.s32.totalorder %s25, 1
    %p300 = por %p298, %p299
    %p301 = scmp.ne.s32.totalorder %s292, %s293
    %p302 = scmp.eq.s32.totalorder %s25, 0
    %p303 = por %p301, %p302
    %p304 = scmp.ne.s32.totalorder %s292, %s293
    %p305 = scmp.eq.s32.totalorder %s26, 1
    %p306 = por %p304, %p305
    %p308 = scmp.ne.s32.totalorder %s293, %s307
    %p309 = scmp.eq.s32.totalorder %s26, 0
    %p310 = por %p308, %p309
    %s312 = sadd.s32 %s311, 1
    %p315 = scmp.eq.s32.totalorder %s20, 1
    %p316 = scmp.ne.s32.totalorder %s311, %s313
    %p317 = scmp.eq.s32.totalorder %s20, 0
    %p318 = por %p316, %p317
    %p319 = scmp.ne.s32.totalorder %s311, %s313
    %p320 = scmp.eq.s32.totalorder %s25, 1
    %p321 = por %p319, %p320
    %p322 = scmp.ne.s32.totalorder %s313, %s314
    %p323 = scmp.eq.s32.totalorder %s25, 0
    %p324 = por %p322, %p323
    %p325 = scmp.ne.s32.totalorder %s313, %s314
    %p326 = scmp.eq.s32.totalorder %s26, 1
    %p327 = por %p325, %p326
    %p329 = scmp.ne.s32.totalorder %s314, %s328
    %p330 = scmp.eq.s32.totalorder %s26, 0
    %p331 = por %p329, %p330
    %s332 = ssub.s32 %s20, %s27
    %p333 = scmp.eq.s32.totalorder %s332, 0
    %s335 = sadd.s32 %s334, 1
    %s336 = scalar_select %p333, %s334, %s335
    %p339 = pneg %p333
    %p340 = scmp.eq.s32.totalorder %s20, 1
    %p341 = por %p339, %p340
    %p342 = scmp.ne.s32.totalorder %s334, %s337
    %p343 = scmp.eq.s32.totalorder %s20, 0
    %p344 = por %p342, %p343
    %p345 = scmp.ne.s32.totalorder %s334, %s337
    %p346 = scmp.eq.s32.totalorder %s25, 1
    %p347 = por %p345, %p346
    %p348 = scmp.ne.s32.totalorder %s337, %s338
    %p349 = scmp.eq.s32.totalorder %s25, 0
    %p350 = por %p348, %p349
    %p351 = scmp.ne.s32.totalorder %s337, %s338
    %p352 = scmp.eq.s32.totalorder %s26, 1
    %p353 = por %p351, %p352
    %p355 = scmp.ne.s32.totalorder %s338, %s354
    %p356 = scmp.eq.s32.totalorder %s26, 0
    %p357 = por %p355, %p356
    %p358 = scmp.le.s32.totalorder 1, %s20
    %p359 = scmp.lt.s32.totalorder %s20, 3
    %p360 = pnand %p358, %p359
    %p361 = pneg %p360
    // Predicated region
    $region9: #{core.4} parent=5 // pred_check
      _
    $region10: #{core.4} parent=5 // pred_check_branch
      %363 = sbr.rel (%p360) target = $region12
    $region11: #{core.4} parent=5 // pred_region
      %s364 = ssub.s32 %s20, 1
      // Predicated region
      $region13: #{core.4} parent=11 // pred_check
        %p365 = pneg %p93
      $region14: #{core.4} parent=11 // pred_check_branch
        %367 = sbr.rel (%p365) target = $region16
      $region15: #{core.4} parent=11 // pred_region
        _
      $region16: #{core.4} parent=11 // pred_fallthru
        _
      // Predicated region
      $region17: #{core.4} parent=11 // pred_check
        %p368 = pneg %p114
      $region18: #{core.4} parent=11 // pred_check_branch
        %370 = sbr.rel (%p368) target = $region20
      $region19: #{core.4} parent=11 // pred_region
        _
      $region20: #{core.4} parent=11 // pred_fallthru
        _
      // Predicated region
      $region21: #{core.4} parent=11 // pred_check
        %p371 = pneg %p135
      $region22: #{core.4} parent=11 // pred_check_branch
        %373 = sbr.rel (%p371) target = $region24
      $region23: #{core.4} parent=11 // pred_region
        _
      $region24: #{core.4} parent=11 // pred_fallthru
        _
      // Predicated region
      $region25: #{core.4} parent=11 // pred_check
        %p374 = pneg %p156
      $region26: #{core.4} parent=11 // pred_check_branch
        %376 = sbr.rel (%p374) target = $region28
      $region27: #{core.4} parent=11 // pred_region
        _
      $region28: #{core.4} parent=11 // pred_fallthru
        _
      // Predicated region
      $region29: #{core.4} parent=11 // pred_check
        %p377 = pneg %p177
      $region30: #{core.4} parent=11 // pred_check_branch
        %379 = sbr.rel (%p377) target = $region32
      $region31: #{core.4} parent=11 // pred_region
        _
      $region32: #{core.4} parent=11 // pred_fallthru
        _
      // Predicated region
      $region33: #{core.4} parent=11 // pred_check
        %p380 = pneg %p198
      $region34: #{core.4} parent=11 // pred_check_branch
        %382 = sbr.rel (%p380) target = $region36
      $region35: #{core.4} parent=11 // pred_region
        _
      $region36: #{core.4} parent=11 // pred_fallthru
        _
      // Predicated region
      $region37: #{core.4} parent=11 // pred_check
        %p383 = pneg %p219
      $region38: #{core.4} parent=11 // pred_check_branch
        %385 = sbr.rel (%p383) target = $region40
      $region39: #{core.4} parent=11 // pred_region
        _
      $region40: #{core.4} parent=11 // pred_fallthru
        _
      // Predicated region
      $region41: #{core.4} parent=11 // pred_check
        %p386 = pneg %p240
      $region42: #{core.4} parent=11 // pred_check_branch
        %388 = sbr.rel (%p386) target = $region44
      $region43: #{core.4} parent=11 // pred_region
        _
      $region44: #{core.4} parent=11 // pred_fallthru
        _
      // Predicated region
      $region45: #{core.4} parent=11 // pred_check
        %p389 = pneg %p261
      $region46: #{core.4} parent=11 // pred_check_branch
        %391 = sbr.rel (%p389) target = $region48
      $region47: #{core.4} parent=11 // pred_region
        _
      $region48: #{core.4} parent=11 // pred_fallthru
        _
      // Predicated region
      $region49: #{core.4} parent=11 // pred_check
        %p392 = pneg %p282
      $region50: #{core.4} parent=11 // pred_check_branch
        %394 = sbr.rel (%p392) target = $region52
      $region51: #{core.4} parent=11 // pred_region
        _
      $region52: #{core.4} parent=11 // pred_fallthru
        _
      // Predicated region
      $region53: #{core.4} parent=11 // pred_check
        %p395 = pneg %p303
      $region54: #{core.4} parent=11 // pred_check_branch
        %397 = sbr.rel (%p395) target = $region56
      $region55: #{core.4} parent=11 // pred_region
        _
      $region56: #{core.4} parent=11 // pred_fallthru
        _
      // Predicated region
      $region57: #{core.4} parent=11 // pred_check
        %p398 = pneg %p324
      $region58: #{core.4} parent=11 // pred_check_branch
        %400 = sbr.rel (%p398) target = $region60
      $region59: #{core.4} parent=11 // pred_region
        _
      $region60: #{core.4} parent=11 // pred_fallthru
        _
    $region12: #{core.4} parent=5 // pred_fallthru
      _
    %p401 = scmp.lt.s32.totalorder %s20, 2
    // Predicated region
    $region61: #{core.4} parent=5 // pred_check
      %p402 = pneg %p401
    $region62: #{core.4} parent=5 // pred_check_branch
      %404 = sbr.rel (%p402) target = $region64
    $region63: #{core.4} parent=5 // pred_region
      // Predicated region
      $region65: #{core.4} parent=63 // pred_check
        %p405 = pneg %p40
      $region66: #{core.4} parent=63 // pred_check_branch
        %407 = sbr.rel (%p405) target = $region68
      $region67: #{core.4} parent=63 // pred_region
        %s408 = smul.u32 6, %s20
        %p409 = scmp.lt.s32.totalorder %s408, 11
        %s410 = scalar_select %p409, %s408, 11
        %s411 = smul.addr %s410, 8
        %s412 = scalar_lea.vmem %s0, %s411
        %s413 = smul.u32 6, %s20
      $region68: #{core.4} parent=63 // pred_fallthru
        _
      // Predicated region
      $region69: #{core.4} parent=63 // pred_check
        %p414 = pneg %p66
      $region70: #{core.4} parent=63 // pred_check_branch
        %416 = sbr.rel (%p414) target = $region72
      $region71: #{core.4} parent=63 // pred_region
        %s417 = smul.u32 6, %s20
        %p418 = scmp.lt.s32.totalorder %s417, 11
        %s419 = scalar_select %p418, %s417, 11
        %s420 = smul.addr %s419, 8
        %s421 = scalar_lea.vmem %s1, %s420
        %s422 = smul.u32 6, %s20
      $region72: #{core.4} parent=63 // pred_fallthru
        _
    $region64: #{core.4} parent=5 // pred_fallthru
      _
    %p423 = scmp.le.s32.totalorder 1, %s20
    %p424 = scmp.lt.s32.totalorder %s20, 3
    %p425 = pnand %p423, %p424
    %p426 = pneg %p425
    // Predicated region
    $region73: #{core.4} parent=5 // pred_check
      _
    $region74: #{core.4} parent=5 // pred_check_branch
      %428 = sbr.rel (%p425) target = $region76
    $region75: #{core.4} parent=5 // pred_region
      %s429 = ssub.s32 %s20, 1
      %s430 = smul.u32 6, %s25
      %p431 = scmp.lt.s32.totalorder %s430, 11
      %s432 = scalar_select %p431, %s430, 11
      %s433 = smul.addr %s432, 8
      %s434 = scalar_lea.vmem %s0, %s433
      %p435 = pneg %p46
      %p436 = pneg %p43
      %s437 = smul.u32 6, %s25
      %p438 = scmp.lt.s32.totalorder %s437, 11
      %s439 = scalar_select %p438, %s437, 11
      %s440 = smul.addr %s439, 8
      %s441 = scalar_lea.vmem %s1, %s440
      %p442 = pneg %p72
      %p443 = pneg %p69
      %p444 = pneg %p93
      %p445 = pneg %p90
      %p446 = pneg %p114
      %p447 = pneg %p111
      %p448 = pneg %p135
      %p449 = pneg %p132
      %p450 = pneg %p156
      %p451 = pneg %p153
      %p452 = pneg %p177
      %p453 = pneg %p174
      %p454 = pneg %p198
      %p455 = pneg %p195
      %p456 = pneg %p219
      %p457 = pneg %p216
      %p458 = pneg %p240
      %p459 = pneg %p237
      %p460 = pneg %p261
      %p461 = pneg %p258
      %p462 = pneg %p282
      %p463 = pneg %p279
      %p464 = pneg %p303
      %p465 = pneg %p300
      %p466 = pneg %p324
      %p467 = pneg %p321
      %p468 = pneg %p350
      %p469 = pneg %p347
      %s470 = smul.u32 6, %s25
      %p471 = scmp.lt.s32.totalorder %s470, 11
      %s472 = scalar_select %p471, %s470, 11
      %s473 = scalar_lea.vmem %s14, %s472
      %s474 = smul.u32 6, %s25
      %p475 = scmp.lt.s32.totalorder %s474, 11
      %s476 = scalar_select %p475, %s474, 11
      %s477 = smul.addr %s476, 8
      %s478 = scalar_lea.vmem %s0, %s477
      %s479 = smul.u32 6, %s25
      %s480 = smul.u32 6, %s25
      %p481 = scmp.lt.s32.totalorder %s480, 11
      %s482 = scalar_select %p481, %s480, 11
      %s483 = smul.addr %s482, 8
      %s484 = scalar_lea.vmem %s1, %s483
      %s485 = smul.u32 6, %s25
      %s486 = smul.u32 6, %s25
      %p487 = scmp.lt.s32.totalorder %s486, 11
      %s488 = scalar_select %p487, %s486, 11
      %s489 = scalar_lea.vmem %s14, %s488
      %s490 = smul.u32 6, %s25
      %v491 = vld [vmem:[%s478] sm:$0xff]
      %v492 = vld [vmem:[%s478 + $0x8] sm:$0xff]
      %v493 = vld [vmem:[%s478 + $0x10] sm:$0xff]
      %v494 = vld [vmem:[%s478 + $0x18] sm:$0xff]
      %v495 = vld [vmem:[%s478 + $0x20] sm:$0xff]
      %v496 = vld [vmem:[%s478 + $0x28] sm:$0xff]
      %v497 = vld [vmem:[%s484] sm:$0xff]
      %v498 = vld [vmem:[%s484 + $0x8] sm:$0xff]
      %v499 = vld [vmem:[%s484 + $0x10] sm:$0xff]
      %v500 = vld [vmem:[%s484 + $0x18] sm:$0xff]
      %v501 = vld [vmem:[%s484 + $0x20] sm:$0xff]
      %v502 = vld [vmem:[%s484 + $0x28] sm:$0xff]
      %v503 = vld [vmem:[%s2] sm:$0xff]
      %v504 = vld [vmem:[%s2 + $0x8] sm:$0xff]
      %v505 = vld [vmem:[%s2 + $0x10] sm:$0xff]
      %v506 = vld [vmem:[%s2 + $0x18] sm:$0xff]
      %v507 = vld [vmem:[%s3] sm:$0x1]
      %v509 = vlaneseq
      %v510 = vshrl.u32 %v509, 7
      %v511 = vsub.s32 0, %v510
      %v512 = vrot.slane %v507, %v511
      %vm514 = vcmask 261120
      %v516 = vsel %vm514, %v491, 0
      %v519 = vsel %vm514, %v492, 0
      %v522 = vsel %vm514, %v493, 0
      %v525 = vsel %vm514, %v494, 0
      %v528 = vsel %vm514, %v495, 0
      %v531 = vsel %vm514, %v496, 0
      %533 = vmatprep.subr.mxu0 0.0
      %534 = vmatpush1.msra.mxu0 0.0
      %535 = vmatprep.subr.mxu0 0.0
      %536 = vmatpush1.msra.mxu0 0.0
      %537 = vmatprep.subr.mxu0 0.0
      %538 = vmatpush1.msra.mxu0 0.0
      %539 = vmatprep.subr.mxu0 0.0
      %540 = vmatpush1.msra.mxu0 0.0
      %541 = vmatprep.subr.mxu0 0.0
      %542 = vmatpush1.msra.mxu0 0.0
      %543 = vmatprep.subr.mxu0 0.0
      %544 = vmatpush1.msra.mxu0 0.0
      %545 = vmatprep.subr.mxu0 0.0
      %546 = vmatpush1.msra.mxu0 0.0
      %547 = vmatprep.subr.mxu0 0.0
      %548 = vmatpush1.msra.mxu0 0.0
      %549 = vmatprep.subr.mxu0 0.0
      %550 = vmatpush1.msra.mxu0 0.0
      %551 = vmatprep.subr.mxu0 0.0
      %552 = vmatpush1.msra.mxu0 0.0
      %553 = vmatprep.subr.mxu0 0.0
      %554 = vmatpush1.msra.mxu0 0.0
      %555 = vmatprep.subr.mxu0 0.0
      %556 = vmatpush1.msra.mxu0 0.0
      %557 = vmatprep.subr.mxu0 0.0
      %558 = vmatpush1.msra.mxu0 %v506
      %559 = vmatprep.subr.mxu0 0.0
      %560 = vmatpush1.msra.mxu0 %v505
      %561 = vmatprep.subr.mxu0 0.0
      %562 = vmatpush1.msra.mxu0 %v504
      %563 = vmatprep.subr.mxu0 0.0
      %564 = vmatpush1.msra.mxu0 %v503
      %565 = vmatprep.subr.mxu0 0.0
      %566 = vmatpush2.msra.mxu0 0.0
      %567 = vmatprep.subr.mxu0 0.0
      %568 = vmatpush2.msra.mxu0 0.0
      %569 = vmatprep.subr.mxu0 0.0
      %570 = vmatpush2.msra.mxu0 0.0
      %571 = vmatprep.subr.mxu0 0.0
      %572 = vmatpush2.msra.mxu0 0.0
      %573 = vmatprep.subr.mxu0 0.0
      %574 = vmatpush2.msra.mxu0 0.0
      %575 = vmatprep.subr.mxu0 0.0
      %576 = vmatpush2.msra.mxu0 0.0
      %577 = vmatprep.subr.mxu0 0.0
      %578 = vmatpush2.msra.mxu0 0.0
      %579 = vmatprep.subr.mxu0 0.0
      %580 = vmatpush2.msra.mxu0 0.0
      %581 = vmatprep.subr.mxu0 0.0
      %582 = vmatpush2.msra.mxu0 0.0
      %583 = vmatprep.subr.mxu0 0.0
      %584 = vmatpush2.msra.mxu0 0.0
      %585 = vmatprep.subr.mxu0 0.0
      %586 = vmatpush2.msra.mxu0 0.0
      %587 = vmatprep.subr.mxu0 0.0
      %588 = vmatpush2.msra.mxu0 0.0
      %589 = vmatprep.subr.mxu0 0.0
      %590 = vmatpush2.msra.mxu0 0.0
      %591 = vmatprep.subr.mxu0 0.0
      %592 = vmatpush2.msra.mxu0 0.0
      %593 = vmatprep.subr.mxu0 0.0
      %594 = vmatpush2.msra.mxu0 0.0
      %595 = vmatprep.subr.mxu0 0.0
      %596 = vmatpush2.msra.mxu0 0.0
      %597 = vmatprep.mubr.f32.mxu0 0.0
      %598 = vmatmul.mubr.f32.gmra.mxu0 %v516
      %v599 = vpop.f32.mrf.mxu0
      %v600 = vadd.f32 %v512, %v599
      %v601 = vpop.f32.mrf.mxu0
      %602 = vmatprep.mubr.f32.mxu0 0.0
      %603 = vmatmul.mubr.f32.gmra.mxu0 %v519
      %v604 = vpop.f32.mrf.mxu0
      %v605 = vadd.f32 %v512, %v604
      %v606 = vpop.f32.mrf.mxu0
      %607 = vmatprep.mubr.f32.mxu0 0.0
      %608 = vmatmul.mubr.f32.gmra.mxu0 %v522
      %v609 = vpop.f32.mrf.mxu0
      %v610 = vadd.f32 %v512, %v609
      %v611 = vpop.f32.mrf.mxu0
      %612 = vmatprep.mubr.f32.mxu0 0.0
      %613 = vmatmul.mubr.f32.gmra.mxu0 %v525
      %v614 = vpop.f32.mrf.mxu0
      %v615 = vadd.f32 %v512, %v614
      %v616 = vpop.f32.mrf.mxu0
      %617 = vmatprep.mubr.f32.mxu0 0.0
      %618 = vmatmul.mubr.f32.gmra.mxu0 %v528
      %v619 = vpop.f32.mrf.mxu0
      %v620 = vadd.f32 %v512, %v619
      %v621 = vpop.f32.mrf.mxu0
      %622 = vmatprep.mubr.f32.mxu0 0.0
      %623 = vmatmul.mubr.f32.gmra.mxu0 %v531
      %v624 = vpop.f32.mrf.mxu0
      %v625 = vadd.f32 %v512, %v624
      %v626 = vpop.f32.mrf.mxu0
      %627 = vdwg.mxu0
      %v629 = vsel %vm514, %v497, 0
      %v632 = vsel %vm514, %v498, 0
      %v635 = vsel %vm514, %v499, 0
      %v638 = vsel %vm514, %v500, 0
      %v641 = vsel %vm514, %v501, 0
      %v644 = vsel %vm514, %v502, 0
      %646 = vmatprep.subr.mxu0 0.0
      %647 = vmatpush1.msra.mxu0 0.0
      %648 = vmatprep.subr.mxu0 0.0
      %649 = vmatpush1.msra.mxu0 0.0
      %650 = vmatprep.subr.mxu0 0.0
      %651 = vmatpush1.msra.mxu0 0.0
      %652 = vmatprep.subr.mxu0 0.0
      %653 = vmatpush1.msra.mxu0 0.0
      %654 = vmatprep.subr.mxu0 0.0
      %655 = vmatpush1.msra.mxu0 0.0
      %656 = vmatprep.subr.mxu0 0.0
      %657 = vmatpush1.msra.mxu0 0.0
      %658 = vmatprep.subr.mxu0 0.0
      %659 = vmatpush1.msra.mxu0 0.0
      %660 = vmatprep.subr.mxu0 0.0
      %661 = vmatpush1.msra.mxu0 0.0
      %662 = vmatprep.subr.mxu0 0.0
      %663 = vmatpush1.msra.mxu0 0.0
      %664 = vmatprep.subr.mxu0 0.0
      %665 = vmatpush1.msra.mxu0 0.0
      %666 = vmatprep.subr.mxu0 0.0
      %667 = vmatpush1.msra.mxu0 0.0
      %668 = vmatprep.subr.mxu0 0.0
      %669 = vmatpush1.msra.mxu0 0.0
      %670 = vmatprep.subr.mxu0 0.0
      %671 = vmatpush1.msra.mxu0 %v506
      %672 = vmatprep.subr.mxu0 0.0
      %673 = vmatpush1.msra.mxu0 %v505
      %674 = vmatprep.subr.mxu0 0.0
      %675 = vmatpush1.msra.mxu0 %v504
      %676 = vmatprep.subr.mxu0 0.0
      %677 = vmatpush1.msra.mxu0 %v503
      %678 = vmatprep.subr.mxu0 0.0
      %679 = vmatpush2.msra.mxu0 0.0
      %680 = vmatprep.subr.mxu0 0.0
      %681 = vmatpush2.msra.mxu0 0.0
      %682 = vmatprep.subr.mxu0 0.0
      %683 = vmatpush2.msra.mxu0 0.0
      %684 = vmatprep.subr.mxu0 0.0
      %685 = vmatpush2.msra.mxu0 0.0
      %686 = vmatprep.subr.mxu0 0.0
      %687 = vmatpush2.msra.mxu0 0.0
      %688 = vmatprep.subr.mxu0 0.0
      %689 = vmatpush2.msra.mxu0 0.0
      %690 = vmatprep.subr.mxu0 0.0
      %691 = vmatpush2.msra.mxu0 0.0
      %692 = vmatprep.subr.mxu0 0.0
      %693 = vmatpush2.msra.mxu0 0.0
      %694 = vmatprep.subr.mxu0 0.0
      %695 = vmatpush2.msra.mxu0 0.0
      %696 = vmatprep.subr.mxu0 0.0
      %697 = vmatpush2.msra.mxu0 0.0
      %698 = vmatprep.subr.mxu0 0.0
      %699 = vmatpush2.msra.mxu0 0.0
      %700 = vmatprep.subr.mxu0 0.0
      %701 = vmatpush2.msra.mxu0 0.0
      %702 = vmatprep.subr.mxu0 0.0
      %703 = vmatpush2.msra.mxu0 0.0
      %704 = vmatprep.subr.mxu0 0.0
      %705 = vmatpush2.msra.mxu0 0.0
      %706 = vmatprep.subr.mxu0 0.0
      %707 = vmatpush2.msra.mxu0 0.0
      %708 = vmatprep.subr.mxu0 0.0
      %709 = vmatpush2.msra.mxu0 0.0
      %710 = vmatprep.mubr.f32.mxu0 0.0
      %711 = vmatmul.mubr.f32.gmra.mxu0 %v629
      %v712 = vpop.f32.mrf.mxu0
      %v713 = vadd.f32 %v512, %v712
      %v714 = vpop.f32.mrf.mxu0
      %715 = vmatprep.mubr.f32.mxu0 0.0
      %716 = vmatmul.mubr.f32.gmra.mxu0 %v632
      %v717 = vpop.f32.mrf.mxu0
      %v718 = vadd.f32 %v512, %v717
      %v719 = vpop.f32.mrf.mxu0
      %720 = vmatprep.mubr.f32.mxu0 0.0
      %721 = vmatmul.mubr.f32.gmra.mxu0 %v635
      %v722 = vpop.f32.mrf.mxu0
      %v723 = vadd.f32 %v512, %v722
      %v724 = vpop.f32.mrf.mxu0
      %725 = vmatprep.mubr.f32.mxu0 0.0
      %726 = vmatmul.mubr.f32.gmra.mxu0 %v638
      %v727 = vpop.f32.mrf.mxu0
      %v728 = vadd.f32 %v512, %v727
      %v729 = vpop.f32.mrf.mxu0
      %730 = vmatprep.mubr.f32.mxu0 0.0
      %731 = vmatmul.mubr.f32.gmra.mxu0 %v641
      %v732 = vpop.f32.mrf.mxu0
      %v733 = vadd.f32 %v512, %v732
      %v734 = vpop.f32.mrf.mxu0
      %735 = vmatprep.mubr.f32.mxu0 0.0
      %736 = vmatmul.mubr.f32.gmra.mxu0 %v644
      %v737 = vpop.f32.mrf.mxu0
      %v738 = vadd.f32 %v512, %v737
      %v739 = vpop.f32.mrf.mxu0
      %740 = vdwg.mxu0
      %742 = vrot.lane.b32.xlu0 %v713, 96
      %v743 = vpop.permute.xlu0 %742
      %vm744 = vcmask 64512
      %v746 = vsel %vm744, %v600, 0
      %v748 = vsel %vm744, %v743, 0
      %750 = vmatprep.subr.mxu0 0.0
      %751 = vmatpush1.xpose.msra.mxu0 0.0
      %752 = vmatprep.subr.mxu0 0.0
      %753 = vmatpush1.xpose.msra.mxu0 0.0
      %754 = vmatprep.subr.mxu0 0.0
      %755 = vmatpush1.xpose.msra.mxu0 0.0
      %756 = vmatprep.subr.mxu0 0.0
      %757 = vmatpush1.xpose.msra.mxu0 0.0
      %758 = vmatprep.subr.mxu0 0.0
      %759 = vmatpush1.xpose.msra.mxu0 0.0
      %760 = vmatprep.subr.mxu0 0.0
      %761 = vmatpush1.xpose.msra.mxu0 0.0
      %762 = vmatprep.subr.mxu0 0.0
      %763 = vmatpush1.xpose.msra.mxu0 0.0
      %764 = vmatprep.subr.mxu0 0.0
      %765 = vmatpush1.xpose.msra.mxu0 0.0
      %766 = vmatprep.subr.mxu0 0.0
      %767 = vmatpush1.xpose.msra.mxu0 0.0
      %768 = vmatprep.subr.mxu0 0.0
      %769 = vmatpush1.xpose.msra.mxu0 0.0
      %770 = vmatprep.subr.mxu0 0.0
      %771 = vmatpush1.xpose.msra.mxu0 0.0
      %772 = vmatprep.subr.mxu0 0.0
      %773 = vmatpush1.xpose.msra.mxu0 0.0
      %774 = vmatprep.subr.mxu0 0.0
      %775 = vmatpush1.xpose.msra.mxu0 0.0
      %776 = vmatprep.subr.mxu0 0.0
      %777 = vmatpush1.xpose.msra.mxu0 0.0
      %778 = vmatprep.subr.mxu0 0.0
      %779 = vmatpush1.xpose.msra.mxu0 0.0
      %780 = vmatprep.subr.mxu0 0.0
      %781 = vmatpush1.xpose.msra.mxu0 %v748
      %782 = vmatprep.subr.mxu0 0.0
      %783 = vmatpush2.xpose.msra.mxu0 0.0
      %784 = vmatprep.subr.mxu0 0.0
      %785 = vmatpush2.xpose.msra.mxu0 0.0
      %786 = vmatprep.subr.mxu0 0.0
      %787 = vmatpush2.xpose.msra.mxu0 0.0
      %788 = vmatprep.subr.mxu0 0.0
      %789 = vmatpush2.xpose.msra.mxu0 0.0
      %790 = vmatprep.subr.mxu0 0.0
      %791 = vmatpush2.xpose.msra.mxu0 0.0
      %792 = vmatprep.subr.mxu0 0.0
      %793 = vmatpush2.xpose.msra.mxu0 0.0
      %794 = vmatprep.subr.mxu0 0.0
      %795 = vmatpush2.xpose.msra.mxu0 0.0
      %796 = vmatprep.subr.mxu0 0.0
      %797 = vmatpush2.xpose.msra.mxu0 0.0
      %798 = vmatprep.subr.mxu0 0.0
      %799 = vmatpush2.xpose.msra.mxu0 0.0
      %800 = vmatprep.subr.mxu0 0.0
      %801 = vmatpush2.xpose.msra.mxu0 0.0
      %802 = vmatprep.subr.mxu0 0.0
      %803 = vmatpush2.xpose.msra.mxu0 0.0
      %804 = vmatprep.subr.mxu0 0.0
      %805 = vmatpush2.xpose.msra.mxu0 0.0
      %806 = vmatprep.subr.mxu0 0.0
      %807 = vmatpush2.xpose.msra.mxu0 0.0
      %808 = vmatprep.subr.mxu0 0.0
      %809 = vmatpush2.xpose.msra.mxu0 0.0
      %810 = vmatprep.subr.mxu0 0.0
      %811 = vmatpush2.xpose.msra.mxu0 0.0
      %812 = vmatprep.subr.mxu0 0.0
      %813 = vmatpush2.xpose.msra.mxu0 0.0
      %814 = vmatprep.mubr.f32.mxu0 0.0
      %815 = vmatmul.mubr.f32.gmra.mxu0 %v746
      %v816 = vpop.f32.mrf.mxu0
      %v817 = vadd.f32 0.0, %v816
      %v818 = vpop.f32.mrf.mxu0
      %819 = vdwg.mxu0
      %821 = vrot.lane.b32.xlu0 %v718, 96
      %v822 = vpop.permute.xlu0 %821
      %v824 = vsel %vm744, %v605, 0
      %v826 = vsel %vm744, %v822, 0
      %828 = vmatprep.subr.mxu0 0.0
      %829 = vmatpush1.xpose.msra.mxu0 0.0
      %830 = vmatprep.subr.mxu0 0.0
      %831 = vmatpush1.xpose.msra.mxu0 0.0
      %832 = vmatprep.subr.mxu0 0.0
      %833 = vmatpush1.xpose.msra.mxu0 0.0
      %834 = vmatprep.subr.mxu0 0.0
      %835 = vmatpush1.xpose.msra.mxu0 0.0
      %836 = vmatprep.subr.mxu0 0.0
      %837 = vmatpush1.xpose.msra.mxu0 0.0
      %838 = vmatprep.subr.mxu0 0.0
      %839 = vmatpush1.xpose.msra.mxu0 0.0
      %840 = vmatprep.subr.mxu0 0.0
      %841 = vmatpush1.xpose.msra.mxu0 0.0
      %842 = vmatprep.subr.mxu0 0.0
      %843 = vmatpush1.xpose.msra.mxu0 0.0
      %844 = vmatprep.subr.mxu0 0.0
      %845 = vmatpush1.xpose.msra.mxu0 0.0
      %846 = vmatprep.subr.mxu0 0.0
      %847 = vmatpush1.xpose.msra.mxu0 0.0
      %848 = vmatprep.subr.mxu0 0.0
      %849 = vmatpush1.xpose.msra.mxu0 0.0
      %850 = vmatprep.subr.mxu0 0.0
      %851 = vmatpush1.xpose.msra.mxu0 0.0
      %852 = vmatprep.subr.mxu0 0.0
      %853 = vmatpush1.xpose.msra.mxu0 0.0
      %854 = vmatprep.subr.mxu0 0.0
      %855 = vmatpush1.xpose.msra.mxu0 0.0
      %856 = vmatprep.subr.mxu0 0.0
      %857 = vmatpush1.xpose.msra.mxu0 0.0
      %858 = vmatprep.subr.mxu0 0.0
      %859 = vmatpush1.xpose.msra.mxu0 %v826
      %860 = vmatprep.subr.mxu0 0.0
      %861 = vmatpush2.xpose.msra.mxu0 0.0
      %862 = vmatprep.subr.mxu0 0.0
      %863 = vmatpush2.xpose.msra.mxu0 0.0
      %864 = vmatprep.subr.mxu0 0.0
      %865 = vmatpush2.xpose.msra.mxu0 0.0
      %866 = vmatprep.subr.mxu0 0.0
      %867 = vmatpush2.xpose.msra.mxu0 0.0
      %868 = vmatprep.subr.mxu0 0.0
      %869 = vmatpush2.xpose.msra.mxu0 0.0
      %870 = vmatprep.subr.mxu0 0.0
      %871 = vmatpush2.xpose.msra.mxu0 0.0
      %872 = vmatprep.subr.mxu0 0.0
      %873 = vmatpush2.xpose.msra.mxu0 0.0
      %874 = vmatprep.subr.mxu0 0.0
      %875 = vmatpush2.xpose.msra.mxu0 0.0
      %876 = vmatprep.subr.mxu0 0.0
      %877 = vmatpush2.xpose.msra.mxu0 0.0
      %878 = vmatprep.subr.mxu0 0.0
      %879 = vmatpush2.xpose.msra.mxu0 0.0
      %880 = vmatprep.subr.mxu0 0.0
      %881 = vmatpush2.xpose.msra.mxu0 0.0
      %882 = vmatprep.subr.mxu0 0.0
      %883 = vmatpush2.xpose.msra.mxu0 0.0
      %884 = vmatprep.subr.mxu0 0.0
      %885 = vmatpush2.xpose.msra.mxu0 0.0
      %886 = vmatprep.subr.mxu0 0.0
      %887 = vmatpush2.xpose.msra.mxu0 0.0
      %888 = vmatprep.subr.mxu0 0.0
      %889 = vmatpush2.xpose.msra.mxu0 0.0
      %890 = vmatprep.subr.mxu0 0.0
      %891 = vmatpush2.xpose.msra.mxu0 0.0
      %892 = vmatprep.mubr.f32.mxu0 0.0
      %893 = vmatmul.mubr.f32.gmra.mxu0 %v824
      %v894 = vpop.f32.mrf.mxu0
      %v895 = vadd.f32 0.0, %v894
      %v896 = vpop.f32.mrf.mxu0
      %897 = vdwg.mxu0
      %899 = vrot.lane.b32.xlu0 %v723, 96
      %v900 = vpop.permute.xlu0 %899
      %v902 = vsel %vm744, %v610, 0
      %v904 = vsel %vm744, %v900, 0
      %906 = vmatprep.subr.mxu0 0.0
      %907 = vmatpush1.xpose.msra.mxu0 0.0
      %908 = vmatprep.subr.mxu0 0.0
      %909 = vmatpush1.xpose.msra.mxu0 0.0
      %910 = vmatprep.subr.mxu0 0.0
      %911 = vmatpush1.xpose.msra.mxu0 0.0
      %912 = vmatprep.subr.mxu0 0.0
      %913 = vmatpush1.xpose.msra.mxu0 0.0
      %914 = vmatprep.subr.mxu0 0.0
      %915 = vmatpush1.xpose.msra.mxu0 0.0
      %916 = vmatprep.subr.mxu0 0.0
      %917 = vmatpush1.xpose.msra.mxu0 0.0
      %918 = vmatprep.subr.mxu0 0.0
      %919 = vmatpush1.xpose.msra.mxu0 0.0
      %920 = vmatprep.subr.mxu0 0.0
      %921 = vmatpush1.xpose.msra.mxu0 0.0
      %922 = vmatprep.subr.mxu0 0.0
      %923 = vmatpush1.xpose.msra.mxu0 0.0
      %924 = vmatprep.subr.mxu0 0.0
      %925 = vmatpush1.xpose.msra.mxu0 0.0
      %926 = vmatprep.subr.mxu0 0.0
      %927 = vmatpush1.xpose.msra.mxu0 0.0
      %928 = vmatprep.subr.mxu0 0.0
      %929 = vmatpush1.xpose.msra.mxu0 0.0
      %930 = vmatprep.subr.mxu0 0.0
      %931 = vmatpush1.xpose.msra.mxu0 0.0
      %932 = vmatprep.subr.mxu0 0.0
      %933 = vmatpush1.xpose.msra.mxu0 0.0
      %934 = vmatprep.subr.mxu0 0.0
      %935 = vmatpush1.xpose.msra.mxu0 0.0
      %936 = vmatprep.subr.mxu0 0.0
      %937 = vmatpush1.xpose.msra.mxu0 %v904
      %938 = vmatprep.subr.mxu0 0.0
      %939 = vmatpush2.xpose.msra.mxu0 0.0
      %940 = vmatprep.subr.mxu0 0.0
      %941 = vmatpush2.xpose.msra.mxu0 0.0
      %942 = vmatprep.subr.mxu0 0.0
      %943 = vmatpush2.xpose.msra.mxu0 0.0
      %944 = vmatprep.subr.mxu0 0.0
      %945 = vmatpush2.xpose.msra.mxu0 0.0
      %946 = vmatprep.subr.mxu0 0.0
      %947 = vmatpush2.xpose.msra.mxu0 0.0
      %948 = vmatprep.subr.mxu0 0.0
      %949 = vmatpush2.xpose.msra.mxu0 0.0
      %950 = vmatprep.subr.mxu0 0.0
      %951 = vmatpush2.xpose.msra.mxu0 0.0
      %952 = vmatprep.subr.mxu0 0.0
      %953 = vmatpush2.xpose.msra.mxu0 0.0
      %954 = vmatprep.subr.mxu0 0.0
      %955 = vmatpush2.xpose.msra.mxu0 0.0
      %956 = vmatprep.subr.mxu0 0.0
      %957 = vmatpush2.xpose.msra.mxu0 0.0
      %958 = vmatprep.subr.mxu0 0.0
      %959 = vmatpush2.xpose.msra.mxu0 0.0
      %960 = vmatprep.subr.mxu0 0.0
      %961 = vmatpush2.xpose.msra.mxu0 0.0
      %962 = vmatprep.subr.mxu0 0.0
      %963 = vmatpush2.xpose.msra.mxu0 0.0
      %964 = vmatprep.subr.mxu0 0.0
      %965 = vmatpush2.xpose.msra.mxu0 0.0
      %966 = vmatprep.subr.mxu0 0.0
      %967 = vmatpush2.xpose.msra.mxu0 0.0
      %968 = vmatprep.subr.mxu0 0.0
      %969 = vmatpush2.xpose.msra.mxu0 0.0
      %970 = vmatprep.mubr.f32.mxu0 0.0
      %971 = vmatmul.mubr.f32.gmra.mxu0 %v902
      %v972 = vpop.f32.mrf.mxu0
      %v973 = vadd.f32 0.0, %v972
      %v974 = vpop.f32.mrf.mxu0
      %975 = vdwg.mxu0
      %977 = vrot.lane.b32.xlu0 %v728, 96
      %v978 = vpop.permute.xlu0 %977
      %v980 = vsel %vm744, %v615, 0
      %v982 = vsel %vm744, %v978, 0
      %984 = vmatprep.subr.mxu0 0.0
      %985 = vmatpush1.xpose.msra.mxu0 0.0
      %986 = vmatprep.subr.mxu0 0.0
      %987 = vmatpush1.xpose.msra.mxu0 0.0
      %988 = vmatprep.subr.mxu0 0.0
      %989 = vmatpush1.xpose.msra.mxu0 0.0
      %990 = vmatprep.subr.mxu0 0.0
      %991 = vmatpush1.xpose.msra.mxu0 0.0
      %992 = vmatprep.subr.mxu0 0.0
      %993 = vmatpush1.xpose.msra.mxu0 0.0
      %994 = vmatprep.subr.mxu0 0.0
      %995 = vmatpush1.xpose.msra.mxu0 0.0
      %996 = vmatprep.subr.mxu0 0.0
      %997 = vmatpush1.xpose.msra.mxu0 0.0
      %998 = vmatprep.subr.mxu0 0.0
      %999 = vmatpush1.xpose.msra.mxu0 0.0
      %1000 = vmatprep.subr.mxu0 0.0
      %1001 = vmatpush1.xpose.msra.mxu0 0.0
      %1002 = vmatprep.subr.mxu0 0.0
      %1003 = vmatpush1.xpose.msra.mxu0 0.0
      %1004 = vmatprep.subr.mxu0 0.0
      %1005 = vmatpush1.xpose.msra.mxu0 0.0
      %1006 = vmatprep.subr.mxu0 0.0
      %1007 = vmatpush1.xpose.msra.mxu0 0.0
      %1008 = vmatprep.subr.mxu0 0.0
      %1009 = vmatpush1.xpose.msra.mxu0 0.0
      %1010 = vmatprep.subr.mxu0 0.0
      %1011 = vmatpush1.xpose.msra.mxu0 0.0
      %1012 = vmatprep.subr.mxu0 0.0
      %1013 = vmatpush1.xpose.msra.mxu0 0.0
      %1014 = vmatprep.subr.mxu0 0.0
      %1015 = vmatpush1.xpose.msra.mxu0 %v982
      %1016 = vmatprep.subr.mxu0 0.0
      %1017 = vmatpush2.xpose.msra.mxu0 0.0
      %1018 = vmatprep.subr.mxu0 0.0
      %1019 = vmatpush2.xpose.msra.mxu0 0.0
      %1020 = vmatprep.subr.mxu0 0.0
      %1021 = vmatpush2.xpose.msra.mxu0 0.0
      %1022 = vmatprep.subr.mxu0 0.0
      %1023 = vmatpush2.xpose.msra.mxu0 0.0
      %1024 = vmatprep.subr.mxu0 0.0
      %1025 = vmatpush2.xpose.msra.mxu0 0.0
      %1026 = vmatprep.subr.mxu0 0.0
      %1027 = vmatpush2.xpose.msra.mxu0 0.0
      %1028 = vmatprep.subr.mxu0 0.0
      %1029 = vmatpush2.xpose.msra.mxu0 0.0
      %1030 = vmatprep.subr.mxu0 0.0
      %1031 = vmatpush2.xpose.msra.mxu0 0.0
      %1032 = vmatprep.subr.mxu0 0.0
      %1033 = vmatpush2.xpose.msra.mxu0 0.0
      %1034 = vmatprep.subr.mxu0 0.0
      %1035 = vmatpush2.xpose.msra.mxu0 0.0
      %1036 = vmatprep.subr.mxu0 0.0
      %1037 = vmatpush2.xpose.msra.mxu0 0.0
      %1038 = vmatprep.subr.mxu0 0.0
      %1039 = vmatpush2.xpose.msra.mxu0 0.0
      %1040 = vmatprep.subr.mxu0 0.0
      %1041 = vmatpush2.xpose.msra.mxu0 0.0
      %1042 = vmatprep.subr.mxu0 0.0
      %1043 = vmatpush2.xpose.msra.mxu0 0.0
      %1044 = vmatprep.subr.mxu0 0.0
      %1045 = vmatpush2.xpose.msra.mxu0 0.0
      %1046 = vmatprep.subr.mxu0 0.0
      %1047 = vmatpush2.xpose.msra.mxu0 0.0
      %1048 = vmatprep.mubr.f32.mxu0 0.0
      %1049 = vmatmul.mubr.f32.gmra.mxu0 %v980
      %v1050 = vpop.f32.mrf.mxu0
      %v1051 = vadd.f32 0.0, %v1050
      %v1052 = vpop.f32.mrf.mxu0
      %1053 = vdwg.mxu0
      %1055 = vrot.lane.b32.xlu0 %v733, 96
      %v1056 = vpop.permute.xlu0 %1055
      %v1058 = vsel %vm744, %v620, 0
      %v1060 = vsel %vm744, %v1056, 0
      %1062 = vmatprep.subr.mxu0 0.0
      %1063 = vmatpush1.xpose.msra.mxu0 0.0
      %1064 = vmatprep.subr.mxu0 0.0
      %1065 = vmatpush1.xpose.msra.mxu0 0.0
      %1066 = vmatprep.subr.mxu0 0.0
      %1067 = vmatpush1.xpose.msra.mxu0 0.0
      %1068 = vmatprep.subr.mxu0 0.0
      %1069 = vmatpush1.xpose.msra.mxu0 0.0
      %1070 = vmatprep.subr.mxu0 0.0
      %1071 = vmatpush1.xpose.msra.mxu0 0.0
      %1072 = vmatprep.subr.mxu0 0.0
      %1073 = vmatpush1.xpose.msra.mxu0 0.0
      %1074 = vmatprep.subr.mxu0 0.0
      %1075 = vmatpush1.xpose.msra.mxu0 0.0
      %1076 = vmatprep.subr.mxu0 0.0
      %1077 = vmatpush1.xpose.msra.mxu0 0.0
      %1078 = vmatprep.subr.mxu0 0.0
      %1079 = vmatpush1.xpose.msra.mxu0 0.0
      %1080 = vmatprep.subr.mxu0 0.0
      %1081 = vmatpush1.xpose.msra.mxu0 0.0
      %1082 = vmatprep.subr.mxu0 0.0
      %1083 = vmatpush1.xpose.msra.mxu0 0.0
      %1084 = vmatprep.subr.mxu0 0.0
      %1085 = vmatpush1.xpose.msra.mxu0 0.0
      %1086 = vmatprep.subr.mxu0 0.0
      %1087 = vmatpush1.xpose.msra.mxu0 0.0
      %1088 = vmatprep.subr.mxu0 0.0
      %1089 = vmatpush1.xpose.msra.mxu0 0.0
      %1090 = vmatprep.subr.mxu0 0.0
      %1091 = vmatpush1.xpose.msra.mxu0 0.0
      %1092 = vmatprep.subr.mxu0 0.0
      %1093 = vmatpush1.xpose.msra.mxu0 %v1060
      %1094 = vmatprep.subr.mxu0 0.0
      %1095 = vmatpush2.xpose.msra.mxu0 0.0
      %1096 = vmatprep.subr.mxu0 0.0
      %1097 = vmatpush2.xpose.msra.mxu0 0.0
      %1098 = vmatprep.subr.mxu0 0.0
      %1099 = vmatpush2.xpose.msra.mxu0 0.0
      %1100 = vmatprep.subr.mxu0 0.0
      %1101 = vmatpush2.xpose.msra.mxu0 0.0
      %1102 = vmatprep.subr.mxu0 0.0
      %1103 = vmatpush2.xpose.msra.mxu0 0.0
      %1104 = vmatprep.subr.mxu0 0.0
      %1105 = vmatpush2.xpose.msra.mxu0 0.0
      %1106 = vmatprep.subr.mxu0 0.0
      %1107 = vmatpush2.xpose.msra.mxu0 0.0
      %1108 = vmatprep.subr.mxu0 0.0
      %1109 = vmatpush2.xpose.msra.mxu0 0.0
      %1110 = vmatprep.subr.mxu0 0.0
      %1111 = vmatpush2.xpose.msra.mxu0 0.0
      %1112 = vmatprep.subr.mxu0 0.0
      %1113 = vmatpush2.xpose.msra.mxu0 0.0
      %1114 = vmatprep.subr.mxu0 0.0
      %1115 = vmatpush2.xpose.msra.mxu0 0.0
      %1116 = vmatprep.subr.mxu0 0.0
      %1117 = vmatpush2.xpose.msra.mxu0 0.0
      %1118 = vmatprep.subr.mxu0 0.0
      %1119 = vmatpush2.xpose.msra.mxu0 0.0
      %1120 = vmatprep.subr.mxu0 0.0
      %1121 = vmatpush2.xpose.msra.mxu0 0.0
      %1122 = vmatprep.subr.mxu0 0.0
      %1123 = vmatpush2.xpose.msra.mxu0 0.0
      %1124 = vmatprep.subr.mxu0 0.0
      %1125 = vmatpush2.xpose.msra.mxu0 0.0
      %1126 = vmatprep.mubr.f32.mxu0 0.0
      %1127 = vmatmul.mubr.f32.gmra.mxu0 %v1058
      %v1128 = vpop.f32.mrf.mxu0
      %v1129 = vadd.f32 0.0, %v1128
      %v1130 = vpop.f32.mrf.mxu0
      %1131 = vdwg.mxu0
      %1133 = vrot.lane.b32.xlu0 %v738, 96
      %v1134 = vpop.permute.xlu0 %1133
      %v1136 = vsel %vm744, %v625, 0
      %v1138 = vsel %vm744, %v1134, 0
      %1140 = vmatprep.subr.mxu0 0.0
      %1141 = vmatpush1.xpose.msra.mxu0 0.0
      %1142 = vmatprep.subr.mxu0 0.0
      %1143 = vmatpush1.xpose.msra.mxu0 0.0
      %1144 = vmatprep.subr.mxu0 0.0
      %1145 = vmatpush1.xpose.msra.mxu0 0.0
      %1146 = vmatprep.subr.mxu0 0.0
      %1147 = vmatpush1.xpose.msra.mxu0 0.0
      %1148 = vmatprep.subr.mxu0 0.0
      %1149 = vmatpush1.xpose.msra.mxu0 0.0
      %1150 = vmatprep.subr.mxu0 0.0
      %1151 = vmatpush1.xpose.msra.mxu0 0.0
      %1152 = vmatprep.subr.mxu0 0.0
      %1153 = vmatpush1.xpose.msra.mxu0 0.0
      %1154 = vmatprep.subr.mxu0 0.0
      %1155 = vmatpush1.xpose.msra.mxu0 0.0
      %1156 = vmatprep.subr.mxu0 0.0
      %1157 = vmatpush1.xpose.msra.mxu0 0.0
      %1158 = vmatprep.subr.mxu0 0.0
      %1159 = vmatpush1.xpose.msra.mxu0 0.0
      %1160 = vmatprep.subr.mxu0 0.0
      %1161 = vmatpush1.xpose.msra.mxu0 0.0
      %1162 = vmatprep.subr.mxu0 0.0
      %1163 = vmatpush1.xpose.msra.mxu0 0.0
      %1164 = vmatprep.subr.mxu0 0.0
      %1165 = vmatpush1.xpose.msra.mxu0 0.0
      %1166 = vmatprep.subr.mxu0 0.0
      %1167 = vmatpush1.xpose.msra.mxu0 0.0
      %1168 = vmatprep.subr.mxu0 0.0
      %1169 = vmatpush1.xpose.msra.mxu0 0.0
      %1170 = vmatprep.subr.mxu0 0.0
      %1171 = vmatpush1.xpose.msra.mxu0 %v1138
      %1172 = vmatprep.subr.mxu0 0.0
      %1173 = vmatpush2.xpose.msra.mxu0 0.0
      %1174 = vmatprep.subr.mxu0 0.0
      %1175 = vmatpush2.xpose.msra.mxu0 0.0
      %1176 = vmatprep.subr.mxu0 0.0
      %1177 = vmatpush2.xpose.msra.mxu0 0.0
      %1178 = vmatprep.subr.mxu0 0.0
      %1179 = vmatpush2.xpose.msra.mxu0 0.0
      %1180 = vmatprep.subr.mxu0 0.0
      %1181 = vmatpush2.xpose.msra.mxu0 0.0
      %1182 = vmatprep.subr.mxu0 0.0
      %1183 = vmatpush2.xpose.msra.mxu0 0.0
      %1184 = vmatprep.subr.mxu0 0.0
      %1185 = vmatpush2.xpose.msra.mxu0 0.0
      %1186 = vmatprep.subr.mxu0 0.0
      %1187 = vmatpush2.xpose.msra.mxu0 0.0
      %1188 = vmatprep.subr.mxu0 0.0
      %1189 = vmatpush2.xpose.msra.mxu0 0.0
      %1190 = vmatprep.subr.mxu0 0.0
      %1191 = vmatpush2.xpose.msra.mxu0 0.0
      %1192 = vmatprep.subr.mxu0 0.0
      %1193 = vmatpush2.xpose.msra.mxu0 0.0
      %1194 = vmatprep.subr.mxu0 0.0
      %1195 = vmatpush2.xpose.msra.mxu0 0.0
      %1196 = vmatprep.subr.mxu0 0.0
      %1197 = vmatpush2.xpose.msra.mxu0 0.0
      %1198 = vmatprep.subr.mxu0 0.0
      %1199 = vmatpush2.xpose.msra.mxu0 0.0
      %1200 = vmatprep.subr.mxu0 0.0
      %1201 = vmatpush2.xpose.msra.mxu0 0.0
      %1202 = vmatprep.subr.mxu0 0.0
      %1203 = vmatpush2.xpose.msra.mxu0 0.0
      %1204 = vmatprep.mubr.f32.mxu0 0.0
      %1205 = vmatmul.mubr.f32.gmra.mxu0 %v1136
      %v1206 = vpop.f32.mrf.mxu0
      %v1207 = vadd.f32 0.0, %v1206
      %v1208 = vpop.f32.mrf.mxu0
      %1209 = vdwg.mxu0
      %v1210 = vmul.f32 %v817, 0.35355338
      %v1211 = vmul.f32 %v895, 0.35355338
      %v1212 = vmul.f32 %v973, 0.35355338
      %v1213 = vmul.f32 %v1051, 0.35355338
      %v1214 = vmul.f32 %v1129, 0.35355338
      %v1215 = vmul.f32 %v1207, 0.35355338
      %v1216 = vsel %vm744, %v1210, -inf
      %1217 = vmax.xlane.f32.xlu0 %v1216
      %v1218 = vpop.xlane.xlu0 %1217
      %v1219 = vsel %vm744, %v1211, -inf
      %1220 = vmax.xlane.f32.xlu0 %v1219
      %v1221 = vpop.xlane.xlu0 %1220
      %v1222 = vsel %vm744, %v1212, -inf
      %1223 = vmax.xlane.f32.xlu0 %v1222
      %v1224 = vpop.xlane.xlu0 %1223
      %v1225 = vsel %vm744, %v1213, -inf
      %1226 = vmax.xlane.f32.xlu0 %v1225
      %v1227 = vpop.xlane.xlu0 %1226
      %v1228 = vsel %vm744, %v1214, -inf
      %1229 = vmax.xlane.f32.xlu0 %v1228
      %v1230 = vpop.xlane.xlu0 %1229
      %v1231 = vsel %vm744, %v1215, -inf
      %1232 = vmax.xlane.f32.xlu0 %v1231
      %v1233 = vpop.xlane.xlu0 %1232
      %v1234 = vsub.f32 %v1210, %v1218
      %v1235 = vsub.f32 %v1211, %v1221
      %v1236 = vsub.f32 %v1212, %v1224
      %v1237 = vsub.f32 %v1213, %v1227
      %v1238 = vsub.f32 %v1214, %v1230
      %v1239 = vsub.f32 %v1215, %v1233
      %v1240 = vmul.f32 %v1234, 1.442695
      %v1241 = vpow.pop %v1240
      %v1242 = vmul.f32 %v1235, 1.442695
      %v1243 = vpow.pop %v1242
      %v1244 = vmul.f32 %v1236, 1.442695
      %v1245 = vpow.pop %v1244
      %v1246 = vmul.f32 %v1237, 1.442695
      %v1247 = vpow.pop %v1246
      %v1248 = vmul.f32 %v1238, 1.442695
      %v1249 = vpow.pop %v1248
      %v1250 = vmul.f32 %v1239, 1.442695
      %v1251 = vpow.pop %v1250
      %v1252 = vsel %vm744, %v1241, 0.0
      %1253 = vadd.xlane.f32.xlu0 %v1252
      %v1254 = vpop.xlane.xlu0 %1253
      %v1255 = vsel %vm744, %v1243, 0.0
      %1256 = vadd.xlane.f32.xlu0 %v1255
      %v1257 = vpop.xlane.xlu0 %1256
      %v1258 = vsel %vm744, %v1245, 0.0
      %1259 = vadd.xlane.f32.xlu0 %v1258
      %v1260 = vpop.xlane.xlu0 %1259
      %v1261 = vsel %vm744, %v1247, 0.0
      %1262 = vadd.xlane.f32.xlu0 %v1261
      %v1263 = vpop.xlane.xlu0 %1262
      %v1264 = vsel %vm744, %v1249, 0.0
      %1265 = vadd.xlane.f32.xlu0 %v1264
      %v1266 = vpop.xlane.xlu0 %1265
      %v1267 = vsel %vm744, %v1251, 0.0
      %1268 = vadd.xlane.f32.xlu0 %v1267
      %v1269 = vpop.xlane.xlu0 %1268
      %v1270 = vrcp.pop %v1254
      %v1271 = vrcp.pop %v1257
      %v1272 = vrcp.pop %v1260
      %v1273 = vrcp.pop %v1263
      %v1274 = vrcp.pop %v1266
      %v1275 = vrcp.pop %v1269
      %v1276 = vmul.f32 %v1241, %v1270
      %v1277 = vmul.f32 %v1243, %v1271
      %v1278 = vmul.f32 %v1245, %v1272
      %v1279 = vmul.f32 %v1247, %v1273
      %v1280 = vmul.f32 %v1249, %v1274
      %v1281 = vmul.f32 %v1251, %v1275
      %1282 = vrot.lane.b32.xlu0 %v713, 64
      %v1283 = vpop.permute.xlu0 %1282
      %v1286 = vsel %vm744, %v1276, 0
      %1288 = vmatprep.subr.mxu0 0.0
      %1289 = vmatpush1.msra.mxu0 0.0
      %1290 = vmatprep.subr.mxu0 0.0
      %1291 = vmatpush1.msra.mxu0 0.0
      %1292 = vmatprep.subr.mxu0 0.0
      %1293 = vmatpush1.msra.mxu0 0.0
      %1294 = vmatprep.subr.mxu0 0.0
      %1295 = vmatpush1.msra.mxu0 0.0
      %1296 = vmatprep.subr.mxu0 0.0
      %1297 = vmatpush1.msra.mxu0 0.0
      %1298 = vmatprep.subr.mxu0 0.0
      %1299 = vmatpush1.msra.mxu0 0.0
      %1300 = vmatprep.subr.mxu0 0.0
      %1301 = vmatpush1.msra.mxu0 0.0
      %1302 = vmatprep.subr.mxu0 0.0
      %1303 = vmatpush1.msra.mxu0 0.0
      %1304 = vmatprep.subr.mxu0 0.0
      %1305 = vmatpush1.msra.mxu0 0.0
      %1306 = vmatprep.subr.mxu0 0.0
      %1307 = vmatpush1.msra.mxu0 0.0
      %1308 = vmatprep.subr.mxu0 0.0
      %1309 = vmatpush1.msra.mxu0 0.0
      %1310 = vmatprep.subr.mxu0 0.0
      %1311 = vmatpush1.msra.mxu0 0.0
      %1312 = vmatprep.subr.mxu0 0.0
      %1313 = vmatpush1.msra.mxu0 0.0
      %1314 = vmatprep.subr.mxu0 0.0
      %1315 = vmatpush1.msra.mxu0 0.0
      %1316 = vmatprep.subr.mxu0 0.0
      %1317 = vmatpush1.msra.mxu0 0.0
      %1318 = vmatprep.subr.mxu0 0.0
      %1319 = vmatpush1.msra.mxu0 %v1283
      %1320 = vmatprep.subr.mxu0 0.0
      %1321 = vmatpush2.msra.mxu0 0.0
      %1322 = vmatprep.subr.mxu0 0.0
      %1323 = vmatpush2.msra.mxu0 0.0
      %1324 = vmatprep.subr.mxu0 0.0
      %1325 = vmatpush2.msra.mxu0 0.0
      %1326 = vmatprep.subr.mxu0 0.0
      %1327 = vmatpush2.msra.mxu0 0.0
      %1328 = vmatprep.subr.mxu0 0.0
      %1329 = vmatpush2.msra.mxu0 0.0
      %1330 = vmatprep.subr.mxu0 0.0
      %1331 = vmatpush2.msra.mxu0 0.0
      %1332 = vmatprep.subr.mxu0 0.0
      %1333 = vmatpush2.msra.mxu0 0.0
      %1334 = vmatprep.subr.mxu0 0.0
      %1335 = vmatpush2.msra.mxu0 0.0
      %1336 = vmatprep.subr.mxu0 0.0
      %1337 = vmatpush2.msra.mxu0 0.0
      %1338 = vmatprep.subr.mxu0 0.0
      %1339 = vmatpush2.msra.mxu0 0.0
      %1340 = vmatprep.subr.mxu0 0.0
      %1341 = vmatpush2.msra.mxu0 0.0
      %1342 = vmatprep.subr.mxu0 0.0
      %1343 = vmatpush2.msra.mxu0 0.0
      %1344 = vmatprep.subr.mxu0 0.0
      %1345 = vmatpush2.msra.mxu0 0.0
      %1346 = vmatprep.subr.mxu0 0.0
      %1347 = vmatpush2.msra.mxu0 0.0
      %1348 = vmatprep.subr.mxu0 0.0
      %1349 = vmatpush2.msra.mxu0 0.0
      %1350 = vmatprep.subr.mxu0 0.0
      %1351 = vmatpush2.msra.mxu0 0.0
      %1352 = vmatprep.mubr.f32.mxu0 0.0
      %1353 = vmatmul.mubr.f32.gmra.mxu0 %v1286
      %v1354 = vpop.f32.mrf.mxu0
      %v1355 = vadd.f32 0.0, %v1354
      %v1356 = vpop.f32.mrf.mxu0
      %1357 = vdwg.mxu0
      %1358 = vrot.lane.b32.xlu0 %v718, 64
      %v1359 = vpop.permute.xlu0 %1358
      %v1362 = vsel %vm744, %v1277, 0
      %1364 = vmatprep.subr.mxu0 0.0
      %1365 = vmatpush1.msra.mxu0 0.0
      %1366 = vmatprep.subr.mxu0 0.0
      %1367 = vmatpush1.msra.mxu0 0.0
      %1368 = vmatprep.subr.mxu0 0.0
      %1369 = vmatpush1.msra.mxu0 0.0
      %1370 = vmatprep.subr.mxu0 0.0
      %1371 = vmatpush1.msra.mxu0 0.0
      %1372 = vmatprep.subr.mxu0 0.0
      %1373 = vmatpush1.msra.mxu0 0.0
      %1374 = vmatprep.subr.mxu0 0.0
      %1375 = vmatpush1.msra.mxu0 0.0
      %1376 = vmatprep.subr.mxu0 0.0
      %1377 = vmatpush1.msra.mxu0 0.0
      %1378 = vmatprep.subr.mxu0 0.0
      %1379 = vmatpush1.msra.mxu0 0.0
      %1380 = vmatprep.subr.mxu0 0.0
      %1381 = vmatpush1.msra.mxu0 0.0
      %1382 = vmatprep.subr.mxu0 0.0
      %1383 = vmatpush1.msra.mxu0 0.0
      %1384 = vmatprep.subr.mxu0 0.0
      %1385 = vmatpush1.msra.mxu0 0.0
      %1386 = vmatprep.subr.mxu0 0.0
      %1387 = vmatpush1.msra.mxu0 0.0
      %1388 = vmatprep.subr.mxu0 0.0
      %1389 = vmatpush1.msra.mxu0 0.0
      %1390 = vmatprep.subr.mxu0 0.0
      %1391 = vmatpush1.msra.mxu0 0.0
      %1392 = vmatprep.subr.mxu0 0.0
      %1393 = vmatpush1.msra.mxu0 0.0
      %1394 = vmatprep.subr.mxu0 0.0
      %1395 = vmatpush1.msra.mxu0 %v1359
      %1396 = vmatprep.subr.mxu0 0.0
      %1397 = vmatpush2.msra.mxu0 0.0
      %1398 = vmatprep.subr.mxu0 0.0
      %1399 = vmatpush2.msra.mxu0 0.0
      %1400 = vmatprep.subr.mxu0 0.0
      %1401 = vmatpush2.msra.mxu0 0.0
      %1402 = vmatprep.subr.mxu0 0.0
      %1403 = vmatpush2.msra.mxu0 0.0
      %1404 = vmatprep.subr.mxu0 0.0
      %1405 = vmatpush2.msra.mxu0 0.0
      %1406 = vmatprep.subr.mxu0 0.0
      %1407 = vmatpush2.msra.mxu0 0.0
      %1408 = vmatprep.subr.mxu0 0.0
      %1409 = vmatpush2.msra.mxu0 0.0
      %1410 = vmatprep.subr.mxu0 0.0
      %1411 = vmatpush2.msra.mxu0 0.0
      %1412 = vmatprep.subr.mxu0 0.0
      %1413 = vmatpush2.msra.mxu0 0.0
      %1414 = vmatprep.subr.mxu0 0.0
      %1415 = vmatpush2.msra.mxu0 0.0
      %1416 = vmatprep.subr.mxu0 0.0
      %1417 = vmatpush2.msra.mxu0 0.0
      %1418 = vmatprep.subr.mxu0 0.0
      %1419 = vmatpush2.msra.mxu0 0.0
      %1420 = vmatprep.subr.mxu0 0.0
      %1421 = vmatpush2.msra.mxu0 0.0
      %1422 = vmatprep.subr.mxu0 0.0
      %1423 = vmatpush2.msra.mxu0 0.0
      %1424 = vmatprep.subr.mxu0 0.0
      %1425 = vmatpush2.msra.mxu0 0.0
      %1426 = vmatprep.subr.mxu0 0.0
      %1427 = vmatpush2.msra.mxu0 0.0
      %1428 = vmatprep.mubr.f32.mxu0 0.0
      %1429 = vmatmul.mubr.f32.gmra.mxu0 %v1362
      %v1430 = vpop.f32.mrf.mxu0
      %v1431 = vadd.f32 0.0, %v1430
      %v1432 = vpop.f32.mrf.mxu0
      %1433 = vdwg.mxu0
      %1434 = vrot.lane.b32.xlu0 %v723, 64
      %v1435 = vpop.permute.xlu0 %1434
      %v1438 = vsel %vm744, %v1278, 0
      %1440 = vmatprep.subr.mxu0 0.0
      %1441 = vmatpush1.msra.mxu0 0.0
      %1442 = vmatprep.subr.mxu0 0.0
      %1443 = vmatpush1.msra.mxu0 0.0
      %1444 = vmatprep.subr.mxu0 0.0
      %1445 = vmatpush1.msra.mxu0 0.0
      %1446 = vmatprep.subr.mxu0 0.0
      %1447 = vmatpush1.msra.mxu0 0.0
      %1448 = vmatprep.subr.mxu0 0.0
      %1449 = vmatpush1.msra.mxu0 0.0
      %1450 = vmatprep.subr.mxu0 0.0
      %1451 = vmatpush1.msra.mxu0 0.0
      %1452 = vmatprep.subr.mxu0 0.0
      %1453 = vmatpush1.msra.mxu0 0.0
      %1454 = vmatprep.subr.mxu0 0.0
      %1455 = vmatpush1.msra.mxu0 0.0
      %1456 = vmatprep.subr.mxu0 0.0
      %1457 = vmatpush1.msra.mxu0 0.0
      %1458 = vmatprep.subr.mxu0 0.0
      %1459 = vmatpush1.msra.mxu0 0.0
      %1460 = vmatprep.subr.mxu0 0.0
      %1461 = vmatpush1.msra.mxu0 0.0
      %1462 = vmatprep.subr.mxu0 0.0
      %1463 = vmatpush1.msra.mxu0 0.0
      %1464 = vmatprep.subr.mxu0 0.0
      %1465 = vmatpush1.msra.mxu0 0.0
      %1466 = vmatprep.subr.mxu0 0.0
      %1467 = vmatpush1.msra.mxu0 0.0
      %1468 = vmatprep.subr.mxu0 0.0
      %1469 = vmatpush1.msra.mxu0 0.0
      %1470 = vmatprep.subr.mxu0 0.0
      %1471 = vmatpush1.msra.mxu0 %v1435
      %1472 = vmatprep.subr.mxu0 0.0
      %1473 = vmatpush2.msra.mxu0 0.0
      %1474 = vmatprep.subr.mxu0 0.0
      %1475 = vmatpush2.msra.mxu0 0.0
      %1476 = vmatprep.subr.mxu0 0.0
      %1477 = vmatpush2.msra.mxu0 0.0
      %1478 = vmatprep.subr.mxu0 0.0
      %1479 = vmatpush2.msra.mxu0 0.0
      %1480 = vmatprep.subr.mxu0 0.0
      %1481 = vmatpush2.msra.mxu0 0.0
      %1482 = vmatprep.subr.mxu0 0.0
      %1483 = vmatpush2.msra.mxu0 0.0
      %1484 = vmatprep.subr.mxu0 0.0
      %1485 = vmatpush2.msra.mxu0 0.0
      %1486 = vmatprep.subr.mxu0 0.0
      %1487 = vmatpush2.msra.mxu0 0.0
      %1488 = vmatprep.subr.mxu0 0.0
      %1489 = vmatpush2.msra.mxu0 0.0
      %1490 = vmatprep.subr.mxu0 0.0
      %1491 = vmatpush2.msra.mxu0 0.0
      %1492 = vmatprep.subr.mxu0 0.0
      %1493 = vmatpush2.msra.mxu0 0.0
      %1494 = vmatprep.subr.mxu0 0.0
      %1495 = vmatpush2.msra.mxu0 0.0
      %1496 = vmatprep.subr.mxu0 0.0
      %1497 = vmatpush2.msra.mxu0 0.0
      %1498 = vmatprep.subr.mxu0 0.0
      %1499 = vmatpush2.msra.mxu0 0.0
      %1500 = vmatprep.subr.mxu0 0.0
      %1501 = vmatpush2.msra.mxu0 0.0
      %1502 = vmatprep.subr.mxu0 0.0
      %1503 = vmatpush2.msra.mxu0 0.0
      %1504 = vmatprep.mubr.f32.mxu0 0.0
      %1505 = vmatmul.mubr.f32.gmra.mxu0 %v1438
      %v1506 = vpop.f32.mrf.mxu0
      %v1507 = vadd.f32 0.0, %v1506
      %v1508 = vpop.f32.mrf.mxu0
      %1509 = vdwg.mxu0
      %1510 = vrot.lane.b32.xlu0 %v728, 64
      %v1511 = vpop.permute.xlu0 %1510
      %v1514 = vsel %vm744, %v1279, 0
      %1516 = vmatprep.subr.mxu0 0.0
      %1517 = vmatpush1.msra.mxu0 0.0
      %1518 = vmatprep.subr.mxu0 0.0
      %1519 = vmatpush1.msra.mxu0 0.0
      %1520 = vmatprep.subr.mxu0 0.0
      %1521 = vmatpush1.msra.mxu0 0.0
      %1522 = vmatprep.subr.mxu0 0.0
      %1523 = vmatpush1.msra.mxu0 0.0
      %1524 = vmatprep.subr.mxu0 0.0
      %1525 = vmatpush1.msra.mxu0 0.0
      %1526 = vmatprep.subr.mxu0 0.0
      %1527 = vmatpush1.msra.mxu0 0.0
      %1528 = vmatprep.subr.mxu0 0.0
      %1529 = vmatpush1.msra.mxu0 0.0
      %1530 = vmatprep.subr.mxu0 0.0
      %1531 = vmatpush1.msra.mxu0 0.0
      %1532 = vmatprep.subr.mxu0 0.0
      %1533 = vmatpush1.msra.mxu0 0.0
      %1534 = vmatprep.subr.mxu0 0.0
      %1535 = vmatpush1.msra.mxu0 0.0
      %1536 = vmatprep.subr.mxu0 0.0
      %1537 = vmatpush1.msra.mxu0 0.0
      %1538 = vmatprep.subr.mxu0 0.0
      %1539 = vmatpush1.msra.mxu0 0.0
      %1540 = vmatprep.subr.mxu0 0.0
      %1541 = vmatpush1.msra.mxu0 0.0
      %1542 = vmatprep.subr.mxu0 0.0
      %1543 = vmatpush1.msra.mxu0 0.0
      %1544 = vmatprep.subr.mxu0 0.0
      %1545 = vmatpush1.msra.mxu0 0.0
      %1546 = vmatprep.subr.mxu0 0.0
      %1547 = vmatpush1.msra.mxu0 %v1511
      %1548 = vmatprep.subr.mxu0 0.0
      %1549 = vmatpush2.msra.mxu0 0.0
      %1550 = vmatprep.subr.mxu0 0.0
      %1551 = vmatpush2.msra.mxu0 0.0
      %1552 = vmatprep.subr.mxu0 0.0
      %1553 = vmatpush2.msra.mxu0 0.0
      %1554 = vmatprep.subr.mxu0 0.0
      %1555 = vmatpush2.msra.mxu0 0.0
      %1556 = vmatprep.subr.mxu0 0.0
      %1557 = vmatpush2.msra.mxu0 0.0
      %1558 = vmatprep.subr.mxu0 0.0
      %1559 = vmatpush2.msra.mxu0 0.0
      %1560 = vmatprep.subr.mxu0 0.0
      %1561 = vmatpush2.msra.mxu0 0.0
      %1562 = vmatprep.subr.mxu0 0.0
      %1563 = vmatpush2.msra.mxu0 0.0
      %1564 = vmatprep.subr.mxu0 0.0
      %1565 = vmatpush2.msra.mxu0 0.0
      %1566 = vmatprep.subr.mxu0 0.0
      %1567 = vmatpush2.msra.mxu0 0.0
      %1568 = vmatprep.subr.mxu0 0.0
      %1569 = vmatpush2.msra.mxu0 0.0
      %1570 = vmatprep.subr.mxu0 0.0
      %1571 = vmatpush2.msra.mxu0 0.0
      %1572 = vmatprep.subr.mxu0 0.0
      %1573 = vmatpush2.msra.mxu0 0.0
      %1574 = vmatprep.subr.mxu0 0.0
      %1575 = vmatpush2.msra.mxu0 0.0
      %1576 = vmatprep.subr.mxu0 0.0
      %1577 = vmatpush2.msra.mxu0 0.0
      %1578 = vmatprep.subr.mxu0 0.0
      %1579 = vmatpush2.msra.mxu0 0.0
      %1580 = vmatprep.mubr.f32.mxu0 0.0
      %1581 = vmatmul.mubr.f32.gmra.mxu0 %v1514
      %v1582 = vpop.f32.mrf.mxu0
      %v1583 = vadd.f32 0.0, %v1582
      %v1584 = vpop.f32.mrf.mxu0
      %1585 = vdwg.mxu0
      %1586 = vrot.lane.b32.xlu0 %v733, 64
      %v1587 = vpop.permute.xlu0 %1586
      %v1590 = vsel %vm744, %v1280, 0
      %1592 = vmatprep.subr.mxu0 0.0
      %1593 = vmatpush1.msra.mxu0 0.0
      %1594 = vmatprep.subr.mxu0 0.0
      %1595 = vmatpush1.msra.mxu0 0.0
      %1596 = vmatprep.subr.mxu0 0.0
      %1597 = vmatpush1.msra.mxu0 0.0
      %1598 = vmatprep.subr.mxu0 0.0
      %1599 = vmatpush1.msra.mxu0 0.0
      %1600 = vmatprep.subr.mxu0 0.0
      %1601 = vmatpush1.msra.mxu0 0.0
      %1602 = vmatprep.subr.mxu0 0.0
      %1603 = vmatpush1.msra.mxu0 0.0
      %1604 = vmatprep.subr.mxu0 0.0
      %1605 = vmatpush1.msra.mxu0 0.0
      %1606 = vmatprep.subr.mxu0 0.0
      %1607 = vmatpush1.msra.mxu0 0.0
      %1608 = vmatprep.subr.mxu0 0.0
      %1609 = vmatpush1.msra.mxu0 0.0
      %1610 = vmatprep.subr.mxu0 0.0
      %1611 = vmatpush1.msra.mxu0 0.0
      %1612 = vmatprep.subr.mxu0 0.0
      %1613 = vmatpush1.msra.mxu0 0.0
      %1614 = vmatprep.subr.mxu0 0.0
      %1615 = vmatpush1.msra.mxu0 0.0
      %1616 = vmatprep.subr.mxu0 0.0
      %1617 = vmatpush1.msra.mxu0 0.0
      %1618 = vmatprep.subr.mxu0 0.0
      %1619 = vmatpush1.msra.mxu0 0.0
      %1620 = vmatprep.subr.mxu0 0.0
      %1621 = vmatpush1.msra.mxu0 0.0
      %1622 = vmatprep.subr.mxu0 0.0
      %1623 = vmatpush1.msra.mxu0 %v1587
      %1624 = vmatprep.subr.mxu0 0.0
      %1625 = vmatpush2.msra.mxu0 0.0
      %1626 = vmatprep.subr.mxu0 0.0
      %1627 = vmatpush2.msra.mxu0 0.0
      %1628 = vmatprep.subr.mxu0 0.0
      %1629 = vmatpush2.msra.mxu0 0.0
      %1630 = vmatprep.subr.mxu0 0.0
      %1631 = vmatpush2.msra.mxu0 0.0
      %1632 = vmatprep.subr.mxu0 0.0
      %1633 = vmatpush2.msra.mxu0 0.0
      %1634 = vmatprep.subr.mxu0 0.0
      %1635 = vmatpush2.msra.mxu0 0.0
      %1636 = vmatprep.subr.mxu0 0.0
      %1637 = vmatpush2.msra.mxu0 0.0
      %1638 = vmatprep.subr.mxu0 0.0
      %1639 = vmatpush2.msra.mxu0 0.0
      %1640 = vmatprep.subr.mxu0 0.0
      %1641 = vmatpush2.msra.mxu0 0.0
      %1642 = vmatprep.subr.mxu0 0.0
      %1643 = vmatpush2.msra.mxu0 0.0
      %1644 = vmatprep.subr.mxu0 0.0
      %1645 = vmatpush2.msra.mxu0 0.0
      %1646 = vmatprep.subr.mxu0 0.0
      %1647 = vmatpush2.msra.mxu0 0.0
      %1648 = vmatprep.subr.mxu0 0.0
      %1649 = vmatpush2.msra.mxu0 0.0
      %1650 = vmatprep.subr.mxu0 0.0
      %1651 = vmatpush2.msra.mxu0 0.0
      %1652 = vmatprep.subr.mxu0 0.0
      %1653 = vmatpush2.msra.mxu0 0.0
      %1654 = vmatprep.subr.mxu0 0.0
      %1655 = vmatpush2.msra.mxu0 0.0
      %1656 = vmatprep.mubr.f32.mxu0 0.0
      %1657 = vmatmul.mubr.f32.gmra.mxu0 %v1590
      %v1658 = vpop.f32.mrf.mxu0
      %v1659 = vadd.f32 0.0, %v1658
      %v1660 = vpop.f32.mrf.mxu0
      %1661 = vdwg.mxu0
      %1662 = vrot.lane.b32.xlu0 %v738, 64
      %v1663 = vpop.permute.xlu0 %1662
      %v1666 = vsel %vm744, %v1281, 0
      %1668 = vmatprep.subr.mxu0 0.0
      %1669 = vmatpush1.msra.mxu0 0.0
      %1670 = vmatprep.subr.mxu0 0.0
      %1671 = vmatpush1.msra.mxu0 0.0
      %1672 = vmatprep.subr.mxu0 0.0
      %1673 = vmatpush1.msra.mxu0 0.0
      %1674 = vmatprep.subr.mxu0 0.0
      %1675 = vmatpush1.msra.mxu0 0.0
      %1676 = vmatprep.subr.mxu0 0.0
      %1677 = vmatpush1.msra.mxu0 0.0
      %1678 = vmatprep.subr.mxu0 0.0
      %1679 = vmatpush1.msra.mxu0 0.0
      %1680 = vmatprep.subr.mxu0 0.0
      %1681 = vmatpush1.msra.mxu0 0.0
      %1682 = vmatprep.subr.mxu0 0.0
      %1683 = vmatpush1.msra.mxu0 0.0
      %1684 = vmatprep.subr.mxu0 0.0
      %1685 = vmatpush1.msra.mxu0 0.0
      %1686 = vmatprep.subr.mxu0 0.0
      %1687 = vmatpush1.msra.mxu0 0.0
      %1688 = vmatprep.subr.mxu0 0.0
      %1689 = vmatpush1.msra.mxu0 0.0
      %1690 = vmatprep.subr.mxu0 0.0
      %1691 = vmatpush1.msra.mxu0 0.0
      %1692 = vmatprep.subr.mxu0 0.0
      %1693 = vmatpush1.msra.mxu0 0.0
      %1694 = vmatprep.subr.mxu0 0.0
      %1695 = vmatpush1.msra.mxu0 0.0
      %1696 = vmatprep.subr.mxu0 0.0
      %1697 = vmatpush1.msra.mxu0 0.0
      %1698 = vmatprep.subr.mxu0 0.0
      %1699 = vmatpush1.msra.mxu0 %v1663
      %1700 = vmatprep.subr.mxu0 0.0
      %1701 = vmatpush2.msra.mxu0 0.0
      %1702 = vmatprep.subr.mxu0 0.0
      %1703 = vmatpush2.msra.mxu0 0.0
      %1704 = vmatprep.subr.mxu0 0.0
      %1705 = vmatpush2.msra.mxu0 0.0
      %1706 = vmatprep.subr.mxu0 0.0
      %1707 = vmatpush2.msra.mxu0 0.0
      %1708 = vmatprep.subr.mxu0 0.0
      %1709 = vmatpush2.msra.mxu0 0.0
      %1710 = vmatprep.subr.mxu0 0.0
      %1711 = vmatpush2.msra.mxu0 0.0
      %1712 = vmatprep.subr.mxu0 0.0
      %1713 = vmatpush2.msra.mxu0 0.0
      %1714 = vmatprep.subr.mxu0 0.0
      %1715 = vmatpush2.msra.mxu0 0.0
      %1716 = vmatprep.subr.mxu0 0.0
      %1717 = vmatpush2.msra.mxu0 0.0
      %1718 = vmatprep.subr.mxu0 0.0
      %1719 = vmatpush2.msra.mxu0 0.0
      %1720 = vmatprep.subr.mxu0 0.0
      %1721 = vmatpush2.msra.mxu0 0.0
      %1722 = vmatprep.subr.mxu0 0.0
      %1723 = vmatpush2.msra.mxu0 0.0
      %1724 = vmatprep.subr.mxu0 0.0
      %1725 = vmatpush2.msra.mxu0 0.0
      %1726 = vmatprep.subr.mxu0 0.0
      %1727 = vmatpush2.msra.mxu0 0.0
      %1728 = vmatprep.subr.mxu0 0.0
      %1729 = vmatpush2.msra.mxu0 0.0
      %1730 = vmatprep.subr.mxu0 0.0
      %1731 = vmatpush2.msra.mxu0 0.0
      %1732 = vmatprep.mubr.f32.mxu0 0.0
      %1733 = vmatmul.mubr.f32.gmra.mxu0 %v1666
      %v1734 = vpop.f32.mrf.mxu0
      %v1735 = vadd.f32 0.0, %v1734
      %v1736 = vpop.f32.mrf.mxu0
      %1737 = vdwg.mxu0
      %1738 = vrot.lane.b32.xlu0 %v600, 120
      %v1739 = vpop.permute.xlu0 %1738
      %1740 = vrot.lane.b32.xlu0 %v713, 88
      %v1741 = vpop.permute.xlu0 %1740
      %v1742 = vsel %vm744, %v1739, 0
      %v1744 = vsel %vm744, %v1741, 0
      %1746 = vmatprep.subr.mxu0 0.0
      %1747 = vmatpush1.xpose.msra.mxu0 0.0
      %1748 = vmatprep.subr.mxu0 0.0
      %1749 = vmatpush1.xpose.msra.mxu0 0.0
      %1750 = vmatprep.subr.mxu0 0.0
      %1751 = vmatpush1.xpose.msra.mxu0 0.0
      %1752 = vmatprep.subr.mxu0 0.0
      %1753 = vmatpush1.xpose.msra.mxu0 0.0
      %1754 = vmatprep.subr.mxu0 0.0
      %1755 = vmatpush1.xpose.msra.mxu0 0.0
      %1756 = vmatprep.subr.mxu0 0.0
      %1757 = vmatpush1.xpose.msra.mxu0 0.0
      %1758 = vmatprep.subr.mxu0 0.0
      %1759 = vmatpush1.xpose.msra.mxu0 0.0
      %1760 = vmatprep.subr.mxu0 0.0
      %1761 = vmatpush1.xpose.msra.mxu0 0.0
      %1762 = vmatprep.subr.mxu0 0.0
      %1763 = vmatpush1.xpose.msra.mxu0 0.0
      %1764 = vmatprep.subr.mxu0 0.0
      %1765 = vmatpush1.xpose.msra.mxu0 0.0
      %1766 = vmatprep.subr.mxu0 0.0
      %1767 = vmatpush1.xpose.msra.mxu0 0.0
      %1768 = vmatprep.subr.mxu0 0.0
      %1769 = vmatpush1.xpose.msra.mxu0 0.0
      %1770 = vmatprep.subr.mxu0 0.0
      %1771 = vmatpush1.xpose.msra.mxu0 0.0
      %1772 = vmatprep.subr.mxu0 0.0
      %1773 = vmatpush1.xpose.msra.mxu0 0.0
      %1774 = vmatprep.subr.mxu0 0.0
      %1775 = vmatpush1.xpose.msra.mxu0 0.0
      %1776 = vmatprep.subr.mxu0 0.0
      %1777 = vmatpush1.xpose.msra.mxu0 %v1744
      %1778 = vmatprep.subr.mxu0 0.0
      %1779 = vmatpush2.xpose.msra.mxu0 0.0
      %1780 = vmatprep.subr.mxu0 0.0
      %1781 = vmatpush2.xpose.msra.mxu0 0.0
      %1782 = vmatprep.subr.mxu0 0.0
      %1783 = vmatpush2.xpose.msra.mxu0 0.0
      %1784 = vmatprep.subr.mxu0 0.0
      %1785 = vmatpush2.xpose.msra.mxu0 0.0
      %1786 = vmatprep.subr.mxu0 0.0
      %1787 = vmatpush2.xpose.msra.mxu0 0.0
      %1788 = vmatprep.subr.mxu0 0.0
      %1789 = vmatpush2.xpose.msra.mxu0 0.0
      %1790 = vmatprep.subr.mxu0 0.0
      %1791 = vmatpush2.xpose.msra.mxu0 0.0
      %1792 = vmatprep.subr.mxu0 0.0
      %1793 = vmatpush2.xpose.msra.mxu0 0.0
      %1794 = vmatprep.subr.mxu0 0.0
      %1795 = vmatpush2.xpose.msra.mxu0 0.0
      %1796 = vmatprep.subr.mxu0 0.0
      %1797 = vmatpush2.xpose.msra.mxu0 0.0
      %1798 = vmatprep.subr.mxu0 0.0
      %1799 = vmatpush2.xpose.msra.mxu0 0.0
      %1800 = vmatprep.subr.mxu0 0.0
      %1801 = vmatpush2.xpose.msra.mxu0 0.0
      %1802 = vmatprep.subr.mxu0 0.0
      %1803 = vmatpush2.xpose.msra.mxu0 0.0
      %1804 = vmatprep.subr.mxu0 0.0
      %1805 = vmatpush2.xpose.msra.mxu0 0.0
      %1806 = vmatprep.subr.mxu0 0.0
      %1807 = vmatpush2.xpose.msra.mxu0 0.0
      %1808 = vmatprep.subr.mxu0 0.0
      %1809 = vmatpush2.xpose.msra.mxu0 0.0
      %1810 = vmatprep.mubr.f32.mxu0 0.0
      %1811 = vmatmul.mubr.f32.gmra.mxu0 %v1742
      %v1812 = vpop.f32.mrf.mxu0
      %v1813 = vadd.f32 0.0, %v1812
      %v1814 = vpop.f32.mrf.mxu0
      %1815 = vdwg.mxu0
      %1816 = vrot.lane.b32.xlu0 %v605, 120
      %v1817 = vpop.permute.xlu0 %1816
      %1818 = vrot.lane.b32.xlu0 %v718, 88
      %v1819 = vpop.permute.xlu0 %1818
      %v1820 = vsel %vm744, %v1817, 0
      %v1822 = vsel %vm744, %v1819, 0
      %1824 = vmatprep.subr.mxu0 0.0
      %1825 = vmatpush1.xpose.msra.mxu0 0.0
      %1826 = vmatprep.subr.mxu0 0.0
      %1827 = vmatpush1.xpose.msra.mxu0 0.0
      %1828 = vmatprep.subr.mxu0 0.0
      %1829 = vmatpush1.xpose.msra.mxu0 0.0
      %1830 = vmatprep.subr.mxu0 0.0
      %1831 = vmatpush1.xpose.msra.mxu0 0.0
      %1832 = vmatprep.subr.mxu0 0.0
      %1833 = vmatpush1.xpose.msra.mxu0 0.0
      %1834 = vmatprep.subr.mxu0 0.0
      %1835 = vmatpush1.xpose.msra.mxu0 0.0
      %1836 = vmatprep.subr.mxu0 0.0
      %1837 = vmatpush1.xpose.msra.mxu0 0.0
      %1838 = vmatprep.subr.mxu0 0.0
      %1839 = vmatpush1.xpose.msra.mxu0 0.0
      %1840 = vmatprep.subr.mxu0 0.0
      %1841 = vmatpush1.xpose.msra.mxu0 0.0
      %1842 = vmatprep.subr.mxu0 0.0
      %1843 = vmatpush1.xpose.msra.mxu0 0.0
      %1844 = vmatprep.subr.mxu0 0.0
      %1845 = vmatpush1.xpose.msra.mxu0 0.0
      %1846 = vmatprep.subr.mxu0 0.0
      %1847 = vmatpush1.xpose.msra.mxu0 0.0
      %1848 = vmatprep.subr.mxu0 0.0
      %1849 = vmatpush1.xpose.msra.mxu0 0.0
      %1850 = vmatprep.subr.mxu0 0.0
      %1851 = vmatpush1.xpose.msra.mxu0 0.0
      %1852 = vmatprep.subr.mxu0 0.0
      %1853 = vmatpush1.xpose.msra.mxu0 0.0
      %1854 = vmatprep.subr.mxu0 0.0
      %1855 = vmatpush1.xpose.msra.mxu0 %v1822
      %1856 = vmatprep.subr.mxu0 0.0
      %1857 = vmatpush2.xpose.msra.mxu0 0.0
      %1858 = vmatprep.subr.mxu0 0.0
      %1859 = vmatpush2.xpose.msra.mxu0 0.0
      %1860 = vmatprep.subr.mxu0 0.0
      %1861 = vmatpush2.xpose.msra.mxu0 0.0
      %1862 = vmatprep.subr.mxu0 0.0
      %1863 = vmatpush2.xpose.msra.mxu0 0.0
      %1864 = vmatprep.subr.mxu0 0.0
      %1865 = vmatpush2.xpose.msra.mxu0 0.0
      %1866 = vmatprep.subr.mxu0 0.0
      %1867 = vmatpush2.xpose.msra.mxu0 0.0
      %1868 = vmatprep.subr.mxu0 0.0
      %1869 = vmatpush2.xpose.msra.mxu0 0.0
      %1870 = vmatprep.subr.mxu0 0.0
      %1871 = vmatpush2.xpose.msra.mxu0 0.0
      %1872 = vmatprep.subr.mxu0 0.0
      %1873 = vmatpush2.xpose.msra.mxu0 0.0
      %1874 = vmatprep.subr.mxu0 0.0
      %1875 = vmatpush2.xpose.msra.mxu0 0.0
      %1876 = vmatprep.subr.mxu0 0.0
      %1877 = vmatpush2.xpose.msra.mxu0 0.0
      %1878 = vmatprep.subr.mxu0 0.0
      %1879 = vmatpush2.xpose.msra.mxu0 0.0
      %1880 = vmatprep.subr.mxu0 0.0
      %1881 = vmatpush2.xpose.msra.mxu0 0.0
      %1882 = vmatprep.subr.mxu0 0.0
      %1883 = vmatpush2.xpose.msra.mxu0 0.0
      %1884 = vmatprep.subr.mxu0 0.0
      %1885 = vmatpush2.xpose.msra.mxu0 0.0
      %1886 = vmatprep.subr.mxu0 0.0
      %1887 = vmatpush2.xpose.msra.mxu0 0.0
      %1888 = vmatprep.mubr.f32.mxu0 0.0
      %1889 = vmatmul.mubr.f32.gmra.mxu0 %v1820
      %v1890 = vpop.f32.mrf.mxu0
      %v1891 = vadd.f32 0.0, %v1890
      %v1892 = vpop.f32.mrf.mxu0
      %1893 = vdwg.mxu0
      %1894 = vrot.lane.b32.xlu0 %v610, 120
      %v1895 = vpop.permute.xlu0 %1894
      %1896 = vrot.lane.b32.xlu0 %v723, 88
      %v1897 = vpop.permute.xlu0 %1896
      %v1898 = vsel %vm744, %v1895, 0
      %v1900 = vsel %vm744, %v1897, 0
      %1902 = vmatprep.subr.mxu0 0.0
      %1903 = vmatpush1.xpose.msra.mxu0 0.0
      %1904 = vmatprep.subr.mxu0 0.0
      %1905 = vmatpush1.xpose.msra.mxu0 0.0
      %1906 = vmatprep.subr.mxu0 0.0
      %1907 = vmatpush1.xpose.msra.mxu0 0.0
      %1908 = vmatprep.subr.mxu0 0.0
      %1909 = vmatpush1.xpose.msra.mxu0 0.0
      %1910 = vmatprep.subr.mxu0 0.0
      %1911 = vmatpush1.xpose.msra.mxu0 0.0
      %1912 = vmatprep.subr.mxu0 0.0
      %1913 = vmatpush1.xpose.msra.mxu0 0.0
      %1914 = vmatprep.subr.mxu0 0.0
      %1915 = vmatpush1.xpose.msra.mxu0 0.0
      %1916 = vmatprep.subr.mxu0 0.0
      %1917 = vmatpush1.xpose.msra.mxu0 0.0
      %1918 = vmatprep.subr.mxu0 0.0
      %1919 = vmatpush1.xpose.msra.mxu0 0.0
      %1920 = vmatprep.subr.mxu0 0.0
      %1921 = vmatpush1.xpose.msra.mxu0 0.0
      %1922 = vmatprep.subr.mxu0 0.0
      %1923 = vmatpush1.xpose.msra.mxu0 0.0
      %1924 = vmatprep.subr.mxu0 0.0
      %1925 = vmatpush1.xpose.msra.mxu0 0.0
      %1926 = vmatprep.subr.mxu0 0.0
      %1927 = vmatpush1.xpose.msra.mxu0 0.0
      %1928 = vmatprep.subr.mxu0 0.0
      %1929 = vmatpush1.xpose.msra.mxu0 0.0
      %1930 = vmatprep.subr.mxu0 0.0
      %1931 = vmatpush1.xpose.msra.mxu0 0.0
      %1932 = vmatprep.subr.mxu0 0.0
      %1933 = vmatpush1.xpose.msra.mxu0 %v1900
      %1934 = vmatprep.subr.mxu0 0.0
      %1935 = vmatpush2.xpose.msra.mxu0 0.0
      %1936 = vmatprep.subr.mxu0 0.0
      %1937 = vmatpush2.xpose.msra.mxu0 0.0
      %1938 = vmatprep.subr.mxu0 0.0
      %1939 = vmatpush2.xpose.msra.mxu0 0.0
      %1940 = vmatprep.subr.mxu0 0.0
      %1941 = vmatpush2.xpose.msra.mxu0 0.0
      %1942 = vmatprep.subr.mxu0 0.0
      %1943 = vmatpush2.xpose.msra.mxu0 0.0
      %1944 = vmatprep.subr.mxu0 0.0
      %1945 = vmatpush2.xpose.msra.mxu0 0.0
      %1946 = vmatprep.subr.mxu0 0.0
      %1947 = vmatpush2.xpose.msra.mxu0 0.0
      %1948 = vmatprep.subr.mxu0 0.0
      %1949 = vmatpush2.xpose.msra.mxu0 0.0
      %1950 = vmatprep.subr.mxu0 0.0
      %1951 = vmatpush2.xpose.msra.mxu0 0.0
      %1952 = vmatprep.subr.mxu0 0.0
      %1953 = vmatpush2.xpose.msra.mxu0 0.0
      %1954 = vmatprep.subr.mxu0 0.0
      %1955 = vmatpush2.xpose.msra.mxu0 0.0
      %1956 = vmatprep.subr.mxu0 0.0
      %1957 = vmatpush2.xpose.msra.mxu0 0.0
      %1958 = vmatprep.subr.mxu0 0.0
      %1959 = vmatpush2.xpose.msra.mxu0 0.0
      %1960 = vmatprep.subr.mxu0 0.0
      %1961 = vmatpush2.xpose.msra.mxu0 0.0
      %1962 = vmatprep.subr.mxu0 0.0
      %1963 = vmatpush2.xpose.msra.mxu0 0.0
      %1964 = vmatprep.subr.mxu0 0.0
      %1965 = vmatpush2.xpose.msra.mxu0 0.0
      %1966 = vmatprep.mubr.f32.mxu0 0.0
      %1967 = vmatmul.mubr.f32.gmra.mxu0 %v1898
      %v1968 = vpop.f32.mrf.mxu0
      %v1969 = vadd.f32 0.0, %v1968
      %v1970 = vpop.f32.mrf.mxu0
      %1971 = vdwg.mxu0
      %1972 = vrot.lane.b32.xlu0 %v615, 120
      %v1973 = vpop.permute.xlu0 %1972
      %1974 = vrot.lane.b32.xlu0 %v728, 88
      %v1975 = vpop.permute.xlu0 %1974
      %v1976 = vsel %vm744, %v1973, 0
      %v1978 = vsel %vm744, %v1975, 0
      %1980 = vmatprep.subr.mxu0 0.0
      %1981 = vmatpush1.xpose.msra.mxu0 0.0
      %1982 = vmatprep.subr.mxu0 0.0
      %1983 = vmatpush1.xpose.msra.mxu0 0.0
      %1984 = vmatprep.subr.mxu0 0.0
      %1985 = vmatpush1.xpose.msra.mxu0 0.0
      %1986 = vmatprep.subr.mxu0 0.0
      %1987 = vmatpush1.xpose.msra.mxu0 0.0
      %1988 = vmatprep.subr.mxu0 0.0
      %1989 = vmatpush1.xpose.msra.mxu0 0.0
      %1990 = vmatprep.subr.mxu0 0.0
      %1991 = vmatpush1.xpose.msra.mxu0 0.0
      %1992 = vmatprep.subr.mxu0 0.0
      %1993 = vmatpush1.xpose.msra.mxu0 0.0
      %1994 = vmatprep.subr.mxu0 0.0
      %1995 = vmatpush1.xpose.msra.mxu0 0.0
      %1996 = vmatprep.subr.mxu0 0.0
      %1997 = vmatpush1.xpose.msra.mxu0 0.0
      %1998 = vmatprep.subr.mxu0 0.0
      %1999 = vmatpush1.xpose.msra.mxu0 0.0
      %2000 = vmatprep.subr.mxu0 0.0
      %2001 = vmatpush1.xpose.msra.mxu0 0.0
      %2002 = vmatprep.subr.mxu0 0.0
      %2003 = vmatpush1.xpose.msra.mxu0 0.0
      %2004 = vmatprep.subr.mxu0 0.0
      %2005 = vmatpush1.xpose.msra.mxu0 0.0
      %2006 = vmatprep.subr.mxu0 0.0
      %2007 = vmatpush1.xpose.msra.mxu0 0.0
      %2008 = vmatprep.subr.mxu0 0.0
      %2009 = vmatpush1.xpose.msra.mxu0 0.0
      %2010 = vmatprep.subr.mxu0 0.0
      %2011 = vmatpush1.xpose.msra.mxu0 %v1978
      %2012 = vmatprep.subr.mxu0 0.0
      %2013 = vmatpush2.xpose.msra.mxu0 0.0
      %2014 = vmatprep.subr.mxu0 0.0
      %2015 = vmatpush2.xpose.msra.mxu0 0.0
      %2016 = vmatprep.subr.mxu0 0.0
      %2017 = vmatpush2.xpose.msra.mxu0 0.0
      %2018 = vmatprep.subr.mxu0 0.0
      %2019 = vmatpush2.xpose.msra.mxu0 0.0
      %2020 = vmatprep.subr.mxu0 0.0
      %2021 = vmatpush2.xpose.msra.mxu0 0.0
      %2022 = vmatprep.subr.mxu0 0.0
      %2023 = vmatpush2.xpose.msra.mxu0 0.0
      %2024 = vmatprep.subr.mxu0 0.0
      %2025 = vmatpush2.xpose.msra.mxu0 0.0
      %2026 = vmatprep.subr.mxu0 0.0
      %2027 = vmatpush2.xpose.msra.mxu0 0.0
      %2028 = vmatprep.subr.mxu0 0.0
      %2029 = vmatpush2.xpose.msra.mxu0 0.0
      %2030 = vmatprep.subr.mxu0 0.0
      %2031 = vmatpush2.xpose.msra.mxu0 0.0
      %2032 = vmatprep.subr.mxu0 0.0
      %2033 = vmatpush2.xpose.msra.mxu0 0.0
      %2034 = vmatprep.subr.mxu0 0.0
      %2035 = vmatpush2.xpose.msra.mxu0 0.0
      %2036 = vmatprep.subr.mxu0 0.0
      %2037 = vmatpush2.xpose.msra.mxu0 0.0
      %2038 = vmatprep.subr.mxu0 0.0
      %2039 = vmatpush2.xpose.msra.mxu0 0.0
      %2040 = vmatprep.subr.mxu0 0.0
      %2041 = vmatpush2.xpose.msra.mxu0 0.0
      %2042 = vmatprep.subr.mxu0 0.0
      %2043 = vmatpush2.xpose.msra.mxu0 0.0
      %2044 = vmatprep.mubr.f32.mxu0 0.0
      %2045 = vmatmul.mubr.f32.gmra.mxu0 %v1976
      %v2046 = vpop.f32.mrf.mxu0
      %v2047 = vadd.f32 0.0, %v2046
      %v2048 = vpop.f32.mrf.mxu0
      %2049 = vdwg.mxu0
      %2050 = vrot.lane.b32.xlu0 %v620, 120
      %v2051 = vpop.permute.xlu0 %2050
      %2052 = vrot.lane.b32.xlu0 %v733, 88
      %v2053 = vpop.permute.xlu0 %2052
      %v2054 = vsel %vm744, %v2051, 0
      %v2056 = vsel %vm744, %v2053, 0
      %2058 = vmatprep.subr.mxu0 0.0
      %2059 = vmatpush1.xpose.msra.mxu0 0.0
      %2060 = vmatprep.subr.mxu0 0.0
      %2061 = vmatpush1.xpose.msra.mxu0 0.0
      %2062 = vmatprep.subr.mxu0 0.0
      %2063 = vmatpush1.xpose.msra.mxu0 0.0
      %2064 = vmatprep.subr.mxu0 0.0
      %2065 = vmatpush1.xpose.msra.mxu0 0.0
      %2066 = vmatprep.subr.mxu0 0.0
      %2067 = vmatpush1.xpose.msra.mxu0 0.0
      %2068 = vmatprep.subr.mxu0 0.0
      %2069 = vmatpush1.xpose.msra.mxu0 0.0
      %2070 = vmatprep.subr.mxu0 0.0
      %2071 = vmatpush1.xpose.msra.mxu0 0.0
      %2072 = vmatprep.subr.mxu0 0.0
      %2073 = vmatpush1.xpose.msra.mxu0 0.0
      %2074 = vmatprep.subr.mxu0 0.0
      %2075 = vmatpush1.xpose.msra.mxu0 0.0
      %2076 = vmatprep.subr.mxu0 0.0
      %2077 = vmatpush1.xpose.msra.mxu0 0.0
      %2078 = vmatprep.subr.mxu0 0.0
      %2079 = vmatpush1.xpose.msra.mxu0 0.0
      %2080 = vmatprep.subr.mxu0 0.0
      %2081 = vmatpush1.xpose.msra.mxu0 0.0
      %2082 = vmatprep.subr.mxu0 0.0
      %2083 = vmatpush1.xpose.msra.mxu0 0.0
      %2084 = vmatprep.subr.mxu0 0.0
      %2085 = vmatpush1.xpose.msra.mxu0 0.0
      %2086 = vmatprep.subr.mxu0 0.0
      %2087 = vmatpush1.xpose.msra.mxu0 0.0
      %2088 = vmatprep.subr.mxu0 0.0
      %2089 = vmatpush1.xpose.msra.mxu0 %v2056
      %2090 = vmatprep.subr.mxu0 0.0
      %2091 = vmatpush2.xpose.msra.mxu0 0.0
      %2092 = vmatprep.subr.mxu0 0.0
      %2093 = vmatpush2.xpose.msra.mxu0 0.0
      %2094 = vmatprep.subr.mxu0 0.0
      %2095 = vmatpush2.xpose.msra.mxu0 0.0
      %2096 = vmatprep.subr.mxu0 0.0
      %2097 = vmatpush2.xpose.msra.mxu0 0.0
      %2098 = vmatprep.subr.mxu0 0.0
      %2099 = vmatpush2.xpose.msra.mxu0 0.0
      %2100 = vmatprep.subr.mxu0 0.0
      %2101 = vmatpush2.xpose.msra.mxu0 0.0
      %2102 = vmatprep.subr.mxu0 0.0
      %2103 = vmatpush2.xpose.msra.mxu0 0.0
      %2104 = vmatprep.subr.mxu0 0.0
      %2105 = vmatpush2.xpose.msra.mxu0 0.0
      %2106 = vmatprep.subr.mxu0 0.0
      %2107 = vmatpush2.xpose.msra.mxu0 0.0
      %2108 = vmatprep.subr.mxu0 0.0
      %2109 = vmatpush2.xpose.msra.mxu0 0.0
      %2110 = vmatprep.subr.mxu0 0.0
      %2111 = vmatpush2.xpose.msra.mxu0 0.0
      %2112 = vmatprep.subr.mxu0 0.0
      %2113 = vmatpush2.xpose.msra.mxu0 0.0
      %2114 = vmatprep.subr.mxu0 0.0
      %2115 = vmatpush2.xpose.msra.mxu0 0.0
      %2116 = vmatprep.subr.mxu0 0.0
      %2117 = vmatpush2.xpose.msra.mxu0 0.0
      %2118 = vmatprep.subr.mxu0 0.0
      %2119 = vmatpush2.xpose.msra.mxu0 0.0
      %2120 = vmatprep.subr.mxu0 0.0
      %2121 = vmatpush2.xpose.msra.mxu0 0.0
      %2122 = vmatprep.mubr.f32.mxu0 0.0
      %2123 = vmatmul.mubr.f32.gmra.mxu0 %v2054
      %v2124 = vpop.f32.mrf.mxu0
      %v2125 = vadd.f32 0.0, %v2124
      %v2126 = vpop.f32.mrf.mxu0
      %2127 = vdwg.mxu0
      %2128 = vrot.lane.b32.xlu0 %v625, 120
      %v2129 = vpop.permute.xlu0 %2128
      %2130 = vrot.lane.b32.xlu0 %v738, 88
      %v2131 = vpop.permute.xlu0 %2130
      %v2132 = vsel %vm744, %v2129, 0
      %v2134 = vsel %vm744, %v2131, 0
      %2136 = vmatprep.subr.mxu0 0.0
      %2137 = vmatpush1.xpose.msra.mxu0 0.0
      %2138 = vmatprep.subr.mxu0 0.0
      %2139 = vmatpush1.xpose.msra.mxu0 0.0
      %2140 = vmatprep.subr.mxu0 0.0
      %2141 = vmatpush1.xpose.msra.mxu0 0.0
      %2142 = vmatprep.subr.mxu0 0.0
      %2143 = vmatpush1.xpose.msra.mxu0 0.0
      %2144 = vmatprep.subr.mxu0 0.0
      %2145 = vmatpush1.xpose.msra.mxu0 0.0
      %2146 = vmatprep.subr.mxu0 0.0
      %2147 = vmatpush1.xpose.msra.mxu0 0.0
      %2148 = vmatprep.subr.mxu0 0.0
      %2149 = vmatpush1.xpose.msra.mxu0 0.0
      %2150 = vmatprep.subr.mxu0 0.0
      %2151 = vmatpush1.xpose.msra.mxu0 0.0
      %2152 = vmatprep.subr.mxu0 0.0
      %2153 = vmatpush1.xpose.msra.mxu0 0.0
      %2154 = vmatprep.subr.mxu0 0.0
      %2155 = vmatpush1.xpose.msra.mxu0 0.0
      %2156 = vmatprep.subr.mxu0 0.0
      %2157 = vmatpush1.xpose.msra.mxu0 0.0
      %2158 = vmatprep.subr.mxu0 0.0
      %2159 = vmatpush1.xpose.msra.mxu0 0.0
      %2160 = vmatprep.subr.mxu0 0.0
      %2161 = vmatpush1.xpose.msra.mxu0 0.0
      %2162 = vmatprep.subr.mxu0 0.0
      %2163 = vmatpush1.xpose.msra.mxu0 0.0
      %2164 = vmatprep.subr.mxu0 0.0
      %2165 = vmatpush1.xpose.msra.mxu0 0.0
      %2166 = vmatprep.subr.mxu0 0.0
      %2167 = vmatpush1.xpose.msra.mxu0 %v2134
      %2168 = vmatprep.subr.mxu0 0.0
      %2169 = vmatpush2.xpose.msra.mxu0 0.0
      %2170 = vmatprep.subr.mxu0 0.0
      %2171 = vmatpush2.xpose.msra.mxu0 0.0
      %2172 = vmatprep.subr.mxu0 0.0
      %2173 = vmatpush2.xpose.msra.mxu0 0.0
      %2174 = vmatprep.subr.mxu0 0.0
      %2175 = vmatpush2.xpose.msra.mxu0 0.0
      %2176 = vmatprep.subr.mxu0 0.0
      %2177 = vmatpush2.xpose.msra.mxu0 0.0
      %2178 = vmatprep.subr.mxu0 0.0
      %2179 = vmatpush2.xpose.msra.mxu0 0.0
      %2180 = vmatprep.subr.mxu0 0.0
      %2181 = vmatpush2.xpose.msra.mxu0 0.0
      %2182 = vmatprep.subr.mxu0 0.0
      %2183 = vmatpush2.xpose.msra.mxu0 0.0
      %2184 = vmatprep.subr.mxu0 0.0
      %2185 = vmatpush2.xpose.msra.mxu0 0.0
      %2186 = vmatprep.subr.mxu0 0.0
      %2187 = vmatpush2.xpose.msra.mxu0 0.0
      %2188 = vmatprep.subr.mxu0 0.0
      %2189 = vmatpush2.xpose.msra.mxu0 0.0
      %2190 = vmatprep.subr.mxu0 0.0
      %2191 = vmatpush2.xpose.msra.mxu0 0.0
      %2192 = vmatprep.subr.mxu0 0.0
      %2193 = vmatpush2.xpose.msra.mxu0 0.0
      %2194 = vmatprep.subr.mxu0 0.0
      %2195 = vmatpush2.xpose.msra.mxu0 0.0
      %2196 = vmatprep.subr.mxu0 0.0
      %2197 = vmatpush2.xpose.msra.mxu0 0.0
      %2198 = vmatprep.subr.mxu0 0.0
      %2199 = vmatpush2.xpose.msra.mxu0 0.0
      %2200 = vmatprep.mubr.f32.mxu0 0.0
      %2201 = vmatmul.mubr.f32.gmra.mxu0 %v2132
      %v2202 = vpop.f32.mrf.mxu0
      %v2203 = vadd.f32 0.0, %v2202
      %v2204 = vpop.f32.mrf.mxu0
      %2205 = vdwg.mxu0
      %v2206 = vmul.f32 %v1813, 0.35355338
      %v2207 = vmul.f32 %v1891, 0.35355338
      %v2208 = vmul.f32 %v1969, 0.35355338
      %v2209 = vmul.f32 %v2047, 0.35355338
      %v2210 = vmul.f32 %v2125, 0.35355338
      %v2211 = vmul.f32 %v2203, 0.35355338
      %v2212 = vsel %vm744, %v2206, -inf
      %2213 = vmax.xlane.f32.xlu0 %v2212
      %v2214 = vpop.xlane.xlu0 %2213
      %v2215 = vsel %vm744, %v2207, -inf
      %2216 = vmax.xlane.f32.xlu0 %v2215
      %v2217 = vpop.xlane.xlu0 %2216
      %v2218 = vsel %vm744, %v2208, -inf
      %2219 = vmax.xlane.f32.xlu0 %v2218
      %v2220 = vpop.xlane.xlu0 %2219
      %v2221 = vsel %vm744, %v2209, -inf
      %2222 = vmax.xlane.f32.xlu0 %v2221
      %v2223 = vpop.xlane.xlu0 %2222
      %v2224 = vsel %vm744, %v2210, -inf
      %2225 = vmax.xlane.f32.xlu0 %v2224
      %v2226 = vpop.xlane.xlu0 %2225
      %v2227 = vsel %vm744, %v2211, -inf
      %2228 = vmax.xlane.f32.xlu0 %v2227
      %v2229 = vpop.xlane.xlu0 %2228
      %v2230 = vsub.f32 %v2206, %v2214
      %v2231 = vsub.f32 %v2207, %v2217
      %v2232 = vsub.f32 %v2208, %v2220
      %v2233 = vsub.f32 %v2209, %v2223
      %v2234 = vsub.f32 %v2210, %v2226
      %v2235 = vsub.f32 %v2211, %v2229
      %v2236 = vmul.f32 %v2230, 1.442695
      %v2237 = vpow.pop %v2236
      %v2238 = vmul.f32 %v2231, 1.442695
      %v2239 = vpow.pop %v2238
      %v2240 = vmul.f32 %v2232, 1.442695
      %v2241 = vpow.pop %v2240
      %v2242 = vmul.f32 %v2233, 1.442695
      %v2243 = vpow.pop %v2242
      %v2244 = vmul.f32 %v2234, 1.442695
      %v2245 = vpow.pop %v2244
      %v2246 = vmul.f32 %v2235, 1.442695
      %v2247 = vpow.pop %v2246
      %v2248 = vsel %vm744, %v2237, 0.0
      %2249 = vadd.xlane.f32.xlu0 %v2248
      %v2250 = vpop.xlane.xlu0 %2249
      %v2251 = vsel %vm744, %v2239, 0.0
      %2252 = vadd.xlane.f32.xlu0 %v2251
      %v2253 = vpop.xlane.xlu0 %2252
      %v2254 = vsel %vm744, %v2241, 0.0
      %2255 = vadd.xlane.f32.xlu0 %v2254
      %v2256 = vpop.xlane.xlu0 %2255
      %v2257 = vsel %vm744, %v2243, 0.0
      %2258 = vadd.xlane.f32.xlu0 %v2257
      %v2259 = vpop.xlane.xlu0 %2258
      %v2260 = vsel %vm744, %v2245, 0.0
      %2261 = vadd.xlane.f32.xlu0 %v2260
      %v2262 = vpop.xlane.xlu0 %2261
      %v2263 = vsel %vm744, %v2247, 0.0
      %2264 = vadd.xlane.f32.xlu0 %v2263
      %v2265 = vpop.xlane.xlu0 %2264
      %v2266 = vrcp.pop %v2250
      %v2267 = vrcp.pop %v2253
      %v2268 = vrcp.pop %v2256
      %v2269 = vrcp.pop %v2259
      %v2270 = vrcp.pop %v2262
      %v2271 = vrcp.pop %v2265
      %v2272 = vmul.f32 %v2237, %v2266
      %v2273 = vmul.f32 %v2239, %v2267
      %v2274 = vmul.f32 %v2241, %v2268
      %v2275 = vmul.f32 %v2243, %v2269
      %v2276 = vmul.f32 %v2245, %v2270
      %v2277 = vmul.f32 %v2247, %v2271
      %2278 = vrot.lane.b32.xlu0 %v713, 56
      %v2279 = vpop.permute.xlu0 %2278
      %v2282 = vsel %vm744, %v2272, 0
      %2284 = vmatprep.subr.mxu0 0.0
      %2285 = vmatpush1.msra.mxu0 0.0
      %2286 = vmatprep.subr.mxu0 0.0
      %2287 = vmatpush1.msra.mxu0 0.0
      %2288 = vmatprep.subr.mxu0 0.0
      %2289 = vmatpush1.msra.mxu0 0.0
      %2290 = vmatprep.subr.mxu0 0.0
      %2291 = vmatpush1.msra.mxu0 0.0
      %2292 = vmatprep.subr.mxu0 0.0
      %2293 = vmatpush1.msra.mxu0 0.0
      %2294 = vmatprep.subr.mxu0 0.0
      %2295 = vmatpush1.msra.mxu0 0.0
      %2296 = vmatprep.subr.mxu0 0.0
      %2297 = vmatpush1.msra.mxu0 0.0
      %2298 = vmatprep.subr.mxu0 0.0
      %2299 = vmatpush1.msra.mxu0 0.0
      %2300 = vmatprep.subr.mxu0 0.0
      %2301 = vmatpush1.msra.mxu0 0.0
      %2302 = vmatprep.subr.mxu0 0.0
      %2303 = vmatpush1.msra.mxu0 0.0
      %2304 = vmatprep.subr.mxu0 0.0
      %2305 = vmatpush1.msra.mxu0 0.0
      %2306 = vmatprep.subr.mxu0 0.0
      %2307 = vmatpush1.msra.mxu0 0.0
      %2308 = vmatprep.subr.mxu0 0.0
      %2309 = vmatpush1.msra.mxu0 0.0
      %2310 = vmatprep.subr.mxu0 0.0
      %2311 = vmatpush1.msra.mxu0 0.0
      %2312 = vmatprep.subr.mxu0 0.0
      %2313 = vmatpush1.msra.mxu0 0.0
      %2314 = vmatprep.subr.mxu0 0.0
      %2315 = vmatpush1.msra.mxu0 %v2279
      %2316 = vmatprep.subr.mxu0 0.0
      %2317 = vmatpush2.msra.mxu0 0.0
      %2318 = vmatprep.subr.mxu0 0.0
      %2319 = vmatpush2.msra.mxu0 0.0
      %2320 = vmatprep.subr.mxu0 0.0
      %2321 = vmatpush2.msra.mxu0 0.0
      %2322 = vmatprep.subr.mxu0 0.0
      %2323 = vmatpush2.msra.mxu0 0.0
      %2324 = vmatprep.subr.mxu0 0.0
      %2325 = vmatpush2.msra.mxu0 0.0
      %2326 = vmatprep.subr.mxu0 0.0
      %2327 = vmatpush2.msra.mxu0 0.0
      %2328 = vmatprep.subr.mxu0 0.0
      %2329 = vmatpush2.msra.mxu0 0.0
      %2330 = vmatprep.subr.mxu0 0.0
      %2331 = vmatpush2.msra.mxu0 0.0
      %2332 = vmatprep.subr.mxu0 0.0
      %2333 = vmatpush2.msra.mxu0 0.0
      %2334 = vmatprep.subr.mxu0 0.0
      %2335 = vmatpush2.msra.mxu0 0.0
      %2336 = vmatprep.subr.mxu0 0.0
      %2337 = vmatpush2.msra.mxu0 0.0
      %2338 = vmatprep.subr.mxu0 0.0
      %2339 = vmatpush2.msra.mxu0 0.0
      %2340 = vmatprep.subr.mxu0 0.0
      %2341 = vmatpush2.msra.mxu0 0.0
      %2342 = vmatprep.subr.mxu0 0.0
      %2343 = vmatpush2.msra.mxu0 0.0
      %2344 = vmatprep.subr.mxu0 0.0
      %2345 = vmatpush2.msra.mxu0 0.0
      %2346 = vmatprep.subr.mxu0 0.0
      %2347 = vmatpush2.msra.mxu0 0.0
      %2348 = vmatprep.mubr.f32.mxu0 0.0
      %2349 = vmatmul.mubr.f32.gmra.mxu0 %v2282
      %v2350 = vpop.f32.mrf.mxu0
      %v2351 = vadd.f32 0.0, %v2350
      %v2352 = vpop.f32.mrf.mxu0
      %2353 = vdwg.mxu0
      %2354 = vrot.lane.b32.xlu0 %v718, 56
      %v2355 = vpop.permute.xlu0 %2354
      %v2358 = vsel %vm744, %v2273, 0
      %2360 = vmatprep.subr.mxu0 0.0
      %2361 = vmatpush1.msra.mxu0 0.0
      %2362 = vmatprep.subr.mxu0 0.0
      %2363 = vmatpush1.msra.mxu0 0.0
      %2364 = vmatprep.subr.mxu0 0.0
      %2365 = vmatpush1.msra.mxu0 0.0
      %2366 = vmatprep.subr.mxu0 0.0
      %2367 = vmatpush1.msra.mxu0 0.0
      %2368 = vmatprep.subr.mxu0 0.0
      %2369 = vmatpush1.msra.mxu0 0.0
      %2370 = vmatprep.subr.mxu0 0.0
      %2371 = vmatpush1.msra.mxu0 0.0
      %2372 = vmatprep.subr.mxu0 0.0
      %2373 = vmatpush1.msra.mxu0 0.0
      %2374 = vmatprep.subr.mxu0 0.0
      %2375 = vmatpush1.msra.mxu0 0.0
      %2376 = vmatprep.subr.mxu0 0.0
      %2377 = vmatpush1.msra.mxu0 0.0
      %2378 = vmatprep.subr.mxu0 0.0
      %2379 = vmatpush1.msra.mxu0 0.0
      %2380 = vmatprep.subr.mxu0 0.0
      %2381 = vmatpush1.msra.mxu0 0.0
      %2382 = vmatprep.subr.mxu0 0.0
      %2383 = vmatpush1.msra.mxu0 0.0
      %2384 = vmatprep.subr.mxu0 0.0
      %2385 = vmatpush1.msra.mxu0 0.0
      %2386 = vmatprep.subr.mxu0 0.0
      %2387 = vmatpush1.msra.mxu0 0.0
      %2388 = vmatprep.subr.mxu0 0.0
      %2389 = vmatpush1.msra.mxu0 0.0
      %2390 = vmatprep.subr.mxu0 0.0
      %2391 = vmatpush1.msra.mxu0 %v2355
      %2392 = vmatprep.subr.mxu0 0.0
      %2393 = vmatpush2.msra.mxu0 0.0
      %2394 = vmatprep.subr.mxu0 0.0
      %2395 = vmatpush2.msra.mxu0 0.0
      %2396 = vmatprep.subr.mxu0 0.0
      %2397 = vmatpush2.msra.mxu0 0.0
      %2398 = vmatprep.subr.mxu0 0.0
      %2399 = vmatpush2.msra.mxu0 0.0
      %2400 = vmatprep.subr.mxu0 0.0
      %2401 = vmatpush2.msra.mxu0 0.0
      %2402 = vmatprep.subr.mxu0 0.0
      %2403 = vmatpush2.msra.mxu0 0.0
      %2404 = vmatprep.subr.mxu0 0.0
      %2405 = vmatpush2.msra.mxu0 0.0
      %2406 = vmatprep.subr.mxu0 0.0
      %2407 = vmatpush2.msra.mxu0 0.0
      %2408 = vmatprep.subr.mxu0 0.0
      %2409 = vmatpush2.msra.mxu0 0.0
      %2410 = vmatprep.subr.mxu0 0.0
      %2411 = vmatpush2.msra.mxu0 0.0
      %2412 = vmatprep.subr.mxu0 0.0
      %2413 = vmatpush2.msra.mxu0 0.0
      %2414 = vmatprep.subr.mxu0 0.0
      %2415 = vmatpush2.msra.mxu0 0.0
      %2416 = vmatprep.subr.mxu0 0.0
      %2417 = vmatpush2.msra.mxu0 0.0
      %2418 = vmatprep.subr.mxu0 0.0
      %2419 = vmatpush2.msra.mxu0 0.0
      %2420 = vmatprep.subr.mxu0 0.0
      %2421 = vmatpush2.msra.mxu0 0.0
      %2422 = vmatprep.subr.mxu0 0.0
      %2423 = vmatpush2.msra.mxu0 0.0
      %2424 = vmatprep.mubr.f32.mxu0 0.0
      %2425 = vmatmul.mubr.f32.gmra.mxu0 %v2358
      %v2426 = vpop.f32.mrf.mxu0
      %v2427 = vadd.f32 0.0, %v2426
      %v2428 = vpop.f32.mrf.mxu0
      %2429 = vdwg.mxu0
      %2430 = vrot.lane.b32.xlu0 %v723, 56
      %v2431 = vpop.permute.xlu0 %2430
      %v2434 = vsel %vm744, %v2274, 0
      %2436 = vmatprep.subr.mxu0 0.0
      %2437 = vmatpush1.msra.mxu0 0.0
      %2438 = vmatprep.subr.mxu0 0.0
      %2439 = vmatpush1.msra.mxu0 0.0
      %2440 = vmatprep.subr.mxu0 0.0
      %2441 = vmatpush1.msra.mxu0 0.0
      %2442 = vmatprep.subr.mxu0 0.0
      %2443 = vmatpush1.msra.mxu0 0.0
      %2444 = vmatprep.subr.mxu0 0.0
      %2445 = vmatpush1.msra.mxu0 0.0
      %2446 = vmatprep.subr.mxu0 0.0
      %2447 = vmatpush1.msra.mxu0 0.0
      %2448 = vmatprep.subr.mxu0 0.0
      %2449 = vmatpush1.msra.mxu0 0.0
      %2450 = vmatprep.subr.mxu0 0.0
      %2451 = vmatpush1.msra.mxu0 0.0
      %2452 = vmatprep.subr.mxu0 0.0
      %2453 = vmatpush1.msra.mxu0 0.0
      %2454 = vmatprep.subr.mxu0 0.0
      %2455 = vmatpush1.msra.mxu0 0.0
      %2456 = vmatprep.subr.mxu0 0.0
      %2457 = vmatpush1.msra.mxu0 0.0
      %2458 = vmatprep.subr.mxu0 0.0
      %2459 = vmatpush1.msra.mxu0 0.0
      %2460 = vmatprep.subr.mxu0 0.0
      %2461 = vmatpush1.msra.mxu0 0.0
      %2462 = vmatprep.subr.mxu0 0.0
      %2463 = vmatpush1.msra.mxu0 0.0
      %2464 = vmatprep.subr.mxu0 0.0
      %2465 = vmatpush1.msra.mxu0 0.0
      %2466 = vmatprep.subr.mxu0 0.0
      %2467 = vmatpush1.msra.mxu0 %v2431
      %2468 = vmatprep.subr.mxu0 0.0
      %2469 = vmatpush2.msra.mxu0 0.0
      %2470 = vmatprep.subr.mxu0 0.0
      %2471 = vmatpush2.msra.mxu0 0.0
      %2472 = vmatprep.subr.mxu0 0.0
      %2473 = vmatpush2.msra.mxu0 0.0
      %2474 = vmatprep.subr.mxu0 0.0
      %2475 = vmatpush2.msra.mxu0 0.0
      %2476 = vmatprep.subr.mxu0 0.0
      %2477 = vmatpush2.msra.mxu0 0.0
      %2478 = vmatprep.subr.mxu0 0.0
      %2479 = vmatpush2.msra.mxu0 0.0
      %2480 = vmatprep.subr.mxu0 0.0
      %2481 = vmatpush2.msra.mxu0 0.0
      %2482 = vmatprep.subr.mxu0 0.0
      %2483 = vmatpush2.msra.mxu0 0.0
      %2484 = vmatprep.subr.mxu0 0.0
      %2485 = vmatpush2.msra.mxu0 0.0
      %2486 = vmatprep.subr.mxu0 0.0
      %2487 = vmatpush2.msra.mxu0 0.0
      %2488 = vmatprep.subr.mxu0 0.0
      %2489 = vmatpush2.msra.mxu0 0.0
      %2490 = vmatprep.subr.mxu0 0.0
      %2491 = vmatpush2.msra.mxu0 0.0
      %2492 = vmatprep.subr.mxu0 0.0
      %2493 = vmatpush2.msra.mxu0 0.0
      %2494 = vmatprep.subr.mxu0 0.0
      %2495 = vmatpush2.msra.mxu0 0.0
      %2496 = vmatprep.subr.mxu0 0.0
      %2497 = vmatpush2.msra.mxu0 0.0
      %2498 = vmatprep.subr.mxu0 0.0
      %2499 = vmatpush2.msra.mxu0 0.0
      %2500 = vmatprep.mubr.f32.mxu0 0.0
      %2501 = vmatmul.mubr.f32.gmra.mxu0 %v2434
      %v2502 = vpop.f32.mrf.mxu0
      %v2503 = vadd.f32 0.0, %v2502
      %v2504 = vpop.f32.mrf.mxu0
      %2505 = vdwg.mxu0
      %2506 = vrot.lane.b32.xlu0 %v728, 56
      %v2507 = vpop.permute.xlu0 %2506
      %v2510 = vsel %vm744, %v2275, 0
      %2512 = vmatprep.subr.mxu0 0.0
      %2513 = vmatpush1.msra.mxu0 0.0
      %2514 = vmatprep.subr.mxu0 0.0
      %2515 = vmatpush1.msra.mxu0 0.0
      %2516 = vmatprep.subr.mxu0 0.0
      %2517 = vmatpush1.msra.mxu0 0.0
      %2518 = vmatprep.subr.mxu0 0.0
      %2519 = vmatpush1.msra.mxu0 0.0
      %2520 = vmatprep.subr.mxu0 0.0
      %2521 = vmatpush1.msra.mxu0 0.0
      %2522 = vmatprep.subr.mxu0 0.0
      %2523 = vmatpush1.msra.mxu0 0.0
      %2524 = vmatprep.subr.mxu0 0.0
      %2525 = vmatpush1.msra.mxu0 0.0
      %2526 = vmatprep.subr.mxu0 0.0
      %2527 = vmatpush1.msra.mxu0 0.0
      %2528 = vmatprep.subr.mxu0 0.0
      %2529 = vmatpush1.msra.mxu0 0.0
      %2530 = vmatprep.subr.mxu0 0.0
      %2531 = vmatpush1.msra.mxu0 0.0
      %2532 = vmatprep.subr.mxu0 0.0
      %2533 = vmatpush1.msra.mxu0 0.0
      %2534 = vmatprep.subr.mxu0 0.0
      %2535 = vmatpush1.msra.mxu0 0.0
      %2536 = vmatprep.subr.mxu0 0.0
      %2537 = vmatpush1.msra.mxu0 0.0
      %2538 = vmatprep.subr.mxu0 0.0
      %2539 = vmatpush1.msra.mxu0 0.0
      %2540 = vmatprep.subr.mxu0 0.0
      %2541 = vmatpush1.msra.mxu0 0.0
      %2542 = vmatprep.subr.mxu0 0.0
      %2543 = vmatpush1.msra.mxu0 %v2507
      %2544 = vmatprep.subr.mxu0 0.0
      %2545 = vmatpush2.msra.mxu0 0.0
      %2546 = vmatprep.subr.mxu0 0.0
      %2547 = vmatpush2.msra.mxu0 0.0
      %2548 = vmatprep.subr.mxu0 0.0
      %2549 = vmatpush2.msra.mxu0 0.0
      %2550 = vmatprep.subr.mxu0 0.0
      %2551 = vmatpush2.msra.mxu0 0.0
      %2552 = vmatprep.subr.mxu0 0.0
      %2553 = vmatpush2.msra.mxu0 0.0
      %2554 = vmatprep.subr.mxu0 0.0
      %2555 = vmatpush2.msra.mxu0 0.0
      %2556 = vmatprep.subr.mxu0 0.0
      %2557 = vmatpush2.msra.mxu0 0.0
      %2558 = vmatprep.subr.mxu0 0.0
      %2559 = vmatpush2.msra.mxu0 0.0
      %2560 = vmatprep.subr.mxu0 0.0
      %2561 = vmatpush2.msra.mxu0 0.0
      %2562 = vmatprep.subr.mxu0 0.0
      %2563 = vmatpush2.msra.mxu0 0.0
      %2564 = vmatprep.subr.mxu0 0.0
      %2565 = vmatpush2.msra.mxu0 0.0
      %2566 = vmatprep.subr.mxu0 0.0
      %2567 = vmatpush2.msra.mxu0 0.0
      %2568 = vmatprep.subr.mxu0 0.0
      %2569 = vmatpush2.msra.mxu0 0.0
      %2570 = vmatprep.subr.mxu0 0.0
      %2571 = vmatpush2.msra.mxu0 0.0
      %2572 = vmatprep.subr.mxu0 0.0
      %2573 = vmatpush2.msra.mxu0 0.0
      %2574 = vmatprep.subr.mxu0 0.0
      %2575 = vmatpush2.msra.mxu0 0.0
      %2576 = vmatprep.mubr.f32.mxu0 0.0
      %2577 = vmatmul.mubr.f32.gmra.mxu0 %v2510
      %v2578 = vpop.f32.mrf.mxu0
      %v2579 = vadd.f32 0.0, %v2578
      %v2580 = vpop.f32.mrf.mxu0
      %2581 = vdwg.mxu0
      %2582 = vrot.lane.b32.xlu0 %v733, 56
      %v2583 = vpop.permute.xlu0 %2582
      %v2586 = vsel %vm744, %v2276, 0
      %2588 = vmatprep.subr.mxu0 0.0
      %2589 = vmatpush1.msra.mxu0 0.0
      %2590 = vmatprep.subr.mxu0 0.0
      %2591 = vmatpush1.msra.mxu0 0.0
      %2592 = vmatprep.subr.mxu0 0.0
      %2593 = vmatpush1.msra.mxu0 0.0
      %2594 = vmatprep.subr.mxu0 0.0
      %2595 = vmatpush1.msra.mxu0 0.0
      %2596 = vmatprep.subr.mxu0 0.0
      %2597 = vmatpush1.msra.mxu0 0.0
      %2598 = vmatprep.subr.mxu0 0.0
      %2599 = vmatpush1.msra.mxu0 0.0
      %2600 = vmatprep.subr.mxu0 0.0
      %2601 = vmatpush1.msra.mxu0 0.0
      %2602 = vmatprep.subr.mxu0 0.0
      %2603 = vmatpush1.msra.mxu0 0.0
      %2604 = vmatprep.subr.mxu0 0.0
      %2605 = vmatpush1.msra.mxu0 0.0
      %2606 = vmatprep.subr.mxu0 0.0
      %2607 = vmatpush1.msra.mxu0 0.0
      %2608 = vmatprep.subr.mxu0 0.0
      %2609 = vmatpush1.msra.mxu0 0.0
      %2610 = vmatprep.subr.mxu0 0.0
      %2611 = vmatpush1.msra.mxu0 0.0
      %2612 = vmatprep.subr.mxu0 0.0
      %2613 = vmatpush1.msra.mxu0 0.0
      %2614 = vmatprep.subr.mxu0 0.0
      %2615 = vmatpush1.msra.mxu0 0.0
      %2616 = vmatprep.subr.mxu0 0.0
      %2617 = vmatpush1.msra.mxu0 0.0
      %2618 = vmatprep.subr.mxu0 0.0
      %2619 = vmatpush1.msra.mxu0 %v2583
      %2620 = vmatprep.subr.mxu0 0.0
      %2621 = vmatpush2.msra.mxu0 0.0
      %2622 = vmatprep.subr.mxu0 0.0
      %2623 = vmatpush2.msra.mxu0 0.0
      %2624 = vmatprep.subr.mxu0 0.0
      %2625 = vmatpush2.msra.mxu0 0.0
      %2626 = vmatprep.subr.mxu0 0.0
      %2627 = vmatpush2.msra.mxu0 0.0
      %2628 = vmatprep.subr.mxu0 0.0
      %2629 = vmatpush2.msra.mxu0 0.0
      %2630 = vmatprep.subr.mxu0 0.0
      %2631 = vmatpush2.msra.mxu0 0.0
      %2632 = vmatprep.subr.mxu0 0.0
      %2633 = vmatpush2.msra.mxu0 0.0
      %2634 = vmatprep.subr.mxu0 0.0
      %2635 = vmatpush2.msra.mxu0 0.0
      %2636 = vmatprep.subr.mxu0 0.0
      %2637 = vmatpush2.msra.mxu0 0.0
      %2638 = vmatprep.subr.mxu0 0.0
      %2639 = vmatpush2.msra.mxu0 0.0
      %2640 = vmatprep.subr.mxu0 0.0
      %2641 = vmatpush2.msra.mxu0 0.0
      %2642 = vmatprep.subr.mxu0 0.0
      %2643 = vmatpush2.msra.mxu0 0.0
      %2644 = vmatprep.subr.mxu0 0.0
      %2645 = vmatpush2.msra.mxu0 0.0
      %2646 = vmatprep.subr.mxu0 0.0
      %2647 = vmatpush2.msra.mxu0 0.0
      %2648 = vmatprep.subr.mxu0 0.0
      %2649 = vmatpush2.msra.mxu0 0.0
      %2650 = vmatprep.subr.mxu0 0.0
      %2651 = vmatpush2.msra.mxu0 0.0
      %2652 = vmatprep.mubr.f32.mxu0 0.0
      %2653 = vmatmul.mubr.f32.gmra.mxu0 %v2586
      %v2654 = vpop.f32.mrf.mxu0
      %v2655 = vadd.f32 0.0, %v2654
      %v2656 = vpop.f32.mrf.mxu0
      %2657 = vdwg.mxu0
      %2658 = vrot.lane.b32.xlu0 %v738, 56
      %v2659 = vpop.permute.xlu0 %2658
      %v2662 = vsel %vm744, %v2277, 0
      %2664 = vmatprep.subr.mxu0 0.0
      %2665 = vmatpush1.msra.mxu0 0.0
      %2666 = vmatprep.subr.mxu0 0.0
      %2667 = vmatpush1.msra.mxu0 0.0
      %2668 = vmatprep.subr.mxu0 0.0
      %2669 = vmatpush1.msra.mxu0 0.0
      %2670 = vmatprep.subr.mxu0 0.0
      %2671 = vmatpush1.msra.mxu0 0.0
      %2672 = vmatprep.subr.mxu0 0.0
      %2673 = vmatpush1.msra.mxu0 0.0
      %2674 = vmatprep.subr.mxu0 0.0
      %2675 = vmatpush1.msra.mxu0 0.0
      %2676 = vmatprep.subr.mxu0 0.0
      %2677 = vmatpush1.msra.mxu0 0.0
      %2678 = vmatprep.subr.mxu0 0.0
      %2679 = vmatpush1.msra.mxu0 0.0
      %2680 = vmatprep.subr.mxu0 0.0
      %2681 = vmatpush1.msra.mxu0 0.0
      %2682 = vmatprep.subr.mxu0 0.0
      %2683 = vmatpush1.msra.mxu0 0.0
      %2684 = vmatprep.subr.mxu0 0.0
      %2685 = vmatpush1.msra.mxu0 0.0
      %2686 = vmatprep.subr.mxu0 0.0
      %2687 = vmatpush1.msra.mxu0 0.0
      %2688 = vmatprep.subr.mxu0 0.0
      %2689 = vmatpush1.msra.mxu0 0.0
      %2690 = vmatprep.subr.mxu0 0.0
      %2691 = vmatpush1.msra.mxu0 0.0
      %2692 = vmatprep.subr.mxu0 0.0
      %2693 = vmatpush1.msra.mxu0 0.0
      %2694 = vmatprep.subr.mxu0 0.0
      %2695 = vmatpush1.msra.mxu0 %v2659
      %2696 = vmatprep.subr.mxu0 0.0
      %2697 = vmatpush2.msra.mxu0 0.0
      %2698 = vmatprep.subr.mxu0 0.0
      %2699 = vmatpush2.msra.mxu0 0.0
      %2700 = vmatprep.subr.mxu0 0.0
      %2701 = vmatpush2.msra.mxu0 0.0
      %2702 = vmatprep.subr.mxu0 0.0
      %2703 = vmatpush2.msra.mxu0 0.0
      %2704 = vmatprep.subr.mxu0 0.0
      %2705 = vmatpush2.msra.mxu0 0.0
      %2706 = vmatprep.subr.mxu0 0.0
      %2707 = vmatpush2.msra.mxu0 0.0
      %2708 = vmatprep.subr.mxu0 0.0
      %2709 = vmatpush2.msra.mxu0 0.0
      %2710 = vmatprep.subr.mxu0 0.0
      %2711 = vmatpush2.msra.mxu0 0.0
      %2712 = vmatprep.subr.mxu0 0.0
      %2713 = vmatpush2.msra.mxu0 0.0
      %2714 = vmatprep.subr.mxu0 0.0
      %2715 = vmatpush2.msra.mxu0 0.0
      %2716 = vmatprep.subr.mxu0 0.0
      %2717 = vmatpush2.msra.mxu0 0.0
      %2718 = vmatprep.subr.mxu0 0.0
      %2719 = vmatpush2.msra.mxu0 0.0
      %2720 = vmatprep.subr.mxu0 0.0
      %2721 = vmatpush2.msra.mxu0 0.0
      %2722 = vmatprep.subr.mxu0 0.0
      %2723 = vmatpush2.msra.mxu0 0.0
      %2724 = vmatprep.subr.mxu0 0.0
      %2725 = vmatpush2.msra.mxu0 0.0
      %2726 = vmatprep.subr.mxu0 0.0
      %2727 = vmatpush2.msra.mxu0 0.0
      %2728 = vmatprep.mubr.f32.mxu0 0.0
      %2729 = vmatmul.mubr.f32.gmra.mxu0 %v2662
      %v2730 = vpop.f32.mrf.mxu0
      %v2731 = vadd.f32 0.0, %v2730
      %v2732 = vpop.f32.mrf.mxu0
      %2733 = vdwg.mxu0
      %2734 = vrot.lane.b32.xlu0 %v600, 112
      %v2735 = vpop.permute.xlu0 %2734
      %2736 = vrot.lane.b32.xlu0 %v713, 80
      %v2737 = vpop.permute.xlu0 %2736
      %v2738 = vsel %vm744, %v2735, 0
      %v2740 = vsel %vm744, %v2737, 0
      %2742 = vmatprep.subr.mxu0 0.0
      %2743 = vmatpush1.xpose.msra.mxu0 0.0
      %2744 = vmatprep.subr.mxu0 0.0
      %2745 = vmatpush1.xpose.msra.mxu0 0.0
      %2746 = vmatprep.subr.mxu0 0.0
      %2747 = vmatpush1.xpose.msra.mxu0 0.0
      %2748 = vmatprep.subr.mxu0 0.0
      %2749 = vmatpush1.xpose.msra.mxu0 0.0
      %2750 = vmatprep.subr.mxu0 0.0
      %2751 = vmatpush1.xpose.msra.mxu0 0.0
      %2752 = vmatprep.subr.mxu0 0.0
      %2753 = vmatpush1.xpose.msra.mxu0 0.0
      %2754 = vmatprep.subr.mxu0 0.0
      %2755 = vmatpush1.xpose.msra.mxu0 0.0
      %2756 = vmatprep.subr.mxu0 0.0
      %2757 = vmatpush1.xpose.msra.mxu0 0.0
      %2758 = vmatprep.subr.mxu0 0.0
      %2759 = vmatpush1.xpose.msra.mxu0 0.0
      %2760 = vmatprep.subr.mxu0 0.0
      %2761 = vmatpush1.xpose.msra.mxu0 0.0
      %2762 = vmatprep.subr.mxu0 0.0
      %2763 = vmatpush1.xpose.msra.mxu0 0.0
      %2764 = vmatprep.subr.mxu0 0.0
      %2765 = vmatpush1.xpose.msra.mxu0 0.0
      %2766 = vmatprep.subr.mxu0 0.0
      %2767 = vmatpush1.xpose.msra.mxu0 0.0
      %2768 = vmatprep.subr.mxu0 0.0
      %2769 = vmatpush1.xpose.msra.mxu0 0.0
      %2770 = vmatprep.subr.mxu0 0.0
      %2771 = vmatpush1.xpose.msra.mxu0 0.0
      %2772 = vmatprep.subr.mxu0 0.0
      %2773 = vmatpush1.xpose.msra.mxu0 %v2740
      %2774 = vmatprep.subr.mxu0 0.0
      %2775 = vmatpush2.xpose.msra.mxu0 0.0
      %2776 = vmatprep.subr.mxu0 0.0
      %2777 = vmatpush2.xpose.msra.mxu0 0.0
      %2778 = vmatprep.subr.mxu0 0.0
      %2779 = vmatpush2.xpose.msra.mxu0 0.0
      %2780 = vmatprep.subr.mxu0 0.0
      %2781 = vmatpush2.xpose.msra.mxu0 0.0
      %2782 = vmatprep.subr.mxu0 0.0
      %2783 = vmatpush2.xpose.msra.mxu0 0.0
      %2784 = vmatprep.subr.mxu0 0.0
      %2785 = vmatpush2.xpose.msra.mxu0 0.0
      %2786 = vmatprep.subr.mxu0 0.0
      %2787 = vmatpush2.xpose.msra.mxu0 0.0
      %2788 = vmatprep.subr.mxu0 0.0
      %2789 = vmatpush2.xpose.msra.mxu0 0.0
      %2790 = vmatprep.subr.mxu0 0.0
      %2791 = vmatpush2.xpose.msra.mxu0 0.0
      %2792 = vmatprep.subr.mxu0 0.0
      %2793 = vmatpush2.xpose.msra.mxu0 0.0
      %2794 = vmatprep.subr.mxu0 0.0
      %2795 = vmatpush2.xpose.msra.mxu0 0.0
      %2796 = vmatprep.subr.mxu0 0.0
      %2797 = vmatpush2.xpose.msra.mxu0 0.0
      %2798 = vmatprep.subr.mxu0 0.0
      %2799 = vmatpush2.xpose.msra.mxu0 0.0
      %2800 = vmatprep.subr.mxu0 0.0
      %2801 = vmatpush2.xpose.msra.mxu0 0.0
      %2802 = vmatprep.subr.mxu0 0.0
      %2803 = vmatpush2.xpose.msra.mxu0 0.0
      %2804 = vmatprep.subr.mxu0 0.0
      %2805 = vmatpush2.xpose.msra.mxu0 0.0
      %2806 = vmatprep.mubr.f32.mxu0 0.0
      %2807 = vmatmul.mubr.f32.gmra.mxu0 %v2738
      %v2808 = vpop.f32.mrf.mxu0
      %v2809 = vadd.f32 0.0, %v2808
      %v2810 = vpop.f32.mrf.mxu0
      %2811 = vdwg.mxu0
      %2812 = vrot.lane.b32.xlu0 %v605, 112
      %v2813 = vpop.permute.xlu0 %2812
      %2814 = vrot.lane.b32.xlu0 %v718, 80
      %v2815 = vpop.permute.xlu0 %2814
      %v2816 = vsel %vm744, %v2813, 0
      %v2818 = vsel %vm744, %v2815, 0
      %2820 = vmatprep.subr.mxu0 0.0
      %2821 = vmatpush1.xpose.msra.mxu0 0.0
      %2822 = vmatprep.subr.mxu0 0.0
      %2823 = vmatpush1.xpose.msra.mxu0 0.0
      %2824 = vmatprep.subr.mxu0 0.0
      %2825 = vmatpush1.xpose.msra.mxu0 0.0
      %2826 = vmatprep.subr.mxu0 0.0
      %2827 = vmatpush1.xpose.msra.mxu0 0.0
      %2828 = vmatprep.subr.mxu0 0.0
      %2829 = vmatpush1.xpose.msra.mxu0 0.0
      %2830 = vmatprep.subr.mxu0 0.0
      %2831 = vmatpush1.xpose.msra.mxu0 0.0
      %2832 = vmatprep.subr.mxu0 0.0
      %2833 = vmatpush1.xpose.msra.mxu0 0.0
      %2834 = vmatprep.subr.mxu0 0.0
      %2835 = vmatpush1.xpose.msra.mxu0 0.0
      %2836 = vmatprep.subr.mxu0 0.0
      %2837 = vmatpush1.xpose.msra.mxu0 0.0
      %2838 = vmatprep.subr.mxu0 0.0
      %2839 = vmatpush1.xpose.msra.mxu0 0.0
      %2840 = vmatprep.subr.mxu0 0.0
      %2841 = vmatpush1.xpose.msra.mxu0 0.0
      %2842 = vmatprep.subr.mxu0 0.0
      %2843 = vmatpush1.xpose.msra.mxu0 0.0
      %2844 = vmatprep.subr.mxu0 0.0
      %2845 = vmatpush1.xpose.msra.mxu0 0.0
      %2846 = vmatprep.subr.mxu0 0.0
      %2847 = vmatpush1.xpose.msra.mxu0 0.0
      %2848 = vmatprep.subr.mxu0 0.0
      %2849 = vmatpush1.xpose.msra.mxu0 0.0
      %2850 = vmatprep.subr.mxu0 0.0
      %2851 = vmatpush1.xpose.msra.mxu0 %v2818
      %2852 = vmatprep.subr.mxu0 0.0
      %2853 = vmatpush2.xpose.msra.mxu0 0.0
      %2854 = vmatprep.subr.mxu0 0.0
      %2855 = vmatpush2.xpose.msra.mxu0 0.0
      %2856 = vmatprep.subr.mxu0 0.0
      %2857 = vmatpush2.xpose.msra.mxu0 0.0
      %2858 = vmatprep.subr.mxu0 0.0
      %2859 = vmatpush2.xpose.msra.mxu0 0.0
      %2860 = vmatprep.subr.mxu0 0.0
      %2861 = vmatpush2.xpose.msra.mxu0 0.0
      %2862 = vmatprep.subr.mxu0 0.0
      %2863 = vmatpush2.xpose.msra.mxu0 0.0
      %2864 = vmatprep.subr.mxu0 0.0
      %2865 = vmatpush2.xpose.msra.mxu0 0.0
      %2866 = vmatprep.subr.mxu0 0.0
      %2867 = vmatpush2.xpose.msra.mxu0 0.0
      %2868 = vmatprep.subr.mxu0 0.0
      %2869 = vmatpush2.xpose.msra.mxu0 0.0
      %2870 = vmatprep.subr.mxu0 0.0
      %2871 = vmatpush2.xpose.msra.mxu0 0.0
      %2872 = vmatprep.subr.mxu0 0.0
      %2873 = vmatpush2.xpose.msra.mxu0 0.0
      %2874 = vmatprep.subr.mxu0 0.0
      %2875 = vmatpush2.xpose.msra.mxu0 0.0
      %2876 = vmatprep.subr.mxu0 0.0
      %2877 = vmatpush2.xpose.msra.mxu0 0.0
      %2878 = vmatprep.subr.mxu0 0.0
      %2879 = vmatpush2.xpose.msra.mxu0 0.0
      %2880 = vmatprep.subr.mxu0 0.0
      %2881 = vmatpush2.xpose.msra.mxu0 0.0
      %2882 = vmatprep.subr.mxu0 0.0
      %2883 = vmatpush2.xpose.msra.mxu0 0.0
      %2884 = vmatprep.mubr.f32.mxu0 0.0
      %2885 = vmatmul.mubr.f32.gmra.mxu0 %v2816
      %v2886 = vpop.f32.mrf.mxu0
      %v2887 = vadd.f32 0.0, %v2886
      %v2888 = vpop.f32.mrf.mxu0
      %2889 = vdwg.mxu0
      %2890 = vrot.lane.b32.xlu0 %v610, 112
      %v2891 = vpop.permute.xlu0 %2890
      %2892 = vrot.lane.b32.xlu0 %v723, 80
      %v2893 = vpop.permute.xlu0 %2892
      %v2894 = vsel %vm744, %v2891, 0
      %v2896 = vsel %vm744, %v2893, 0
      %2898 = vmatprep.subr.mxu0 0.0
      %2899 = vmatpush1.xpose.msra.mxu0 0.0
      %2900 = vmatprep.subr.mxu0 0.0
      %2901 = vmatpush1.xpose.msra.mxu0 0.0
      %2902 = vmatprep.subr.mxu0 0.0
      %2903 = vmatpush1.xpose.msra.mxu0 0.0
      %2904 = vmatprep.subr.mxu0 0.0
      %2905 = vmatpush1.xpose.msra.mxu0 0.0
      %2906 = vmatprep.subr.mxu0 0.0
      %2907 = vmatpush1.xpose.msra.mxu0 0.0
      %2908 = vmatprep.subr.mxu0 0.0
      %2909 = vmatpush1.xpose.msra.mxu0 0.0
      %2910 = vmatprep.subr.mxu0 0.0
      %2911 = vmatpush1.xpose.msra.mxu0 0.0
      %2912 = vmatprep.subr.mxu0 0.0
      %2913 = vmatpush1.xpose.msra.mxu0 0.0
      %2914 = vmatprep.subr.mxu0 0.0
      %2915 = vmatpush1.xpose.msra.mxu0 0.0
      %2916 = vmatprep.subr.mxu0 0.0
      %2917 = vmatpush1.xpose.msra.mxu0 0.0
      %2918 = vmatprep.subr.mxu0 0.0
      %2919 = vmatpush1.xpose.msra.mxu0 0.0
      %2920 = vmatprep.subr.mxu0 0.0
      %2921 = vmatpush1.xpose.msra.mxu0 0.0
      %2922 = vmatprep.subr.mxu0 0.0
      %2923 = vmatpush1.xpose.msra.mxu0 0.0
      %2924 = vmatprep.subr.mxu0 0.0
      %2925 = vmatpush1.xpose.msra.mxu0 0.0
      %2926 = vmatprep.subr.mxu0 0.0
      %2927 = vmatpush1.xpose.msra.mxu0 0.0
      %2928 = vmatprep.subr.mxu0 0.0
      %2929 = vmatpush1.xpose.msra.mxu0 %v2896
      %2930 = vmatprep.subr.mxu0 0.0
      %2931 = vmatpush2.xpose.msra.mxu0 0.0
      %2932 = vmatprep.subr.mxu0 0.0
      %2933 = vmatpush2.xpose.msra.mxu0 0.0
      %2934 = vmatprep.subr.mxu0 0.0
      %2935 = vmatpush2.xpose.msra.mxu0 0.0
      %2936 = vmatprep.subr.mxu0 0.0
      %2937 = vmatpush2.xpose.msra.mxu0 0.0
      %2938 = vmatprep.subr.mxu0 0.0
      %2939 = vmatpush2.xpose.msra.mxu0 0.0
      %2940 = vmatprep.subr.mxu0 0.0
      %2941 = vmatpush2.xpose.msra.mxu0 0.0
      %2942 = vmatprep.subr.mxu0 0.0
      %2943 = vmatpush2.xpose.msra.mxu0 0.0
      %2944 = vmatprep.subr.mxu0 0.0
      %2945 = vmatpush2.xpose.msra.mxu0 0.0
      %2946 = vmatprep.subr.mxu0 0.0
      %2947 = vmatpush2.xpose.msra.mxu0 0.0
      %2948 = vmatprep.subr.mxu0 0.0
      %2949 = vmatpush2.xpose.msra.mxu0 0.0
      %2950 = vmatprep.subr.mxu0 0.0
      %2951 = vmatpush2.xpose.msra.mxu0 0.0
      %2952 = vmatprep.subr.mxu0 0.0
      %2953 = vmatpush2.xpose.msra.mxu0 0.0
      %2954 = vmatprep.subr.mxu0 0.0
      %2955 = vmatpush2.xpose.msra.mxu0 0.0
      %2956 = vmatprep.subr.mxu0 0.0
      %2957 = vmatpush2.xpose.msra.mxu0 0.0
      %2958 = vmatprep.subr.mxu0 0.0
      %2959 = vmatpush2.xpose.msra.mxu0 0.0
      %2960 = vmatprep.subr.mxu0 0.0
      %2961 = vmatpush2.xpose.msra.mxu0 0.0
      %2962 = vmatprep.mubr.f32.mxu0 0.0
      %2963 = vmatmul.mubr.f32.gmra.mxu0 %v2894
      %v2964 = vpop.f32.mrf.mxu0
      %v2965 = vadd.f32 0.0, %v2964
      %v2966 = vpop.f32.mrf.mxu0
      %2967 = vdwg.mxu0
      %2968 = vrot.lane.b32.xlu0 %v615, 112
      %v2969 = vpop.permute.xlu0 %2968
      %2970 = vrot.lane.b32.xlu0 %v728, 80
      %v2971 = vpop.permute.xlu0 %2970
      %v2972 = vsel %vm744, %v2969, 0
      %v2974 = vsel %vm744, %v2971, 0
      %2976 = vmatprep.subr.mxu0 0.0
      %2977 = vmatpush1.xpose.msra.mxu0 0.0
      %2978 = vmatprep.subr.mxu0 0.0
      %2979 = vmatpush1.xpose.msra.mxu0 0.0
      %2980 = vmatprep.subr.mxu0 0.0
      %2981 = vmatpush1.xpose.msra.mxu0 0.0
      %2982 = vmatprep.subr.mxu0 0.0
      %2983 = vmatpush1.xpose.msra.mxu0 0.0
      %2984 = vmatprep.subr.mxu0 0.0
      %2985 = vmatpush1.xpose.msra.mxu0 0.0
      %2986 = vmatprep.subr.mxu0 0.0
      %2987 = vmatpush1.xpose.msra.mxu0 0.0
      %2988 = vmatprep.subr.mxu0 0.0
      %2989 = vmatpush1.xpose.msra.mxu0 0.0
      %2990 = vmatprep.subr.mxu0 0.0
      %2991 = vmatpush1.xpose.msra.mxu0 0.0
      %2992 = vmatprep.subr.mxu0 0.0
      %2993 = vmatpush1.xpose.msra.mxu0 0.0
      %2994 = vmatprep.subr.mxu0 0.0
      %2995 = vmatpush1.xpose.msra.mxu0 0.0
      %2996 = vmatprep.subr.mxu0 0.0
      %2997 = vmatpush1.xpose.msra.mxu0 0.0
      %2998 = vmatprep.subr.mxu0 0.0
      %2999 = vmatpush1.xpose.msra.mxu0 0.0
      %3000 = vmatprep.subr.mxu0 0.0
      %3001 = vmatpush1.xpose.msra.mxu0 0.0
      %3002 = vmatprep.subr.mxu0 0.0
      %3003 = vmatpush1.xpose.msra.mxu0 0.0
      %3004 = vmatprep.subr.mxu0 0.0
      %3005 = vmatpush1.xpose.msra.mxu0 0.0
      %3006 = vmatprep.subr.mxu0 0.0
      %3007 = vmatpush1.xpose.msra.mxu0 %v2974
      %3008 = vmatprep.subr.mxu0 0.0
      %3009 = vmatpush2.xpose.msra.mxu0 0.0
      %3010 = vmatprep.subr.mxu0 0.0
      %3011 = vmatpush2.xpose.msra.mxu0 0.0
      %3012 = vmatprep.subr.mxu0 0.0
      %3013 = vmatpush2.xpose.msra.mxu0 0.0
      %3014 = vmatprep.subr.mxu0 0.0
      %3015 = vmatpush2.xpose.msra.mxu0 0.0
      %3016 = vmatprep.subr.mxu0 0.0
      %3017 = vmatpush2.xpose.msra.mxu0 0.0
      %3018 = vmatprep.subr.mxu0 0.0
      %3019 = vmatpush2.xpose.msra.mxu0 0.0
      %3020 = vmatprep.subr.mxu0 0.0
      %3021 = vmatpush2.xpose.msra.mxu0 0.0
      %3022 = vmatprep.subr.mxu0 0.0
      %3023 = vmatpush2.xpose.msra.mxu0 0.0
      %3024 = vmatprep.subr.mxu0 0.0
      %3025 = vmatpush2.xpose.msra.mxu0 0.0
      %3026 = vmatprep.subr.mxu0 0.0
      %3027 = vmatpush2.xpose.msra.mxu0 0.0
      %3028 = vmatprep.subr.mxu0 0.0
      %3029 = vmatpush2.xpose.msra.mxu0 0.0
      %3030 = vmatprep.subr.mxu0 0.0
      %3031 = vmatpush2.xpose.msra.mxu0 0.0
      %3032 = vmatprep.subr.mxu0 0.0
      %3033 = vmatpush2.xpose.msra.mxu0 0.0
      %3034 = vmatprep.subr.mxu0 0.0
      %3035 = vmatpush2.xpose.msra.mxu0 0.0
      %3036 = vmatprep.subr.mxu0 0.0
      %3037 = vmatpush2.xpose.msra.mxu0 0.0
      %3038 = vmatprep.subr.mxu0 0.0
      %3039 = vmatpush2.xpose.msra.mxu0 0.0
      %3040 = vmatprep.mubr.f32.mxu0 0.0
      %3041 = vmatmul.mubr.f32.gmra.mxu0 %v2972
      %v3042 = vpop.f32.mrf.mxu0
      %v3043 = vadd.f32 0.0, %v3042
      %v3044 = vpop.f32.mrf.mxu0
      %3045 = vdwg.mxu0
      %3046 = vrot.lane.b32.xlu0 %v620, 112
      %v3047 = vpop.permute.xlu0 %3046
      %3048 = vrot.lane.b32.xlu0 %v733, 80
      %v3049 = vpop.permute.xlu0 %3048
      %v3050 = vsel %vm744, %v3047, 0
      %v3052 = vsel %vm744, %v3049, 0
      %3054 = vmatprep.subr.mxu0 0.0
      %3055 = vmatpush1.xpose.msra.mxu0 0.0
      %3056 = vmatprep.subr.mxu0 0.0
      %3057 = vmatpush1.xpose.msra.mxu0 0.0
      %3058 = vmatprep.subr.mxu0 0.0
      %3059 = vmatpush1.xpose.msra.mxu0 0.0
      %3060 = vmatprep.subr.mxu0 0.0
      %3061 = vmatpush1.xpose.msra.mxu0 0.0
      %3062 = vmatprep.subr.mxu0 0.0
      %3063 = vmatpush1.xpose.msra.mxu0 0.0
      %3064 = vmatprep.subr.mxu0 0.0
      %3065 = vmatpush1.xpose.msra.mxu0 0.0
      %3066 = vmatprep.subr.mxu0 0.0
      %3067 = vmatpush1.xpose.msra.mxu0 0.0
      %3068 = vmatprep.subr.mxu0 0.0
      %3069 = vmatpush1.xpose.msra.mxu0 0.0
      %3070 = vmatprep.subr.mxu0 0.0
      %3071 = vmatpush1.xpose.msra.mxu0 0.0
      %3072 = vmatprep.subr.mxu0 0.0
      %3073 = vmatpush1.xpose.msra.mxu0 0.0
      %3074 = vmatprep.subr.mxu0 0.0
      %3075 = vmatpush1.xpose.msra.mxu0 0.0
      %3076 = vmatprep.subr.mxu0 0.0
      %3077 = vmatpush1.xpose.msra.mxu0 0.0
      %3078 = vmatprep.subr.mxu0 0.0
      %3079 = vmatpush1.xpose.msra.mxu0 0.0
      %3080 = vmatprep.subr.mxu0 0.0
      %3081 = vmatpush1.xpose.msra.mxu0 0.0
      %3082 = vmatprep.subr.mxu0 0.0
      %3083 = vmatpush1.xpose.msra.mxu0 0.0
      %3084 = vmatprep.subr.mxu0 0.0
      %3085 = vmatpush1.xpose.msra.mxu0 %v3052
      %3086 = vmatprep.subr.mxu0 0.0
      %3087 = vmatpush2.xpose.msra.mxu0 0.0
      %3088 = vmatprep.subr.mxu0 0.0
      %3089 = vmatpush2.xpose.msra.mxu0 0.0
      %3090 = vmatprep.subr.mxu0 0.0
      %3091 = vmatpush2.xpose.msra.mxu0 0.0
      %3092 = vmatprep.subr.mxu0 0.0
      %3093 = vmatpush2.xpose.msra.mxu0 0.0
      %3094 = vmatprep.subr.mxu0 0.0
      %3095 = vmatpush2.xpose.msra.mxu0 0.0
      %3096 = vmatprep.subr.mxu0 0.0
      %3097 = vmatpush2.xpose.msra.mxu0 0.0
      %3098 = vmatprep.subr.mxu0 0.0
      %3099 = vmatpush2.xpose.msra.mxu0 0.0
      %3100 = vmatprep.subr.mxu0 0.0
      %3101 = vmatpush2.xpose.msra.mxu0 0.0
      %3102 = vmatprep.subr.mxu0 0.0
      %3103 = vmatpush2.xpose.msra.mxu0 0.0
      %3104 = vmatprep.subr.mxu0 0.0
      %3105 = vmatpush2.xpose.msra.mxu0 0.0
      %3106 = vmatprep.subr.mxu0 0.0
      %3107 = vmatpush2.xpose.msra.mxu0 0.0
      %3108 = vmatprep.subr.mxu0 0.0
      %3109 = vmatpush2.xpose.msra.mxu0 0.0
      %3110 = vmatprep.subr.mxu0 0.0
      %3111 = vmatpush2.xpose.msra.mxu0 0.0
      %3112 = vmatprep.subr.mxu0 0.0
      %3113 = vmatpush2.xpose.msra.mxu0 0.0
      %3114 = vmatprep.subr.mxu0 0.0
      %3115 = vmatpush2.xpose.msra.mxu0 0.0
      %3116 = vmatprep.subr.mxu0 0.0
      %3117 = vmatpush2.xpose.msra.mxu0 0.0
      %3118 = vmatprep.mubr.f32.mxu0 0.0
      %3119 = vmatmul.mubr.f32.gmra.mxu0 %v3050
      %v3120 = vpop.f32.mrf.mxu0
      %v3121 = vadd.f32 0.0, %v3120
      %v3122 = vpop.f32.mrf.mxu0
      %3123 = vdwg.mxu0
      %3124 = vrot.lane.b32.xlu0 %v625, 112
      %v3125 = vpop.permute.xlu0 %3124
      %3126 = vrot.lane.b32.xlu0 %v738, 80
      %v3127 = vpop.permute.xlu0 %3126
      %v3128 = vsel %vm744, %v3125, 0
      %v3130 = vsel %vm744, %v3127, 0
      %3132 = vmatprep.subr.mxu0 0.0
      %3133 = vmatpush1.xpose.msra.mxu0 0.0
      %3134 = vmatprep.subr.mxu0 0.0
      %3135 = vmatpush1.xpose.msra.mxu0 0.0
      %3136 = vmatprep.subr.mxu0 0.0
      %3137 = vmatpush1.xpose.msra.mxu0 0.0
      %3138 = vmatprep.subr.mxu0 0.0
      %3139 = vmatpush1.xpose.msra.mxu0 0.0
      %3140 = vmatprep.subr.mxu0 0.0
      %3141 = vmatpush1.xpose.msra.mxu0 0.0
      %3142 = vmatprep.subr.mxu0 0.0
      %3143 = vmatpush1.xpose.msra.mxu0 0.0
      %3144 = vmatprep.subr.mxu0 0.0
      %3145 = vmatpush1.xpose.msra.mxu0 0.0
      %3146 = vmatprep.subr.mxu0 0.0
      %3147 = vmatpush1.xpose.msra.mxu0 0.0
      %3148 = vmatprep.subr.mxu0 0.0
      %3149 = vmatpush1.xpose.msra.mxu0 0.0
      %3150 = vmatprep.subr.mxu0 0.0
      %3151 = vmatpush1.xpose.msra.mxu0 0.0
      %3152 = vmatprep.subr.mxu0 0.0
      %3153 = vmatpush1.xpose.msra.mxu0 0.0
      %3154 = vmatprep.subr.mxu0 0.0
      %3155 = vmatpush1.xpose.msra.mxu0 0.0
      %3156 = vmatprep.subr.mxu0 0.0
      %3157 = vmatpush1.xpose.msra.mxu0 0.0
      %3158 = vmatprep.subr.mxu0 0.0
      %3159 = vmatpush1.xpose.msra.mxu0 0.0
      %3160 = vmatprep.subr.mxu0 0.0
      %3161 = vmatpush1.xpose.msra.mxu0 0.0
      %3162 = vmatprep.subr.mxu0 0.0
      %3163 = vmatpush1.xpose.msra.mxu0 %v3130
      %3164 = vmatprep.subr.mxu0 0.0
      %3165 = vmatpush2.xpose.msra.mxu0 0.0
      %3166 = vmatprep.subr.mxu0 0.0
      %3167 = vmatpush2.xpose.msra.mxu0 0.0
      %3168 = vmatprep.subr.mxu0 0.0
      %3169 = vmatpush2.xpose.msra.mxu0 0.0
      %3170 = vmatprep.subr.mxu0 0.0
      %3171 = vmatpush2.xpose.msra.mxu0 0.0
      %3172 = vmatprep.subr.mxu0 0.0
      %3173 = vmatpush2.xpose.msra.mxu0 0.0
      %3174 = vmatprep.subr.mxu0 0.0
      %3175 = vmatpush2.xpose.msra.mxu0 0.0
      %3176 = vmatprep.subr.mxu0 0.0
      %3177 = vmatpush2.xpose.msra.mxu0 0.0
      %3178 = vmatprep.subr.mxu0 0.0
      %3179 = vmatpush2.xpose.msra.mxu0 0.0
      %3180 = vmatprep.subr.mxu0 0.0
      %3181 = vmatpush2.xpose.msra.mxu0 0.0
      %3182 = vmatprep.subr.mxu0 0.0
      %3183 = vmatpush2.xpose.msra.mxu0 0.0
      %3184 = vmatprep.subr.mxu0 0.0
      %3185 = vmatpush2.xpose.msra.mxu0 0.0
      %3186 = vmatprep.subr.mxu0 0.0
      %3187 = vmatpush2.xpose.msra.mxu0 0.0
      %3188 = vmatprep.subr.mxu0 0.0
      %3189 = vmatpush2.xpose.msra.mxu0 0.0
      %3190 = vmatprep.subr.mxu0 0.0
      %3191 = vmatpush2.xpose.msra.mxu0 0.0
      %3192 = vmatprep.subr.mxu0 0.0
      %3193 = vmatpush2.xpose.msra.mxu0 0.0
      %3194 = vmatprep.subr.mxu0 0.0
      %3195 = vmatpush2.xpose.msra.mxu0 0.0
      %3196 = vmatprep.mubr.f32.mxu0 0.0
      %3197 = vmatmul.mubr.f32.gmra.mxu0 %v3128
      %v3198 = vpop.f32.mrf.mxu0
      %v3199 = vadd.f32 0.0, %v3198
      %v3200 = vpop.f32.mrf.mxu0
      %3201 = vdwg.mxu0
      %v3202 = vmul.f32 %v2809, 0.35355338
      %v3203 = vmul.f32 %v2887, 0.35355338
      %v3204 = vmul.f32 %v2965, 0.35355338
      %v3205 = vmul.f32 %v3043, 0.35355338
      %v3206 = vmul.f32 %v3121, 0.35355338
      %v3207 = vmul.f32 %v3199, 0.35355338
      %v3208 = vsel %vm744, %v3202, -inf
      %3209 = vmax.xlane.f32.xlu0 %v3208
      %v3210 = vpop.xlane.xlu0 %3209
      %v3211 = vsel %vm744, %v3203, -inf
      %3212 = vmax.xlane.f32.xlu0 %v3211
      %v3213 = vpop.xlane.xlu0 %3212
      %v3214 = vsel %vm744, %v3204, -inf
      %3215 = vmax.xlane.f32.xlu0 %v3214
      %v3216 = vpop.xlane.xlu0 %3215
      %v3217 = vsel %vm744, %v3205, -inf
      %3218 = vmax.xlane.f32.xlu0 %v3217
      %v3219 = vpop.xlane.xlu0 %3218
      %v3220 = vsel %vm744, %v3206, -inf
      %3221 = vmax.xlane.f32.xlu0 %v3220
      %v3222 = vpop.xlane.xlu0 %3221
      %v3223 = vsel %vm744, %v3207, -inf
      %3224 = vmax.xlane.f32.xlu0 %v3223
      %v3225 = vpop.xlane.xlu0 %3224
      %v3226 = vsub.f32 %v3202, %v3210
      %v3227 = vsub.f32 %v3203, %v3213
      %v3228 = vsub.f32 %v3204, %v3216
      %v3229 = vsub.f32 %v3205, %v3219
      %v3230 = vsub.f32 %v3206, %v3222
      %v3231 = vsub.f32 %v3207, %v3225
      %v3232 = vmul.f32 %v3226, 1.442695
      %v3233 = vpow.pop %v3232
      %v3234 = vmul.f32 %v3227, 1.442695
      %v3235 = vpow.pop %v3234
      %v3236 = vmul.f32 %v3228, 1.442695
      %v3237 = vpow.pop %v3236
      %v3238 = vmul.f32 %v3229, 1.442695
      %v3239 = vpow.pop %v3238
      %v3240 = vmul.f32 %v3230, 1.442695
      %v3241 = vpow.pop %v3240
      %v3242 = vmul.f32 %v3231, 1.442695
      %v3243 = vpow.pop %v3242
      %v3244 = vsel %vm744, %v3233, 0.0
      %3245 = vadd.xlane.f32.xlu0 %v3244
      %v3246 = vpop.xlane.xlu0 %3245
      %v3247 = vsel %vm744, %v3235, 0.0
      %3248 = vadd.xlane.f32.xlu0 %v3247
      %v3249 = vpop.xlane.xlu0 %3248
      %v3250 = vsel %vm744, %v3237, 0.0
      %3251 = vadd.xlane.f32.xlu0 %v3250
      %v3252 = vpop.xlane.xlu0 %3251
      %v3253 = vsel %vm744, %v3239, 0.0
      %3254 = vadd.xlane.f32.xlu0 %v3253
      %v3255 = vpop.xlane.xlu0 %3254
      %v3256 = vsel %vm744, %v3241, 0.0
      %3257 = vadd.xlane.f32.xlu0 %v3256
      %v3258 = vpop.xlane.xlu0 %3257
      %v3259 = vsel %vm744, %v3243, 0.0
      %3260 = vadd.xlane.f32.xlu0 %v3259
      %v3261 = vpop.xlane.xlu0 %3260
      %v3262 = vrcp.pop %v3246
      %v3263 = vrcp.pop %v3249
      %v3264 = vrcp.pop %v3252
      %v3265 = vrcp.pop %v3255
      %v3266 = vrcp.pop %v3258
      %v3267 = vrcp.pop %v3261
      %v3268 = vmul.f32 %v3233, %v3262
      %v3269 = vmul.f32 %v3235, %v3263
      %v3270 = vmul.f32 %v3237, %v3264
      %v3271 = vmul.f32 %v3239, %v3265
      %v3272 = vmul.f32 %v3241, %v3266
      %v3273 = vmul.f32 %v3243, %v3267
      %3274 = vrot.lane.b32.xlu0 %v713, 48
      %v3275 = vpop.permute.xlu0 %3274
      %v3278 = vsel %vm744, %v3268, 0
      %3280 = vmatprep.subr.mxu0 0.0
      %3281 = vmatpush1.msra.mxu0 0.0
      %3282 = vmatprep.subr.mxu0 0.0
      %3283 = vmatpush1.msra.mxu0 0.0
      %3284 = vmatprep.subr.mxu0 0.0
      %3285 = vmatpush1.msra.mxu0 0.0
      %3286 = vmatprep.subr.mxu0 0.0
      %3287 = vmatpush1.msra.mxu0 0.0
      %3288 = vmatprep.subr.mxu0 0.0
      %3289 = vmatpush1.msra.mxu0 0.0
      %3290 = vmatprep.subr.mxu0 0.0
      %3291 = vmatpush1.msra.mxu0 0.0
      %3292 = vmatprep.subr.mxu0 0.0
      %3293 = vmatpush1.msra.mxu0 0.0
      %3294 = vmatprep.subr.mxu0 0.0
      %3295 = vmatpush1.msra.mxu0 0.0
      %3296 = vmatprep.subr.mxu0 0.0
      %3297 = vmatpush1.msra.mxu0 0.0
      %3298 = vmatprep.subr.mxu0 0.0
      %3299 = vmatpush1.msra.mxu0 0.0
      %3300 = vmatprep.subr.mxu0 0.0
      %3301 = vmatpush1.msra.mxu0 0.0
      %3302 = vmatprep.subr.mxu0 0.0
      %3303 = vmatpush1.msra.mxu0 0.0
      %3304 = vmatprep.subr.mxu0 0.0
      %3305 = vmatpush1.msra.mxu0 0.0
      %3306 = vmatprep.subr.mxu0 0.0
      %3307 = vmatpush1.msra.mxu0 0.0
      %3308 = vmatprep.subr.mxu0 0.0
      %3309 = vmatpush1.msra.mxu0 0.0
      %3310 = vmatprep.subr.mxu0 0.0
      %3311 = vmatpush1.msra.mxu0 %v3275
      %3312 = vmatprep.subr.mxu0 0.0
      %3313 = vmatpush2.msra.mxu0 0.0
      %3314 = vmatprep.subr.mxu0 0.0
      %3315 = vmatpush2.msra.mxu0 0.0
      %3316 = vmatprep.subr.mxu0 0.0
      %3317 = vmatpush2.msra.mxu0 0.0
      %3318 = vmatprep.subr.mxu0 0.0
      %3319 = vmatpush2.msra.mxu0 0.0
      %3320 = vmatprep.subr.mxu0 0.0
      %3321 = vmatpush2.msra.mxu0 0.0
      %3322 = vmatprep.subr.mxu0 0.0
      %3323 = vmatpush2.msra.mxu0 0.0
      %3324 = vmatprep.subr.mxu0 0.0
      %3325 = vmatpush2.msra.mxu0 0.0
      %3326 = vmatprep.subr.mxu0 0.0
      %3327 = vmatpush2.msra.mxu0 0.0
      %3328 = vmatprep.subr.mxu0 0.0
      %3329 = vmatpush2.msra.mxu0 0.0
      %3330 = vmatprep.subr.mxu0 0.0
      %3331 = vmatpush2.msra.mxu0 0.0
      %3332 = vmatprep.subr.mxu0 0.0
      %3333 = vmatpush2.msra.mxu0 0.0
      %3334 = vmatprep.subr.mxu0 0.0
      %3335 = vmatpush2.msra.mxu0 0.0
      %3336 = vmatprep.subr.mxu0 0.0
      %3337 = vmatpush2.msra.mxu0 0.0
      %3338 = vmatprep.subr.mxu0 0.0
      %3339 = vmatpush2.msra.mxu0 0.0
      %3340 = vmatprep.subr.mxu0 0.0
      %3341 = vmatpush2.msra.mxu0 0.0
      %3342 = vmatprep.subr.mxu0 0.0
      %3343 = vmatpush2.msra.mxu0 0.0
      %3344 = vmatprep.mubr.f32.mxu0 0.0
      %3345 = vmatmul.mubr.f32.gmra.mxu0 %v3278
      %v3346 = vpop.f32.mrf.mxu0
      %v3347 = vadd.f32 0.0, %v3346
      %v3348 = vpop.f32.mrf.mxu0
      %3349 = vdwg.mxu0
      %3350 = vrot.lane.b32.xlu0 %v718, 48
      %v3351 = vpop.permute.xlu0 %3350
      %v3354 = vsel %vm744, %v3269, 0
      %3356 = vmatprep.subr.mxu0 0.0
      %3357 = vmatpush1.msra.mxu0 0.0
      %3358 = vmatprep.subr.mxu0 0.0
      %3359 = vmatpush1.msra.mxu0 0.0
      %3360 = vmatprep.subr.mxu0 0.0
      %3361 = vmatpush1.msra.mxu0 0.0
      %3362 = vmatprep.subr.mxu0 0.0
      %3363 = vmatpush1.msra.mxu0 0.0
      %3364 = vmatprep.subr.mxu0 0.0
      %3365 = vmatpush1.msra.mxu0 0.0
      %3366 = vmatprep.subr.mxu0 0.0
      %3367 = vmatpush1.msra.mxu0 0.0
      %3368 = vmatprep.subr.mxu0 0.0
      %3369 = vmatpush1.msra.mxu0 0.0
      %3370 = vmatprep.subr.mxu0 0.0
      %3371 = vmatpush1.msra.mxu0 0.0
      %3372 = vmatprep.subr.mxu0 0.0
      %3373 = vmatpush1.msra.mxu0 0.0
      %3374 = vmatprep.subr.mxu0 0.0
      %3375 = vmatpush1.msra.mxu0 0.0
      %3376 = vmatprep.subr.mxu0 0.0
      %3377 = vmatpush1.msra.mxu0 0.0
      %3378 = vmatprep.subr.mxu0 0.0
      %3379 = vmatpush1.msra.mxu0 0.0
      %3380 = vmatprep.subr.mxu0 0.0
      %3381 = vmatpush1.msra.mxu0 0.0
      %3382 = vmatprep.subr.mxu0 0.0
      %3383 = vmatpush1.msra.mxu0 0.0
      %3384 = vmatprep.subr.mxu0 0.0
      %3385 = vmatpush1.msra.mxu0 0.0
      %3386 = vmatprep.subr.mxu0 0.0
      %3387 = vmatpush1.msra.mxu0 %v3351
      %3388 = vmatprep.subr.mxu0 0.0
      %3389 = vmatpush2.msra.mxu0 0.0
      %3390 = vmatprep.subr.mxu0 0.0
      %3391 = vmatpush2.msra.mxu0 0.0
      %3392 = vmatprep.subr.mxu0 0.0
      %3393 = vmatpush2.msra.mxu0 0.0
      %3394 = vmatprep.subr.mxu0 0.0
      %3395 = vmatpush2.msra.mxu0 0.0
      %3396 = vmatprep.subr.mxu0 0.0
      %3397 = vmatpush2.msra.mxu0 0.0
      %3398 = vmatprep.subr.mxu0 0.0
      %3399 = vmatpush2.msra.mxu0 0.0
      %3400 = vmatprep.subr.mxu0 0.0
      %3401 = vmatpush2.msra.mxu0 0.0
      %3402 = vmatprep.subr.mxu0 0.0
      %3403 = vmatpush2.msra.mxu0 0.0
      %3404 = vmatprep.subr.mxu0 0.0
      %3405 = vmatpush2.msra.mxu0 0.0
      %3406 = vmatprep.subr.mxu0 0.0
      %3407 = vmatpush2.msra.mxu0 0.0
      %3408 = vmatprep.subr.mxu0 0.0
      %3409 = vmatpush2.msra.mxu0 0.0
      %3410 = vmatprep.subr.mxu0 0.0
      %3411 = vmatpush2.msra.mxu0 0.0
      %3412 = vmatprep.subr.mxu0 0.0
      %3413 = vmatpush2.msra.mxu0 0.0
      %3414 = vmatprep.subr.mxu0 0.0
      %3415 = vmatpush2.msra.mxu0 0.0
      %3416 = vmatprep.subr.mxu0 0.0
      %3417 = vmatpush2.msra.mxu0 0.0
      %3418 = vmatprep.subr.mxu0 0.0
      %3419 = vmatpush2.msra.mxu0 0.0
      %3420 = vmatprep.mubr.f32.mxu0 0.0
      %3421 = vmatmul.mubr.f32.gmra.mxu0 %v3354
      %v3422 = vpop.f32.mrf.mxu0
      %v3423 = vadd.f32 0.0, %v3422
      %v3424 = vpop.f32.mrf.mxu0
      %3425 = vdwg.mxu0
      %3426 = vrot.lane.b32.xlu0 %v723, 48
      %v3427 = vpop.permute.xlu0 %3426
      %v3430 = vsel %vm744, %v3270, 0
      %3432 = vmatprep.subr.mxu0 0.0
      %3433 = vmatpush1.msra.mxu0 0.0
      %3434 = vmatprep.subr.mxu0 0.0
      %3435 = vmatpush1.msra.mxu0 0.0
      %3436 = vmatprep.subr.mxu0 0.0
      %3437 = vmatpush1.msra.mxu0 0.0
      %3438 = vmatprep.subr.mxu0 0.0
      %3439 = vmatpush1.msra.mxu0 0.0
      %3440 = vmatprep.subr.mxu0 0.0
      %3441 = vmatpush1.msra.mxu0 0.0
      %3442 = vmatprep.subr.mxu0 0.0
      %3443 = vmatpush1.msra.mxu0 0.0
      %3444 = vmatprep.subr.mxu0 0.0
      %3445 = vmatpush1.msra.mxu0 0.0
      %3446 = vmatprep.subr.mxu0 0.0
      %3447 = vmatpush1.msra.mxu0 0.0
      %3448 = vmatprep.subr.mxu0 0.0
      %3449 = vmatpush1.msra.mxu0 0.0
      %3450 = vmatprep.subr.mxu0 0.0
      %3451 = vmatpush1.msra.mxu0 0.0
      %3452 = vmatprep.subr.mxu0 0.0
      %3453 = vmatpush1.msra.mxu0 0.0
      %3454 = vmatprep.subr.mxu0 0.0
      %3455 = vmatpush1.msra.mxu0 0.0
      %3456 = vmatprep.subr.mxu0 0.0
      %3457 = vmatpush1.msra.mxu0 0.0
      %3458 = vmatprep.subr.mxu0 0.0
      %3459 = vmatpush1.msra.mxu0 0.0
      %3460 = vmatprep.subr.mxu0 0.0
      %3461 = vmatpush1.msra.mxu0 0.0
      %3462 = vmatprep.subr.mxu0 0.0
      %3463 = vmatpush1.msra.mxu0 %v3427
      %3464 = vmatprep.subr.mxu0 0.0
      %3465 = vmatpush2.msra.mxu0 0.0
      %3466 = vmatprep.subr.mxu0 0.0
      %3467 = vmatpush2.msra.mxu0 0.0
      %3468 = vmatprep.subr.mxu0 0.0
      %3469 = vmatpush2.msra.mxu0 0.0
      %3470 = vmatprep.subr.mxu0 0.0
      %3471 = vmatpush2.msra.mxu0 0.0
      %3472 = vmatprep.subr.mxu0 0.0
      %3473 = vmatpush2.msra.mxu0 0.0
      %3474 = vmatprep.subr.mxu0 0.0
      %3475 = vmatpush2.msra.mxu0 0.0
      %3476 = vmatprep.subr.mxu0 0.0
      %3477 = vmatpush2.msra.mxu0 0.0
      %3478 = vmatprep.subr.mxu0 0.0
      %3479 = vmatpush2.msra.mxu0 0.0
      %3480 = vmatprep.subr.mxu0 0.0
      %3481 = vmatpush2.msra.mxu0 0.0
      %3482 = vmatprep.subr.mxu0 0.0
      %3483 = vmatpush2.msra.mxu0 0.0
      %3484 = vmatprep.subr.mxu0 0.0
      %3485 = vmatpush2.msra.mxu0 0.0
      %3486 = vmatprep.subr.mxu0 0.0
      %3487 = vmatpush2.msra.mxu0 0.0
      %3488 = vmatprep.subr.mxu0 0.0
      %3489 = vmatpush2.msra.mxu0 0.0
      %3490 = vmatprep.subr.mxu0 0.0
      %3491 = vmatpush2.msra.mxu0 0.0
      %3492 = vmatprep.subr.mxu0 0.0
      %3493 = vmatpush2.msra.mxu0 0.0
      %3494 = vmatprep.subr.mxu0 0.0
      %3495 = vmatpush2.msra.mxu0 0.0
      %3496 = vmatprep.mubr.f32.mxu0 0.0
      %3497 = vmatmul.mubr.f32.gmra.mxu0 %v3430
      %v3498 = vpop.f32.mrf.mxu0
      %v3499 = vadd.f32 0.0, %v3498
      %v3500 = vpop.f32.mrf.mxu0
      %3501 = vdwg.mxu0
      %3502 = vrot.lane.b32.xlu0 %v728, 48
      %v3503 = vpop.permute.xlu0 %3502
      %v3506 = vsel %vm744, %v3271, 0
      %3508 = vmatprep.subr.mxu0 0.0
      %3509 = vmatpush1.msra.mxu0 0.0
      %3510 = vmatprep.subr.mxu0 0.0
      %3511 = vmatpush1.msra.mxu0 0.0
      %3512 = vmatprep.subr.mxu0 0.0
      %3513 = vmatpush1.msra.mxu0 0.0
      %3514 = vmatprep.subr.mxu0 0.0
      %3515 = vmatpush1.msra.mxu0 0.0
      %3516 = vmatprep.subr.mxu0 0.0
      %3517 = vmatpush1.msra.mxu0 0.0
      %3518 = vmatprep.subr.mxu0 0.0
      %3519 = vmatpush1.msra.mxu0 0.0
      %3520 = vmatprep.subr.mxu0 0.0
      %3521 = vmatpush1.msra.mxu0 0.0
      %3522 = vmatprep.subr.mxu0 0.0
      %3523 = vmatpush1.msra.mxu0 0.0
      %3524 = vmatprep.subr.mxu0 0.0
      %3525 = vmatpush1.msra.mxu0 0.0
      %3526 = vmatprep.subr.mxu0 0.0
      %3527 = vmatpush1.msra.mxu0 0.0
      %3528 = vmatprep.subr.mxu0 0.0
      %3529 = vmatpush1.msra.mxu0 0.0
      %3530 = vmatprep.subr.mxu0 0.0
      %3531 = vmatpush1.msra.mxu0 0.0
      %3532 = vmatprep.subr.mxu0 0.0
      %3533 = vmatpush1.msra.mxu0 0.0
      %3534 = vmatprep.subr.mxu0 0.0
      %3535 = vmatpush1.msra.mxu0 0.0
      %3536 = vmatprep.subr.mxu0 0.0
      %3537 = vmatpush1.msra.mxu0 0.0
      %3538 = vmatprep.subr.mxu0 0.0
      %3539 = vmatpush1.msra.mxu0 %v3503
      %3540 = vmatprep.subr.mxu0 0.0
      %3541 = vmatpush2.msra.mxu0 0.0
      %3542 = vmatprep.subr.mxu0 0.0
      %3543 = vmatpush2.msra.mxu0 0.0
      %3544 = vmatprep.subr.mxu0 0.0
      %3545 = vmatpush2.msra.mxu0 0.0
      %3546 = vmatprep.subr.mxu0 0.0
      %3547 = vmatpush2.msra.mxu0 0.0
      %3548 = vmatprep.subr.mxu0 0.0
      %3549 = vmatpush2.msra.mxu0 0.0
      %3550 = vmatprep.subr.mxu0 0.0
      %3551 = vmatpush2.msra.mxu0 0.0
      %3552 = vmatprep.subr.mxu0 0.0
      %3553 = vmatpush2.msra.mxu0 0.0
      %3554 = vmatprep.subr.mxu0 0.0
      %3555 = vmatpush2.msra.mxu0 0.0
      %3556 = vmatprep.subr.mxu0 0.0
      %3557 = vmatpush2.msra.mxu0 0.0
      %3558 = vmatprep.subr.mxu0 0.0
      %3559 = vmatpush2.msra.mxu0 0.0
      %3560 = vmatprep.subr.mxu0 0.0
      %3561 = vmatpush2.msra.mxu0 0.0
      %3562 = vmatprep.subr.mxu0 0.0
      %3563 = vmatpush2.msra.mxu0 0.0
      %3564 = vmatprep.subr.mxu0 0.0
      %3565 = vmatpush2.msra.mxu0 0.0
      %3566 = vmatprep.subr.mxu0 0.0
      %3567 = vmatpush2.msra.mxu0 0.0
      %3568 = vmatprep.subr.mxu0 0.0
      %3569 = vmatpush2.msra.mxu0 0.0
      %3570 = vmatprep.subr.mxu0 0.0
      %3571 = vmatpush2.msra.mxu0 0.0
      %3572 = vmatprep.mubr.f32.mxu0 0.0
      %3573 = vmatmul.mubr.f32.gmra.mxu0 %v3506
      %v3574 = vpop.f32.mrf.mxu0
      %v3575 = vadd.f32 0.0, %v3574
      %v3576 = vpop.f32.mrf.mxu0
      %3577 = vdwg.mxu0
      %3578 = vrot.lane.b32.xlu0 %v733, 48
      %v3579 = vpop.permute.xlu0 %3578
      %v3582 = vsel %vm744, %v3272, 0
      %3584 = vmatprep.subr.mxu0 0.0
      %3585 = vmatpush1.msra.mxu0 0.0
      %3586 = vmatprep.subr.mxu0 0.0
      %3587 = vmatpush1.msra.mxu0 0.0
      %3588 = vmatprep.subr.mxu0 0.0
      %3589 = vmatpush1.msra.mxu0 0.0
      %3590 = vmatprep.subr.mxu0 0.0
      %3591 = vmatpush1.msra.mxu0 0.0
      %3592 = vmatprep.subr.mxu0 0.0
      %3593 = vmatpush1.msra.mxu0 0.0
      %3594 = vmatprep.subr.mxu0 0.0
      %3595 = vmatpush1.msra.mxu0 0.0
      %3596 = vmatprep.subr.mxu0 0.0
      %3597 = vmatpush1.msra.mxu0 0.0
      %3598 = vmatprep.subr.mxu0 0.0
      %3599 = vmatpush1.msra.mxu0 0.0
      %3600 = vmatprep.subr.mxu0 0.0
      %3601 = vmatpush1.msra.mxu0 0.0
      %3602 = vmatprep.subr.mxu0 0.0
      %3603 = vmatpush1.msra.mxu0 0.0
      %3604 = vmatprep.subr.mxu0 0.0
      %3605 = vmatpush1.msra.mxu0 0.0
      %3606 = vmatprep.subr.mxu0 0.0
      %3607 = vmatpush1.msra.mxu0 0.0
      %3608 = vmatprep.subr.mxu0 0.0
      %3609 = vmatpush1.msra.mxu0 0.0
      %3610 = vmatprep.subr.mxu0 0.0
      %3611 = vmatpush1.msra.mxu0 0.0
      %3612 = vmatprep.subr.mxu0 0.0
      %3613 = vmatpush1.msra.mxu0 0.0
      %3614 = vmatprep.subr.mxu0 0.0
      %3615 = vmatpush1.msra.mxu0 %v3579
      %3616 = vmatprep.subr.mxu0 0.0
      %3617 = vmatpush2.msra.mxu0 0.0
      %3618 = vmatprep.subr.mxu0 0.0
      %3619 = vmatpush2.msra.mxu0 0.0
      %3620 = vmatprep.subr.mxu0 0.0
      %3621 = vmatpush2.msra.mxu0 0.0
      %3622 = vmatprep.subr.mxu0 0.0
      %3623 = vmatpush2.msra.mxu0 0.0
      %3624 = vmatprep.subr.mxu0 0.0
      %3625 = vmatpush2.msra.mxu0 0.0
      %3626 = vmatprep.subr.mxu0 0.0
      %3627 = vmatpush2.msra.mxu0 0.0
      %3628 = vmatprep.subr.mxu0 0.0
      %3629 = vmatpush2.msra.mxu0 0.0
      %3630 = vmatprep.subr.mxu0 0.0
      %3631 = vmatpush2.msra.mxu0 0.0
      %3632 = vmatprep.subr.mxu0 0.0
      %3633 = vmatpush2.msra.mxu0 0.0
      %3634 = vmatprep.subr.mxu0 0.0
      %3635 = vmatpush2.msra.mxu0 0.0
      %3636 = vmatprep.subr.mxu0 0.0
      %3637 = vmatpush2.msra.mxu0 0.0
      %3638 = vmatprep.subr.mxu0 0.0
      %3639 = vmatpush2.msra.mxu0 0.0
      %3640 = vmatprep.subr.mxu0 0.0
      %3641 = vmatpush2.msra.mxu0 0.0
      %3642 = vmatprep.subr.mxu0 0.0
      %3643 = vmatpush2.msra.mxu0 0.0
      %3644 = vmatprep.subr.mxu0 0.0
      %3645 = vmatpush2.msra.mxu0 0.0
      %3646 = vmatprep.subr.mxu0 0.0
      %3647 = vmatpush2.msra.mxu0 0.0
      %3648 = vmatprep.mubr.f32.mxu0 0.0
      %3649 = vmatmul.mubr.f32.gmra.mxu0 %v3582
      %v3650 = vpop.f32.mrf.mxu0
      %v3651 = vadd.f32 0.0, %v3650
      %v3652 = vpop.f32.mrf.mxu0
      %3653 = vdwg.mxu0
      %3654 = vrot.lane.b32.xlu0 %v738, 48
      %v3655 = vpop.permute.xlu0 %3654
      %v3658 = vsel %vm744, %v3273, 0
      %3660 = vmatprep.subr.mxu0 0.0
      %3661 = vmatpush1.msra.mxu0 0.0
      %3662 = vmatprep.subr.mxu0 0.0
      %3663 = vmatpush1.msra.mxu0 0.0
      %3664 = vmatprep.subr.mxu0 0.0
      %3665 = vmatpush1.msra.mxu0 0.0
      %3666 = vmatprep.subr.mxu0 0.0
      %3667 = vmatpush1.msra.mxu0 0.0
      %3668 = vmatprep.subr.mxu0 0.0
      %3669 = vmatpush1.msra.mxu0 0.0
      %3670 = vmatprep.subr.mxu0 0.0
      %3671 = vmatpush1.msra.mxu0 0.0
      %3672 = vmatprep.subr.mxu0 0.0
      %3673 = vmatpush1.msra.mxu0 0.0
      %3674 = vmatprep.subr.mxu0 0.0
      %3675 = vmatpush1.msra.mxu0 0.0
      %3676 = vmatprep.subr.mxu0 0.0
      %3677 = vmatpush1.msra.mxu0 0.0
      %3678 = vmatprep.subr.mxu0 0.0
      %3679 = vmatpush1.msra.mxu0 0.0
      %3680 = vmatprep.subr.mxu0 0.0
      %3681 = vmatpush1.msra.mxu0 0.0
      %3682 = vmatprep.subr.mxu0 0.0
      %3683 = vmatpush1.msra.mxu0 0.0
      %3684 = vmatprep.subr.mxu0 0.0
      %3685 = vmatpush1.msra.mxu0 0.0
      %3686 = vmatprep.subr.mxu0 0.0
      %3687 = vmatpush1.msra.mxu0 0.0
      %3688 = vmatprep.subr.mxu0 0.0
      %3689 = vmatpush1.msra.mxu0 0.0
      %3690 = vmatprep.subr.mxu0 0.0
      %3691 = vmatpush1.msra.mxu0 %v3655
      %3692 = vmatprep.subr.mxu0 0.0
      %3693 = vmatpush2.msra.mxu0 0.0
      %3694 = vmatprep.subr.mxu0 0.0
      %3695 = vmatpush2.msra.mxu0 0.0
      %3696 = vmatprep.subr.mxu0 0.0
      %3697 = vmatpush2.msra.mxu0 0.0
      %3698 = vmatprep.subr.mxu0 0.0
      %3699 = vmatpush2.msra.mxu0 0.0
      %3700 = vmatprep.subr.mxu0 0.0
      %3701 = vmatpush2.msra.mxu0 0.0
      %3702 = vmatprep.subr.mxu0 0.0
      %3703 = vmatpush2.msra.mxu0 0.0
      %3704 = vmatprep.subr.mxu0 0.0
      %3705 = vmatpush2.msra.mxu0 0.0
      %3706 = vmatprep.subr.mxu0 0.0
      %3707 = vmatpush2.msra.mxu0 0.0
      %3708 = vmatprep.subr.mxu0 0.0
      %3709 = vmatpush2.msra.mxu0 0.0
      %3710 = vmatprep.subr.mxu0 0.0
      %3711 = vmatpush2.msra.mxu0 0.0
      %3712 = vmatprep.subr.mxu0 0.0
      %3713 = vmatpush2.msra.mxu0 0.0
      %3714 = vmatprep.subr.mxu0 0.0
      %3715 = vmatpush2.msra.mxu0 0.0
      %3716 = vmatprep.subr.mxu0 0.0
      %3717 = vmatpush2.msra.mxu0 0.0
      %3718 = vmatprep.subr.mxu0 0.0
      %3719 = vmatpush2.msra.mxu0 0.0
      %3720 = vmatprep.subr.mxu0 0.0
      %3721 = vmatpush2.msra.mxu0 0.0
      %3722 = vmatprep.subr.mxu0 0.0
      %3723 = vmatpush2.msra.mxu0 0.0
      %3724 = vmatprep.mubr.f32.mxu0 0.0
      %3725 = vmatmul.mubr.f32.gmra.mxu0 %v3658
      %v3726 = vpop.f32.mrf.mxu0
      %v3727 = vadd.f32 0.0, %v3726
      %v3728 = vpop.f32.mrf.mxu0
      %3729 = vdwg.mxu0
      %3730 = vrot.lane.b32.xlu0 %v600, 104
      %v3731 = vpop.permute.xlu0 %3730
      %3732 = vrot.lane.b32.xlu0 %v713, 72
      %v3733 = vpop.permute.xlu0 %3732
      %v3734 = vsel %vm744, %v3731, 0
      %v3736 = vsel %vm744, %v3733, 0
      %3738 = vmatprep.subr.mxu0 0.0
      %3739 = vmatpush1.xpose.msra.mxu0 0.0
      %3740 = vmatprep.subr.mxu0 0.0
      %3741 = vmatpush1.xpose.msra.mxu0 0.0
      %3742 = vmatprep.subr.mxu0 0.0
      %3743 = vmatpush1.xpose.msra.mxu0 0.0
      %3744 = vmatprep.subr.mxu0 0.0
      %3745 = vmatpush1.xpose.msra.mxu0 0.0
      %3746 = vmatprep.subr.mxu0 0.0
      %3747 = vmatpush1.xpose.msra.mxu0 0.0
      %3748 = vmatprep.subr.mxu0 0.0
      %3749 = vmatpush1.xpose.msra.mxu0 0.0
      %3750 = vmatprep.subr.mxu0 0.0
      %3751 = vmatpush1.xpose.msra.mxu0 0.0
      %3752 = vmatprep.subr.mxu0 0.0
      %3753 = vmatpush1.xpose.msra.mxu0 0.0
      %3754 = vmatprep.subr.mxu0 0.0
      %3755 = vmatpush1.xpose.msra.mxu0 0.0
      %3756 = vmatprep.subr.mxu0 0.0
      %3757 = vmatpush1.xpose.msra.mxu0 0.0
      %3758 = vmatprep.subr.mxu0 0.0
      %3759 = vmatpush1.xpose.msra.mxu0 0.0
      %3760 = vmatprep.subr.mxu0 0.0
      %3761 = vmatpush1.xpose.msra.mxu0 0.0
      %3762 = vmatprep.subr.mxu0 0.0
      %3763 = vmatpush1.xpose.msra.mxu0 0.0
      %3764 = vmatprep.subr.mxu0 0.0
      %3765 = vmatpush1.xpose.msra.mxu0 0.0
      %3766 = vmatprep.subr.mxu0 0.0
      %3767 = vmatpush1.xpose.msra.mxu0 0.0
      %3768 = vmatprep.subr.mxu0 0.0
      %3769 = vmatpush1.xpose.msra.mxu0 %v3736
      %3770 = vmatprep.subr.mxu0 0.0
      %3771 = vmatpush2.xpose.msra.mxu0 0.0
      %3772 = vmatprep.subr.mxu0 0.0
      %3773 = vmatpush2.xpose.msra.mxu0 0.0
      %3774 = vmatprep.subr.mxu0 0.0
      %3775 = vmatpush2.xpose.msra.mxu0 0.0
      %3776 = vmatprep.subr.mxu0 0.0
      %3777 = vmatpush2.xpose.msra.mxu0 0.0
      %3778 = vmatprep.subr.mxu0 0.0
      %3779 = vmatpush2.xpose.msra.mxu0 0.0
      %3780 = vmatprep.subr.mxu0 0.0
      %3781 = vmatpush2.xpose.msra.mxu0 0.0
      %3782 = vmatprep.subr.mxu0 0.0
      %3783 = vmatpush2.xpose.msra.mxu0 0.0
      %3784 = vmatprep.subr.mxu0 0.0
      %3785 = vmatpush2.xpose.msra.mxu0 0.0
      %3786 = vmatprep.subr.mxu0 0.0
      %3787 = vmatpush2.xpose.msra.mxu0 0.0
      %3788 = vmatprep.subr.mxu0 0.0
      %3789 = vmatpush2.xpose.msra.mxu0 0.0
      %3790 = vmatprep.subr.mxu0 0.0
      %3791 = vmatpush2.xpose.msra.mxu0 0.0
      %3792 = vmatprep.subr.mxu0 0.0
      %3793 = vmatpush2.xpose.msra.mxu0 0.0
      %3794 = vmatprep.subr.mxu0 0.0
      %3795 = vmatpush2.xpose.msra.mxu0 0.0
      %3796 = vmatprep.subr.mxu0 0.0
      %3797 = vmatpush2.xpose.msra.mxu0 0.0
      %3798 = vmatprep.subr.mxu0 0.0
      %3799 = vmatpush2.xpose.msra.mxu0 0.0
      %3800 = vmatprep.subr.mxu0 0.0
      %3801 = vmatpush2.xpose.msra.mxu0 0.0
      %3802 = vmatprep.mubr.f32.mxu0 0.0
      %3803 = vmatmul.mubr.f32.gmra.mxu0 %v3734
      %v3804 = vpop.f32.mrf.mxu0
      %v3805 = vadd.f32 0.0, %v3804
      %v3806 = vpop.f32.mrf.mxu0
      %3807 = vdwg.mxu0
      %3808 = vrot.lane.b32.xlu0 %v605, 104
      %v3809 = vpop.permute.xlu0 %3808
      %3810 = vrot.lane.b32.xlu0 %v718, 72
      %v3811 = vpop.permute.xlu0 %3810
      %v3812 = vsel %vm744, %v3809, 0
      %v3814 = vsel %vm744, %v3811, 0
      %3816 = vmatprep.subr.mxu0 0.0
      %3817 = vmatpush1.xpose.msra.mxu0 0.0
      %3818 = vmatprep.subr.mxu0 0.0
      %3819 = vmatpush1.xpose.msra.mxu0 0.0
      %3820 = vmatprep.subr.mxu0 0.0
      %3821 = vmatpush1.xpose.msra.mxu0 0.0
      %3822 = vmatprep.subr.mxu0 0.0
      %3823 = vmatpush1.xpose.msra.mxu0 0.0
      %3824 = vmatprep.subr.mxu0 0.0
      %3825 = vmatpush1.xpose.msra.mxu0 0.0
      %3826 = vmatprep.subr.mxu0 0.0
      %3827 = vmatpush1.xpose.msra.mxu0 0.0
      %3828 = vmatprep.subr.mxu0 0.0
      %3829 = vmatpush1.xpose.msra.mxu0 0.0
      %3830 = vmatprep.subr.mxu0 0.0
      %3831 = vmatpush1.xpose.msra.mxu0 0.0
      %3832 = vmatprep.subr.mxu0 0.0
      %3833 = vmatpush1.xpose.msra.mxu0 0.0
      %3834 = vmatprep.subr.mxu0 0.0
      %3835 = vmatpush1.xpose.msra.mxu0 0.0
      %3836 = vmatprep.subr.mxu0 0.0
      %3837 = vmatpush1.xpose.msra.mxu0 0.0
      %3838 = vmatprep.subr.mxu0 0.0
      %3839 = vmatpush1.xpose.msra.mxu0 0.0
      %3840 = vmatprep.subr.mxu0 0.0
      %3841 = vmatpush1.xpose.msra.mxu0 0.0
      %3842 = vmatprep.subr.mxu0 0.0
      %3843 = vmatpush1.xpose.msra.mxu0 0.0
      %3844 = vmatprep.subr.mxu0 0.0
      %3845 = vmatpush1.xpose.msra.mxu0 0.0
      %3846 = vmatprep.subr.mxu0 0.0
      %3847 = vmatpush1.xpose.msra.mxu0 %v3814
      %3848 = vmatprep.subr.mxu0 0.0
      %3849 = vmatpush2.xpose.msra.mxu0 0.0
      %3850 = vmatprep.subr.mxu0 0.0
      %3851 = vmatpush2.xpose.msra.mxu0 0.0
      %3852 = vmatprep.subr.mxu0 0.0
      %3853 = vmatpush2.xpose.msra.mxu0 0.0
      %3854 = vmatprep.subr.mxu0 0.0
      %3855 = vmatpush2.xpose.msra.mxu0 0.0
      %3856 = vmatprep.subr.mxu0 0.0
      %3857 = vmatpush2.xpose.msra.mxu0 0.0
      %3858 = vmatprep.subr.mxu0 0.0
      %3859 = vmatpush2.xpose.msra.mxu0 0.0
      %3860 = vmatprep.subr.mxu0 0.0
      %3861 = vmatpush2.xpose.msra.mxu0 0.0
      %3862 = vmatprep.subr.mxu0 0.0
      %3863 = vmatpush2.xpose.msra.mxu0 0.0
      %3864 = vmatprep.subr.mxu0 0.0
      %3865 = vmatpush2.xpose.msra.mxu0 0.0
      %3866 = vmatprep.subr.mxu0 0.0
      %3867 = vmatpush2.xpose.msra.mxu0 0.0
      %3868 = vmatprep.subr.mxu0 0.0
      %3869 = vmatpush2.xpose.msra.mxu0 0.0
      %3870 = vmatprep.subr.mxu0 0.0
      %3871 = vmatpush2.xpose.msra.mxu0 0.0
      %3872 = vmatprep.subr.mxu0 0.0
      %3873 = vmatpush2.xpose.msra.mxu0 0.0
      %3874 = vmatprep.subr.mxu0 0.0
      %3875 = vmatpush2.xpose.msra.mxu0 0.0
      %3876 = vmatprep.subr.mxu0 0.0
      %3877 = vmatpush2.xpose.msra.mxu0 0.0
      %3878 = vmatprep.subr.mxu0 0.0
      %3879 = vmatpush2.xpose.msra.mxu0 0.0
      %3880 = vmatprep.mubr.f32.mxu0 0.0
      %3881 = vmatmul.mubr.f32.gmra.mxu0 %v3812
      %v3882 = vpop.f32.mrf.mxu0
      %v3883 = vadd.f32 0.0, %v3882
      %v3884 = vpop.f32.mrf.mxu0
      %3885 = vdwg.mxu0
      %3886 = vrot.lane.b32.xlu0 %v610, 104
      %v3887 = vpop.permute.xlu0 %3886
      %3888 = vrot.lane.b32.xlu0 %v723, 72
      %v3889 = vpop.permute.xlu0 %3888
      %v3890 = vsel %vm744, %v3887, 0
      %v3892 = vsel %vm744, %v3889, 0
      %3894 = vmatprep.subr.mxu0 0.0
      %3895 = vmatpush1.xpose.msra.mxu0 0.0
      %3896 = vmatprep.subr.mxu0 0.0
      %3897 = vmatpush1.xpose.msra.mxu0 0.0
      %3898 = vmatprep.subr.mxu0 0.0
      %3899 = vmatpush1.xpose.msra.mxu0 0.0
      %3900 = vmatprep.subr.mxu0 0.0
      %3901 = vmatpush1.xpose.msra.mxu0 0.0
      %3902 = vmatprep.subr.mxu0 0.0
      %3903 = vmatpush1.xpose.msra.mxu0 0.0
      %3904 = vmatprep.subr.mxu0 0.0
      %3905 = vmatpush1.xpose.msra.mxu0 0.0
      %3906 = vmatprep.subr.mxu0 0.0
      %3907 = vmatpush1.xpose.msra.mxu0 0.0
      %3908 = vmatprep.subr.mxu0 0.0
      %3909 = vmatpush1.xpose.msra.mxu0 0.0
      %3910 = vmatprep.subr.mxu0 0.0
      %3911 = vmatpush1.xpose.msra.mxu0 0.0
      %3912 = vmatprep.subr.mxu0 0.0
      %3913 = vmatpush1.xpose.msra.mxu0 0.0
      %3914 = vmatprep.subr.mxu0 0.0
      %3915 = vmatpush1.xpose.msra.mxu0 0.0
      %3916 = vmatprep.subr.mxu0 0.0
      %3917 = vmatpush1.xpose.msra.mxu0 0.0
      %3918 = vmatprep.subr.mxu0 0.0
      %3919 = vmatpush1.xpose.msra.mxu0 0.0
      %3920 = vmatprep.subr.mxu0 0.0
      %3921 = vmatpush1.xpose.msra.mxu0 0.0
      %3922 = vmatprep.subr.mxu0 0.0
      %3923 = vmatpush1.xpose.msra.mxu0 0.0
      %3924 = vmatprep.subr.mxu0 0.0
      %3925 = vmatpush1.xpose.msra.mxu0 %v3892
      %3926 = vmatprep.subr.mxu0 0.0
      %3927 = vmatpush2.xpose.msra.mxu0 0.0
      %3928 = vmatprep.subr.mxu0 0.0
      %3929 = vmatpush2.xpose.msra.mxu0 0.0
      %3930 = vmatprep.subr.mxu0 0.0
      %3931 = vmatpush2.xpose.msra.mxu0 0.0
      %3932 = vmatprep.subr.mxu0 0.0
      %3933 = vmatpush2.xpose.msra.mxu0 0.0
      %3934 = vmatprep.subr.mxu0 0.0
      %3935 = vmatpush2.xpose.msra.mxu0 0.0
      %3936 = vmatprep.subr.mxu0 0.0
      %3937 = vmatpush2.xpose.msra.mxu0 0.0
      %3938 = vmatprep.subr.mxu0 0.0
      %3939 = vmatpush2.xpose.msra.mxu0 0.0
      %3940 = vmatprep.subr.mxu0 0.0
      %3941 = vmatpush2.xpose.msra.mxu0 0.0
      %3942 = vmatprep.subr.mxu0 0.0
      %3943 = vmatpush2.xpose.msra.mxu0 0.0
      %3944 = vmatprep.subr.mxu0 0.0
      %3945 = vmatpush2.xpose.msra.mxu0 0.0
      %3946 = vmatprep.subr.mxu0 0.0
      %3947 = vmatpush2.xpose.msra.mxu0 0.0
      %3948 = vmatprep.subr.mxu0 0.0
      %3949 = vmatpush2.xpose.msra.mxu0 0.0
      %3950 = vmatprep.subr.mxu0 0.0
      %3951 = vmatpush2.xpose.msra.mxu0 0.0
      %3952 = vmatprep.subr.mxu0 0.0
      %3953 = vmatpush2.xpose.msra.mxu0 0.0
      %3954 = vmatprep.subr.mxu0 0.0
      %3955 = vmatpush2.xpose.msra.mxu0 0.0
      %3956 = vmatprep.subr.mxu0 0.0
      %3957 = vmatpush2.xpose.msra.mxu0 0.0
      %3958 = vmatprep.mubr.f32.mxu0 0.0
      %3959 = vmatmul.mubr.f32.gmra.mxu0 %v3890
      %v3960 = vpop.f32.mrf.mxu0
      %v3961 = vadd.f32 0.0, %v3960
      %v3962 = vpop.f32.mrf.mxu0
      %3963 = vdwg.mxu0
      %3964 = vrot.lane.b32.xlu0 %v615, 104
      %v3965 = vpop.permute.xlu0 %3964
      %3966 = vrot.lane.b32.xlu0 %v728, 72
      %v3967 = vpop.permute.xlu0 %3966
      %v3968 = vsel %vm744, %v3965, 0
      %v3970 = vsel %vm744, %v3967, 0
      %3972 = vmatprep.subr.mxu0 0.0
      %3973 = vmatpush1.xpose.msra.mxu0 0.0
      %3974 = vmatprep.subr.mxu0 0.0
      %3975 = vmatpush1.xpose.msra.mxu0 0.0
      %3976 = vmatprep.subr.mxu0 0.0
      %3977 = vmatpush1.xpose.msra.mxu0 0.0
      %3978 = vmatprep.subr.mxu0 0.0
      %3979 = vmatpush1.xpose.msra.mxu0 0.0
      %3980 = vmatprep.subr.mxu0 0.0
      %3981 = vmatpush1.xpose.msra.mxu0 0.0
      %3982 = vmatprep.subr.mxu0 0.0
      %3983 = vmatpush1.xpose.msra.mxu0 0.0
      %3984 = vmatprep.subr.mxu0 0.0
      %3985 = vmatpush1.xpose.msra.mxu0 0.0
      %3986 = vmatprep.subr.mxu0 0.0
      %3987 = vmatpush1.xpose.msra.mxu0 0.0
      %3988 = vmatprep.subr.mxu0 0.0
      %3989 = vmatpush1.xpose.msra.mxu0 0.0
      %3990 = vmatprep.subr.mxu0 0.0
      %3991 = vmatpush1.xpose.msra.mxu0 0.0
      %3992 = vmatprep.subr.mxu0 0.0
      %3993 = vmatpush1.xpose.msra.mxu0 0.0
      %3994 = vmatprep.subr.mxu0 0.0
      %3995 = vmatpush1.xpose.msra.mxu0 0.0
      %3996 = vmatprep.subr.mxu0 0.0
      %3997 = vmatpush1.xpose.msra.mxu0 0.0
      %3998 = vmatprep.subr.mxu0 0.0
      %3999 = vmatpush1.xpose.msra.mxu0 0.0
      %4000 = vmatprep.subr.mxu0 0.0
      %4001 = vmatpush1.xpose.msra.mxu0 0.0
      %4002 = vmatprep.subr.mxu0 0.0
      %4003 = vmatpush1.xpose.msra.mxu0 %v3970
      %4004 = vmatprep.subr.mxu0 0.0
      %4005 = vmatpush2.xpose.msra.mxu0 0.0
      %4006 = vmatprep.subr.mxu0 0.0
      %4007 = vmatpush2.xpose.msra.mxu0 0.0
      %4008 = vmatprep.subr.mxu0 0.0
      %4009 = vmatpush2.xpose.msra.mxu0 0.0
      %4010 = vmatprep.subr.mxu0 0.0
      %4011 = vmatpush2.xpose.msra.mxu0 0.0
      %4012 = vmatprep.subr.mxu0 0.0
      %4013 = vmatpush2.xpose.msra.mxu0 0.0
      %4014 = vmatprep.subr.mxu0 0.0
      %4015 = vmatpush2.xpose.msra.mxu0 0.0
      %4016 = vmatprep.subr.mxu0 0.0
      %4017 = vmatpush2.xpose.msra.mxu0 0.0
      %4018 = vmatprep.subr.mxu0 0.0
      %4019 = vmatpush2.xpose.msra.mxu0 0.0
      %4020 = vmatprep.subr.mxu0 0.0
      %4021 = vmatpush2.xpose.msra.mxu0 0.0
      %4022 = vmatprep.subr.mxu0 0.0
      %4023 = vmatpush2.xpose.msra.mxu0 0.0
      %4024 = vmatprep.subr.mxu0 0.0
      %4025 = vmatpush2.xpose.msra.mxu0 0.0
      %4026 = vmatprep.subr.mxu0 0.0
      %4027 = vmatpush2.xpose.msra.mxu0 0.0
      %4028 = vmatprep.subr.mxu0 0.0
      %4029 = vmatpush2.xpose.msra.mxu0 0.0
      %4030 = vmatprep.subr.mxu0 0.0
      %4031 = vmatpush2.xpose.msra.mxu0 0.0
      %4032 = vmatprep.subr.mxu0 0.0
      %4033 = vmatpush2.xpose.msra.mxu0 0.0
      %4034 = vmatprep.subr.mxu0 0.0
      %4035 = vmatpush2.xpose.msra.mxu0 0.0
      %4036 = vmatprep.mubr.f32.mxu0 0.0
      %4037 = vmatmul.mubr.f32.gmra.mxu0 %v3968
      %v4038 = vpop.f32.mrf.mxu0
      %v4039 = vadd.f32 0.0, %v4038
      %v4040 = vpop.f32.mrf.mxu0
      %4041 = vdwg.mxu0
      %4042 = vrot.lane.b32.xlu0 %v620, 104
      %v4043 = vpop.permute.xlu0 %4042
      %4044 = vrot.lane.b32.xlu0 %v733, 72
      %v4045 = vpop.permute.xlu0 %4044
      %v4046 = vsel %vm744, %v4043, 0
      %v4048 = vsel %vm744, %v4045, 0
      %4050 = vmatprep.subr.mxu0 0.0
      %4051 = vmatpush1.xpose.msra.mxu0 0.0
      %4052 = vmatprep.subr.mxu0 0.0
      %4053 = vmatpush1.xpose.msra.mxu0 0.0
      %4054 = vmatprep.subr.mxu0 0.0
      %4055 = vmatpush1.xpose.msra.mxu0 0.0
      %4056 = vmatprep.subr.mxu0 0.0
      %4057 = vmatpush1.xpose.msra.mxu0 0.0
      %4058 = vmatprep.subr.mxu0 0.0
      %4059 = vmatpush1.xpose.msra.mxu0 0.0
      %4060 = vmatprep.subr.mxu0 0.0
      %4061 = vmatpush1.xpose.msra.mxu0 0.0
      %4062 = vmatprep.subr.mxu0 0.0
      %4063 = vmatpush1.xpose.msra.mxu0 0.0
      %4064 = vmatprep.subr.mxu0 0.0
      %4065 = vmatpush1.xpose.msra.mxu0 0.0
      %4066 = vmatprep.subr.mxu0 0.0
      %4067 = vmatpush1.xpose.msra.mxu0 0.0
      %4068 = vmatprep.subr.mxu0 0.0
      %4069 = vmatpush1.xpose.msra.mxu0 0.0
      %4070 = vmatprep.subr.mxu0 0.0
      %4071 = vmatpush1.xpose.msra.mxu0 0.0
      %4072 = vmatprep.subr.mxu0 0.0
      %4073 = vmatpush1.xpose.msra.mxu0 0.0
      %4074 = vmatprep.subr.mxu0 0.0
      %4075 = vmatpush1.xpose.msra.mxu0 0.0
      %4076 = vmatprep.subr.mxu0 0.0
      %4077 = vmatpush1.xpose.msra.mxu0 0.0
      %4078 = vmatprep.subr.mxu0 0.0
      %4079 = vmatpush1.xpose.msra.mxu0 0.0
      %4080 = vmatprep.subr.mxu0 0.0
      %4081 = vmatpush1.xpose.msra.mxu0 %v4048
      %4082 = vmatprep.subr.mxu0 0.0
      %4083 = vmatpush2.xpose.msra.mxu0 0.0
      %4084 = vmatprep.subr.mxu0 0.0
      %4085 = vmatpush2.xpose.msra.mxu0 0.0
      %4086 = vmatprep.subr.mxu0 0.0
      %4087 = vmatpush2.xpose.msra.mxu0 0.0
      %4088 = vmatprep.subr.mxu0 0.0
      %4089 = vmatpush2.xpose.msra.mxu0 0.0
      %4090 = vmatprep.subr.mxu0 0.0
      %4091 = vmatpush2.xpose.msra.mxu0 0.0
      %4092 = vmatprep.subr.mxu0 0.0
      %4093 = vmatpush2.xpose.msra.mxu0 0.0
      %4094 = vmatprep.subr.mxu0 0.0
      %4095 = vmatpush2.xpose.msra.mxu0 0.0
      %4096 = vmatprep.subr.mxu0 0.0
      %4097 = vmatpush2.xpose.msra.mxu0 0.0
      %4098 = vmatprep.subr.mxu0 0.0
      %4099 = vmatpush2.xpose.msra.mxu0 0.0
      %4100 = vmatprep.subr.mxu0 0.0
      %4101 = vmatpush2.xpose.msra.mxu0 0.0
      %4102 = vmatprep.subr.mxu0 0.0
      %4103 = vmatpush2.xpose.msra.mxu0 0.0
      %4104 = vmatprep.subr.mxu0 0.0
      %4105 = vmatpush2.xpose.msra.mxu0 0.0
      %4106 = vmatprep.subr.mxu0 0.0
      %4107 = vmatpush2.xpose.msra.mxu0 0.0
      %4108 = vmatprep.subr.mxu0 0.0
      %4109 = vmatpush2.xpose.msra.mxu0 0.0
      %4110 = vmatprep.subr.mxu0 0.0
      %4111 = vmatpush2.xpose.msra.mxu0 0.0
      %4112 = vmatprep.subr.mxu0 0.0
      %4113 = vmatpush2.xpose.msra.mxu0 0.0
      %4114 = vmatprep.mubr.f32.mxu0 0.0
      %4115 = vmatmul.mubr.f32.gmra.mxu0 %v4046
      %v4116 = vpop.f32.mrf.mxu0
      %v4117 = vadd.f32 0.0, %v4116
      %v4118 = vpop.f32.mrf.mxu0
      %4119 = vdwg.mxu0
      %4120 = vrot.lane.b32.xlu0 %v625, 104
      %v4121 = vpop.permute.xlu0 %4120
      %4122 = vrot.lane.b32.xlu0 %v738, 72
      %v4123 = vpop.permute.xlu0 %4122
      %v4124 = vsel %vm744, %v4121, 0
      %v4126 = vsel %vm744, %v4123, 0
      %4128 = vmatprep.subr.mxu0 0.0
      %4129 = vmatpush1.xpose.msra.mxu0 0.0
      %4130 = vmatprep.subr.mxu0 0.0
      %4131 = vmatpush1.xpose.msra.mxu0 0.0
      %4132 = vmatprep.subr.mxu0 0.0
      %4133 = vmatpush1.xpose.msra.mxu0 0.0
      %4134 = vmatprep.subr.mxu0 0.0
      %4135 = vmatpush1.xpose.msra.mxu0 0.0
      %4136 = vmatprep.subr.mxu0 0.0
      %4137 = vmatpush1.xpose.msra.mxu0 0.0
      %4138 = vmatprep.subr.mxu0 0.0
      %4139 = vmatpush1.xpose.msra.mxu0 0.0
      %4140 = vmatprep.subr.mxu0 0.0
      %4141 = vmatpush1.xpose.msra.mxu0 0.0
      %4142 = vmatprep.subr.mxu0 0.0
      %4143 = vmatpush1.xpose.msra.mxu0 0.0
      %4144 = vmatprep.subr.mxu0 0.0
      %4145 = vmatpush1.xpose.msra.mxu0 0.0
      %4146 = vmatprep.subr.mxu0 0.0
      %4147 = vmatpush1.xpose.msra.mxu0 0.0
      %4148 = vmatprep.subr.mxu0 0.0
      %4149 = vmatpush1.xpose.msra.mxu0 0.0
      %4150 = vmatprep.subr.mxu0 0.0
      %4151 = vmatpush1.xpose.msra.mxu0 0.0
      %4152 = vmatprep.subr.mxu0 0.0
      %4153 = vmatpush1.xpose.msra.mxu0 0.0
      %4154 = vmatprep.subr.mxu0 0.0
      %4155 = vmatpush1.xpose.msra.mxu0 0.0
      %4156 = vmatprep.subr.mxu0 0.0
      %4157 = vmatpush1.xpose.msra.mxu0 0.0
      %4158 = vmatprep.subr.mxu0 0.0
      %4159 = vmatpush1.xpose.msra.mxu0 %v4126
      %4160 = vmatprep.subr.mxu0 0.0
      %4161 = vmatpush2.xpose.msra.mxu0 0.0
      %4162 = vmatprep.subr.mxu0 0.0
      %4163 = vmatpush2.xpose.msra.mxu0 0.0
      %4164 = vmatprep.subr.mxu0 0.0
      %4165 = vmatpush2.xpose.msra.mxu0 0.0
      %4166 = vmatprep.subr.mxu0 0.0
      %4167 = vmatpush2.xpose.msra.mxu0 0.0
      %4168 = vmatprep.subr.mxu0 0.0
      %4169 = vmatpush2.xpose.msra.mxu0 0.0
      %4170 = vmatprep.subr.mxu0 0.0
      %4171 = vmatpush2.xpose.msra.mxu0 0.0
      %4172 = vmatprep.subr.mxu0 0.0
      %4173 = vmatpush2.xpose.msra.mxu0 0.0
      %4174 = vmatprep.subr.mxu0 0.0
      %4175 = vmatpush2.xpose.msra.mxu0 0.0
      %4176 = vmatprep.subr.mxu0 0.0
      %4177 = vmatpush2.xpose.msra.mxu0 0.0
      %4178 = vmatprep.subr.mxu0 0.0
      %4179 = vmatpush2.xpose.msra.mxu0 0.0
      %4180 = vmatprep.subr.mxu0 0.0
      %4181 = vmatpush2.xpose.msra.mxu0 0.0
      %4182 = vmatprep.subr.mxu0 0.0
      %4183 = vmatpush2.xpose.msra.mxu0 0.0
      %4184 = vmatprep.subr.mxu0 0.0
      %4185 = vmatpush2.xpose.msra.mxu0 0.0
      %4186 = vmatprep.subr.mxu0 0.0
      %4187 = vmatpush2.xpose.msra.mxu0 0.0
      %4188 = vmatprep.subr.mxu0 0.0
      %4189 = vmatpush2.xpose.msra.mxu0 0.0
      %4190 = vmatprep.subr.mxu0 0.0
      %4191 = vmatpush2.xpose.msra.mxu0 0.0
      %4192 = vmatprep.mubr.f32.mxu0 0.0
      %4193 = vmatmul.mubr.f32.gmra.mxu0 %v4124
      %v4194 = vpop.f32.mrf.mxu0
      %v4195 = vadd.f32 0.0, %v4194
      %v4196 = vpop.f32.mrf.mxu0
      %4197 = vdwg.mxu0
      %v4198 = vmul.f32 %v3805, 0.35355338
      %v4199 = vmul.f32 %v3883, 0.35355338
      %v4200 = vmul.f32 %v3961, 0.35355338
      %v4201 = vmul.f32 %v4039, 0.35355338
      %v4202 = vmul.f32 %v4117, 0.35355338
      %v4203 = vmul.f32 %v4195, 0.35355338
      %v4204 = vsel %vm744, %v4198, -inf
      %4205 = vmax.xlane.f32.xlu0 %v4204
      %v4206 = vpop.xlane.xlu0 %4205
      %v4207 = vsel %vm744, %v4199, -inf
      %4208 = vmax.xlane.f32.xlu0 %v4207
      %v4209 = vpop.xlane.xlu0 %4208
      %v4210 = vsel %vm744, %v4200, -inf
      %4211 = vmax.xlane.f32.xlu0 %v4210
      %v4212 = vpop.xlane.xlu0 %4211
      %v4213 = vsel %vm744, %v4201, -inf
      %4214 = vmax.xlane.f32.xlu0 %v4213
      %v4215 = vpop.xlane.xlu0 %4214
      %v4216 = vsel %vm744, %v4202, -inf
      %4217 = vmax.xlane.f32.xlu0 %v4216
      %v4218 = vpop.xlane.xlu0 %4217
      %v4219 = vsel %vm744, %v4203, -inf
      %4220 = vmax.xlane.f32.xlu0 %v4219
      %v4221 = vpop.xlane.xlu0 %4220
      %v4222 = vsub.f32 %v4198, %v4206
      %v4223 = vsub.f32 %v4199, %v4209
      %v4224 = vsub.f32 %v4200, %v4212
      %v4225 = vsub.f32 %v4201, %v4215
      %v4226 = vsub.f32 %v4202, %v4218
      %v4227 = vsub.f32 %v4203, %v4221
      %v4228 = vmul.f32 %v4222, 1.442695
      %v4229 = vpow.pop %v4228
      %v4230 = vmul.f32 %v4223, 1.442695
      %v4231 = vpow.pop %v4230
      %v4232 = vmul.f32 %v4224, 1.442695
      %v4233 = vpow.pop %v4232
      %v4234 = vmul.f32 %v4225, 1.442695
      %v4235 = vpow.pop %v4234
      %v4236 = vmul.f32 %v4226, 1.442695
      %v4237 = vpow.pop %v4236
      %v4238 = vmul.f32 %v4227, 1.442695
      %v4239 = vpow.pop %v4238
      %v4240 = vsel %vm744, %v4229, 0.0
      %4241 = vadd.xlane.f32.xlu0 %v4240
      %v4242 = vpop.xlane.xlu0 %4241
      %v4243 = vsel %vm744, %v4231, 0.0
      %4244 = vadd.xlane.f32.xlu0 %v4243
      %v4245 = vpop.xlane.xlu0 %4244
      %v4246 = vsel %vm744, %v4233, 0.0
      %4247 = vadd.xlane.f32.xlu0 %v4246
      %v4248 = vpop.xlane.xlu0 %4247
      %v4249 = vsel %vm744, %v4235, 0.0
      %4250 = vadd.xlane.f32.xlu0 %v4249
      %v4251 = vpop.xlane.xlu0 %4250
      %v4252 = vsel %vm744, %v4237, 0.0
      %4253 = vadd.xlane.f32.xlu0 %v4252
      %v4254 = vpop.xlane.xlu0 %4253
      %v4255 = vsel %vm744, %v4239, 0.0
      %4256 = vadd.xlane.f32.xlu0 %v4255
      %v4257 = vpop.xlane.xlu0 %4256
      %v4258 = vrcp.pop %v4242
      %v4259 = vrcp.pop %v4245
      %v4260 = vrcp.pop %v4248
      %v4261 = vrcp.pop %v4251
      %v4262 = vrcp.pop %v4254
      %v4263 = vrcp.pop %v4257
      %v4264 = vmul.f32 %v4229, %v4258
      %v4265 = vmul.f32 %v4231, %v4259
      %v4266 = vmul.f32 %v4233, %v4260
      %v4267 = vmul.f32 %v4235, %v4261
      %v4268 = vmul.f32 %v4237, %v4262
      %v4269 = vmul.f32 %v4239, %v4263
      %4270 = vrot.lane.b32.xlu0 %v713, 40
      %v4271 = vpop.permute.xlu0 %4270
      %v4274 = vsel %vm744, %v4264, 0
      %4276 = vmatprep.subr.mxu0 0.0
      %4277 = vmatpush1.msra.mxu0 0.0
      %4278 = vmatprep.subr.mxu0 0.0
      %4279 = vmatpush1.msra.mxu0 0.0
      %4280 = vmatprep.subr.mxu0 0.0
      %4281 = vmatpush1.msra.mxu0 0.0
      %4282 = vmatprep.subr.mxu0 0.0
      %4283 = vmatpush1.msra.mxu0 0.0
      %4284 = vmatprep.subr.mxu0 0.0
      %4285 = vmatpush1.msra.mxu0 0.0
      %4286 = vmatprep.subr.mxu0 0.0
      %4287 = vmatpush1.msra.mxu0 0.0
      %4288 = vmatprep.subr.mxu0 0.0
      %4289 = vmatpush1.msra.mxu0 0.0
      %4290 = vmatprep.subr.mxu0 0.0
      %4291 = vmatpush1.msra.mxu0 0.0
      %4292 = vmatprep.subr.mxu0 0.0
      %4293 = vmatpush1.msra.mxu0 0.0
      %4294 = vmatprep.subr.mxu0 0.0
      %4295 = vmatpush1.msra.mxu0 0.0
      %4296 = vmatprep.subr.mxu0 0.0
      %4297 = vmatpush1.msra.mxu0 0.0
      %4298 = vmatprep.subr.mxu0 0.0
      %4299 = vmatpush1.msra.mxu0 0.0
      %4300 = vmatprep.subr.mxu0 0.0
      %4301 = vmatpush1.msra.mxu0 0.0
      %4302 = vmatprep.subr.mxu0 0.0
      %4303 = vmatpush1.msra.mxu0 0.0
      %4304 = vmatprep.subr.mxu0 0.0
      %4305 = vmatpush1.msra.mxu0 0.0
      %4306 = vmatprep.subr.mxu0 0.0
      %4307 = vmatpush1.msra.mxu0 %v4271
      %4308 = vmatprep.subr.mxu0 0.0
      %4309 = vmatpush2.msra.mxu0 0.0
      %4310 = vmatprep.subr.mxu0 0.0
      %4311 = vmatpush2.msra.mxu0 0.0
      %4312 = vmatprep.subr.mxu0 0.0
      %4313 = vmatpush2.msra.mxu0 0.0
      %4314 = vmatprep.subr.mxu0 0.0
      %4315 = vmatpush2.msra.mxu0 0.0
      %4316 = vmatprep.subr.mxu0 0.0
      %4317 = vmatpush2.msra.mxu0 0.0
      %4318 = vmatprep.subr.mxu0 0.0
      %4319 = vmatpush2.msra.mxu0 0.0
      %4320 = vmatprep.subr.mxu0 0.0
      %4321 = vmatpush2.msra.mxu0 0.0
      %4322 = vmatprep.subr.mxu0 0.0
      %4323 = vmatpush2.msra.mxu0 0.0
      %4324 = vmatprep.subr.mxu0 0.0
      %4325 = vmatpush2.msra.mxu0 0.0
      %4326 = vmatprep.subr.mxu0 0.0
      %4327 = vmatpush2.msra.mxu0 0.0
      %4328 = vmatprep.subr.mxu0 0.0
      %4329 = vmatpush2.msra.mxu0 0.0
      %4330 = vmatprep.subr.mxu0 0.0
      %4331 = vmatpush2.msra.mxu0 0.0
      %4332 = vmatprep.subr.mxu0 0.0
      %4333 = vmatpush2.msra.mxu0 0.0
      %4334 = vmatprep.subr.mxu0 0.0
      %4335 = vmatpush2.msra.mxu0 0.0
      %4336 = vmatprep.subr.mxu0 0.0
      %4337 = vmatpush2.msra.mxu0 0.0
      %4338 = vmatprep.subr.mxu0 0.0
      %4339 = vmatpush2.msra.mxu0 0.0
      %4340 = vmatprep.mubr.f32.mxu0 0.0
      %4341 = vmatmul.mubr.f32.gmra.mxu0 %v4274
      %v4342 = vpop.f32.mrf.mxu0
      %v4343 = vadd.f32 0.0, %v4342
      %v4344 = vpop.f32.mrf.mxu0
      %4345 = vdwg.mxu0
      %4346 = vrot.lane.b32.xlu0 %v718, 40
      %v4347 = vpop.permute.xlu0 %4346
      %v4350 = vsel %vm744, %v4265, 0
      %4352 = vmatprep.subr.mxu0 0.0
      %4353 = vmatpush1.msra.mxu0 0.0
      %4354 = vmatprep.subr.mxu0 0.0
      %4355 = vmatpush1.msra.mxu0 0.0
      %4356 = vmatprep.subr.mxu0 0.0
      %4357 = vmatpush1.msra.mxu0 0.0
      %4358 = vmatprep.subr.mxu0 0.0
      %4359 = vmatpush1.msra.mxu0 0.0
      %4360 = vmatprep.subr.mxu0 0.0
      %4361 = vmatpush1.msra.mxu0 0.0
      %4362 = vmatprep.subr.mxu0 0.0
      %4363 = vmatpush1.msra.mxu0 0.0
      %4364 = vmatprep.subr.mxu0 0.0
      %4365 = vmatpush1.msra.mxu0 0.0
      %4366 = vmatprep.subr.mxu0 0.0
      %4367 = vmatpush1.msra.mxu0 0.0
      %4368 = vmatprep.subr.mxu0 0.0
      %4369 = vmatpush1.msra.mxu0 0.0
      %4370 = vmatprep.subr.mxu0 0.0
      %4371 = vmatpush1.msra.mxu0 0.0
      %4372 = vmatprep.subr.mxu0 0.0
      %4373 = vmatpush1.msra.mxu0 0.0
      %4374 = vmatprep.subr.mxu0 0.0
      %4375 = vmatpush1.msra.mxu0 0.0
      %4376 = vmatprep.subr.mxu0 0.0
      %4377 = vmatpush1.msra.mxu0 0.0
      %4378 = vmatprep.subr.mxu0 0.0
      %4379 = vmatpush1.msra.mxu0 0.0
      %4380 = vmatprep.subr.mxu0 0.0
      %4381 = vmatpush1.msra.mxu0 0.0
      %4382 = vmatprep.subr.mxu0 0.0
      %4383 = vmatpush1.msra.mxu0 %v4347
      %4384 = vmatprep.subr.mxu0 0.0
      %4385 = vmatpush2.msra.mxu0 0.0
      %4386 = vmatprep.subr.mxu0 0.0
      %4387 = vmatpush2.msra.mxu0 0.0
      %4388 = vmatprep.subr.mxu0 0.0
      %4389 = vmatpush2.msra.mxu0 0.0
      %4390 = vmatprep.subr.mxu0 0.0
      %4391 = vmatpush2.msra.mxu0 0.0
      %4392 = vmatprep.subr.mxu0 0.0
      %4393 = vmatpush2.msra.mxu0 0.0
      %4394 = vmatprep.subr.mxu0 0.0
      %4395 = vmatpush2.msra.mxu0 0.0
      %4396 = vmatprep.subr.mxu0 0.0
      %4397 = vmatpush2.msra.mxu0 0.0
      %4398 = vmatprep.subr.mxu0 0.0
      %4399 = vmatpush2.msra.mxu0 0.0
      %4400 = vmatprep.subr.mxu0 0.0
      %4401 = vmatpush2.msra.mxu0 0.0
      %4402 = vmatprep.subr.mxu0 0.0
      %4403 = vmatpush2.msra.mxu0 0.0
      %4404 = vmatprep.subr.mxu0 0.0
      %4405 = vmatpush2.msra.mxu0 0.0
      %4406 = vmatprep.subr.mxu0 0.0
      %4407 = vmatpush2.msra.mxu0 0.0
      %4408 = vmatprep.subr.mxu0 0.0
      %4409 = vmatpush2.msra.mxu0 0.0
      %4410 = vmatprep.subr.mxu0 0.0
      %4411 = vmatpush2.msra.mxu0 0.0
      %4412 = vmatprep.subr.mxu0 0.0
      %4413 = vmatpush2.msra.mxu0 0.0
      %4414 = vmatprep.subr.mxu0 0.0
      %4415 = vmatpush2.msra.mxu0 0.0
      %4416 = vmatprep.mubr.f32.mxu0 0.0
      %4417 = vmatmul.mubr.f32.gmra.mxu0 %v4350
      %v4418 = vpop.f32.mrf.mxu0
      %v4419 = vadd.f32 0.0, %v4418
      %v4420 = vpop.f32.mrf.mxu0
      %4421 = vdwg.mxu0
      %4422 = vrot.lane.b32.xlu0 %v723, 40
      %v4423 = vpop.permute.xlu0 %4422
      %v4426 = vsel %vm744, %v4266, 0
      %4428 = vmatprep.subr.mxu0 0.0
      %4429 = vmatpush1.msra.mxu0 0.0
      %4430 = vmatprep.subr.mxu0 0.0
      %4431 = vmatpush1.msra.mxu0 0.0
      %4432 = vmatprep.subr.mxu0 0.0
      %4433 = vmatpush1.msra.mxu0 0.0
      %4434 = vmatprep.subr.mxu0 0.0
      %4435 = vmatpush1.msra.mxu0 0.0
      %4436 = vmatprep.subr.mxu0 0.0
      %4437 = vmatpush1.msra.mxu0 0.0
      %4438 = vmatprep.subr.mxu0 0.0
      %4439 = vmatpush1.msra.mxu0 0.0
      %4440 = vmatprep.subr.mxu0 0.0
      %4441 = vmatpush1.msra.mxu0 0.0
      %4442 = vmatprep.subr.mxu0 0.0
      %4443 = vmatpush1.msra.mxu0 0.0
      %4444 = vmatprep.subr.mxu0 0.0
      %4445 = vmatpush1.msra.mxu0 0.0
      %4446 = vmatprep.subr.mxu0 0.0
      %4447 = vmatpush1.msra.mxu0 0.0
      %4448 = vmatprep.subr.mxu0 0.0
      %4449 = vmatpush1.msra.mxu0 0.0
      %4450 = vmatprep.subr.mxu0 0.0
      %4451 = vmatpush1.msra.mxu0 0.0
      %4452 = vmatprep.subr.mxu0 0.0
      %4453 = vmatpush1.msra.mxu0 0.0
      %4454 = vmatprep.subr.mxu0 0.0
      %4455 = vmatpush1.msra.mxu0 0.0
      %4456 = vmatprep.subr.mxu0 0.0
      %4457 = vmatpush1.msra.mxu0 0.0
      %4458 = vmatprep.subr.mxu0 0.0
      %4459 = vmatpush1.msra.mxu0 %v4423
      %4460 = vmatprep.subr.mxu0 0.0
      %4461 = vmatpush2.msra.mxu0 0.0
      %4462 = vmatprep.subr.mxu0 0.0
      %4463 = vmatpush2.msra.mxu0 0.0
      %4464 = vmatprep.subr.mxu0 0.0
      %4465 = vmatpush2.msra.mxu0 0.0
      %4466 = vmatprep.subr.mxu0 0.0
      %4467 = vmatpush2.msra.mxu0 0.0
      %4468 = vmatprep.subr.mxu0 0.0
      %4469 = vmatpush2.msra.mxu0 0.0
      %4470 = vmatprep.subr.mxu0 0.0
      %4471 = vmatpush2.msra.mxu0 0.0
      %4472 = vmatprep.subr.mxu0 0.0
      %4473 = vmatpush2.msra.mxu0 0.0
      %4474 = vmatprep.subr.mxu0 0.0
      %4475 = vmatpush2.msra.mxu0 0.0
      %4476 = vmatprep.subr.mxu0 0.0
      %4477 = vmatpush2.msra.mxu0 0.0
      %4478 = vmatprep.subr.mxu0 0.0
      %4479 = vmatpush2.msra.mxu0 0.0
      %4480 = vmatprep.subr.mxu0 0.0
      %4481 = vmatpush2.msra.mxu0 0.0
      %4482 = vmatprep.subr.mxu0 0.0
      %4483 = vmatpush2.msra.mxu0 0.0
      %4484 = vmatprep.subr.mxu0 0.0
      %4485 = vmatpush2.msra.mxu0 0.0
      %4486 = vmatprep.subr.mxu0 0.0
      %4487 = vmatpush2.msra.mxu0 0.0
      %4488 = vmatprep.subr.mxu0 0.0
      %4489 = vmatpush2.msra.mxu0 0.0
      %4490 = vmatprep.subr.mxu0 0.0
      %4491 = vmatpush2.msra.mxu0 0.0
      %4492 = vmatprep.mubr.f32.mxu0 0.0
      %4493 = vmatmul.mubr.f32.gmra.mxu0 %v4426
      %v4494 = vpop.f32.mrf.mxu0
      %v4495 = vadd.f32 0.0, %v4494
      %v4496 = vpop.f32.mrf.mxu0
      %4497 = vdwg.mxu0
      %4498 = vrot.lane.b32.xlu0 %v728, 40
      %v4499 = vpop.permute.xlu0 %4498
      %v4502 = vsel %vm744, %v4267, 0
      %4504 = vmatprep.subr.mxu0 0.0
      %4505 = vmatpush1.msra.mxu0 0.0
      %4506 = vmatprep.subr.mxu0 0.0
      %4507 = vmatpush1.msra.mxu0 0.0
      %4508 = vmatprep.subr.mxu0 0.0
      %4509 = vmatpush1.msra.mxu0 0.0
      %4510 = vmatprep.subr.mxu0 0.0
      %4511 = vmatpush1.msra.mxu0 0.0
      %4512 = vmatprep.subr.mxu0 0.0
      %4513 = vmatpush1.msra.mxu0 0.0
      %4514 = vmatprep.subr.mxu0 0.0
      %4515 = vmatpush1.msra.mxu0 0.0
      %4516 = vmatprep.subr.mxu0 0.0
      %4517 = vmatpush1.msra.mxu0 0.0
      %4518 = vmatprep.subr.mxu0 0.0
      %4519 = vmatpush1.msra.mxu0 0.0
      %4520 = vmatprep.subr.mxu0 0.0
      %4521 = vmatpush1.msra.mxu0 0.0
      %4522 = vmatprep.subr.mxu0 0.0
      %4523 = vmatpush1.msra.mxu0 0.0
      %4524 = vmatprep.subr.mxu0 0.0
      %4525 = vmatpush1.msra.mxu0 0.0
      %4526 = vmatprep.subr.mxu0 0.0
      %4527 = vmatpush1.msra.mxu0 0.0
      %4528 = vmatprep.subr.mxu0 0.0
      %4529 = vmatpush1.msra.mxu0 0.0
      %4530 = vmatprep.subr.mxu0 0.0
      %4531 = vmatpush1.msra.mxu0 0.0
      %4532 = vmatprep.subr.mxu0 0.0
      %4533 = vmatpush1.msra.mxu0 0.0
      %4534 = vmatprep.subr.mxu0 0.0
      %4535 = vmatpush1.msra.mxu0 %v4499
      %4536 = vmatprep.subr.mxu0 0.0
      %4537 = vmatpush2.msra.mxu0 0.0
      %4538 = vmatprep.subr.mxu0 0.0
      %4539 = vmatpush2.msra.mxu0 0.0
      %4540 = vmatprep.subr.mxu0 0.0
      %4541 = vmatpush2.msra.mxu0 0.0
      %4542 = vmatprep.subr.mxu0 0.0
      %4543 = vmatpush2.msra.mxu0 0.0
      %4544 = vmatprep.subr.mxu0 0.0
      %4545 = vmatpush2.msra.mxu0 0.0
      %4546 = vmatprep.subr.mxu0 0.0
      %4547 = vmatpush2.msra.mxu0 0.0
      %4548 = vmatprep.subr.mxu0 0.0
      %4549 = vmatpush2.msra.mxu0 0.0
      %4550 = vmatprep.subr.mxu0 0.0
      %4551 = vmatpush2.msra.mxu0 0.0
      %4552 = vmatprep.subr.mxu0 0.0
      %4553 = vmatpush2.msra.mxu0 0.0
      %4554 = vmatprep.subr.mxu0 0.0
      %4555 = vmatpush2.msra.mxu0 0.0
      %4556 = vmatprep.subr.mxu0 0.0
      %4557 = vmatpush2.msra.mxu0 0.0
      %4558 = vmatprep.subr.mxu0 0.0
      %4559 = vmatpush2.msra.mxu0 0.0
      %4560 = vmatprep.subr.mxu0 0.0
      %4561 = vmatpush2.msra.mxu0 0.0
      %4562 = vmatprep.subr.mxu0 0.0
      %4563 = vmatpush2.msra.mxu0 0.0
      %4564 = vmatprep.subr.mxu0 0.0
      %4565 = vmatpush2.msra.mxu0 0.0
      %4566 = vmatprep.subr.mxu0 0.0
      %4567 = vmatpush2.msra.mxu0 0.0
      %4568 = vmatprep.mubr.f32.mxu0 0.0
      %4569 = vmatmul.mubr.f32.gmra.mxu0 %v4502
      %v4570 = vpop.f32.mrf.mxu0
      %v4571 = vadd.f32 0.0, %v4570
      %v4572 = vpop.f32.mrf.mxu0
      %4573 = vdwg.mxu0
      %4574 = vrot.lane.b32.xlu0 %v733, 40
      %v4575 = vpop.permute.xlu0 %4574
      %v4578 = vsel %vm744, %v4268, 0
      %4580 = vmatprep.subr.mxu0 0.0
      %4581 = vmatpush1.msra.mxu0 0.0
      %4582 = vmatprep.subr.mxu0 0.0
      %4583 = vmatpush1.msra.mxu0 0.0
      %4584 = vmatprep.subr.mxu0 0.0
      %4585 = vmatpush1.msra.mxu0 0.0
      %4586 = vmatprep.subr.mxu0 0.0
      %4587 = vmatpush1.msra.mxu0 0.0
      %4588 = vmatprep.subr.mxu0 0.0
      %4589 = vmatpush1.msra.mxu0 0.0
      %4590 = vmatprep.subr.mxu0 0.0
      %4591 = vmatpush1.msra.mxu0 0.0
      %4592 = vmatprep.subr.mxu0 0.0
      %4593 = vmatpush1.msra.mxu0 0.0
      %4594 = vmatprep.subr.mxu0 0.0
      %4595 = vmatpush1.msra.mxu0 0.0
      %4596 = vmatprep.subr.mxu0 0.0
      %4597 = vmatpush1.msra.mxu0 0.0
      %4598 = vmatprep.subr.mxu0 0.0
      %4599 = vmatpush1.msra.mxu0 0.0
      %4600 = vmatprep.subr.mxu0 0.0
      %4601 = vmatpush1.msra.mxu0 0.0
      %4602 = vmatprep.subr.mxu0 0.0
      %4603 = vmatpush1.msra.mxu0 0.0
      %4604 = vmatprep.subr.mxu0 0.0
      %4605 = vmatpush1.msra.mxu0 0.0
      %4606 = vmatprep.subr.mxu0 0.0
      %4607 = vmatpush1.msra.mxu0 0.0
      %4608 = vmatprep.subr.mxu0 0.0
      %4609 = vmatpush1.msra.mxu0 0.0
      %4610 = vmatprep.subr.mxu0 0.0
      %4611 = vmatpush1.msra.mxu0 %v4575
      %4612 = vmatprep.subr.mxu0 0.0
      %4613 = vmatpush2.msra.mxu0 0.0
      %4614 = vmatprep.subr.mxu0 0.0
      %4615 = vmatpush2.msra.mxu0 0.0
      %4616 = vmatprep.subr.mxu0 0.0
      %4617 = vmatpush2.msra.mxu0 0.0
      %4618 = vmatprep.subr.mxu0 0.0
      %4619 = vmatpush2.msra.mxu0 0.0
      %4620 = vmatprep.subr.mxu0 0.0
      %4621 = vmatpush2.msra.mxu0 0.0
      %4622 = vmatprep.subr.mxu0 0.0
      %4623 = vmatpush2.msra.mxu0 0.0
      %4624 = vmatprep.subr.mxu0 0.0
      %4625 = vmatpush2.msra.mxu0 0.0
      %4626 = vmatprep.subr.mxu0 0.0
      %4627 = vmatpush2.msra.mxu0 0.0
      %4628 = vmatprep.subr.mxu0 0.0
      %4629 = vmatpush2.msra.mxu0 0.0
      %4630 = vmatprep.subr.mxu0 0.0
      %4631 = vmatpush2.msra.mxu0 0.0
      %4632 = vmatprep.subr.mxu0 0.0
      %4633 = vmatpush2.msra.mxu0 0.0
      %4634 = vmatprep.subr.mxu0 0.0
      %4635 = vmatpush2.msra.mxu0 0.0
      %4636 = vmatprep.subr.mxu0 0.0
      %4637 = vmatpush2.msra.mxu0 0.0
      %4638 = vmatprep.subr.mxu0 0.0
      %4639 = vmatpush2.msra.mxu0 0.0
      %4640 = vmatprep.subr.mxu0 0.0
      %4641 = vmatpush2.msra.mxu0 0.0
      %4642 = vmatprep.subr.mxu0 0.0
      %4643 = vmatpush2.msra.mxu0 0.0
      %4644 = vmatprep.mubr.f32.mxu0 0.0
      %4645 = vmatmul.mubr.f32.gmra.mxu0 %v4578
      %v4646 = vpop.f32.mrf.mxu0
      %v4647 = vadd.f32 0.0, %v4646
      %v4648 = vpop.f32.mrf.mxu0
      %4649 = vdwg.mxu0
      %4650 = vrot.lane.b32.xlu0 %v738, 40
      %v4651 = vpop.permute.xlu0 %4650
      %v4654 = vsel %vm744, %v4269, 0
      %4656 = vmatprep.subr.mxu0 0.0
      %4657 = vmatpush1.msra.mxu0 0.0
      %4658 = vmatprep.subr.mxu0 0.0
      %4659 = vmatpush1.msra.mxu0 0.0
      %4660 = vmatprep.subr.mxu0 0.0
      %4661 = vmatpush1.msra.mxu0 0.0
      %4662 = vmatprep.subr.mxu0 0.0
      %4663 = vmatpush1.msra.mxu0 0.0
      %4664 = vmatprep.subr.mxu0 0.0
      %4665 = vmatpush1.msra.mxu0 0.0
      %4666 = vmatprep.subr.mxu0 0.0
      %4667 = vmatpush1.msra.mxu0 0.0
      %4668 = vmatprep.subr.mxu0 0.0
      %4669 = vmatpush1.msra.mxu0 0.0
      %4670 = vmatprep.subr.mxu0 0.0
      %4671 = vmatpush1.msra.mxu0 0.0
      %4672 = vmatprep.subr.mxu0 0.0
      %4673 = vmatpush1.msra.mxu0 0.0
      %4674 = vmatprep.subr.mxu0 0.0
      %4675 = vmatpush1.msra.mxu0 0.0
      %4676 = vmatprep.subr.mxu0 0.0
      %4677 = vmatpush1.msra.mxu0 0.0
      %4678 = vmatprep.subr.mxu0 0.0
      %4679 = vmatpush1.msra.mxu0 0.0
      %4680 = vmatprep.subr.mxu0 0.0
      %4681 = vmatpush1.msra.mxu0 0.0
      %4682 = vmatprep.subr.mxu0 0.0
      %4683 = vmatpush1.msra.mxu0 0.0
      %4684 = vmatprep.subr.mxu0 0.0
      %4685 = vmatpush1.msra.mxu0 0.0
      %4686 = vmatprep.subr.mxu0 0.0
      %4687 = vmatpush1.msra.mxu0 %v4651
      %4688 = vmatprep.subr.mxu0 0.0
      %4689 = vmatpush2.msra.mxu0 0.0
      %4690 = vmatprep.subr.mxu0 0.0
      %4691 = vmatpush2.msra.mxu0 0.0
      %4692 = vmatprep.subr.mxu0 0.0
      %4693 = vmatpush2.msra.mxu0 0.0
      %4694 = vmatprep.subr.mxu0 0.0
      %4695 = vmatpush2.msra.mxu0 0.0
      %4696 = vmatprep.subr.mxu0 0.0
      %4697 = vmatpush2.msra.mxu0 0.0
      %4698 = vmatprep.subr.mxu0 0.0
      %4699 = vmatpush2.msra.mxu0 0.0
      %4700 = vmatprep.subr.mxu0 0.0
      %4701 = vmatpush2.msra.mxu0 0.0
      %4702 = vmatprep.subr.mxu0 0.0
      %4703 = vmatpush2.msra.mxu0 0.0
      %4704 = vmatprep.subr.mxu0 0.0
      %4705 = vmatpush2.msra.mxu0 0.0
      %4706 = vmatprep.subr.mxu0 0.0
      %4707 = vmatpush2.msra.mxu0 0.0
      %4708 = vmatprep.subr.mxu0 0.0
      %4709 = vmatpush2.msra.mxu0 0.0
      %4710 = vmatprep.subr.mxu0 0.0
      %4711 = vmatpush2.msra.mxu0 0.0
      %4712 = vmatprep.subr.mxu0 0.0
      %4713 = vmatpush2.msra.mxu0 0.0
      %4714 = vmatprep.subr.mxu0 0.0
      %4715 = vmatpush2.msra.mxu0 0.0
      %4716 = vmatprep.subr.mxu0 0.0
      %4717 = vmatpush2.msra.mxu0 0.0
      %4718 = vmatprep.subr.mxu0 0.0
      %4719 = vmatpush2.msra.mxu0 0.0
      %4720 = vmatprep.mubr.f32.mxu0 0.0
      %4721 = vmatmul.mubr.f32.gmra.mxu0 %v4654
      %v4722 = vpop.f32.mrf.mxu0
      %v4723 = vadd.f32 0.0, %v4722
      %v4724 = vpop.f32.mrf.mxu0
      %4725 = vdwg.mxu0
      %4732 = vrot.lane.b32.xlu0 %v2351, 8
      %v4733 = vpop.permute.xlu0 %4732
      %4734 = vrot.lane.b32.xlu0 %v2427, 8
      %v4735 = vpop.permute.xlu0 %4734
      %4736 = vrot.lane.b32.xlu0 %v2503, 8
      %v4737 = vpop.permute.xlu0 %4736
      %4738 = vrot.lane.b32.xlu0 %v2579, 8
      %v4739 = vpop.permute.xlu0 %4738
      %4740 = vrot.lane.b32.xlu0 %v2655, 8
      %v4741 = vpop.permute.xlu0 %4740
      %4742 = vrot.lane.b32.xlu0 %v2731, 8
      %v4743 = vpop.permute.xlu0 %4742
      %4756 = vrot.lane.b32.xlu0 %v3347, 16
      %v4757 = vpop.permute.xlu0 %4756
      %4758 = vrot.lane.b32.xlu0 %v3423, 16
      %v4759 = vpop.permute.xlu0 %4758
      %4760 = vrot.lane.b32.xlu0 %v3499, 16
      %v4761 = vpop.permute.xlu0 %4760
      %4762 = vrot.lane.b32.xlu0 %v3575, 16
      %v4763 = vpop.permute.xlu0 %4762
      %4764 = vrot.lane.b32.xlu0 %v3651, 16
      %v4765 = vpop.permute.xlu0 %4764
      %4766 = vrot.lane.b32.xlu0 %v3727, 16
      %v4767 = vpop.permute.xlu0 %4766
      %4780 = vrot.lane.b32.xlu0 %v4343, 24
      %v4781 = vpop.permute.xlu0 %4780
      %4782 = vrot.lane.b32.xlu0 %v4419, 24
      %v4783 = vpop.permute.xlu0 %4782
      %4784 = vrot.lane.b32.xlu0 %v4495, 24
      %v4785 = vpop.permute.xlu0 %4784
      %4786 = vrot.lane.b32.xlu0 %v4571, 24
      %v4787 = vpop.permute.xlu0 %4786
      %4788 = vrot.lane.b32.xlu0 %v4647, 24
      %v4789 = vpop.permute.xlu0 %4788
      %4790 = vrot.lane.b32.xlu0 %v4723, 24
      %v4791 = vpop.permute.xlu0 %4790
      %v4798 = vsel %vm744, %v1355, %v4733
      %v4799 = vsel %vm744, %v1431, %v4735
      %v4800 = vsel %vm744, %v1507, %v4737
      %v4801 = vsel %vm744, %v1583, %v4739
      %v4802 = vsel %vm744, %v1659, %v4741
      %v4803 = vsel %vm744, %v1735, %v4743
      %vm4804 = vcmask 130048
      %v4805 = vsel %vm4804, %v4798, %v4757
      %v4806 = vsel %vm4804, %v4799, %v4759
      %v4807 = vsel %vm4804, %v4800, %v4761
      %v4808 = vsel %vm4804, %v4801, %v4763
      %v4809 = vsel %vm4804, %v4802, %v4765
      %v4810 = vsel %vm4804, %v4803, %v4767
      %vm4811 = vcmask 195584
      %v4812 = vsel %vm4811, %v4805, %v4781
      %v4813 = vsel %vm4811, %v4806, %v4783
      %v4814 = vsel %vm4811, %v4807, %v4785
      %v4815 = vsel %vm4811, %v4808, %v4787
      %v4816 = vsel %vm4811, %v4809, %v4789
      %v4817 = vsel %vm4811, %v4810, %v4791
      %v4818 = vld [vmem:[%s4] sm:$0xff]
      %v4819 = vld [vmem:[%s4 + $0x8] sm:$0xff]
      %v4820 = vld [vmem:[%s4 + $0x10] sm:$0xff]
      %v4821 = vld [vmem:[%s4 + $0x18] sm:$0xff]
      %v4822 = vld [vmem:[%s5] sm:$0x1]
      %v4824 = vlaneseq
      %v4825 = vshrl.u32 %v4824, 7
      %v4826 = vsub.s32 0, %v4825
      %v4827 = vrot.slane %v4822, %v4826
      %v4830 = vsel %vm514, %v4812, 0
      %v4833 = vsel %vm514, %v4813, 0
      %v4836 = vsel %vm514, %v4814, 0
      %v4839 = vsel %vm514, %v4815, 0
      %v4842 = vsel %vm514, %v4816, 0
      %v4845 = vsel %vm514, %v4817, 0
      %4847 = vmatprep.subr.mxu0 0.0
      %4848 = vmatpush1.msra.mxu0 0.0
      %4849 = vmatprep.subr.mxu0 0.0
      %4850 = vmatpush1.msra.mxu0 0.0
      %4851 = vmatprep.subr.mxu0 0.0
      %4852 = vmatpush1.msra.mxu0 0.0
      %4853 = vmatprep.subr.mxu0 0.0
      %4854 = vmatpush1.msra.mxu0 0.0
      %4855 = vmatprep.subr.mxu0 0.0
      %4856 = vmatpush1.msra.mxu0 0.0
      %4857 = vmatprep.subr.mxu0 0.0
      %4858 = vmatpush1.msra.mxu0 0.0
      %4859 = vmatprep.subr.mxu0 0.0
      %4860 = vmatpush1.msra.mxu0 0.0
      %4861 = vmatprep.subr.mxu0 0.0
      %4862 = vmatpush1.msra.mxu0 0.0
      %4863 = vmatprep.subr.mxu0 0.0
      %4864 = vmatpush1.msra.mxu0 0.0
      %4865 = vmatprep.subr.mxu0 0.0
      %4866 = vmatpush1.msra.mxu0 0.0
      %4867 = vmatprep.subr.mxu0 0.0
      %4868 = vmatpush1.msra.mxu0 0.0
      %4869 = vmatprep.subr.mxu0 0.0
      %4870 = vmatpush1.msra.mxu0 0.0
      %4871 = vmatprep.subr.mxu0 0.0
      %4872 = vmatpush1.msra.mxu0 %v4821
      %4873 = vmatprep.subr.mxu0 0.0
      %4874 = vmatpush1.msra.mxu0 %v4820
      %4875 = vmatprep.subr.mxu0 0.0
      %4876 = vmatpush1.msra.mxu0 %v4819
      %4877 = vmatprep.subr.mxu0 0.0
      %4878 = vmatpush1.msra.mxu0 %v4818
      %4879 = vmatprep.subr.mxu0 0.0
      %4880 = vmatpush2.msra.mxu0 0.0
      %4881 = vmatprep.subr.mxu0 0.0
      %4882 = vmatpush2.msra.mxu0 0.0
      %4883 = vmatprep.subr.mxu0 0.0
      %4884 = vmatpush2.msra.mxu0 0.0
      %4885 = vmatprep.subr.mxu0 0.0
      %4886 = vmatpush2.msra.mxu0 0.0
      %4887 = vmatprep.subr.mxu0 0.0
      %4888 = vmatpush2.msra.mxu0 0.0
      %4889 = vmatprep.subr.mxu0 0.0
      %4890 = vmatpush2.msra.mxu0 0.0
      %4891 = vmatprep.subr.mxu0 0.0
      %4892 = vmatpush2.msra.mxu0 0.0
      %4893 = vmatprep.subr.mxu0 0.0
      %4894 = vmatpush2.msra.mxu0 0.0
      %4895 = vmatprep.subr.mxu0 0.0
      %4896 = vmatpush2.msra.mxu0 0.0
      %4897 = vmatprep.subr.mxu0 0.0
      %4898 = vmatpush2.msra.mxu0 0.0
      %4899 = vmatprep.subr.mxu0 0.0
      %4900 = vmatpush2.msra.mxu0 0.0
      %4901 = vmatprep.subr.mxu0 0.0
      %4902 = vmatpush2.msra.mxu0 0.0
      %4903 = vmatprep.subr.mxu0 0.0
      %4904 = vmatpush2.msra.mxu0 0.0
      %4905 = vmatprep.subr.mxu0 0.0
      %4906 = vmatpush2.msra.mxu0 0.0
      %4907 = vmatprep.subr.mxu0 0.0
      %4908 = vmatpush2.msra.mxu0 0.0
      %4909 = vmatprep.subr.mxu0 0.0
      %4910 = vmatpush2.msra.mxu0 0.0
      %4911 = vmatprep.mubr.f32.mxu0 0.0
      %4912 = vmatmul.mubr.f32.gmra.mxu0 %v4830
      %v4913 = vpop.f32.mrf.mxu0
      %v4914 = vadd.f32 %v4827, %v4913
      %v4915 = vpop.f32.mrf.mxu0
      %4916 = vmatprep.mubr.f32.mxu0 0.0
      %4917 = vmatmul.mubr.f32.gmra.mxu0 %v4833
      %v4918 = vpop.f32.mrf.mxu0
      %v4919 = vadd.f32 %v4827, %v4918
      %v4920 = vpop.f32.mrf.mxu0
      %4921 = vmatprep.mubr.f32.mxu0 0.0
      %4922 = vmatmul.mubr.f32.gmra.mxu0 %v4836
      %v4923 = vpop.f32.mrf.mxu0
      %v4924 = vadd.f32 %v4827, %v4923
      %v4925 = vpop.f32.mrf.mxu0
      %4926 = vmatprep.mubr.f32.mxu0 0.0
      %4927 = vmatmul.mubr.f32.gmra.mxu0 %v4839
      %v4928 = vpop.f32.mrf.mxu0
      %v4929 = vadd.f32 %v4827, %v4928
      %v4930 = vpop.f32.mrf.mxu0
      %4931 = vmatprep.mubr.f32.mxu0 0.0
      %4932 = vmatmul.mubr.f32.gmra.mxu0 %v4842
      %v4933 = vpop.f32.mrf.mxu0
      %v4934 = vadd.f32 %v4827, %v4933
      %v4935 = vpop.f32.mrf.mxu0
      %4936 = vmatprep.mubr.f32.mxu0 0.0
      %4937 = vmatmul.mubr.f32.gmra.mxu0 %v4845
      %v4938 = vpop.f32.mrf.mxu0
      %v4939 = vadd.f32 %v4827, %v4938
      %v4940 = vpop.f32.mrf.mxu0
      %4941 = vdwg.mxu0
      %v4942 = vadd.f32 %v491, %v4914
      %v4943 = vadd.f32 %v492, %v4919
      %v4944 = vadd.f32 %v493, %v4924
      %v4945 = vadd.f32 %v494, %v4929
      %v4946 = vadd.f32 %v495, %v4934
      %v4947 = vadd.f32 %v496, %v4939
      %v4948 = vld [vmem:[%s10] sm:$0x1]
      %v4949 = vld [vmem:[%s11] sm:$0x1]
      %v4950 = vsel %vm514, %v4942, 0.0
      %4951 = vadd.xlane.f32.xlu0 %v4950
      %v4952 = vpop.xlane.xlu0 %4951
      %v4953 = vsel %vm514, %v4943, 0.0
      %4954 = vadd.xlane.f32.xlu0 %v4953
      %v4955 = vpop.xlane.xlu0 %4954
      %v4956 = vsel %vm514, %v4944, 0.0
      %4957 = vadd.xlane.f32.xlu0 %v4956
      %v4958 = vpop.xlane.xlu0 %4957
      %v4959 = vsel %vm514, %v4945, 0.0
      %4960 = vadd.xlane.f32.xlu0 %v4959
      %v4961 = vpop.xlane.xlu0 %4960
      %v4962 = vsel %vm514, %v4946, 0.0
      %4963 = vadd.xlane.f32.xlu0 %v4962
      %v4964 = vpop.xlane.xlu0 %4963
      %v4965 = vsel %vm514, %v4947, 0.0
      %4966 = vadd.xlane.f32.xlu0 %v4965
      %v4967 = vpop.xlane.xlu0 %4966
      %v4968 = vrcp.pop 32.0
      %v4969 = vmul.f32 %v4952, %v4968
      %v4970 = vmul.f32 %v4955, %v4968
      %v4971 = vmul.f32 %v4958, %v4968
      %v4972 = vmul.f32 %v4961, %v4968
      %v4973 = vmul.f32 %v4964, %v4968
      %v4974 = vmul.f32 %v4967, %v4968
      %v4975 = vsub.f32 %v4942, %v4969
      %v4976 = vsub.f32 %v4943, %v4970
      %v4977 = vsub.f32 %v4944, %v4971
      %v4978 = vsub.f32 %v4945, %v4972
      %v4979 = vsub.f32 %v4946, %v4973
      %v4980 = vsub.f32 %v4947, %v4974
      %v4981 = vmul.f32 %v4975, %v4975
      %v4982 = vmul.f32 %v4976, %v4976
      %v4983 = vmul.f32 %v4977, %v4977
      %v4984 = vmul.f32 %v4978, %v4978
      %v4985 = vmul.f32 %v4979, %v4979
      %v4986 = vmul.f32 %v4980, %v4980
      %v4987 = vsel %vm514, %v4981, 0.0
      %4988 = vadd.xlane.f32.xlu0 %v4987
      %v4989 = vpop.xlane.xlu0 %4988
      %v4990 = vsel %vm514, %v4982, 0.0
      %4991 = vadd.xlane.f32.xlu0 %v4990
      %v4992 = vpop.xlane.xlu0 %4991
      %v4993 = vsel %vm514, %v4983, 0.0
      %4994 = vadd.xlane.f32.xlu0 %v4993
      %v4995 = vpop.xlane.xlu0 %4994
      %v4996 = vsel %vm514, %v4984, 0.0
      %4997 = vadd.xlane.f32.xlu0 %v4996
      %v4998 = vpop.xlane.xlu0 %4997
      %v4999 = vsel %vm514, %v4985, 0.0
      %5000 = vadd.xlane.f32.xlu0 %v4999
      %v5001 = vpop.xlane.xlu0 %5000
      %v5002 = vsel %vm514, %v4986, 0.0
      %5003 = vadd.xlane.f32.xlu0 %v5002
      %v5004 = vpop.xlane.xlu0 %5003
      %v5005 = vmul.f32 %v4989, %v4968
      %v5006 = vmul.f32 %v4992, %v4968
      %v5007 = vmul.f32 %v4995, %v4968
      %v5008 = vmul.f32 %v4998, %v4968
      %v5009 = vmul.f32 %v5001, %v4968
      %v5010 = vmul.f32 %v5004, %v4968
      %v5011 = vadd.f32 %v5005, 1e-05
      %v5012 = vadd.f32 %v5006, 1e-05
      %v5013 = vadd.f32 %v5007, 1e-05
      %v5014 = vadd.f32 %v5008, 1e-05
      %v5015 = vadd.f32 %v5009, 1e-05
      %v5016 = vadd.f32 %v5010, 1e-05
      %v5017 = vrsqrt.pop %v5011
      %v5018 = vrsqrt.pop %v5012
      %v5019 = vrsqrt.pop %v5013
      %v5020 = vrsqrt.pop %v5014
      %v5021 = vrsqrt.pop %v5015
      %v5022 = vrsqrt.pop %v5016
      %v5023 = vmul.f32 %v4975, %v5017
      %v5024 = vmul.f32 %v4976, %v5018
      %v5025 = vmul.f32 %v4977, %v5019
      %v5026 = vmul.f32 %v4978, %v5020
      %v5027 = vmul.f32 %v4979, %v5021
      %v5028 = vmul.f32 %v4980, %v5022
      %v5030 = vlaneseq
      %v5031 = vshrl.u32 %v5030, 7
      %v5032 = vsub.s32 0, %v5031
      %v5033 = vrot.slane %v4948, %v5032
      %v5035 = vmul.f32 %v5023, %v5033
      %v5036 = vmul.f32 %v5024, %v5033
      %v5037 = vmul.f32 %v5025, %v5033
      %v5038 = vmul.f32 %v5026, %v5033
      %v5039 = vmul.f32 %v5027, %v5033
      %v5040 = vmul.f32 %v5028, %v5033
      %v5042 = vlaneseq
      %v5043 = vshrl.u32 %v5042, 7
      %v5044 = vsub.s32 0, %v5043
      %v5045 = vrot.slane %v4949, %v5044
      %v5047 = vadd.f32 %v5035, %v5045
      %v5048 = vadd.f32 %v5036, %v5045
      %v5049 = vadd.f32 %v5037, %v5045
      %v5050 = vadd.f32 %v5038, %v5045
      %v5051 = vadd.f32 %v5039, %v5045
      %v5052 = vadd.f32 %v5040, %v5045
      %v5053 = vld [vmem:[%s6] sm:$0xff]
      %v5054 = vld [vmem:[%s6 + $0x8] sm:$0xff]
      %v5055 = vld [vmem:[%s6 + $0x10] sm:$0xff]
      %v5056 = vld [vmem:[%s6 + $0x18] sm:$0xff]
      %v5057 = vld [vmem:[%s7] sm:$0x1]
      %v5059 = vlaneseq
      %v5060 = vshrl.u32 %v5059, 7
      %v5061 = vsub.s32 0, %v5060
      %v5062 = vrot.slane %v5057, %v5061
      %v5065 = vsel %vm514, %v5047, 0
      %v5068 = vsel %vm514, %v5048, 0
      %v5071 = vsel %vm514, %v5049, 0
      %v5074 = vsel %vm514, %v5050, 0
      %v5077 = vsel %vm514, %v5051, 0
      %v5080 = vsel %vm514, %v5052, 0
      %5082 = vmatprep.subr.mxu0 0.0
      %5083 = vmatpush1.msra.mxu0 0.0
      %5084 = vmatprep.subr.mxu0 0.0
      %5085 = vmatpush1.msra.mxu0 0.0
      %5086 = vmatprep.subr.mxu0 0.0
      %5087 = vmatpush1.msra.mxu0 0.0
      %5088 = vmatprep.subr.mxu0 0.0
      %5089 = vmatpush1.msra.mxu0 0.0
      %5090 = vmatprep.subr.mxu0 0.0
      %5091 = vmatpush1.msra.mxu0 0.0
      %5092 = vmatprep.subr.mxu0 0.0
      %5093 = vmatpush1.msra.mxu0 0.0
      %5094 = vmatprep.subr.mxu0 0.0
      %5095 = vmatpush1.msra.mxu0 0.0
      %5096 = vmatprep.subr.mxu0 0.0
      %5097 = vmatpush1.msra.mxu0 0.0
      %5098 = vmatprep.subr.mxu0 0.0
      %5099 = vmatpush1.msra.mxu0 0.0
      %5100 = vmatprep.subr.mxu0 0.0
      %5101 = vmatpush1.msra.mxu0 0.0
      %5102 = vmatprep.subr.mxu0 0.0
      %5103 = vmatpush1.msra.mxu0 0.0
      %5104 = vmatprep.subr.mxu0 0.0
      %5105 = vmatpush1.msra.mxu0 0.0
      %5106 = vmatprep.subr.mxu0 0.0
      %5107 = vmatpush1.msra.mxu0 %v5056
      %5108 = vmatprep.subr.mxu0 0.0
      %5109 = vmatpush1.msra.mxu0 %v5055
      %5110 = vmatprep.subr.mxu0 0.0
      %5111 = vmatpush1.msra.mxu0 %v5054
      %5112 = vmatprep.subr.mxu0 0.0
      %5113 = vmatpush1.msra.mxu0 %v5053
      %5114 = vmatprep.subr.mxu0 0.0
      %5115 = vmatpush2.msra.mxu0 0.0
      %5116 = vmatprep.subr.mxu0 0.0
      %5117 = vmatpush2.msra.mxu0 0.0
      %5118 = vmatprep.subr.mxu0 0.0
      %5119 = vmatpush2.msra.mxu0 0.0
      %5120 = vmatprep.subr.mxu0 0.0
      %5121 = vmatpush2.msra.mxu0 0.0
      %5122 = vmatprep.subr.mxu0 0.0
      %5123 = vmatpush2.msra.mxu0 0.0
      %5124 = vmatprep.subr.mxu0 0.0
      %5125 = vmatpush2.msra.mxu0 0.0
      %5126 = vmatprep.subr.mxu0 0.0
      %5127 = vmatpush2.msra.mxu0 0.0
      %5128 = vmatprep.subr.mxu0 0.0
      %5129 = vmatpush2.msra.mxu0 0.0
      %5130 = vmatprep.subr.mxu0 0.0
      %5131 = vmatpush2.msra.mxu0 0.0
      %5132 = vmatprep.subr.mxu0 0.0
      %5133 = vmatpush2.msra.mxu0 0.0
      %5134 = vmatprep.subr.mxu0 0.0
      %5135 = vmatpush2.msra.mxu0 0.0
      %5136 = vmatprep.subr.mxu0 0.0
      %5137 = vmatpush2.msra.mxu0 0.0
      %5138 = vmatprep.subr.mxu0 0.0
      %5139 = vmatpush2.msra.mxu0 0.0
      %5140 = vmatprep.subr.mxu0 0.0
      %5141 = vmatpush2.msra.mxu0 0.0
      %5142 = vmatprep.subr.mxu0 0.0
      %5143 = vmatpush2.msra.mxu0 0.0
      %5144 = vmatprep.subr.mxu0 0.0
      %5145 = vmatpush2.msra.mxu0 0.0
      %5146 = vmatprep.mubr.f32.mxu0 0.0
      %5147 = vmatmul.mubr.f32.gmra.mxu0 %v5065
      %v5148 = vpop.f32.mrf.mxu0
      %v5149 = vadd.f32 %v5062, %v5148
      %v5150 = vpop.f32.mrf.mxu0
      %5151 = vmatprep.mubr.f32.mxu0 0.0
      %5152 = vmatmul.mubr.f32.gmra.mxu0 %v5068
      %v5153 = vpop.f32.mrf.mxu0
      %v5154 = vadd.f32 %v5062, %v5153
      %v5155 = vpop.f32.mrf.mxu0
      %5156 = vmatprep.mubr.f32.mxu0 0.0
      %5157 = vmatmul.mubr.f32.gmra.mxu0 %v5071
      %v5158 = vpop.f32.mrf.mxu0
      %v5159 = vadd.f32 %v5062, %v5158
      %v5160 = vpop.f32.mrf.mxu0
      %5161 = vmatprep.mubr.f32.mxu0 0.0
      %5162 = vmatmul.mubr.f32.gmra.mxu0 %v5074
      %v5163 = vpop.f32.mrf.mxu0
      %v5164 = vadd.f32 %v5062, %v5163
      %v5165 = vpop.f32.mrf.mxu0
      %5166 = vmatprep.mubr.f32.mxu0 0.0
      %5167 = vmatmul.mubr.f32.gmra.mxu0 %v5077
      %v5168 = vpop.f32.mrf.mxu0
      %v5169 = vadd.f32 %v5062, %v5168
      %v5170 = vpop.f32.mrf.mxu0
      %5171 = vmatprep.mubr.f32.mxu0 0.0
      %5172 = vmatmul.mubr.f32.gmra.mxu0 %v5080
      %v5173 = vpop.f32.mrf.mxu0
      %v5174 = vadd.f32 %v5062, %v5173
      %v5175 = vpop.f32.mrf.mxu0
      %5176 = vdwg.mxu0
      %v5177 = vmax.f32 %v5149, 0.0
      %v5178 = vmax.f32 %v5154, 0.0
      %v5179 = vmax.f32 %v5159, 0.0
      %v5180 = vmax.f32 %v5164, 0.0
      %v5181 = vmax.f32 %v5169, 0.0
      %v5182 = vmax.f32 %v5174, 0.0
      %v5183 = vld [vmem:[%s8] sm:$0xff]
      %v5184 = vld [vmem:[%s8 + $0x8] sm:$0xff]
      %v5185 = vld [vmem:[%s8 + $0x10] sm:$0xff]
      %v5186 = vld [vmem:[%s8 + $0x18] sm:$0xff]
      %v5187 = vld [vmem:[%s8 + $0x20] sm:$0xff]
      %v5188 = vld [vmem:[%s8 + $0x28] sm:$0xff]
      %v5189 = vld [vmem:[%s8 + $0x30] sm:$0xff]
      %v5190 = vld [vmem:[%s8 + $0x38] sm:$0xff]
      %v5191 = vld [vmem:[%s9] sm:$0x1]
      %v5193 = vlaneseq
      %v5194 = vshrl.u32 %v5193, 7
      %v5195 = vsub.s32 0, %v5194
      %v5196 = vrot.slane %v5191, %v5195
      %vm5198 = vcmask 523264
      %v5200 = vsel %vm5198, %v5177, 0
      %v5203 = vsel %vm5198, %v5178, 0
      %v5206 = vsel %vm5198, %v5179, 0
      %v5209 = vsel %vm5198, %v5180, 0
      %v5212 = vsel %vm5198, %v5181, 0
      %v5215 = vsel %vm5198, %v5182, 0
      %5217 = vmatprep.subr.mxu0 0.0
      %5218 = vmatpush1.msra.mxu0 0.0
      %5219 = vmatprep.subr.mxu0 0.0
      %5220 = vmatpush1.msra.mxu0 0.0
      %5221 = vmatprep.subr.mxu0 0.0
      %5222 = vmatpush1.msra.mxu0 0.0
      %5223 = vmatprep.subr.mxu0 0.0
      %5224 = vmatpush1.msra.mxu0 0.0
      %5225 = vmatprep.subr.mxu0 0.0
      %5226 = vmatpush1.msra.mxu0 0.0
      %5227 = vmatprep.subr.mxu0 0.0
      %5228 = vmatpush1.msra.mxu0 0.0
      %5229 = vmatprep.subr.mxu0 0.0
      %5230 = vmatpush1.msra.mxu0 0.0
      %5231 = vmatprep.subr.mxu0 0.0
      %5232 = vmatpush1.msra.mxu0 0.0
      %5233 = vmatprep.subr.mxu0 0.0
      %5234 = vmatpush1.msra.mxu0 %v5190
      %5235 = vmatprep.subr.mxu0 0.0
      %5236 = vmatpush1.msra.mxu0 %v5189
      %5237 = vmatprep.subr.mxu0 0.0
      %5238 = vmatpush1.msra.mxu0 %v5188
      %5239 = vmatprep.subr.mxu0 0.0
      %5240 = vmatpush1.msra.mxu0 %v5187
      %5241 = vmatprep.subr.mxu0 0.0
      %5242 = vmatpush1.msra.mxu0 %v5186
      %5243 = vmatprep.subr.mxu0 0.0
      %5244 = vmatpush1.msra.mxu0 %v5185
      %5245 = vmatprep.subr.mxu0 0.0
      %5246 = vmatpush1.msra.mxu0 %v5184
      %5247 = vmatprep.subr.mxu0 0.0
      %5248 = vmatpush1.msra.mxu0 %v5183
      %5249 = vmatprep.subr.mxu0 0.0
      %5250 = vmatpush2.msra.mxu0 0.0
      %5251 = vmatprep.subr.mxu0 0.0
      %5252 = vmatpush2.msra.mxu0 0.0
      %5253 = vmatprep.subr.mxu0 0.0
      %5254 = vmatpush2.msra.mxu0 0.0
      %5255 = vmatprep.subr.mxu0 0.0
      %5256 = vmatpush2.msra.mxu0 0.0
      %5257 = vmatprep.subr.mxu0 0.0
      %5258 = vmatpush2.msra.mxu0 0.0
      %5259 = vmatprep.subr.mxu0 0.0
      %5260 = vmatpush2.msra.mxu0 0.0
      %5261 = vmatprep.subr.mxu0 0.0
      %5262 = vmatpush2.msra.mxu0 0.0
      %5263 = vmatprep.subr.mxu0 0.0
      %5264 = vmatpush2.msra.mxu0 0.0
      %5265 = vmatprep.subr.mxu0 0.0
      %5266 = vmatpush2.msra.mxu0 0.0
      %5267 = vmatprep.subr.mxu0 0.0
      %5268 = vmatpush2.msra.mxu0 0.0
      %5269 = vmatprep.subr.mxu0 0.0
      %5270 = vmatpush2.msra.mxu0 0.0
      %5271 = vmatprep.subr.mxu0 0.0
      %5272 = vmatpush2.msra.mxu0 0.0
      %5273 = vmatprep.subr.mxu0 0.0
      %5274 = vmatpush2.msra.mxu0 0.0
      %5275 = vmatprep.subr.mxu0 0.0
      %5276 = vmatpush2.msra.mxu0 0.0
      %5277 = vmatprep.subr.mxu0 0.0
      %5278 = vmatpush2.msra.mxu0 0.0
      %5279 = vmatprep.subr.mxu0 0.0
      %5280 = vmatpush2.msra.mxu0 0.0
      %5281 = vmatprep.mubr.f32.mxu0 0.0
      %5282 = vmatmul.mubr.f32.gmra.mxu0 %v5200
      %v5283 = vpop.f32.mrf.mxu0
      %v5284 = vadd.f32 %v5196, %v5283
      %v5285 = vpop.f32.mrf.mxu0
      %5286 = vmatprep.mubr.f32.mxu0 0.0
      %5287 = vmatmul.mubr.f32.gmra.mxu0 %v5203
      %v5288 = vpop.f32.mrf.mxu0
      %v5289 = vadd.f32 %v5196, %v5288
      %v5290 = vpop.f32.mrf.mxu0
      %5291 = vmatprep.mubr.f32.mxu0 0.0
      %5292 = vmatmul.mubr.f32.gmra.mxu0 %v5206
      %v5293 = vpop.f32.mrf.mxu0
      %v5294 = vadd.f32 %v5196, %v5293
      %v5295 = vpop.f32.mrf.mxu0
      %5296 = vmatprep.mubr.f32.mxu0 0.0
      %5297 = vmatmul.mubr.f32.gmra.mxu0 %v5209
      %v5298 = vpop.f32.mrf.mxu0
      %v5299 = vadd.f32 %v5196, %v5298
      %v5300 = vpop.f32.mrf.mxu0
      %5301 = vmatprep.mubr.f32.mxu0 0.0
      %5302 = vmatmul.mubr.f32.gmra.mxu0 %v5212
      %v5303 = vpop.f32.mrf.mxu0
      %v5304 = vadd.f32 %v5196, %v5303
      %v5305 = vpop.f32.mrf.mxu0
      %5306 = vmatprep.mubr.f32.mxu0 0.0
      %5307 = vmatmul.mubr.f32.gmra.mxu0 %v5215
      %v5308 = vpop.f32.mrf.mxu0
      %v5309 = vadd.f32 %v5196, %v5308
      %v5310 = vpop.f32.mrf.mxu0
      %5311 = vdwg.mxu0
      %v5312 = vadd.f32 %v5047, %v5284
      %v5313 = vadd.f32 %v5048, %v5289
      %v5314 = vadd.f32 %v5049, %v5294
      %v5315 = vadd.f32 %v5050, %v5299
      %v5316 = vadd.f32 %v5051, %v5304
      %v5317 = vadd.f32 %v5052, %v5309
      %v5318 = vld [vmem:[%s12] sm:$0x1]
      %v5319 = vld [vmem:[%s13] sm:$0x1]
      %v5320 = vsel %vm514, %v5312, 0.0
      %5321 = vadd.xlane.f32.xlu0 %v5320
      %v5322 = vpop.xlane.xlu0 %5321
      %v5323 = vsel %vm514, %v5313, 0.0
      %5324 = vadd.xlane.f32.xlu0 %v5323
      %v5325 = vpop.xlane.xlu0 %5324
      %v5326 = vsel %vm514, %v5314, 0.0
      %5327 = vadd.xlane.f32.xlu0 %v5326
      %v5328 = vpop.xlane.xlu0 %5327
      %v5329 = vsel %vm514, %v5315, 0.0
      %5330 = vadd.xlane.f32.xlu0 %v5329
      %v5331 = vpop.xlane.xlu0 %5330
      %v5332 = vsel %vm514, %v5316, 0.0
      %5333 = vadd.xlane.f32.xlu0 %v5332
      %v5334 = vpop.xlane.xlu0 %5333
      %v5335 = vsel %vm514, %v5317, 0.0
      %5336 = vadd.xlane.f32.xlu0 %v5335
      %v5337 = vpop.xlane.xlu0 %5336
      %v5338 = vmul.f32 %v5322, %v4968
      %v5339 = vmul.f32 %v5325, %v4968
      %v5340 = vmul.f32 %v5328, %v4968
      %v5341 = vmul.f32 %v5331, %v4968
      %v5342 = vmul.f32 %v5334, %v4968
      %v5343 = vmul.f32 %v5337, %v4968
      %v5344 = vsub.f32 %v5312, %v5338
      %v5345 = vsub.f32 %v5313, %v5339
      %v5346 = vsub.f32 %v5314, %v5340
      %v5347 = vsub.f32 %v5315, %v5341
      %v5348 = vsub.f32 %v5316, %v5342
      %v5349 = vsub.f32 %v5317, %v5343
      %v5350 = vmul.f32 %v5344, %v5344
      %v5351 = vmul.f32 %v5345, %v5345
      %v5352 = vmul.f32 %v5346, %v5346
      %v5353 = vmul.f32 %v5347, %v5347
      %v5354 = vmul.f32 %v5348, %v5348
      %v5355 = vmul.f32 %v5349, %v5349
      %v5356 = vsel %vm514, %v5350, 0.0
      %5357 = vadd.xlane.f32.xlu0 %v5356
      %v5358 = vpop.xlane.xlu0 %5357
      %v5359 = vsel %vm514, %v5351, 0.0
      %5360 = vadd.xlane.f32.xlu0 %v5359
      %v5361 = vpop.xlane.xlu0 %5360
      %v5362 = vsel %vm514, %v5352, 0.0
      %5363 = vadd.xlane.f32.xlu0 %v5362
      %v5364 = vpop.xlane.xlu0 %5363
      %v5365 = vsel %vm514, %v5353, 0.0
      %5366 = vadd.xlane.f32.xlu0 %v5365
      %v5367 = vpop.xlane.xlu0 %5366
      %v5368 = vsel %vm514, %v5354, 0.0
      %5369 = vadd.xlane.f32.xlu0 %v5368
      %v5370 = vpop.xlane.xlu0 %5369
      %v5371 = vsel %vm514, %v5355, 0.0
      %5372 = vadd.xlane.f32.xlu0 %v5371
      %v5373 = vpop.xlane.xlu0 %5372
      %v5374 = vmul.f32 %v5358, %v4968
      %v5375 = vmul.f32 %v5361, %v4968
      %v5376 = vmul.f32 %v5364, %v4968
      %v5377 = vmul.f32 %v5367, %v4968
      %v5378 = vmul.f32 %v5370, %v4968
      %v5379 = vmul.f32 %v5373, %v4968
      %v5380 = vadd.f32 %v5374, 1e-05
      %v5381 = vadd.f32 %v5375, 1e-05
      %v5382 = vadd.f32 %v5376, 1e-05
      %v5383 = vadd.f32 %v5377, 1e-05
      %v5384 = vadd.f32 %v5378, 1e-05
      %v5385 = vadd.f32 %v5379, 1e-05
      %v5386 = vrsqrt.pop %v5380
      %v5387 = vrsqrt.pop %v5381
      %v5388 = vrsqrt.pop %v5382
      %v5389 = vrsqrt.pop %v5383
      %v5390 = vrsqrt.pop %v5384
      %v5391 = vrsqrt.pop %v5385
      %v5392 = vmul.f32 %v5344, %v5386
      %v5393 = vmul.f32 %v5345, %v5387
      %v5394 = vmul.f32 %v5346, %v5388
      %v5395 = vmul.f32 %v5347, %v5389
      %v5396 = vmul.f32 %v5348, %v5390
      %v5397 = vmul.f32 %v5349, %v5391
      %v5399 = vlaneseq
      %v5400 = vshrl.u32 %v5399, 7
      %v5401 = vsub.s32 0, %v5400
      %v5402 = vrot.slane %v5318, %v5401
      %v5404 = vmul.f32 %v5392, %v5402
      %v5405 = vmul.f32 %v5393, %v5402
      %v5406 = vmul.f32 %v5394, %v5402
      %v5407 = vmul.f32 %v5395, %v5402
      %v5408 = vmul.f32 %v5396, %v5402
      %v5409 = vmul.f32 %v5397, %v5402
      %v5411 = vlaneseq
      %v5412 = vshrl.u32 %v5411, 7
      %v5413 = vsub.s32 0, %v5412
      %v5414 = vrot.slane %v5319, %v5413
      %v5416 = vadd.f32 %v5404, %v5414
      %v5417 = vadd.f32 %v5405, %v5414
      %v5418 = vadd.f32 %v5406, %v5414
      %v5419 = vadd.f32 %v5407, %v5414
      %v5420 = vadd.f32 %v5408, %v5414
      %v5421 = vadd.f32 %v5409, %v5414
      %s5422 = scalar_lea.vmem %s2, 32
      %v5423 = vld [vmem:[%s5422] sm:$0xff]
      %v5424 = vld [vmem:[%s5422 + $0x8] sm:$0xff]
      %v5425 = vld [vmem:[%s5422 + $0x10] sm:$0xff]
      %v5426 = vld [vmem:[%s5422 + $0x18] sm:$0xff]
      %s5427 = scalar_lea.vmem %s3, 1
      %v5428 = vld [vmem:[%s5427] sm:$0x1]
      %v5430 = vlaneseq
      %v5431 = vshrl.u32 %v5430, 7
      %v5432 = vsub.s32 0, %v5431
      %v5433 = vrot.slane %v5428, %v5432
      %v5436 = vsel %vm514, %v5416, 0
      %v5439 = vsel %vm514, %v5417, 0
      %v5442 = vsel %vm514, %v5418, 0
      %v5445 = vsel %vm514, %v5419, 0
      %v5448 = vsel %vm514, %v5420, 0
      %v5451 = vsel %vm514, %v5421, 0
      %5453 = vmatprep.subr.mxu0 0.0
      %5454 = vmatpush1.msra.mxu0 0.0
      %5455 = vmatprep.subr.mxu0 0.0
      %5456 = vmatpush1.msra.mxu0 0.0
      %5457 = vmatprep.subr.mxu0 0.0
      %5458 = vmatpush1.msra.mxu0 0.0
      %5459 = vmatprep.subr.mxu0 0.0
      %5460 = vmatpush1.msra.mxu0 0.0
      %5461 = vmatprep.subr.mxu0 0.0
      %5462 = vmatpush1.msra.mxu0 0.0
      %5463 = vmatprep.subr.mxu0 0.0
      %5464 = vmatpush1.msra.mxu0 0.0
      %5465 = vmatprep.subr.mxu0 0.0
      %5466 = vmatpush1.msra.mxu0 0.0
      %5467 = vmatprep.subr.mxu0 0.0
      %5468 = vmatpush1.msra.mxu0 0.0
      %5469 = vmatprep.subr.mxu0 0.0
      %5470 = vmatpush1.msra.mxu0 0.0
      %5471 = vmatprep.subr.mxu0 0.0
      %5472 = vmatpush1.msra.mxu0 0.0
      %5473 = vmatprep.subr.mxu0 0.0
      %5474 = vmatpush1.msra.mxu0 0.0
      %5475 = vmatprep.subr.mxu0 0.0
      %5476 = vmatpush1.msra.mxu0 0.0
      %5477 = vmatprep.subr.mxu0 0.0
      %5478 = vmatpush1.msra.mxu0 %v5426
      %5479 = vmatprep.subr.mxu0 0.0
      %5480 = vmatpush1.msra.mxu0 %v5425
      %5481 = vmatprep.subr.mxu0 0.0
      %5482 = vmatpush1.msra.mxu0 %v5424
      %5483 = vmatprep.subr.mxu0 0.0
      %5484 = vmatpush1.msra.mxu0 %v5423
      %5485 = vmatprep.subr.mxu0 0.0
      %5486 = vmatpush2.msra.mxu0 0.0
      %5487 = vmatprep.subr.mxu0 0.0
      %5488 = vmatpush2.msra.mxu0 0.0
      %5489 = vmatprep.subr.mxu0 0.0
      %5490 = vmatpush2.msra.mxu0 0.0
      %5491 = vmatprep.subr.mxu0 0.0
      %5492 = vmatpush2.msra.mxu0 0.0
      %5493 = vmatprep.subr.mxu0 0.0
      %5494 = vmatpush2.msra.mxu0 0.0
      %5495 = vmatprep.subr.mxu0 0.0
      %5496 = vmatpush2.msra.mxu0 0.0
      %5497 = vmatprep.subr.mxu0 0.0
      %5498 = vmatpush2.msra.mxu0 0.0
      %5499 = vmatprep.subr.mxu0 0.0
      %5500 = vmatpush2.msra.mxu0 0.0
      %5501 = vmatprep.subr.mxu0 0.0
      %5502 = vmatpush2.msra.mxu0 0.0
      %5503 = vmatprep.subr.mxu0 0.0
      %5504 = vmatpush2.msra.mxu0 0.0
      %5505 = vmatprep.subr.mxu0 0.0
      %5506 = vmatpush2.msra.mxu0 0.0
      %5507 = vmatprep.subr.mxu0 0.0
      %5508 = vmatpush2.msra.mxu0 0.0
      %5509 = vmatprep.subr.mxu0 0.0
      %5510 = vmatpush2.msra.mxu0 0.0
      %5511 = vmatprep.subr.mxu0 0.0
      %5512 = vmatpush2.msra.mxu0 0.0
      %5513 = vmatprep.subr.mxu0 0.0
      %5514 = vmatpush2.msra.mxu0 0.0
      %5515 = vmatprep.subr.mxu0 0.0
      %5516 = vmatpush2.msra.mxu0 0.0
      %5517 = vmatprep.mubr.f32.mxu0 0.0
      %5518 = vmatmul.mubr.f32.gmra.mxu0 %v5436
      %v5519 = vpop.f32.mrf.mxu0
      %v5520 = vadd.f32 %v5433, %v5519
      %v5521 = vpop.f32.mrf.mxu0
      %5522 = vmatprep.mubr.f32.mxu0 0.0
      %5523 = vmatmul.mubr.f32.gmra.mxu0 %v5439
      %v5524 = vpop.f32.mrf.mxu0
      %v5525 = vadd.f32 %v5433, %v5524
      %v5526 = vpop.f32.mrf.mxu0
      %5527 = vmatprep.mubr.f32.mxu0 0.0
      %5528 = vmatmul.mubr.f32.gmra.mxu0 %v5442
      %v5529 = vpop.f32.mrf.mxu0
      %v5530 = vadd.f32 %v5433, %v5529
      %v5531 = vpop.f32.mrf.mxu0
      %5532 = vmatprep.mubr.f32.mxu0 0.0
      %5533 = vmatmul.mubr.f32.gmra.mxu0 %v5445
      %v5534 = vpop.f32.mrf.mxu0
      %v5535 = vadd.f32 %v5433, %v5534
      %v5536 = vpop.f32.mrf.mxu0
      %5537 = vmatprep.mubr.f32.mxu0 0.0
      %5538 = vmatmul.mubr.f32.gmra.mxu0 %v5448
      %v5539 = vpop.f32.mrf.mxu0
      %v5540 = vadd.f32 %v5433, %v5539
      %v5541 = vpop.f32.mrf.mxu0
      %5542 = vmatprep.mubr.f32.mxu0 0.0
      %5543 = vmatmul.mubr.f32.gmra.mxu0 %v5451
      %v5544 = vpop.f32.mrf.mxu0
      %v5545 = vadd.f32 %v5433, %v5544
      %v5546 = vpop.f32.mrf.mxu0
      %5547 = vdwg.mxu0
      %5549 = vrot.lane.b32.xlu0 %v5520, 96
      %v5550 = vpop.permute.xlu0 %5549
      %v5551 = vsel %vm744, %v5520, 0
      %v5553 = vsel %vm744, %v5550, 0
      %5555 = vmatprep.subr.mxu0 0.0
      %5556 = vmatpush1.xpose.msra.mxu0 0.0
      %5557 = vmatprep.subr.mxu0 0.0
      %5558 = vmatpush1.xpose.msra.mxu0 0.0
      %5559 = vmatprep.subr.mxu0 0.0
      %5560 = vmatpush1.xpose.msra.mxu0 0.0
      %5561 = vmatprep.subr.mxu0 0.0
      %5562 = vmatpush1.xpose.msra.mxu0 0.0
      %5563 = vmatprep.subr.mxu0 0.0
      %5564 = vmatpush1.xpose.msra.mxu0 0.0
      %5565 = vmatprep.subr.mxu0 0.0
      %5566 = vmatpush1.xpose.msra.mxu0 0.0
      %5567 = vmatprep.subr.mxu0 0.0
      %5568 = vmatpush1.xpose.msra.mxu0 0.0
      %5569 = vmatprep.subr.mxu0 0.0
      %5570 = vmatpush1.xpose.msra.mxu0 0.0
      %5571 = vmatprep.subr.mxu0 0.0
      %5572 = vmatpush1.xpose.msra.mxu0 0.0
      %5573 = vmatprep.subr.mxu0 0.0
      %5574 = vmatpush1.xpose.msra.mxu0 0.0
      %5575 = vmatprep.subr.mxu0 0.0
      %5576 = vmatpush1.xpose.msra.mxu0 0.0
      %5577 = vmatprep.subr.mxu0 0.0
      %5578 = vmatpush1.xpose.msra.mxu0 0.0
      %5579 = vmatprep.subr.mxu0 0.0
      %5580 = vmatpush1.xpose.msra.mxu0 0.0
      %5581 = vmatprep.subr.mxu0 0.0
      %5582 = vmatpush1.xpose.msra.mxu0 0.0
      %5583 = vmatprep.subr.mxu0 0.0
      %5584 = vmatpush1.xpose.msra.mxu0 0.0
      %5585 = vmatprep.subr.mxu0 0.0
      %5586 = vmatpush1.xpose.msra.mxu0 %v5553
      %5587 = vmatprep.subr.mxu0 0.0
      %5588 = vmatpush2.xpose.msra.mxu0 0.0
      %5589 = vmatprep.subr.mxu0 0.0
      %5590 = vmatpush2.xpose.msra.mxu0 0.0
      %5591 = vmatprep.subr.mxu0 0.0
      %5592 = vmatpush2.xpose.msra.mxu0 0.0
      %5593 = vmatprep.subr.mxu0 0.0
      %5594 = vmatpush2.xpose.msra.mxu0 0.0
      %5595 = vmatprep.subr.mxu0 0.0
      %5596 = vmatpush2.xpose.msra.mxu0 0.0
      %5597 = vmatprep.subr.mxu0 0.0
      %5598 = vmatpush2.xpose.msra.mxu0 0.0
      %5599 = vmatprep.subr.mxu0 0.0
      %5600 = vmatpush2.xpose.msra.mxu0 0.0
      %5601 = vmatprep.subr.mxu0 0.0
      %5602 = vmatpush2.xpose.msra.mxu0 0.0
      %5603 = vmatprep.subr.mxu0 0.0
      %5604 = vmatpush2.xpose.msra.mxu0 0.0
      %5605 = vmatprep.subr.mxu0 0.0
      %5606 = vmatpush2.xpose.msra.mxu0 0.0
      %5607 = vmatprep.subr.mxu0 0.0
      %5608 = vmatpush2.xpose.msra.mxu0 0.0
      %5609 = vmatprep.subr.mxu0 0.0
      %5610 = vmatpush2.xpose.msra.mxu0 0.0
      %5611 = vmatprep.subr.mxu0 0.0
      %5612 = vmatpush2.xpose.msra.mxu0 0.0
      %5613 = vmatprep.subr.mxu0 0.0
      %5614 = vmatpush2.xpose.msra.mxu0 0.0
      %5615 = vmatprep.subr.mxu0 0.0
      %5616 = vmatpush2.xpose.msra.mxu0 0.0
      %5617 = vmatprep.subr.mxu0 0.0
      %5618 = vmatpush2.xpose.msra.mxu0 0.0
      %5619 = vmatprep.mubr.f32.mxu0 0.0
      %5620 = vmatmul.mubr.f32.gmra.mxu0 %v5551
      %v5621 = vpop.f32.mrf.mxu0
      %v5622 = vadd.f32 0.0, %v5621
      %v5623 = vpop.f32.mrf.mxu0
      %5624 = vdwg.mxu0
      %5626 = vrot.lane.b32.xlu0 %v5525, 96
      %v5627 = vpop.permute.xlu0 %5626
      %v5628 = vsel %vm744, %v5525, 0
      %v5630 = vsel %vm744, %v5627, 0
      %5632 = vmatprep.subr.mxu0 0.0
      %5633 = vmatpush1.xpose.msra.mxu0 0.0
      %5634 = vmatprep.subr.mxu0 0.0
      %5635 = vmatpush1.xpose.msra.mxu0 0.0
      %5636 = vmatprep.subr.mxu0 0.0
      %5637 = vmatpush1.xpose.msra.mxu0 0.0
      %5638 = vmatprep.subr.mxu0 0.0
      %5639 = vmatpush1.xpose.msra.mxu0 0.0
      %5640 = vmatprep.subr.mxu0 0.0
      %5641 = vmatpush1.xpose.msra.mxu0 0.0
      %5642 = vmatprep.subr.mxu0 0.0
      %5643 = vmatpush1.xpose.msra.mxu0 0.0
      %5644 = vmatprep.subr.mxu0 0.0
      %5645 = vmatpush1.xpose.msra.mxu0 0.0
      %5646 = vmatprep.subr.mxu0 0.0
      %5647 = vmatpush1.xpose.msra.mxu0 0.0
      %5648 = vmatprep.subr.mxu0 0.0
      %5649 = vmatpush1.xpose.msra.mxu0 0.0
      %5650 = vmatprep.subr.mxu0 0.0
      %5651 = vmatpush1.xpose.msra.mxu0 0.0
      %5652 = vmatprep.subr.mxu0 0.0
      %5653 = vmatpush1.xpose.msra.mxu0 0.0
      %5654 = vmatprep.subr.mxu0 0.0
      %5655 = vmatpush1.xpose.msra.mxu0 0.0
      %5656 = vmatprep.subr.mxu0 0.0
      %5657 = vmatpush1.xpose.msra.mxu0 0.0
      %5658 = vmatprep.subr.mxu0 0.0
      %5659 = vmatpush1.xpose.msra.mxu0 0.0
      %5660 = vmatprep.subr.mxu0 0.0
      %5661 = vmatpush1.xpose.msra.mxu0 0.0
      %5662 = vmatprep.subr.mxu0 0.0
      %5663 = vmatpush1.xpose.msra.mxu0 %v5630
      %5664 = vmatprep.subr.mxu0 0.0
      %5665 = vmatpush2.xpose.msra.mxu0 0.0
      %5666 = vmatprep.subr.mxu0 0.0
      %5667 = vmatpush2.xpose.msra.mxu0 0.0
      %5668 = vmatprep.subr.mxu0 0.0
      %5669 = vmatpush2.xpose.msra.mxu0 0.0
      %5670 = vmatprep.subr.mxu0 0.0
      %5671 = vmatpush2.xpose.msra.mxu0 0.0
      %5672 = vmatprep.subr.mxu0 0.0
      %5673 = vmatpush2.xpose.msra.mxu0 0.0
      %5674 = vmatprep.subr.mxu0 0.0
      %5675 = vmatpush2.xpose.msra.mxu0 0.0
      %5676 = vmatprep.subr.mxu0 0.0
      %5677 = vmatpush2.xpose.msra.mxu0 0.0
      %5678 = vmatprep.subr.mxu0 0.0
      %5679 = vmatpush2.xpose.msra.mxu0 0.0
      %5680 = vmatprep.subr.mxu0 0.0
      %5681 = vmatpush2.xpose.msra.mxu0 0.0
      %5682 = vmatprep.subr.mxu0 0.0
      %5683 = vmatpush2.xpose.msra.mxu0 0.0
      %5684 = vmatprep.subr.mxu0 0.0
      %5685 = vmatpush2.xpose.msra.mxu0 0.0
      %5686 = vmatprep.subr.mxu0 0.0
      %5687 = vmatpush2.xpose.msra.mxu0 0.0
      %5688 = vmatprep.subr.mxu0 0.0
      %5689 = vmatpush2.xpose.msra.mxu0 0.0
      %5690 = vmatprep.subr.mxu0 0.0
      %5691 = vmatpush2.xpose.msra.mxu0 0.0
      %5692 = vmatprep.subr.mxu0 0.0
      %5693 = vmatpush2.xpose.msra.mxu0 0.0
      %5694 = vmatprep.subr.mxu0 0.0
      %5695 = vmatpush2.xpose.msra.mxu0 0.0
      %5696 = vmatprep.mubr.f32.mxu0 0.0
      %5697 = vmatmul.mubr.f32.gmra.mxu0 %v5628
      %v5698 = vpop.f32.mrf.mxu0
      %v5699 = vadd.f32 0.0, %v5698
      %v5700 = vpop.f32.mrf.mxu0
      %5701 = vdwg.mxu0
      %5703 = vrot.lane.b32.xlu0 %v5530, 96
      %v5704 = vpop.permute.xlu0 %5703
      %v5705 = vsel %vm744, %v5530, 0
      %v5707 = vsel %vm744, %v5704, 0
      %5709 = vmatprep.subr.mxu0 0.0
      %5710 = vmatpush1.xpose.msra.mxu0 0.0
      %5711 = vmatprep.subr.mxu0 0.0
      %5712 = vmatpush1.xpose.msra.mxu0 0.0
      %5713 = vmatprep.subr.mxu0 0.0
      %5714 = vmatpush1.xpose.msra.mxu0 0.0
      %5715 = vmatprep.subr.mxu0 0.0
      %5716 = vmatpush1.xpose.msra.mxu0 0.0
      %5717 = vmatprep.subr.mxu0 0.0
      %5718 = vmatpush1.xpose.msra.mxu0 0.0
      %5719 = vmatprep.subr.mxu0 0.0
      %5720 = vmatpush1.xpose.msra.mxu0 0.0
      %5721 = vmatprep.subr.mxu0 0.0
      %5722 = vmatpush1.xpose.msra.mxu0 0.0
      %5723 = vmatprep.subr.mxu0 0.0
      %5724 = vmatpush1.xpose.msra.mxu0 0.0
      %5725 = vmatprep.subr.mxu0 0.0
      %5726 = vmatpush1.xpose.msra.mxu0 0.0
      %5727 = vmatprep.subr.mxu0 0.0
      %5728 = vmatpush1.xpose.msra.mxu0 0.0
      %5729 = vmatprep.subr.mxu0 0.0
      %5730 = vmatpush1.xpose.msra.mxu0 0.0
      %5731 = vmatprep.subr.mxu0 0.0
      %5732 = vmatpush1.xpose.msra.mxu0 0.0
      %5733 = vmatprep.subr.mxu0 0.0
      %5734 = vmatpush1.xpose.msra.mxu0 0.0
      %5735 = vmatprep.subr.mxu0 0.0
      %5736 = vmatpush1.xpose.msra.mxu0 0.0
      %5737 = vmatprep.subr.mxu0 0.0
      %5738 = vmatpush1.xpose.msra.mxu0 0.0
      %5739 = vmatprep.subr.mxu0 0.0
      %5740 = vmatpush1.xpose.msra.mxu0 %v5707
      %5741 = vmatprep.subr.mxu0 0.0
      %5742 = vmatpush2.xpose.msra.mxu0 0.0
      %5743 = vmatprep.subr.mxu0 0.0
      %5744 = vmatpush2.xpose.msra.mxu0 0.0
      %5745 = vmatprep.subr.mxu0 0.0
      %5746 = vmatpush2.xpose.msra.mxu0 0.0
      %5747 = vmatprep.subr.mxu0 0.0
      %5748 = vmatpush2.xpose.msra.mxu0 0.0
      %5749 = vmatprep.subr.mxu0 0.0
      %5750 = vmatpush2.xpose.msra.mxu0 0.0
      %5751 = vmatprep.subr.mxu0 0.0
      %5752 = vmatpush2.xpose.msra.mxu0 0.0
      %5753 = vmatprep.subr.mxu0 0.0
      %5754 = vmatpush2.xpose.msra.mxu0 0.0
      %5755 = vmatprep.subr.mxu0 0.0
      %5756 = vmatpush2.xpose.msra.mxu0 0.0
      %5757 = vmatprep.subr.mxu0 0.0
      %5758 = vmatpush2.xpose.msra.mxu0 0.0
      %5759 = vmatprep.subr.mxu0 0.0
      %5760 = vmatpush2.xpose.msra.mxu0 0.0
      %5761 = vmatprep.subr.mxu0 0.0
      %5762 = vmatpush2.xpose.msra.mxu0 0.0
      %5763 = vmatprep.subr.mxu0 0.0
      %5764 = vmatpush2.xpose.msra.mxu0 0.0
      %5765 = vmatprep.subr.mxu0 0.0
      %5766 = vmatpush2.xpose.msra.mxu0 0.0
      %5767 = vmatprep.subr.mxu0 0.0
      %5768 = vmatpush2.xpose.msra.mxu0 0.0
      %5769 = vmatprep.subr.mxu0 0.0
      %5770 = vmatpush2.xpose.msra.mxu0 0.0
      %5771 = vmatprep.subr.mxu0 0.0
      %5772 = vmatpush2.xpose.msra.mxu0 0.0
      %5773 = vmatprep.mubr.f32.mxu0 0.0
      %5774 = vmatmul.mubr.f32.gmra.mxu0 %v5705
      %v5775 = vpop.f32.mrf.mxu0
      %v5776 = vadd.f32 0.0, %v5775
      %v5777 = vpop.f32.mrf.mxu0
      %5778 = vdwg.mxu0
      %5780 = vrot.lane.b32.xlu0 %v5535, 96
      %v5781 = vpop.permute.xlu0 %5780
      %v5782 = vsel %vm744, %v5535, 0
      %v5784 = vsel %vm744, %v5781, 0
      %5786 = vmatprep.subr.mxu0 0.0
      %5787 = vmatpush1.xpose.msra.mxu0 0.0
      %5788 = vmatprep.subr.mxu0 0.0
      %5789 = vmatpush1.xpose.msra.mxu0 0.0
      %5790 = vmatprep.subr.mxu0 0.0
      %5791 = vmatpush1.xpose.msra.mxu0 0.0
      %5792 = vmatprep.subr.mxu0 0.0
      %5793 = vmatpush1.xpose.msra.mxu0 0.0
      %5794 = vmatprep.subr.mxu0 0.0
      %5795 = vmatpush1.xpose.msra.mxu0 0.0
      %5796 = vmatprep.subr.mxu0 0.0
      %5797 = vmatpush1.xpose.msra.mxu0 0.0
      %5798 = vmatprep.subr.mxu0 0.0
      %5799 = vmatpush1.xpose.msra.mxu0 0.0
      %5800 = vmatprep.subr.mxu0 0.0
      %5801 = vmatpush1.xpose.msra.mxu0 0.0
      %5802 = vmatprep.subr.mxu0 0.0
      %5803 = vmatpush1.xpose.msra.mxu0 0.0
      %5804 = vmatprep.subr.mxu0 0.0
      %5805 = vmatpush1.xpose.msra.mxu0 0.0
      %5806 = vmatprep.subr.mxu0 0.0
      %5807 = vmatpush1.xpose.msra.mxu0 0.0
      %5808 = vmatprep.subr.mxu0 0.0
      %5809 = vmatpush1.xpose.msra.mxu0 0.0
      %5810 = vmatprep.subr.mxu0 0.0
      %5811 = vmatpush1.xpose.msra.mxu0 0.0
      %5812 = vmatprep.subr.mxu0 0.0
      %5813 = vmatpush1.xpose.msra.mxu0 0.0
      %5814 = vmatprep.subr.mxu0 0.0
      %5815 = vmatpush1.xpose.msra.mxu0 0.0
      %5816 = vmatprep.subr.mxu0 0.0
      %5817 = vmatpush1.xpose.msra.mxu0 %v5784
      %5818 = vmatprep.subr.mxu0 0.0
      %5819 = vmatpush2.xpose.msra.mxu0 0.0
      %5820 = vmatprep.subr.mxu0 0.0
      %5821 = vmatpush2.xpose.msra.mxu0 0.0
      %5822 = vmatprep.subr.mxu0 0.0
      %5823 = vmatpush2.xpose.msra.mxu0 0.0
      %5824 = vmatprep.subr.mxu0 0.0
      %5825 = vmatpush2.xpose.msra.mxu0 0.0
      %5826 = vmatprep.subr.mxu0 0.0
      %5827 = vmatpush2.xpose.msra.mxu0 0.0
      %5828 = vmatprep.subr.mxu0 0.0
      %5829 = vmatpush2.xpose.msra.mxu0 0.0
      %5830 = vmatprep.subr.mxu0 0.0
      %5831 = vmatpush2.xpose.msra.mxu0 0.0
      %5832 = vmatprep.subr.mxu0 0.0
      %5833 = vmatpush2.xpose.msra.mxu0 0.0
      %5834 = vmatprep.subr.mxu0 0.0
      %5835 = vmatpush2.xpose.msra.mxu0 0.0
      %5836 = vmatprep.subr.mxu0 0.0
      %5837 = vmatpush2.xpose.msra.mxu0 0.0
      %5838 = vmatprep.subr.mxu0 0.0
      %5839 = vmatpush2.xpose.msra.mxu0 0.0
      %5840 = vmatprep.subr.mxu0 0.0
      %5841 = vmatpush2.xpose.msra.mxu0 0.0
      %5842 = vmatprep.subr.mxu0 0.0
      %5843 = vmatpush2.xpose.msra.mxu0 0.0
      %5844 = vmatprep.subr.mxu0 0.0
      %5845 = vmatpush2.xpose.msra.mxu0 0.0
      %5846 = vmatprep.subr.mxu0 0.0
      %5847 = vmatpush2.xpose.msra.mxu0 0.0
      %5848 = vmatprep.subr.mxu0 0.0
      %5849 = vmatpush2.xpose.msra.mxu0 0.0
      %5850 = vmatprep.mubr.f32.mxu0 0.0
      %5851 = vmatmul.mubr.f32.gmra.mxu0 %v5782
      %v5852 = vpop.f32.mrf.mxu0
      %v5853 = vadd.f32 0.0, %v5852
      %v5854 = vpop.f32.mrf.mxu0
      %5855 = vdwg.mxu0
      %5857 = vrot.lane.b32.xlu0 %v5540, 96
      %v5858 = vpop.permute.xlu0 %5857
      %v5859 = vsel %vm744, %v5540, 0
      %v5861 = vsel %vm744, %v5858, 0
      %5863 = vmatprep.subr.mxu0 0.0
      %5864 = vmatpush1.xpose.msra.mxu0 0.0
      %5865 = vmatprep.subr.mxu0 0.0
      %5866 = vmatpush1.xpose.msra.mxu0 0.0
      %5867 = vmatprep.subr.mxu0 0.0
      %5868 = vmatpush1.xpose.msra.mxu0 0.0
      %5869 = vmatprep.subr.mxu0 0.0
      %5870 = vmatpush1.xpose.msra.mxu0 0.0
      %5871 = vmatprep.subr.mxu0 0.0
      %5872 = vmatpush1.xpose.msra.mxu0 0.0
      %5873 = vmatprep.subr.mxu0 0.0
      %5874 = vmatpush1.xpose.msra.mxu0 0.0
      %5875 = vmatprep.subr.mxu0 0.0
      %5876 = vmatpush1.xpose.msra.mxu0 0.0
      %5877 = vmatprep.subr.mxu0 0.0
      %5878 = vmatpush1.xpose.msra.mxu0 0.0
      %5879 = vmatprep.subr.mxu0 0.0
      %5880 = vmatpush1.xpose.msra.mxu0 0.0
      %5881 = vmatprep.subr.mxu0 0.0
      %5882 = vmatpush1.xpose.msra.mxu0 0.0
      %5883 = vmatprep.subr.mxu0 0.0
      %5884 = vmatpush1.xpose.msra.mxu0 0.0
      %5885 = vmatprep.subr.mxu0 0.0
      %5886 = vmatpush1.xpose.msra.mxu0 0.0
      %5887 = vmatprep.subr.mxu0 0.0
      %5888 = vmatpush1.xpose.msra.mxu0 0.0
      %5889 = vmatprep.subr.mxu0 0.0
      %5890 = vmatpush1.xpose.msra.mxu0 0.0
      %5891 = vmatprep.subr.mxu0 0.0
      %5892 = vmatpush1.xpose.msra.mxu0 0.0
      %5893 = vmatprep.subr.mxu0 0.0
      %5894 = vmatpush1.xpose.msra.mxu0 %v5861
      %5895 = vmatprep.subr.mxu0 0.0
      %5896 = vmatpush2.xpose.msra.mxu0 0.0
      %5897 = vmatprep.subr.mxu0 0.0
      %5898 = vmatpush2.xpose.msra.mxu0 0.0
      %5899 = vmatprep.subr.mxu0 0.0
      %5900 = vmatpush2.xpose.msra.mxu0 0.0
      %5901 = vmatprep.subr.mxu0 0.0
      %5902 = vmatpush2.xpose.msra.mxu0 0.0
      %5903 = vmatprep.subr.mxu0 0.0
      %5904 = vmatpush2.xpose.msra.mxu0 0.0
      %5905 = vmatprep.subr.mxu0 0.0
      %5906 = vmatpush2.xpose.msra.mxu0 0.0
      %5907 = vmatprep.subr.mxu0 0.0
      %5908 = vmatpush2.xpose.msra.mxu0 0.0
      %5909 = vmatprep.subr.mxu0 0.0
      %5910 = vmatpush2.xpose.msra.mxu0 0.0
      %5911 = vmatprep.subr.mxu0 0.0
      %5912 = vmatpush2.xpose.msra.mxu0 0.0
      %5913 = vmatprep.subr.mxu0 0.0
      %5914 = vmatpush2.xpose.msra.mxu0 0.0
      %5915 = vmatprep.subr.mxu0 0.0
      %5916 = vmatpush2.xpose.msra.mxu0 0.0
      %5917 = vmatprep.subr.mxu0 0.0
      %5918 = vmatpush2.xpose.msra.mxu0 0.0
      %5919 = vmatprep.subr.mxu0 0.0
      %5920 = vmatpush2.xpose.msra.mxu0 0.0
      %5921 = vmatprep.subr.mxu0 0.0
      %5922 = vmatpush2.xpose.msra.mxu0 0.0
      %5923 = vmatprep.subr.mxu0 0.0
      %5924 = vmatpush2.xpose.msra.mxu0 0.0
      %5925 = vmatprep.subr.mxu0 0.0
      %5926 = vmatpush2.xpose.msra.mxu0 0.0
      %5927 = vmatprep.mubr.f32.mxu0 0.0
      %5928 = vmatmul.mubr.f32.gmra.mxu0 %v5859
      %v5929 = vpop.f32.mrf.mxu0
      %v5930 = vadd.f32 0.0, %v5929
      %v5931 = vpop.f32.mrf.mxu0
      %5932 = vdwg.mxu0
      %5934 = vrot.lane.b32.xlu0 %v5545, 96
      %v5935 = vpop.permute.xlu0 %5934
      %v5936 = vsel %vm744, %v5545, 0
      %v5938 = vsel %vm744, %v5935, 0
      %5940 = vmatprep.subr.mxu0 0.0
      %5941 = vmatpush1.xpose.msra.mxu0 0.0
      %5942 = vmatprep.subr.mxu0 0.0
      %5943 = vmatpush1.xpose.msra.mxu0 0.0
      %5944 = vmatprep.subr.mxu0 0.0
      %5945 = vmatpush1.xpose.msra.mxu0 0.0
      %5946 = vmatprep.subr.mxu0 0.0
      %5947 = vmatpush1.xpose.msra.mxu0 0.0
      %5948 = vmatprep.subr.mxu0 0.0
      %5949 = vmatpush1.xpose.msra.mxu0 0.0
      %5950 = vmatprep.subr.mxu0 0.0
      %5951 = vmatpush1.xpose.msra.mxu0 0.0
      %5952 = vmatprep.subr.mxu0 0.0
      %5953 = vmatpush1.xpose.msra.mxu0 0.0
      %5954 = vmatprep.subr.mxu0 0.0
      %5955 = vmatpush1.xpose.msra.mxu0 0.0
      %5956 = vmatprep.subr.mxu0 0.0
      %5957 = vmatpush1.xpose.msra.mxu0 0.0
      %5958 = vmatprep.subr.mxu0 0.0
      %5959 = vmatpush1.xpose.msra.mxu0 0.0
      %5960 = vmatprep.subr.mxu0 0.0
      %5961 = vmatpush1.xpose.msra.mxu0 0.0
      %5962 = vmatprep.subr.mxu0 0.0
      %5963 = vmatpush1.xpose.msra.mxu0 0.0
      %5964 = vmatprep.subr.mxu0 0.0
      %5965 = vmatpush1.xpose.msra.mxu0 0.0
      %5966 = vmatprep.subr.mxu0 0.0
      %5967 = vmatpush1.xpose.msra.mxu0 0.0
      %5968 = vmatprep.subr.mxu0 0.0
      %5969 = vmatpush1.xpose.msra.mxu0 0.0
      %5970 = vmatprep.subr.mxu0 0.0
      %5971 = vmatpush1.xpose.msra.mxu0 %v5938
      %5972 = vmatprep.subr.mxu0 0.0
      %5973 = vmatpush2.xpose.msra.mxu0 0.0
      %5974 = vmatprep.subr.mxu0 0.0
      %5975 = vmatpush2.xpose.msra.mxu0 0.0
      %5976 = vmatprep.subr.mxu0 0.0
      %5977 = vmatpush2.xpose.msra.mxu0 0.0
      %5978 = vmatprep.subr.mxu0 0.0
      %5979 = vmatpush2.xpose.msra.mxu0 0.0
      %5980 = vmatprep.subr.mxu0 0.0
      %5981 = vmatpush2.xpose.msra.mxu0 0.0
      %5982 = vmatprep.subr.mxu0 0.0
      %5983 = vmatpush2.xpose.msra.mxu0 0.0
      %5984 = vmatprep.subr.mxu0 0.0
      %5985 = vmatpush2.xpose.msra.mxu0 0.0
      %5986 = vmatprep.subr.mxu0 0.0
      %5987 = vmatpush2.xpose.msra.mxu0 0.0
      %5988 = vmatprep.subr.mxu0 0.0
      %5989 = vmatpush2.xpose.msra.mxu0 0.0
      %5990 = vmatprep.subr.mxu0 0.0
      %5991 = vmatpush2.xpose.msra.mxu0 0.0
      %5992 = vmatprep.subr.mxu0 0.0
      %5993 = vmatpush2.xpose.msra.mxu0 0.0
      %5994 = vmatprep.subr.mxu0 0.0
      %5995 = vmatpush2.xpose.msra.mxu0 0.0
      %5996 = vmatprep.subr.mxu0 0.0
      %5997 = vmatpush2.xpose.msra.mxu0 0.0
      %5998 = vmatprep.subr.mxu0 0.0
      %5999 = vmatpush2.xpose.msra.mxu0 0.0
      %6000 = vmatprep.subr.mxu0 0.0
      %6001 = vmatpush2.xpose.msra.mxu0 0.0
      %6002 = vmatprep.subr.mxu0 0.0
      %6003 = vmatpush2.xpose.msra.mxu0 0.0
      %6004 = vmatprep.mubr.f32.mxu0 0.0
      %6005 = vmatmul.mubr.f32.gmra.mxu0 %v5936
      %v6006 = vpop.f32.mrf.mxu0
      %v6007 = vadd.f32 0.0, %v6006
      %v6008 = vpop.f32.mrf.mxu0
      %6009 = vdwg.mxu0
      %v6010 = vmul.f32 %v5622, 0.35355338
      %v6011 = vmul.f32 %v5699, 0.35355338
      %v6012 = vmul.f32 %v5776, 0.35355338
      %v6013 = vmul.f32 %v5853, 0.35355338
      %v6014 = vmul.f32 %v5930, 0.35355338
      %v6015 = vmul.f32 %v6007, 0.35355338
      %v6016 = vsel %vm744, %v6010, -inf
      %6017 = vmax.xlane.f32.xlu0 %v6016
      %v6018 = vpop.xlane.xlu0 %6017
      %v6019 = vsel %vm744, %v6011, -inf
      %6020 = vmax.xlane.f32.xlu0 %v6019
      %v6021 = vpop.xlane.xlu0 %6020
      %v6022 = vsel %vm744, %v6012, -inf
      %6023 = vmax.xlane.f32.xlu0 %v6022
      %v6024 = vpop.xlane.xlu0 %6023
      %v6025 = vsel %vm744, %v6013, -inf
      %6026 = vmax.xlane.f32.xlu0 %v6025
      %v6027 = vpop.xlane.xlu0 %6026
      %v6028 = vsel %vm744, %v6014, -inf
      %6029 = vmax.xlane.f32.xlu0 %v6028
      %v6030 = vpop.xlane.xlu0 %6029
      %v6031 = vsel %vm744, %v6015, -inf
      %6032 = vmax.xlane.f32.xlu0 %v6031
      %v6033 = vpop.xlane.xlu0 %6032
      %v6034 = vsub.f32 %v6010, %v6018
      %v6035 = vsub.f32 %v6011, %v6021
      %v6036 = vsub.f32 %v6012, %v6024
      %v6037 = vsub.f32 %v6013, %v6027
      %v6038 = vsub.f32 %v6014, %v6030
      %v6039 = vsub.f32 %v6015, %v6033
      %v6040 = vmul.f32 %v6034, 1.442695
      %v6041 = vpow.pop %v6040
      %v6042 = vmul.f32 %v6035, 1.442695
      %v6043 = vpow.pop %v6042
      %v6044 = vmul.f32 %v6036, 1.442695
      %v6045 = vpow.pop %v6044
      %v6046 = vmul.f32 %v6037, 1.442695
      %v6047 = vpow.pop %v6046
      %v6048 = vmul.f32 %v6038, 1.442695
      %v6049 = vpow.pop %v6048
      %v6050 = vmul.f32 %v6039, 1.442695
      %v6051 = vpow.pop %v6050
      %v6052 = vsel %vm744, %v6041, 0.0
      %6053 = vadd.xlane.f32.xlu0 %v6052
      %v6054 = vpop.xlane.xlu0 %6053
      %v6055 = vsel %vm744, %v6043, 0.0
      %6056 = vadd.xlane.f32.xlu0 %v6055
      %v6057 = vpop.xlane.xlu0 %6056
      %v6058 = vsel %vm744, %v6045, 0.0
      %6059 = vadd.xlane.f32.xlu0 %v6058
      %v6060 = vpop.xlane.xlu0 %6059
      %v6061 = vsel %vm744, %v6047, 0.0
      %6062 = vadd.xlane.f32.xlu0 %v6061
      %v6063 = vpop.xlane.xlu0 %6062
      %v6064 = vsel %vm744, %v6049, 0.0
      %6065 = vadd.xlane.f32.xlu0 %v6064
      %v6066 = vpop.xlane.xlu0 %6065
      %v6067 = vsel %vm744, %v6051, 0.0
      %6068 = vadd.xlane.f32.xlu0 %v6067
      %v6069 = vpop.xlane.xlu0 %6068
      %v6070 = vrcp.pop %v6054
      %v6071 = vrcp.pop %v6057
      %v6072 = vrcp.pop %v6060
      %v6073 = vrcp.pop %v6063
      %v6074 = vrcp.pop %v6066
      %v6075 = vrcp.pop %v6069
      %v6076 = vmul.f32 %v6041, %v6070
      %v6077 = vmul.f32 %v6043, %v6071
      %v6078 = vmul.f32 %v6045, %v6072
      %v6079 = vmul.f32 %v6047, %v6073
      %v6080 = vmul.f32 %v6049, %v6074
      %v6081 = vmul.f32 %v6051, %v6075
      %6082 = vrot.lane.b32.xlu0 %v5520, 64
      %v6083 = vpop.permute.xlu0 %6082
      %v6086 = vsel %vm744, %v6076, 0
      %6088 = vmatprep.subr.mxu0 0.0
      %6089 = vmatpush1.msra.mxu0 0.0
      %6090 = vmatprep.subr.mxu0 0.0
      %6091 = vmatpush1.msra.mxu0 0.0
      %6092 = vmatprep.subr.mxu0 0.0
      %6093 = vmatpush1.msra.mxu0 0.0
      %6094 = vmatprep.subr.mxu0 0.0
      %6095 = vmatpush1.msra.mxu0 0.0
      %6096 = vmatprep.subr.mxu0 0.0
      %6097 = vmatpush1.msra.mxu0 0.0
      %6098 = vmatprep.subr.mxu0 0.0
      %6099 = vmatpush1.msra.mxu0 0.0
      %6100 = vmatprep.subr.mxu0 0.0
      %6101 = vmatpush1.msra.mxu0 0.0
      %6102 = vmatprep.subr.mxu0 0.0
      %6103 = vmatpush1.msra.mxu0 0.0
      %6104 = vmatprep.subr.mxu0 0.0
      %6105 = vmatpush1.msra.mxu0 0.0
      %6106 = vmatprep.subr.mxu0 0.0
      %6107 = vmatpush1.msra.mxu0 0.0
      %6108 = vmatprep.subr.mxu0 0.0
      %6109 = vmatpush1.msra.mxu0 0.0
      %6110 = vmatprep.subr.mxu0 0.0
      %6111 = vmatpush1.msra.mxu0 0.0
      %6112 = vmatprep.subr.mxu0 0.0
      %6113 = vmatpush1.msra.mxu0 0.0
      %6114 = vmatprep.subr.mxu0 0.0
      %6115 = vmatpush1.msra.mxu0 0.0
      %6116 = vmatprep.subr.mxu0 0.0
      %6117 = vmatpush1.msra.mxu0 0.0
      %6118 = vmatprep.subr.mxu0 0.0
      %6119 = vmatpush1.msra.mxu0 %v6083
      %6120 = vmatprep.subr.mxu0 0.0
      %6121 = vmatpush2.msra.mxu0 0.0
      %6122 = vmatprep.subr.mxu0 0.0
      %6123 = vmatpush2.msra.mxu0 0.0
      %6124 = vmatprep.subr.mxu0 0.0
      %6125 = vmatpush2.msra.mxu0 0.0
      %6126 = vmatprep.subr.mxu0 0.0
      %6127 = vmatpush2.msra.mxu0 0.0
      %6128 = vmatprep.subr.mxu0 0.0
      %6129 = vmatpush2.msra.mxu0 0.0
      %6130 = vmatprep.subr.mxu0 0.0
      %6131 = vmatpush2.msra.mxu0 0.0
      %6132 = vmatprep.subr.mxu0 0.0
      %6133 = vmatpush2.msra.mxu0 0.0
      %6134 = vmatprep.subr.mxu0 0.0
      %6135 = vmatpush2.msra.mxu0 0.0
      %6136 = vmatprep.subr.mxu0 0.0
      %6137 = vmatpush2.msra.mxu0 0.0
      %6138 = vmatprep.subr.mxu0 0.0
      %6139 = vmatpush2.msra.mxu0 0.0
      %6140 = vmatprep.subr.mxu0 0.0
      %6141 = vmatpush2.msra.mxu0 0.0
      %6142 = vmatprep.subr.mxu0 0.0
      %6143 = vmatpush2.msra.mxu0 0.0
      %6144 = vmatprep.subr.mxu0 0.0
      %6145 = vmatpush2.msra.mxu0 0.0
      %6146 = vmatprep.subr.mxu0 0.0
      %6147 = vmatpush2.msra.mxu0 0.0
      %6148 = vmatprep.subr.mxu0 0.0
      %6149 = vmatpush2.msra.mxu0 0.0
      %6150 = vmatprep.subr.mxu0 0.0
      %6151 = vmatpush2.msra.mxu0 0.0
      %6152 = vmatprep.mubr.f32.mxu0 0.0
      %6153 = vmatmul.mubr.f32.gmra.mxu0 %v6086
      %v6154 = vpop.f32.mrf.mxu0
      %v6155 = vadd.f32 0.0, %v6154
      %v6156 = vpop.f32.mrf.mxu0
      %6157 = vdwg.mxu0
      %6158 = vrot.lane.b32.xlu0 %v5525, 64
      %v6159 = vpop.permute.xlu0 %6158
      %v6162 = vsel %vm744, %v6077, 0
      %6164 = vmatprep.subr.mxu0 0.0
      %6165 = vmatpush1.msra.mxu0 0.0
      %6166 = vmatprep.subr.mxu0 0.0
      %6167 = vmatpush1.msra.mxu0 0.0
      %6168 = vmatprep.subr.mxu0 0.0
      %6169 = vmatpush1.msra.mxu0 0.0
      %6170 = vmatprep.subr.mxu0 0.0
      %6171 = vmatpush1.msra.mxu0 0.0
      %6172 = vmatprep.subr.mxu0 0.0
      %6173 = vmatpush1.msra.mxu0 0.0
      %6174 = vmatprep.subr.mxu0 0.0
      %6175 = vmatpush1.msra.mxu0 0.0
      %6176 = vmatprep.subr.mxu0 0.0
      %6177 = vmatpush1.msra.mxu0 0.0
      %6178 = vmatprep.subr.mxu0 0.0
      %6179 = vmatpush1.msra.mxu0 0.0
      %6180 = vmatprep.subr.mxu0 0.0
      %6181 = vmatpush1.msra.mxu0 0.0
      %6182 = vmatprep.subr.mxu0 0.0
      %6183 = vmatpush1.msra.mxu0 0.0
      %6184 = vmatprep.subr.mxu0 0.0
      %6185 = vmatpush1.msra.mxu0 0.0
      %6186 = vmatprep.subr.mxu0 0.0
      %6187 = vmatpush1.msra.mxu0 0.0
      %6188 = vmatprep.subr.mxu0 0.0
      %6189 = vmatpush1.msra.mxu0 0.0
      %6190 = vmatprep.subr.mxu0 0.0
      %6191 = vmatpush1.msra.mxu0 0.0
      %6192 = vmatprep.subr.mxu0 0.0
      %6193 = vmatpush1.msra.mxu0 0.0
      %6194 = vmatprep.subr.mxu0 0.0
      %6195 = vmatpush1.msra.mxu0 %v6159
      %6196 = vmatprep.subr.mxu0 0.0
      %6197 = vmatpush2.msra.mxu0 0.0
      %6198 = vmatprep.subr.mxu0 0.0
      %6199 = vmatpush2.msra.mxu0 0.0
      %6200 = vmatprep.subr.mxu0 0.0
      %6201 = vmatpush2.msra.mxu0 0.0
      %6202 = vmatprep.subr.mxu0 0.0
      %6203 = vmatpush2.msra.mxu0 0.0
      %6204 = vmatprep.subr.mxu0 0.0
      %6205 = vmatpush2.msra.mxu0 0.0
      %6206 = vmatprep.subr.mxu0 0.0
      %6207 = vmatpush2.msra.mxu0 0.0
      %6208 = vmatprep.subr.mxu0 0.0
      %6209 = vmatpush2.msra.mxu0 0.0
      %6210 = vmatprep.subr.mxu0 0.0
      %6211 = vmatpush2.msra.mxu0 0.0
      %6212 = vmatprep.subr.mxu0 0.0
      %6213 = vmatpush2.msra.mxu0 0.0
      %6214 = vmatprep.subr.mxu0 0.0
      %6215 = vmatpush2.msra.mxu0 0.0
      %6216 = vmatprep.subr.mxu0 0.0
      %6217 = vmatpush2.msra.mxu0 0.0
      %6218 = vmatprep.subr.mxu0 0.0
      %6219 = vmatpush2.msra.mxu0 0.0
      %6220 = vmatprep.subr.mxu0 0.0
      %6221 = vmatpush2.msra.mxu0 0.0
      %6222 = vmatprep.subr.mxu0 0.0
      %6223 = vmatpush2.msra.mxu0 0.0
      %6224 = vmatprep.subr.mxu0 0.0
      %6225 = vmatpush2.msra.mxu0 0.0
      %6226 = vmatprep.subr.mxu0 0.0
      %6227 = vmatpush2.msra.mxu0 0.0
      %6228 = vmatprep.mubr.f32.mxu0 0.0
      %6229 = vmatmul.mubr.f32.gmra.mxu0 %v6162
      %v6230 = vpop.f32.mrf.mxu0
      %v6231 = vadd.f32 0.0, %v6230
      %v6232 = vpop.f32.mrf.mxu0
      %6233 = vdwg.mxu0
      %6234 = vrot.lane.b32.xlu0 %v5530, 64
      %v6235 = vpop.permute.xlu0 %6234
      %v6238 = vsel %vm744, %v6078, 0
      %6240 = vmatprep.subr.mxu0 0.0
      %6241 = vmatpush1.msra.mxu0 0.0
      %6242 = vmatprep.subr.mxu0 0.0
      %6243 = vmatpush1.msra.mxu0 0.0
      %6244 = vmatprep.subr.mxu0 0.0
      %6245 = vmatpush1.msra.mxu0 0.0
      %6246 = vmatprep.subr.mxu0 0.0
      %6247 = vmatpush1.msra.mxu0 0.0
      %6248 = vmatprep.subr.mxu0 0.0
      %6249 = vmatpush1.msra.mxu0 0.0
      %6250 = vmatprep.subr.mxu0 0.0
      %6251 = vmatpush1.msra.mxu0 0.0
      %6252 = vmatprep.subr.mxu0 0.0
      %6253 = vmatpush1.msra.mxu0 0.0
      %6254 = vmatprep.subr.mxu0 0.0
      %6255 = vmatpush1.msra.mxu0 0.0
      %6256 = vmatprep.subr.mxu0 0.0
      %6257 = vmatpush1.msra.mxu0 0.0
      %6258 = vmatprep.subr.mxu0 0.0
      %6259 = vmatpush1.msra.mxu0 0.0
      %6260 = vmatprep.subr.mxu0 0.0
      %6261 = vmatpush1.msra.mxu0 0.0
      %6262 = vmatprep.subr.mxu0 0.0
      %6263 = vmatpush1.msra.mxu0 0.0
      %6264 = vmatprep.subr.mxu0 0.0
      %6265 = vmatpush1.msra.mxu0 0.0
      %6266 = vmatprep.subr.mxu0 0.0
      %6267 = vmatpush1.msra.mxu0 0.0
      %6268 = vmatprep.subr.mxu0 0.0
      %6269 = vmatpush1.msra.mxu0 0.0
      %6270 = vmatprep.subr.mxu0 0.0
      %6271 = vmatpush1.msra.mxu0 %v6235
      %6272 = vmatprep.subr.mxu0 0.0
      %6273 = vmatpush2.msra.mxu0 0.0
      %6274 = vmatprep.subr.mxu0 0.0
      %6275 = vmatpush2.msra.mxu0 0.0
      %6276 = vmatprep.subr.mxu0 0.0
      %6277 = vmatpush2.msra.mxu0 0.0
      %6278 = vmatprep.subr.mxu0 0.0
      %6279 = vmatpush2.msra.mxu0 0.0
      %6280 = vmatprep.subr.mxu0 0.0
      %6281 = vmatpush2.msra.mxu0 0.0
      %6282 = vmatprep.subr.mxu0 0.0
      %6283 = vmatpush2.msra.mxu0 0.0
      %6284 = vmatprep.subr.mxu0 0.0
      %6285 = vmatpush2.msra.mxu0 0.0
      %6286 = vmatprep.subr.mxu0 0.0
      %6287 = vmatpush2.msra.mxu0 0.0
      %6288 = vmatprep.subr.mxu0 0.0
      %6289 = vmatpush2.msra.mxu0 0.0
      %6290 = vmatprep.subr.mxu0 0.0
      %6291 = vmatpush2.msra.mxu0 0.0
      %6292 = vmatprep.subr.mxu0 0.0
      %6293 = vmatpush2.msra.mxu0 0.0
      %6294 = vmatprep.subr.mxu0 0.0
      %6295 = vmatpush2.msra.mxu0 0.0
      %6296 = vmatprep.subr.mxu0 0.0
      %6297 = vmatpush2.msra.mxu0 0.0
      %6298 = vmatprep.subr.mxu0 0.0
      %6299 = vmatpush2.msra.mxu0 0.0
      %6300 = vmatprep.subr.mxu0 0.0
      %6301 = vmatpush2.msra.mxu0 0.0
      %6302 = vmatprep.subr.mxu0 0.0
      %6303 = vmatpush2.msra.mxu0 0.0
      %6304 = vmatprep.mubr.f32.mxu0 0.0
      %6305 = vmatmul.mubr.f32.gmra.mxu0 %v6238
      %v6306 = vpop.f32.mrf.mxu0
      %v6307 = vadd.f32 0.0, %v6306
      %v6308 = vpop.f32.mrf.mxu0
      %6309 = vdwg.mxu0
      %6310 = vrot.lane.b32.xlu0 %v5535, 64
      %v6311 = vpop.permute.xlu0 %6310
      %v6314 = vsel %vm744, %v6079, 0
      %6316 = vmatprep.subr.mxu0 0.0
      %6317 = vmatpush1.msra.mxu0 0.0
      %6318 = vmatprep.subr.mxu0 0.0
      %6319 = vmatpush1.msra.mxu0 0.0
      %6320 = vmatprep.subr.mxu0 0.0
      %6321 = vmatpush1.msra.mxu0 0.0
      %6322 = vmatprep.subr.mxu0 0.0
      %6323 = vmatpush1.msra.mxu0 0.0
      %6324 = vmatprep.subr.mxu0 0.0
      %6325 = vmatpush1.msra.mxu0 0.0
      %6326 = vmatprep.subr.mxu0 0.0
      %6327 = vmatpush1.msra.mxu0 0.0
      %6328 = vmatprep.subr.mxu0 0.0
      %6329 = vmatpush1.msra.mxu0 0.0
      %6330 = vmatprep.subr.mxu0 0.0
      %6331 = vmatpush1.msra.mxu0 0.0
      %6332 = vmatprep.subr.mxu0 0.0
      %6333 = vmatpush1.msra.mxu0 0.0
      %6334 = vmatprep.subr.mxu0 0.0
      %6335 = vmatpush1.msra.mxu0 0.0
      %6336 = vmatprep.subr.mxu0 0.0
      %6337 = vmatpush1.msra.mxu0 0.0
      %6338 = vmatprep.subr.mxu0 0.0
      %6339 = vmatpush1.msra.mxu0 0.0
      %6340 = vmatprep.subr.mxu0 0.0
      %6341 = vmatpush1.msra.mxu0 0.0
      %6342 = vmatprep.subr.mxu0 0.0
      %6343 = vmatpush1.msra.mxu0 0.0
      %6344 = vmatprep.subr.mxu0 0.0
      %6345 = vmatpush1.msra.mxu0 0.0
      %6346 = vmatprep.subr.mxu0 0.0
      %6347 = vmatpush1.msra.mxu0 %v6311
      %6348 = vmatprep.subr.mxu0 0.0
      %6349 = vmatpush2.msra.mxu0 0.0
      %6350 = vmatprep.subr.mxu0 0.0
      %6351 = vmatpush2.msra.mxu0 0.0
      %6352 = vmatprep.subr.mxu0 0.0
      %6353 = vmatpush2.msra.mxu0 0.0
      %6354 = vmatprep.subr.mxu0 0.0
      %6355 = vmatpush2.msra.mxu0 0.0
      %6356 = vmatprep.subr.mxu0 0.0
      %6357 = vmatpush2.msra.mxu0 0.0
      %6358 = vmatprep.subr.mxu0 0.0
      %6359 = vmatpush2.msra.mxu0 0.0
      %6360 = vmatprep.subr.mxu0 0.0
      %6361 = vmatpush2.msra.mxu0 0.0
      %6362 = vmatprep.subr.mxu0 0.0
      %6363 = vmatpush2.msra.mxu0 0.0
      %6364 = vmatprep.subr.mxu0 0.0
      %6365 = vmatpush2.msra.mxu0 0.0
      %6366 = vmatprep.subr.mxu0 0.0
      %6367 = vmatpush2.msra.mxu0 0.0
      %6368 = vmatprep.subr.mxu0 0.0
      %6369 = vmatpush2.msra.mxu0 0.0
      %6370 = vmatprep.subr.mxu0 0.0
      %6371 = vmatpush2.msra.mxu0 0.0
      %6372 = vmatprep.subr.mxu0 0.0
      %6373 = vmatpush2.msra.mxu0 0.0
      %6374 = vmatprep.subr.mxu0 0.0
      %6375 = vmatpush2.msra.mxu0 0.0
      %6376 = vmatprep.subr.mxu0 0.0
      %6377 = vmatpush2.msra.mxu0 0.0
      %6378 = vmatprep.subr.mxu0 0.0
      %6379 = vmatpush2.msra.mxu0 0.0
      %6380 = vmatprep.mubr.f32.mxu0 0.0
      %6381 = vmatmul.mubr.f32.gmra.mxu0 %v6314
      %v6382 = vpop.f32.mrf.mxu0
      %v6383 = vadd.f32 0.0, %v6382
      %v6384 = vpop.f32.mrf.mxu0
      %6385 = vdwg.mxu0
      %6386 = vrot.lane.b32.xlu0 %v5540, 64
      %v6387 = vpop.permute.xlu0 %6386
      %v6390 = vsel %vm744, %v6080, 0
      %6392 = vmatprep.subr.mxu0 0.0
      %6393 = vmatpush1.msra.mxu0 0.0
      %6394 = vmatprep.subr.mxu0 0.0
      %6395 = vmatpush1.msra.mxu0 0.0
      %6396 = vmatprep.subr.mxu0 0.0
      %6397 = vmatpush1.msra.mxu0 0.0
      %6398 = vmatprep.subr.mxu0 0.0
      %6399 = vmatpush1.msra.mxu0 0.0
      %6400 = vmatprep.subr.mxu0 0.0
      %6401 = vmatpush1.msra.mxu0 0.0
      %6402 = vmatprep.subr.mxu0 0.0
      %6403 = vmatpush1.msra.mxu0 0.0
      %6404 = vmatprep.subr.mxu0 0.0
      %6405 = vmatpush1.msra.mxu0 0.0
      %6406 = vmatprep.subr.mxu0 0.0
      %6407 = vmatpush1.msra.mxu0 0.0
      %6408 = vmatprep.subr.mxu0 0.0
      %6409 = vmatpush1.msra.mxu0 0.0
      %6410 = vmatprep.subr.mxu0 0.0
      %6411 = vmatpush1.msra.mxu0 0.0
      %6412 = vmatprep.subr.mxu0 0.0
      %6413 = vmatpush1.msra.mxu0 0.0
      %6414 = vmatprep.subr.mxu0 0.0
      %6415 = vmatpush1.msra.mxu0 0.0
      %6416 = vmatprep.subr.mxu0 0.0
      %6417 = vmatpush1.msra.mxu0 0.0
      %6418 = vmatprep.subr.mxu0 0.0
      %6419 = vmatpush1.msra.mxu0 0.0
      %6420 = vmatprep.subr.mxu0 0.0
      %6421 = vmatpush1.msra.mxu0 0.0
      %6422 = vmatprep.subr.mxu0 0.0
      %6423 = vmatpush1.msra.mxu0 %v6387
      %6424 = vmatprep.subr.mxu0 0.0
      %6425 = vmatpush2.msra.mxu0 0.0
      %6426 = vmatprep.subr.mxu0 0.0
      %6427 = vmatpush2.msra.mxu0 0.0
      %6428 = vmatprep.subr.mxu0 0.0
      %6429 = vmatpush2.msra.mxu0 0.0
      %6430 = vmatprep.subr.mxu0 0.0
      %6431 = vmatpush2.msra.mxu0 0.0
      %6432 = vmatprep.subr.mxu0 0.0
      %6433 = vmatpush2.msra.mxu0 0.0
      %6434 = vmatprep.subr.mxu0 0.0
      %6435 = vmatpush2.msra.mxu0 0.0
      %6436 = vmatprep.subr.mxu0 0.0
      %6437 = vmatpush2.msra.mxu0 0.0
      %6438 = vmatprep.subr.mxu0 0.0
      %6439 = vmatpush2.msra.mxu0 0.0
      %6440 = vmatprep.subr.mxu0 0.0
      %6441 = vmatpush2.msra.mxu0 0.0
      %6442 = vmatprep.subr.mxu0 0.0
      %6443 = vmatpush2.msra.mxu0 0.0
      %6444 = vmatprep.subr.mxu0 0.0
      %6445 = vmatpush2.msra.mxu0 0.0
      %6446 = vmatprep.subr.mxu0 0.0
      %6447 = vmatpush2.msra.mxu0 0.0
      %6448 = vmatprep.subr.mxu0 0.0
      %6449 = vmatpush2.msra.mxu0 0.0
      %6450 = vmatprep.subr.mxu0 0.0
      %6451 = vmatpush2.msra.mxu0 0.0
      %6452 = vmatprep.subr.mxu0 0.0
      %6453 = vmatpush2.msra.mxu0 0.0
      %6454 = vmatprep.subr.mxu0 0.0
      %6455 = vmatpush2.msra.mxu0 0.0
      %6456 = vmatprep.mubr.f32.mxu0 0.0
      %6457 = vmatmul.mubr.f32.gmra.mxu0 %v6390
      %v6458 = vpop.f32.mrf.mxu0
      %v6459 = vadd.f32 0.0, %v6458
      %v6460 = vpop.f32.mrf.mxu0
      %6461 = vdwg.mxu0
      %6462 = vrot.lane.b32.xlu0 %v5545, 64
      %v6463 = vpop.permute.xlu0 %6462
      %v6466 = vsel %vm744, %v6081, 0
      %6468 = vmatprep.subr.mxu0 0.0
      %6469 = vmatpush1.msra.mxu0 0.0
      %6470 = vmatprep.subr.mxu0 0.0
      %6471 = vmatpush1.msra.mxu0 0.0
      %6472 = vmatprep.subr.mxu0 0.0
      %6473 = vmatpush1.msra.mxu0 0.0
      %6474 = vmatprep.subr.mxu0 0.0
      %6475 = vmatpush1.msra.mxu0 0.0
      %6476 = vmatprep.subr.mxu0 0.0
      %6477 = vmatpush1.msra.mxu0 0.0
      %6478 = vmatprep.subr.mxu0 0.0
      %6479 = vmatpush1.msra.mxu0 0.0
      %6480 = vmatprep.subr.mxu0 0.0
      %6481 = vmatpush1.msra.mxu0 0.0
      %6482 = vmatprep.subr.mxu0 0.0
      %6483 = vmatpush1.msra.mxu0 0.0
      %6484 = vmatprep.subr.mxu0 0.0
      %6485 = vmatpush1.msra.mxu0 0.0
      %6486 = vmatprep.subr.mxu0 0.0
      %6487 = vmatpush1.msra.mxu0 0.0
      %6488 = vmatprep.subr.mxu0 0.0
      %6489 = vmatpush1.msra.mxu0 0.0
      %6490 = vmatprep.subr.mxu0 0.0
      %6491 = vmatpush1.msra.mxu0 0.0
      %6492 = vmatprep.subr.mxu0 0.0
      %6493 = vmatpush1.msra.mxu0 0.0
      %6494 = vmatprep.subr.mxu0 0.0
      %6495 = vmatpush1.msra.mxu0 0.0
      %6496 = vmatprep.subr.mxu0 0.0
      %6497 = vmatpush1.msra.mxu0 0.0
      %6498 = vmatprep.subr.mxu0 0.0
      %6499 = vmatpush1.msra.mxu0 %v6463
      %6500 = vmatprep.subr.mxu0 0.0
      %6501 = vmatpush2.msra.mxu0 0.0
      %6502 = vmatprep.subr.mxu0 0.0
      %6503 = vmatpush2.msra.mxu0 0.0
      %6504 = vmatprep.subr.mxu0 0.0
      %6505 = vmatpush2.msra.mxu0 0.0
      %6506 = vmatprep.subr.mxu0 0.0
      %6507 = vmatpush2.msra.mxu0 0.0
      %6508 = vmatprep.subr.mxu0 0.0
      %6509 = vmatpush2.msra.mxu0 0.0
      %6510 = vmatprep.subr.mxu0 0.0
      %6511 = vmatpush2.msra.mxu0 0.0
      %6512 = vmatprep.subr.mxu0 0.0
      %6513 = vmatpush2.msra.mxu0 0.0
      %6514 = vmatprep.subr.mxu0 0.0
      %6515 = vmatpush2.msra.mxu0 0.0
      %6516 = vmatprep.subr.mxu0 0.0
      %6517 = vmatpush2.msra.mxu0 0.0
      %6518 = vmatprep.subr.mxu0 0.0
      %6519 = vmatpush2.msra.mxu0 0.0
      %6520 = vmatprep.subr.mxu0 0.0
      %6521 = vmatpush2.msra.mxu0 0.0
      %6522 = vmatprep.subr.mxu0 0.0
      %6523 = vmatpush2.msra.mxu0 0.0
      %6524 = vmatprep.subr.mxu0 0.0
      %6525 = vmatpush2.msra.mxu0 0.0
      %6526 = vmatprep.subr.mxu0 0.0
      %6527 = vmatpush2.msra.mxu0 0.0
      %6528 = vmatprep.subr.mxu0 0.0
      %6529 = vmatpush2.msra.mxu0 0.0
      %6530 = vmatprep.subr.mxu0 0.0
      %6531 = vmatpush2.msra.mxu0 0.0
      %6532 = vmatprep.mubr.f32.mxu0 0.0
      %6533 = vmatmul.mubr.f32.gmra.mxu0 %v6466
      %v6534 = vpop.f32.mrf.mxu0
      %v6535 = vadd.f32 0.0, %v6534
      %v6536 = vpop.f32.mrf.mxu0
      %6537 = vdwg.mxu0
      %6538 = vrot.lane.b32.xlu0 %v5520, 120
      %v6539 = vpop.permute.xlu0 %6538
      %6540 = vrot.lane.b32.xlu0 %v5520, 88
      %v6541 = vpop.permute.xlu0 %6540
      %v6542 = vsel %vm744, %v6539, 0
      %v6544 = vsel %vm744, %v6541, 0
      %6546 = vmatprep.subr.mxu0 0.0
      %6547 = vmatpush1.xpose.msra.mxu0 0.0
      %6548 = vmatprep.subr.mxu0 0.0
      %6549 = vmatpush1.xpose.msra.mxu0 0.0
      %6550 = vmatprep.subr.mxu0 0.0
      %6551 = vmatpush1.xpose.msra.mxu0 0.0
      %6552 = vmatprep.subr.mxu0 0.0
      %6553 = vmatpush1.xpose.msra.mxu0 0.0
      %6554 = vmatprep.subr.mxu0 0.0
      %6555 = vmatpush1.xpose.msra.mxu0 0.0
      %6556 = vmatprep.subr.mxu0 0.0
      %6557 = vmatpush1.xpose.msra.mxu0 0.0
      %6558 = vmatprep.subr.mxu0 0.0
      %6559 = vmatpush1.xpose.msra.mxu0 0.0
      %6560 = vmatprep.subr.mxu0 0.0
      %6561 = vmatpush1.xpose.msra.mxu0 0.0
      %6562 = vmatprep.subr.mxu0 0.0
      %6563 = vmatpush1.xpose.msra.mxu0 0.0
      %6564 = vmatprep.subr.mxu0 0.0
      %6565 = vmatpush1.xpose.msra.mxu0 0.0
      %6566 = vmatprep.subr.mxu0 0.0
      %6567 = vmatpush1.xpose.msra.mxu0 0.0
      %6568 = vmatprep.subr.mxu0 0.0
      %6569 = vmatpush1.xpose.msra.mxu0 0.0
      %6570 = vmatprep.subr.mxu0 0.0
      %6571 = vmatpush1.xpose.msra.mxu0 0.0
      %6572 = vmatprep.subr.mxu0 0.0
      %6573 = vmatpush1.xpose.msra.mxu0 0.0
      %6574 = vmatprep.subr.mxu0 0.0
      %6575 = vmatpush1.xpose.msra.mxu0 0.0
      %6576 = vmatprep.subr.mxu0 0.0
      %6577 = vmatpush1.xpose.msra.mxu0 %v6544
      %6578 = vmatprep.subr.mxu0 0.0
      %6579 = vmatpush2.xpose.msra.mxu0 0.0
      %6580 = vmatprep.subr.mxu0 0.0
      %6581 = vmatpush2.xpose.msra.mxu0 0.0
      %6582 = vmatprep.subr.mxu0 0.0
      %6583 = vmatpush2.xpose.msra.mxu0 0.0
      %6584 = vmatprep.subr.mxu0 0.0
      %6585 = vmatpush2.xpose.msra.mxu0 0.0
      %6586 = vmatprep.subr.mxu0 0.0
      %6587 = vmatpush2.xpose.msra.mxu0 0.0
      %6588 = vmatprep.subr.mxu0 0.0
      %6589 = vmatpush2.xpose.msra.mxu0 0.0
      %6590 = vmatprep.subr.mxu0 0.0
      %6591 = vmatpush2.xpose.msra.mxu0 0.0
      %6592 = vmatprep.subr.mxu0 0.0
      %6593 = vmatpush2.xpose.msra.mxu0 0.0
      %6594 = vmatprep.subr.mxu0 0.0
      %6595 = vmatpush2.xpose.msra.mxu0 0.0
      %6596 = vmatprep.subr.mxu0 0.0
      %6597 = vmatpush2.xpose.msra.mxu0 0.0
      %6598 = vmatprep.subr.mxu0 0.0
      %6599 = vmatpush2.xpose.msra.mxu0 0.0
      %6600 = vmatprep.subr.mxu0 0.0
      %6601 = vmatpush2.xpose.msra.mxu0 0.0
      %6602 = vmatprep.subr.mxu0 0.0
      %6603 = vmatpush2.xpose.msra.mxu0 0.0
      %6604 = vmatprep.subr.mxu0 0.0
      %6605 = vmatpush2.xpose.msra.mxu0 0.0
      %6606 = vmatprep.subr.mxu0 0.0
      %6607 = vmatpush2.xpose.msra.mxu0 0.0
      %6608 = vmatprep.subr.mxu0 0.0
      %6609 = vmatpush2.xpose.msra.mxu0 0.0
      %6610 = vmatprep.mubr.f32.mxu0 0.0
      %6611 = vmatmul.mubr.f32.gmra.mxu0 %v6542
      %v6612 = vpop.f32.mrf.mxu0
      %v6613 = vadd.f32 0.0, %v6612
      %v6614 = vpop.f32.mrf.mxu0
      %6615 = vdwg.mxu0
      %6616 = vrot.lane.b32.xlu0 %v5525, 120
      %v6617 = vpop.permute.xlu0 %6616
      %6618 = vrot.lane.b32.xlu0 %v5525, 88
      %v6619 = vpop.permute.xlu0 %6618
      %v6620 = vsel %vm744, %v6617, 0
      %v6622 = vsel %vm744, %v6619, 0
      %6624 = vmatprep.subr.mxu0 0.0
      %6625 = vmatpush1.xpose.msra.mxu0 0.0
      %6626 = vmatprep.subr.mxu0 0.0
      %6627 = vmatpush1.xpose.msra.mxu0 0.0
      %6628 = vmatprep.subr.mxu0 0.0
      %6629 = vmatpush1.xpose.msra.mxu0 0.0
      %6630 = vmatprep.subr.mxu0 0.0
      %6631 = vmatpush1.xpose.msra.mxu0 0.0
      %6632 = vmatprep.subr.mxu0 0.0
      %6633 = vmatpush1.xpose.msra.mxu0 0.0
      %6634 = vmatprep.subr.mxu0 0.0
      %6635 = vmatpush1.xpose.msra.mxu0 0.0
      %6636 = vmatprep.subr.mxu0 0.0
      %6637 = vmatpush1.xpose.msra.mxu0 0.0
      %6638 = vmatprep.subr.mxu0 0.0
      %6639 = vmatpush1.xpose.msra.mxu0 0.0
      %6640 = vmatprep.subr.mxu0 0.0
      %6641 = vmatpush1.xpose.msra.mxu0 0.0
      %6642 = vmatprep.subr.mxu0 0.0
      %6643 = vmatpush1.xpose.msra.mxu0 0.0
      %6644 = vmatprep.subr.mxu0 0.0
      %6645 = vmatpush1.xpose.msra.mxu0 0.0
      %6646 = vmatprep.subr.mxu0 0.0
      %6647 = vmatpush1.xpose.msra.mxu0 0.0
      %6648 = vmatprep.subr.mxu0 0.0
      %6649 = vmatpush1.xpose.msra.mxu0 0.0
      %6650 = vmatprep.subr.mxu0 0.0
      %6651 = vmatpush1.xpose.msra.mxu0 0.0
      %6652 = vmatprep.subr.mxu0 0.0
      %6653 = vmatpush1.xpose.msra.mxu0 0.0
      %6654 = vmatprep.subr.mxu0 0.0
      %6655 = vmatpush1.xpose.msra.mxu0 %v6622
      %6656 = vmatprep.subr.mxu0 0.0
      %6657 = vmatpush2.xpose.msra.mxu0 0.0
      %6658 = vmatprep.subr.mxu0 0.0
      %6659 = vmatpush2.xpose.msra.mxu0 0.0
      %6660 = vmatprep.subr.mxu0 0.0
      %6661 = vmatpush2.xpose.msra.mxu0 0.0
      %6662 = vmatprep.subr.mxu0 0.0
      %6663 = vmatpush2.xpose.msra.mxu0 0.0
      %6664 = vmatprep.subr.mxu0 0.0
      %6665 = vmatpush2.xpose.msra.mxu0 0.0
      %6666 = vmatprep.subr.mxu0 0.0
      %6667 = vmatpush2.xpose.msra.mxu0 0.0
      %6668 = vmatprep.subr.mxu0 0.0
      %6669 = vmatpush2.xpose.msra.mxu0 0.0
      %6670 = vmatprep.subr.mxu0 0.0
      %6671 = vmatpush2.xpose.msra.mxu0 0.0
      %6672 = vmatprep.subr.mxu0 0.0
      %6673 = vmatpush2.xpose.msra.mxu0 0.0
      %6674 = vmatprep.subr.mxu0 0.0
      %6675 = vmatpush2.xpose.msra.mxu0 0.0
      %6676 = vmatprep.subr.mxu0 0.0
      %6677 = vmatpush2.xpose.msra.mxu0 0.0
      %6678 = vmatprep.subr.mxu0 0.0
      %6679 = vmatpush2.xpose.msra.mxu0 0.0
      %6680 = vmatprep.subr.mxu0 0.0
      %6681 = vmatpush2.xpose.msra.mxu0 0.0
      %6682 = vmatprep.subr.mxu0 0.0
      %6683 = vmatpush2.xpose.msra.mxu0 0.0
      %6684 = vmatprep.subr.mxu0 0.0
      %6685 = vmatpush2.xpose.msra.mxu0 0.0
      %6686 = vmatprep.subr.mxu0 0.0
      %6687 = vmatpush2.xpose.msra.mxu0 0.0
      %6688 = vmatprep.mubr.f32.mxu0 0.0
      %6689 = vmatmul.mubr.f32.gmra.mxu0 %v6620
      %v6690 = vpop.f32.mrf.mxu0
      %v6691 = vadd.f32 0.0, %v6690
      %v6692 = vpop.f32.mrf.mxu0
      %6693 = vdwg.mxu0
      %6694 = vrot.lane.b32.xlu0 %v5530, 120
      %v6695 = vpop.permute.xlu0 %6694
      %6696 = vrot.lane.b32.xlu0 %v5530, 88
      %v6697 = vpop.permute.xlu0 %6696
      %v6698 = vsel %vm744, %v6695, 0
      %v6700 = vsel %vm744, %v6697, 0
      %6702 = vmatprep.subr.mxu0 0.0
      %6703 = vmatpush1.xpose.msra.mxu0 0.0
      %6704 = vmatprep.subr.mxu0 0.0
      %6705 = vmatpush1.xpose.msra.mxu0 0.0
      %6706 = vmatprep.subr.mxu0 0.0
      %6707 = vmatpush1.xpose.msra.mxu0 0.0
      %6708 = vmatprep.subr.mxu0 0.0
      %6709 = vmatpush1.xpose.msra.mxu0 0.0
      %6710 = vmatprep.subr.mxu0 0.0
      %6711 = vmatpush1.xpose.msra.mxu0 0.0
      %6712 = vmatprep.subr.mxu0 0.0
      %6713 = vmatpush1.xpose.msra.mxu0 0.0
      %6714 = vmatprep.subr.mxu0 0.0
      %6715 = vmatpush1.xpose.msra.mxu0 0.0
      %6716 = vmatprep.subr.mxu0 0.0
      %6717 = vmatpush1.xpose.msra.mxu0 0.0
      %6718 = vmatprep.subr.mxu0 0.0
      %6719 = vmatpush1.xpose.msra.mxu0 0.0
      %6720 = vmatprep.subr.mxu0 0.0
      %6721 = vmatpush1.xpose.msra.mxu0 0.0
      %6722 = vmatprep.subr.mxu0 0.0
      %6723 = vmatpush1.xpose.msra.mxu0 0.0
      %6724 = vmatprep.subr.mxu0 0.0
      %6725 = vmatpush1.xpose.msra.mxu0 0.0
      %6726 = vmatprep.subr.mxu0 0.0
      %6727 = vmatpush1.xpose.msra.mxu0 0.0
      %6728 = vmatprep.subr.mxu0 0.0
      %6729 = vmatpush1.xpose.msra.mxu0 0.0
      %6730 = vmatprep.subr.mxu0 0.0
      %6731 = vmatpush1.xpose.msra.mxu0 0.0
      %6732 = vmatprep.subr.mxu0 0.0
      %6733 = vmatpush1.xpose.msra.mxu0 %v6700
      %6734 = vmatprep.subr.mxu0 0.0
      %6735 = vmatpush2.xpose.msra.mxu0 0.0
      %6736 = vmatprep.subr.mxu0 0.0
      %6737 = vmatpush2.xpose.msra.mxu0 0.0
      %6738 = vmatprep.subr.mxu0 0.0
      %6739 = vmatpush2.xpose.msra.mxu0 0.0
      %6740 = vmatprep.subr.mxu0 0.0
      %6741 = vmatpush2.xpose.msra.mxu0 0.0
      %6742 = vmatprep.subr.mxu0 0.0
      %6743 = vmatpush2.xpose.msra.mxu0 0.0
      %6744 = vmatprep.subr.mxu0 0.0
      %6745 = vmatpush2.xpose.msra.mxu0 0.0
      %6746 = vmatprep.subr.mxu0 0.0
      %6747 = vmatpush2.xpose.msra.mxu0 0.0
      %6748 = vmatprep.subr.mxu0 0.0
      %6749 = vmatpush2.xpose.msra.mxu0 0.0
      %6750 = vmatprep.subr.mxu0 0.0
      %6751 = vmatpush2.xpose.msra.mxu0 0.0
      %6752 = vmatprep.subr.mxu0 0.0
      %6753 = vmatpush2.xpose.msra.mxu0 0.0
      %6754 = vmatprep.subr.mxu0 0.0
      %6755 = vmatpush2.xpose.msra.mxu0 0.0
      %6756 = vmatprep.subr.mxu0 0.0
      %6757 = vmatpush2.xpose.msra.mxu0 0.0
      %6758 = vmatprep.subr.mxu0 0.0
      %6759 = vmatpush2.xpose.msra.mxu0 0.0
      %6760 = vmatprep.subr.mxu0 0.0
      %6761 = vmatpush2.xpose.msra.mxu0 0.0
      %6762 = vmatprep.subr.mxu0 0.0
      %6763 = vmatpush2.xpose.msra.mxu0 0.0
      %6764 = vmatprep.subr.mxu0 0.0
      %6765 = vmatpush2.xpose.msra.mxu0 0.0
      %6766 = vmatprep.mubr.f32.mxu0 0.0
      %6767 = vmatmul.mubr.f32.gmra.mxu0 %v6698
      %v6768 = vpop.f32.mrf.mxu0
      %v6769 = vadd.f32 0.0, %v6768
      %v6770 = vpop.f32.mrf.mxu0
      %6771 = vdwg.mxu0
      %6772 = vrot.lane.b32.xlu0 %v5535, 120
      %v6773 = vpop.permute.xlu0 %6772
      %6774 = vrot.lane.b32.xlu0 %v5535, 88
      %v6775 = vpop.permute.xlu0 %6774
      %v6776 = vsel %vm744, %v6773, 0
      %v6778 = vsel %vm744, %v6775, 0
      %6780 = vmatprep.subr.mxu0 0.0
      %6781 = vmatpush1.xpose.msra.mxu0 0.0
      %6782 = vmatprep.subr.mxu0 0.0
      %6783 = vmatpush1.xpose.msra.mxu0 0.0
      %6784 = vmatprep.subr.mxu0 0.0
      %6785 = vmatpush1.xpose.msra.mxu0 0.0
      %6786 = vmatprep.subr.mxu0 0.0
      %6787 = vmatpush1.xpose.msra.mxu0 0.0
      %6788 = vmatprep.subr.mxu0 0.0
      %6789 = vmatpush1.xpose.msra.mxu0 0.0
      %6790 = vmatprep.subr.mxu0 0.0
      %6791 = vmatpush1.xpose.msra.mxu0 0.0
      %6792 = vmatprep.subr.mxu0 0.0
      %6793 = vmatpush1.xpose.msra.mxu0 0.0
      %6794 = vmatprep.subr.mxu0 0.0
      %6795 = vmatpush1.xpose.msra.mxu0 0.0
      %6796 = vmatprep.subr.mxu0 0.0
      %6797 = vmatpush1.xpose.msra.mxu0 0.0
      %6798 = vmatprep.subr.mxu0 0.0
      %6799 = vmatpush1.xpose.msra.mxu0 0.0
      %6800 = vmatprep.subr.mxu0 0.0
      %6801 = vmatpush1.xpose.msra.mxu0 0.0
      %6802 = vmatprep.subr.mxu0 0.0
      %6803 = vmatpush1.xpose.msra.mxu0 0.0
      %6804 = vmatprep.subr.mxu0 0.0
      %6805 = vmatpush1.xpose.msra.mxu0 0.0
      %6806 = vmatprep.subr.mxu0 0.0
      %6807 = vmatpush1.xpose.msra.mxu0 0.0
      %6808 = vmatprep.subr.mxu0 0.0
      %6809 = vmatpush1.xpose.msra.mxu0 0.0
      %6810 = vmatprep.subr.mxu0 0.0
      %6811 = vmatpush1.xpose.msra.mxu0 %v6778
      %6812 = vmatprep.subr.mxu0 0.0
      %6813 = vmatpush2.xpose.msra.mxu0 0.0
      %6814 = vmatprep.subr.mxu0 0.0
      %6815 = vmatpush2.xpose.msra.mxu0 0.0
      %6816 = vmatprep.subr.mxu0 0.0
      %6817 = vmatpush2.xpose.msra.mxu0 0.0
      %6818 = vmatprep.subr.mxu0 0.0
      %6819 = vmatpush2.xpose.msra.mxu0 0.0
      %6820 = vmatprep.subr.mxu0 0.0
      %6821 = vmatpush2.xpose.msra.mxu0 0.0
      %6822 = vmatprep.subr.mxu0 0.0
      %6823 = vmatpush2.xpose.msra.mxu0 0.0
      %6824 = vmatprep.subr.mxu0 0.0
      %6825 = vmatpush2.xpose.msra.mxu0 0.0
      %6826 = vmatprep.subr.mxu0 0.0
      %6827 = vmatpush2.xpose.msra.mxu0 0.0
      %6828 = vmatprep.subr.mxu0 0.0
      %6829 = vmatpush2.xpose.msra.mxu0 0.0
      %6830 = vmatprep.subr.mxu0 0.0
      %6831 = vmatpush2.xpose.msra.mxu0 0.0
      %6832 = vmatprep.subr.mxu0 0.0
      %6833 = vmatpush2.xpose.msra.mxu0 0.0
      %6834 = vmatprep.subr.mxu0 0.0
      %6835 = vmatpush2.xpose.msra.mxu0 0.0
      %6836 = vmatprep.subr.mxu0 0.0
      %6837 = vmatpush2.xpose.msra.mxu0 0.0
      %6838 = vmatprep.subr.mxu0 0.0
      %6839 = vmatpush2.xpose.msra.mxu0 0.0
      %6840 = vmatprep.subr.mxu0 0.0
      %6841 = vmatpush2.xpose.msra.mxu0 0.0
      %6842 = vmatprep.subr.mxu0 0.0
      %6843 = vmatpush2.xpose.msra.mxu0 0.0
      %6844 = vmatprep.mubr.f32.mxu0 0.0
      %6845 = vmatmul.mubr.f32.gmra.mxu0 %v6776
      %v6846 = vpop.f32.mrf.mxu0
      %v6847 = vadd.f32 0.0, %v6846
      %v6848 = vpop.f32.mrf.mxu0
      %6849 = vdwg.mxu0
      %6850 = vrot.lane.b32.xlu0 %v5540, 120
      %v6851 = vpop.permute.xlu0 %6850
      %6852 = vrot.lane.b32.xlu0 %v5540, 88
      %v6853 = vpop.permute.xlu0 %6852
      %v6854 = vsel %vm744, %v6851, 0
      %v6856 = vsel %vm744, %v6853, 0
      %6858 = vmatprep.subr.mxu0 0.0
      %6859 = vmatpush1.xpose.msra.mxu0 0.0
      %6860 = vmatprep.subr.mxu0 0.0
      %6861 = vmatpush1.xpose.msra.mxu0 0.0
      %6862 = vmatprep.subr.mxu0 0.0
      %6863 = vmatpush1.xpose.msra.mxu0 0.0
      %6864 = vmatprep.subr.mxu0 0.0
      %6865 = vmatpush1.xpose.msra.mxu0 0.0
      %6866 = vmatprep.subr.mxu0 0.0
      %6867 = vmatpush1.xpose.msra.mxu0 0.0
      %6868 = vmatprep.subr.mxu0 0.0
      %6869 = vmatpush1.xpose.msra.mxu0 0.0
      %6870 = vmatprep.subr.mxu0 0.0
      %6871 = vmatpush1.xpose.msra.mxu0 0.0
      %6872 = vmatprep.subr.mxu0 0.0
      %6873 = vmatpush1.xpose.msra.mxu0 0.0
      %6874 = vmatprep.subr.mxu0 0.0
      %6875 = vmatpush1.xpose.msra.mxu0 0.0
      %6876 = vmatprep.subr.mxu0 0.0
      %6877 = vmatpush1.xpose.msra.mxu0 0.0
      %6878 = vmatprep.subr.mxu0 0.0
      %6879 = vmatpush1.xpose.msra.mxu0 0.0
      %6880 = vmatprep.subr.mxu0 0.0
      %6881 = vmatpush1.xpose.msra.mxu0 0.0
      %6882 = vmatprep.subr.mxu0 0.0
      %6883 = vmatpush1.xpose.msra.mxu0 0.0
      %6884 = vmatprep.subr.mxu0 0.0
      %6885 = vmatpush1.xpose.msra.mxu0 0.0
      %6886 = vmatprep.subr.mxu0 0.0
      %6887 = vmatpush1.xpose.msra.mxu0 0.0
      %6888 = vmatprep.subr.mxu0 0.0
      %6889 = vmatpush1.xpose.msra.mxu0 %v6856
      %6890 = vmatprep.subr.mxu0 0.0
      %6891 = vmatpush2.xpose.msra.mxu0 0.0
      %6892 = vmatprep.subr.mxu0 0.0
      %6893 = vmatpush2.xpose.msra.mxu0 0.0
      %6894 = vmatprep.subr.mxu0 0.0
      %6895 = vmatpush2.xpose.msra.mxu0 0.0
      %6896 = vmatprep.subr.mxu0 0.0
      %6897 = vmatpush2.xpose.msra.mxu0 0.0
      %6898 = vmatprep.subr.mxu0 0.0
      %6899 = vmatpush2.xpose.msra.mxu0 0.0
      %6900 = vmatprep.subr.mxu0 0.0
      %6901 = vmatpush2.xpose.msra.mxu0 0.0
      %6902 = vmatprep.subr.mxu0 0.0
      %6903 = vmatpush2.xpose.msra.mxu0 0.0
      %6904 = vmatprep.subr.mxu0 0.0
      %6905 = vmatpush2.xpose.msra.mxu0 0.0
      %6906 = vmatprep.subr.mxu0 0.0
      %6907 = vmatpush2.xpose.msra.mxu0 0.0
      %6908 = vmatprep.subr.mxu0 0.0
      %6909 = vmatpush2.xpose.msra.mxu0 0.0
      %6910 = vmatprep.subr.mxu0 0.0
      %6911 = vmatpush2.xpose.msra.mxu0 0.0
      %6912 = vmatprep.subr.mxu0 0.0
      %6913 = vmatpush2.xpose.msra.mxu0 0.0
      %6914 = vmatprep.subr.mxu0 0.0
      %6915 = vmatpush2.xpose.msra.mxu0 0.0
      %6916 = vmatprep.subr.mxu0 0.0
      %6917 = vmatpush2.xpose.msra.mxu0 0.0
      %6918 = vmatprep.subr.mxu0 0.0
      %6919 = vmatpush2.xpose.msra.mxu0 0.0
      %6920 = vmatprep.subr.mxu0 0.0
      %6921 = vmatpush2.xpose.msra.mxu0 0.0
      %6922 = vmatprep.mubr.f32.mxu0 0.0
      %6923 = vmatmul.mubr.f32.gmra.mxu0 %v6854
      %v6924 = vpop.f32.mrf.mxu0
      %v6925 = vadd.f32 0.0, %v6924
      %v6926 = vpop.f32.mrf.mxu0
      %6927 = vdwg.mxu0
      %6928 = vrot.lane.b32.xlu0 %v5545, 120
      %v6929 = vpop.permute.xlu0 %6928
      %6930 = vrot.lane.b32.xlu0 %v5545, 88
      %v6931 = vpop.permute.xlu0 %6930
      %v6932 = vsel %vm744, %v6929, 0
      %v6934 = vsel %vm744, %v6931, 0
      %6936 = vmatprep.subr.mxu0 0.0
      %6937 = vmatpush1.xpose.msra.mxu0 0.0
      %6938 = vmatprep.subr.mxu0 0.0
      %6939 = vmatpush1.xpose.msra.mxu0 0.0
      %6940 = vmatprep.subr.mxu0 0.0
      %6941 = vmatpush1.xpose.msra.mxu0 0.0
      %6942 = vmatprep.subr.mxu0 0.0
      %6943 = vmatpush1.xpose.msra.mxu0 0.0
      %6944 = vmatprep.subr.mxu0 0.0
      %6945 = vmatpush1.xpose.msra.mxu0 0.0
      %6946 = vmatprep.subr.mxu0 0.0
      %6947 = vmatpush1.xpose.msra.mxu0 0.0
      %6948 = vmatprep.subr.mxu0 0.0
      %6949 = vmatpush1.xpose.msra.mxu0 0.0
      %6950 = vmatprep.subr.mxu0 0.0
      %6951 = vmatpush1.xpose.msra.mxu0 0.0
      %6952 = vmatprep.subr.mxu0 0.0
      %6953 = vmatpush1.xpose.msra.mxu0 0.0
      %6954 = vmatprep.subr.mxu0 0.0
      %6955 = vmatpush1.xpose.msra.mxu0 0.0
      %6956 = vmatprep.subr.mxu0 0.0
      %6957 = vmatpush1.xpose.msra.mxu0 0.0
      %6958 = vmatprep.subr.mxu0 0.0
      %6959 = vmatpush1.xpose.msra.mxu0 0.0
      %6960 = vmatprep.subr.mxu0 0.0
      %6961 = vmatpush1.xpose.msra.mxu0 0.0
      %6962 = vmatprep.subr.mxu0 0.0
      %6963 = vmatpush1.xpose.msra.mxu0 0.0
      %6964 = vmatprep.subr.mxu0 0.0
      %6965 = vmatpush1.xpose.msra.mxu0 0.0
      %6966 = vmatprep.subr.mxu0 0.0
      %6967 = vmatpush1.xpose.msra.mxu0 %v6934
      %6968 = vmatprep.subr.mxu0 0.0
      %6969 = vmatpush2.xpose.msra.mxu0 0.0
      %6970 = vmatprep.subr.mxu0 0.0
      %6971 = vmatpush2.xpose.msra.mxu0 0.0
      %6972 = vmatprep.subr.mxu0 0.0
      %6973 = vmatpush2.xpose.msra.mxu0 0.0
      %6974 = vmatprep.subr.mxu0 0.0
      %6975 = vmatpush2.xpose.msra.mxu0 0.0
      %6976 = vmatprep.subr.mxu0 0.0
      %6977 = vmatpush2.xpose.msra.mxu0 0.0
      %6978 = vmatprep.subr.mxu0 0.0
      %6979 = vmatpush2.xpose.msra.mxu0 0.0
      %6980 = vmatprep.subr.mxu0 0.0
      %6981 = vmatpush2.xpose.msra.mxu0 0.0
      %6982 = vmatprep.subr.mxu0 0.0
      %6983 = vmatpush2.xpose.msra.mxu0 0.0
      %6984 = vmatprep.subr.mxu0 0.0
      %6985 = vmatpush2.xpose.msra.mxu0 0.0
      %6986 = vmatprep.subr.mxu0 0.0
      %6987 = vmatpush2.xpose.msra.mxu0 0.0
      %6988 = vmatprep.subr.mxu0 0.0
      %6989 = vmatpush2.xpose.msra.mxu0 0.0
      %6990 = vmatprep.subr.mxu0 0.0
      %6991 = vmatpush2.xpose.msra.mxu0 0.0
      %6992 = vmatprep.subr.mxu0 0.0
      %6993 = vmatpush2.xpose.msra.mxu0 0.0
      %6994 = vmatprep.subr.mxu0 0.0
      %6995 = vmatpush2.xpose.msra.mxu0 0.0
      %6996 = vmatprep.subr.mxu0 0.0
      %6997 = vmatpush2.xpose.msra.mxu0 0.0
      %6998 = vmatprep.subr.mxu0 0.0
      %6999 = vmatpush2.xpose.msra.mxu0 0.0
      %7000 = vmatprep.mubr.f32.mxu0 0.0
      %7001 = vmatmul.mubr.f32.gmra.mxu0 %v6932
      %v7002 = vpop.f32.mrf.mxu0
      %v7003 = vadd.f32 0.0, %v7002
      %v7004 = vpop.f32.mrf.mxu0
      %7005 = vdwg.mxu0
      %v7006 = vmul.f32 %v6613, 0.35355338
      %v7007 = vmul.f32 %v6691, 0.35355338
      %v7008 = vmul.f32 %v6769, 0.35355338
      %v7009 = vmul.f32 %v6847, 0.35355338
      %v7010 = vmul.f32 %v6925, 0.35355338
      %v7011 = vmul.f32 %v7003, 0.35355338
      %v7012 = vsel %vm744, %v7006, -inf
      %7013 = vmax.xlane.f32.xlu0 %v7012
      %v7014 = vpop.xlane.xlu0 %7013
      %v7015 = vsel %vm744, %v7007, -inf
      %7016 = vmax.xlane.f32.xlu0 %v7015
      %v7017 = vpop.xlane.xlu0 %7016
      %v7018 = vsel %vm744, %v7008, -inf
      %7019 = vmax.xlane.f32.xlu0 %v7018
      %v7020 = vpop.xlane.xlu0 %7019
      %v7021 = vsel %vm744, %v7009, -inf
      %7022 = vmax.xlane.f32.xlu0 %v7021
      %v7023 = vpop.xlane.xlu0 %7022
      %v7024 = vsel %vm744, %v7010, -inf
      %7025 = vmax.xlane.f32.xlu0 %v7024
      %v7026 = vpop.xlane.xlu0 %7025
      %v7027 = vsel %vm744, %v7011, -inf
      %7028 = vmax.xlane.f32.xlu0 %v7027
      %v7029 = vpop.xlane.xlu0 %7028
      %v7030 = vsub.f32 %v7006, %v7014
      %v7031 = vsub.f32 %v7007, %v7017
      %v7032 = vsub.f32 %v7008, %v7020
      %v7033 = vsub.f32 %v7009, %v7023
      %v7034 = vsub.f32 %v7010, %v7026
      %v7035 = vsub.f32 %v7011, %v7029
      %v7036 = vmul.f32 %v7030, 1.442695
      %v7037 = vpow.pop %v7036
      %v7038 = vmul.f32 %v7031, 1.442695
      %v7039 = vpow.pop %v7038
      %v7040 = vmul.f32 %v7032, 1.442695
      %v7041 = vpow.pop %v7040
      %v7042 = vmul.f32 %v7033, 1.442695
      %v7043 = vpow.pop %v7042
      %v7044 = vmul.f32 %v7034, 1.442695
      %v7045 = vpow.pop %v7044
      %v7046 = vmul.f32 %v7035, 1.442695
      %v7047 = vpow.pop %v7046
      %v7048 = vsel %vm744, %v7037, 0.0
      %7049 = vadd.xlane.f32.xlu0 %v7048
      %v7050 = vpop.xlane.xlu0 %7049
      %v7051 = vsel %vm744, %v7039, 0.0
      %7052 = vadd.xlane.f32.xlu0 %v7051
      %v7053 = vpop.xlane.xlu0 %7052
      %v7054 = vsel %vm744, %v7041, 0.0
      %7055 = vadd.xlane.f32.xlu0 %v7054
      %v7056 = vpop.xlane.xlu0 %7055
      %v7057 = vsel %vm744, %v7043, 0.0
      %7058 = vadd.xlane.f32.xlu0 %v7057
      %v7059 = vpop.xlane.xlu0 %7058
      %v7060 = vsel %vm744, %v7045, 0.0
      %7061 = vadd.xlane.f32.xlu0 %v7060
      %v7062 = vpop.xlane.xlu0 %7061
      %v7063 = vsel %vm744, %v7047, 0.0
      %7064 = vadd.xlane.f32.xlu0 %v7063
      %v7065 = vpop.xlane.xlu0 %7064
      %v7066 = vrcp.pop %v7050
      %v7067 = vrcp.pop %v7053
      %v7068 = vrcp.pop %v7056
      %v7069 = vrcp.pop %v7059
      %v7070 = vrcp.pop %v7062
      %v7071 = vrcp.pop %v7065
      %v7072 = vmul.f32 %v7037, %v7066
      %v7073 = vmul.f32 %v7039, %v7067
      %v7074 = vmul.f32 %v7041, %v7068
      %v7075 = vmul.f32 %v7043, %v7069
      %v7076 = vmul.f32 %v7045, %v7070
      %v7077 = vmul.f32 %v7047, %v7071
      %7078 = vrot.lane.b32.xlu0 %v5520, 56
      %v7079 = vpop.permute.xlu0 %7078
      %v7082 = vsel %vm744, %v7072, 0
      %7084 = vmatprep.subr.mxu0 0.0
      %7085 = vmatpush1.msra.mxu0 0.0
      %7086 = vmatprep.subr.mxu0 0.0
      %7087 = vmatpush1.msra.mxu0 0.0
      %7088 = vmatprep.subr.mxu0 0.0
      %7089 = vmatpush1.msra.mxu0 0.0
      %7090 = vmatprep.subr.mxu0 0.0
      %7091 = vmatpush1.msra.mxu0 0.0
      %7092 = vmatprep.subr.mxu0 0.0
      %7093 = vmatpush1.msra.mxu0 0.0
      %7094 = vmatprep.subr.mxu0 0.0
      %7095 = vmatpush1.msra.mxu0 0.0
      %7096 = vmatprep.subr.mxu0 0.0
      %7097 = vmatpush1.msra.mxu0 0.0
      %7098 = vmatprep.subr.mxu0 0.0
      %7099 = vmatpush1.msra.mxu0 0.0
      %7100 = vmatprep.subr.mxu0 0.0
      %7101 = vmatpush1.msra.mxu0 0.0
      %7102 = vmatprep.subr.mxu0 0.0
      %7103 = vmatpush1.msra.mxu0 0.0
      %7104 = vmatprep.subr.mxu0 0.0
      %7105 = vmatpush1.msra.mxu0 0.0
      %7106 = vmatprep.subr.mxu0 0.0
      %7107 = vmatpush1.msra.mxu0 0.0
      %7108 = vmatprep.subr.mxu0 0.0
      %7109 = vmatpush1.msra.mxu0 0.0
      %7110 = vmatprep.subr.mxu0 0.0
      %7111 = vmatpush1.msra.mxu0 0.0
      %7112 = vmatprep.subr.mxu0 0.0
      %7113 = vmatpush1.msra.mxu0 0.0
      %7114 = vmatprep.subr.mxu0 0.0
      %7115 = vmatpush1.msra.mxu0 %v7079
      %7116 = vmatprep.subr.mxu0 0.0
      %7117 = vmatpush2.msra.mxu0 0.0
      %7118 = vmatprep.subr.mxu0 0.0
      %7119 = vmatpush2.msra.mxu0 0.0
      %7120 = vmatprep.subr.mxu0 0.0
      %7121 = vmatpush2.msra.mxu0 0.0
      %7122 = vmatprep.subr.mxu0 0.0
      %7123 = vmatpush2.msra.mxu0 0.0
      %7124 = vmatprep.subr.mxu0 0.0
      %7125 = vmatpush2.msra.mxu0 0.0
      %7126 = vmatprep.subr.mxu0 0.0
      %7127 = vmatpush2.msra.mxu0 0.0
      %7128 = vmatprep.subr.mxu0 0.0
      %7129 = vmatpush2.msra.mxu0 0.0
      %7130 = vmatprep.subr.mxu0 0.0
      %7131 = vmatpush2.msra.mxu0 0.0
      %7132 = vmatprep.subr.mxu0 0.0
      %7133 = vmatpush2.msra.mxu0 0.0
      %7134 = vmatprep.subr.mxu0 0.0
      %7135 = vmatpush2.msra.mxu0 0.0
      %7136 = vmatprep.subr.mxu0 0.0
      %7137 = vmatpush2.msra.mxu0 0.0
      %7138 = vmatprep.subr.mxu0 0.0
      %7139 = vmatpush2.msra.mxu0 0.0
      %7140 = vmatprep.subr.mxu0 0.0
      %7141 = vmatpush2.msra.mxu0 0.0
      %7142 = vmatprep.subr.mxu0 0.0
      %7143 = vmatpush2.msra.mxu0 0.0
      %7144 = vmatprep.subr.mxu0 0.0
      %7145 = vmatpush2.msra.mxu0 0.0
      %7146 = vmatprep.subr.mxu0 0.0
      %7147 = vmatpush2.msra.mxu0 0.0
      %7148 = vmatprep.mubr.f32.mxu0 0.0
      %7149 = vmatmul.mubr.f32.gmra.mxu0 %v7082
      %v7150 = vpop.f32.mrf.mxu0
      %v7151 = vadd.f32 0.0, %v7150
      %v7152 = vpop.f32.mrf.mxu0
      %7153 = vdwg.mxu0
      %7154 = vrot.lane.b32.xlu0 %v5525, 56
      %v7155 = vpop.permute.xlu0 %7154
      %v7158 = vsel %vm744, %v7073, 0
      %7160 = vmatprep.subr.mxu0 0.0
      %7161 = vmatpush1.msra.mxu0 0.0
      %7162 = vmatprep.subr.mxu0 0.0
      %7163 = vmatpush1.msra.mxu0 0.0
      %7164 = vmatprep.subr.mxu0 0.0
      %7165 = vmatpush1.msra.mxu0 0.0
      %7166 = vmatprep.subr.mxu0 0.0
      %7167 = vmatpush1.msra.mxu0 0.0
      %7168 = vmatprep.subr.mxu0 0.0
      %7169 = vmatpush1.msra.mxu0 0.0
      %7170 = vmatprep.subr.mxu0 0.0
      %7171 = vmatpush1.msra.mxu0 0.0
      %7172 = vmatprep.subr.mxu0 0.0
      %7173 = vmatpush1.msra.mxu0 0.0
      %7174 = vmatprep.subr.mxu0 0.0
      %7175 = vmatpush1.msra.mxu0 0.0
      %7176 = vmatprep.subr.mxu0 0.0
      %7177 = vmatpush1.msra.mxu0 0.0
      %7178 = vmatprep.subr.mxu0 0.0
      %7179 = vmatpush1.msra.mxu0 0.0
      %7180 = vmatprep.subr.mxu0 0.0
      %7181 = vmatpush1.msra.mxu0 0.0
      %7182 = vmatprep.subr.mxu0 0.0
      %7183 = vmatpush1.msra.mxu0 0.0
      %7184 = vmatprep.subr.mxu0 0.0
      %7185 = vmatpush1.msra.mxu0 0.0
      %7186 = vmatprep.subr.mxu0 0.0
      %7187 = vmatpush1.msra.mxu0 0.0
      %7188 = vmatprep.subr.mxu0 0.0
      %7189 = vmatpush1.msra.mxu0 0.0
      %7190 = vmatprep.subr.mxu0 0.0
      %7191 = vmatpush1.msra.mxu0 %v7155
      %7192 = vmatprep.subr.mxu0 0.0
      %7193 = vmatpush2.msra.mxu0 0.0
      %7194 = vmatprep.subr.mxu0 0.0
      %7195 = vmatpush2.msra.mxu0 0.0
      %7196 = vmatprep.subr.mxu0 0.0
      %7197 = vmatpush2.msra.mxu0 0.0
      %7198 = vmatprep.subr.mxu0 0.0
      %7199 = vmatpush2.msra.mxu0 0.0
      %7200 = vmatprep.subr.mxu0 0.0
      %7201 = vmatpush2.msra.mxu0 0.0
      %7202 = vmatprep.subr.mxu0 0.0
      %7203 = vmatpush2.msra.mxu0 0.0
      %7204 = vmatprep.subr.mxu0 0.0
      %7205 = vmatpush2.msra.mxu0 0.0
      %7206 = vmatprep.subr.mxu0 0.0
      %7207 = vmatpush2.msra.mxu0 0.0
      %7208 = vmatprep.subr.mxu0 0.0
      %7209 = vmatpush2.msra.mxu0 0.0
      %7210 = vmatprep.subr.mxu0 0.0
      %7211 = vmatpush2.msra.mxu0 0.0
      %7212 = vmatprep.subr.mxu0 0.0
      %7213 = vmatpush2.msra.mxu0 0.0
      %7214 = vmatprep.subr.mxu0 0.0
      %7215 = vmatpush2.msra.mxu0 0.0
      %7216 = vmatprep.subr.mxu0 0.0
      %7217 = vmatpush2.msra.mxu0 0.0
      %7218 = vmatprep.subr.mxu0 0.0
      %7219 = vmatpush2.msra.mxu0 0.0
      %7220 = vmatprep.subr.mxu0 0.0
      %7221 = vmatpush2.msra.mxu0 0.0
      %7222 = vmatprep.subr.mxu0 0.0
      %7223 = vmatpush2.msra.mxu0 0.0
      %7224 = vmatprep.mubr.f32.mxu0 0.0
      %7225 = vmatmul.mubr.f32.gmra.mxu0 %v7158
      %v7226 = vpop.f32.mrf.mxu0
      %v7227 = vadd.f32 0.0, %v7226
      %v7228 = vpop.f32.mrf.mxu0
      %7229 = vdwg.mxu0
      %7230 = vrot.lane.b32.xlu0 %v5530, 56
      %v7231 = vpop.permute.xlu0 %7230
      %v7234 = vsel %vm744, %v7074, 0
      %7236 = vmatprep.subr.mxu0 0.0
      %7237 = vmatpush1.msra.mxu0 0.0
      %7238 = vmatprep.subr.mxu0 0.0
      %7239 = vmatpush1.msra.mxu0 0.0
      %7240 = vmatprep.subr.mxu0 0.0
      %7241 = vmatpush1.msra.mxu0 0.0
      %7242 = vmatprep.subr.mxu0 0.0
      %7243 = vmatpush1.msra.mxu0 0.0
      %7244 = vmatprep.subr.mxu0 0.0
      %7245 = vmatpush1.msra.mxu0 0.0
      %7246 = vmatprep.subr.mxu0 0.0
      %7247 = vmatpush1.msra.mxu0 0.0
      %7248 = vmatprep.subr.mxu0 0.0
      %7249 = vmatpush1.msra.mxu0 0.0
      %7250 = vmatprep.subr.mxu0 0.0
      %7251 = vmatpush1.msra.mxu0 0.0
      %7252 = vmatprep.subr.mxu0 0.0
      %7253 = vmatpush1.msra.mxu0 0.0
      %7254 = vmatprep.subr.mxu0 0.0
      %7255 = vmatpush1.msra.mxu0 0.0
      %7256 = vmatprep.subr.mxu0 0.0
      %7257 = vmatpush1.msra.mxu0 0.0
      %7258 = vmatprep.subr.mxu0 0.0
      %7259 = vmatpush1.msra.mxu0 0.0
      %7260 = vmatprep.subr.mxu0 0.0
      %7261 = vmatpush1.msra.mxu0 0.0
      %7262 = vmatprep.subr.mxu0 0.0
      %7263 = vmatpush1.msra.mxu0 0.0
      %7264 = vmatprep.subr.mxu0 0.0
      %7265 = vmatpush1.msra.mxu0 0.0
      %7266 = vmatprep.subr.mxu0 0.0
      %7267 = vmatpush1.msra.mxu0 %v7231
      %7268 = vmatprep.subr.mxu0 0.0
      %7269 = vmatpush2.msra.mxu0 0.0
      %7270 = vmatprep.subr.mxu0 0.0
      %7271 = vmatpush2.msra.mxu0 0.0
      %7272 = vmatprep.subr.mxu0 0.0
      %7273 = vmatpush2.msra.mxu0 0.0
      %7274 = vmatprep.subr.mxu0 0.0
      %7275 = vmatpush2.msra.mxu0 0.0
      %7276 = vmatprep.subr.mxu0 0.0
      %7277 = vmatpush2.msra.mxu0 0.0
      %7278 = vmatprep.subr.mxu0 0.0
      %7279 = vmatpush2.msra.mxu0 0.0
      %7280 = vmatprep.subr.mxu0 0.0
      %7281 = vmatpush2.msra.mxu0 0.0
      %7282 = vmatprep.subr.mxu0 0.0
      %7283 = vmatpush2.msra.mxu0 0.0
      %7284 = vmatprep.subr.mxu0 0.0
      %7285 = vmatpush2.msra.mxu0 0.0
      %7286 = vmatprep.subr.mxu0 0.0
      %7287 = vmatpush2.msra.mxu0 0.0
      %7288 = vmatprep.subr.mxu0 0.0
      %7289 = vmatpush2.msra.mxu0 0.0
      %7290 = vmatprep.subr.mxu0 0.0
      %7291 = vmatpush2.msra.mxu0 0.0
      %7292 = vmatprep.subr.mxu0 0.0
      %7293 = vmatpush2.msra.mxu0 0.0
      %7294 = vmatprep.subr.mxu0 0.0
      %7295 = vmatpush2.msra.mxu0 0.0
      %7296 = vmatprep.subr.mxu0 0.0
      %7297 = vmatpush2.msra.mxu0 0.0
      %7298 = vmatprep.subr.mxu0 0.0
      %7299 = vmatpush2.msra.mxu0 0.0
      %7300 = vmatprep.mubr.f32.mxu0 0.0
      %7301 = vmatmul.mubr.f32.gmra.mxu0 %v7234
      %v7302 = vpop.f32.mrf.mxu0
      %v7303 = vadd.f32 0.0, %v7302
      %v7304 = vpop.f32.mrf.mxu0
      %7305 = vdwg.mxu0
      %7306 = vrot.lane.b32.xlu0 %v5535, 56
      %v7307 = vpop.permute.xlu0 %7306
      %v7310 = vsel %vm744, %v7075, 0
      %7312 = vmatprep.subr.mxu0 0.0
      %7313 = vmatpush1.msra.mxu0 0.0
      %7314 = vmatprep.subr.mxu0 0.0
      %7315 = vmatpush1.msra.mxu0 0.0
      %7316 = vmatprep.subr.mxu0 0.0
      %7317 = vmatpush1.msra.mxu0 0.0
      %7318 = vmatprep.subr.mxu0 0.0
      %7319 = vmatpush1.msra.mxu0 0.0
      %7320 = vmatprep.subr.mxu0 0.0
      %7321 = vmatpush1.msra.mxu0 0.0
      %7322 = vmatprep.subr.mxu0 0.0
      %7323 = vmatpush1.msra.mxu0 0.0
      %7324 = vmatprep.subr.mxu0 0.0
      %7325 = vmatpush1.msra.mxu0 0.0
      %7326 = vmatprep.subr.mxu0 0.0
      %7327 = vmatpush1.msra.mxu0 0.0
      %7328 = vmatprep.subr.mxu0 0.0
      %7329 = vmatpush1.msra.mxu0 0.0
      %7330 = vmatprep.subr.mxu0 0.0
      %7331 = vmatpush1.msra.mxu0 0.0
      %7332 = vmatprep.subr.mxu0 0.0
      %7333 = vmatpush1.msra.mxu0 0.0
      %7334 = vmatprep.subr.mxu0 0.0
      %7335 = vmatpush1.msra.mxu0 0.0
      %7336 = vmatprep.subr.mxu0 0.0
      %7337 = vmatpush1.msra.mxu0 0.0
      %7338 = vmatprep.subr.mxu0 0.0
      %7339 = vmatpush1.msra.mxu0 0.0
      %7340 = vmatprep.subr.mxu0 0.0
      %7341 = vmatpush1.msra.mxu0 0.0
      %7342 = vmatprep.subr.mxu0 0.0
      %7343 = vmatpush1.msra.mxu0 %v7307
      %7344 = vmatprep.subr.mxu0 0.0
      %7345 = vmatpush2.msra.mxu0 0.0
      %7346 = vmatprep.subr.mxu0 0.0
      %7347 = vmatpush2.msra.mxu0 0.0
      %7348 = vmatprep.subr.mxu0 0.0
      %7349 = vmatpush2.msra.mxu0 0.0
      %7350 = vmatprep.subr.mxu0 0.0
      %7351 = vmatpush2.msra.mxu0 0.0
      %7352 = vmatprep.subr.mxu0 0.0
      %7353 = vmatpush2.msra.mxu0 0.0
      %7354 = vmatprep.subr.mxu0 0.0
      %7355 = vmatpush2.msra.mxu0 0.0
      %7356 = vmatprep.subr.mxu0 0.0
      %7357 = vmatpush2.msra.mxu0 0.0
      %7358 = vmatprep.subr.mxu0 0.0
      %7359 = vmatpush2.msra.mxu0 0.0
      %7360 = vmatprep.subr.mxu0 0.0
      %7361 = vmatpush2.msra.mxu0 0.0
      %7362 = vmatprep.subr.mxu0 0.0
      %7363 = vmatpush2.msra.mxu0 0.0
      %7364 = vmatprep.subr.mxu0 0.0
      %7365 = vmatpush2.msra.mxu0 0.0
      %7366 = vmatprep.subr.mxu0 0.0
      %7367 = vmatpush2.msra.mxu0 0.0
      %7368 = vmatprep.subr.mxu0 0.0
      %7369 = vmatpush2.msra.mxu0 0.0
      %7370 = vmatprep.subr.mxu0 0.0
      %7371 = vmatpush2.msra.mxu0 0.0
      %7372 = vmatprep.subr.mxu0 0.0
      %7373 = vmatpush2.msra.mxu0 0.0
      %7374 = vmatprep.subr.mxu0 0.0
      %7375 = vmatpush2.msra.mxu0 0.0
      %7376 = vmatprep.mubr.f32.mxu0 0.0
      %7377 = vmatmul.mubr.f32.gmra.mxu0 %v7310
      %v7378 = vpop.f32.mrf.mxu0
      %v7379 = vadd.f32 0.0, %v7378
      %v7380 = vpop.f32.mrf.mxu0
      %7381 = vdwg.mxu0
      %7382 = vrot.lane.b32.xlu0 %v5540, 56
      %v7383 = vpop.permute.xlu0 %7382
      %v7386 = vsel %vm744, %v7076, 0
      %7388 = vmatprep.subr.mxu0 0.0
      %7389 = vmatpush1.msra.mxu0 0.0
      %7390 = vmatprep.subr.mxu0 0.0
      %7391 = vmatpush1.msra.mxu0 0.0
      %7392 = vmatprep.subr.mxu0 0.0
      %7393 = vmatpush1.msra.mxu0 0.0
      %7394 = vmatprep.subr.mxu0 0.0
      %7395 = vmatpush1.msra.mxu0 0.0
      %7396 = vmatprep.subr.mxu0 0.0
      %7397 = vmatpush1.msra.mxu0 0.0
      %7398 = vmatprep.subr.mxu0 0.0
      %7399 = vmatpush1.msra.mxu0 0.0
      %7400 = vmatprep.subr.mxu0 0.0
      %7401 = vmatpush1.msra.mxu0 0.0
      %7402 = vmatprep.subr.mxu0 0.0
      %7403 = vmatpush1.msra.mxu0 0.0
      %7404 = vmatprep.subr.mxu0 0.0
      %7405 = vmatpush1.msra.mxu0 0.0
      %7406 = vmatprep.subr.mxu0 0.0
      %7407 = vmatpush1.msra.mxu0 0.0
      %7408 = vmatprep.subr.mxu0 0.0
      %7409 = vmatpush1.msra.mxu0 0.0
      %7410 = vmatprep.subr.mxu0 0.0
      %7411 = vmatpush1.msra.mxu0 0.0
      %7412 = vmatprep.subr.mxu0 0.0
      %7413 = vmatpush1.msra.mxu0 0.0
      %7414 = vmatprep.subr.mxu0 0.0
      %7415 = vmatpush1.msra.mxu0 0.0
      %7416 = vmatprep.subr.mxu0 0.0
      %7417 = vmatpush1.msra.mxu0 0.0
      %7418 = vmatprep.subr.mxu0 0.0
      %7419 = vmatpush1.msra.mxu0 %v7383
      %7420 = vmatprep.subr.mxu0 0.0
      %7421 = vmatpush2.msra.mxu0 0.0
      %7422 = vmatprep.subr.mxu0 0.0
      %7423 = vmatpush2.msra.mxu0 0.0
      %7424 = vmatprep.subr.mxu0 0.0
      %7425 = vmatpush2.msra.mxu0 0.0
      %7426 = vmatprep.subr.mxu0 0.0
      %7427 = vmatpush2.msra.mxu0 0.0
      %7428 = vmatprep.subr.mxu0 0.0
      %7429 = vmatpush2.msra.mxu0 0.0
      %7430 = vmatprep.subr.mxu0 0.0
      %7431 = vmatpush2.msra.mxu0 0.0
      %7432 = vmatprep.subr.mxu0 0.0
      %7433 = vmatpush2.msra.mxu0 0.0
      %7434 = vmatprep.subr.mxu0 0.0
      %7435 = vmatpush2.msra.mxu0 0.0
      %7436 = vmatprep.subr.mxu0 0.0
      %7437 = vmatpush2.msra.mxu0 0.0
      %7438 = vmatprep.subr.mxu0 0.0
      %7439 = vmatpush2.msra.mxu0 0.0
      %7440 = vmatprep.subr.mxu0 0.0
      %7441 = vmatpush2.msra.mxu0 0.0
      %7442 = vmatprep.subr.mxu0 0.0
      %7443 = vmatpush2.msra.mxu0 0.0
      %7444 = vmatprep.subr.mxu0 0.0
      %7445 = vmatpush2.msra.mxu0 0.0
      %7446 = vmatprep.subr.mxu0 0.0
      %7447 = vmatpush2.msra.mxu0 0.0
      %7448 = vmatprep.subr.mxu0 0.0
      %7449 = vmatpush2.msra.mxu0 0.0
      %7450 = vmatprep.subr.mxu0 0.0
      %7451 = vmatpush2.msra.mxu0 0.0
      %7452 = vmatprep.mubr.f32.mxu0 0.0
      %7453 = vmatmul.mubr.f32.gmra.mxu0 %v7386
      %v7454 = vpop.f32.mrf.mxu0
      %v7455 = vadd.f32 0.0, %v7454
      %v7456 = vpop.f32.mrf.mxu0
      %7457 = vdwg.mxu0
      %7458 = vrot.lane.b32.xlu0 %v5545, 56
      %v7459 = vpop.permute.xlu0 %7458
      %v7462 = vsel %vm744, %v7077, 0
      %7464 = vmatprep.subr.mxu0 0.0
      %7465 = vmatpush1.msra.mxu0 0.0
      %7466 = vmatprep.subr.mxu0 0.0
      %7467 = vmatpush1.msra.mxu0 0.0
      %7468 = vmatprep.subr.mxu0 0.0
      %7469 = vmatpush1.msra.mxu0 0.0
      %7470 = vmatprep.subr.mxu0 0.0
      %7471 = vmatpush1.msra.mxu0 0.0
      %7472 = vmatprep.subr.mxu0 0.0
      %7473 = vmatpush1.msra.mxu0 0.0
      %7474 = vmatprep.subr.mxu0 0.0
      %7475 = vmatpush1.msra.mxu0 0.0
      %7476 = vmatprep.subr.mxu0 0.0
      %7477 = vmatpush1.msra.mxu0 0.0
      %7478 = vmatprep.subr.mxu0 0.0
      %7479 = vmatpush1.msra.mxu0 0.0
      %7480 = vmatprep.subr.mxu0 0.0
      %7481 = vmatpush1.msra.mxu0 0.0
      %7482 = vmatprep.subr.mxu0 0.0
      %7483 = vmatpush1.msra.mxu0 0.0
      %7484 = vmatprep.subr.mxu0 0.0
      %7485 = vmatpush1.msra.mxu0 0.0
      %7486 = vmatprep.subr.mxu0 0.0
      %7487 = vmatpush1.msra.mxu0 0.0
      %7488 = vmatprep.subr.mxu0 0.0
      %7489 = vmatpush1.msra.mxu0 0.0
      %7490 = vmatprep.subr.mxu0 0.0
      %7491 = vmatpush1.msra.mxu0 0.0
      %7492 = vmatprep.subr.mxu0 0.0
      %7493 = vmatpush1.msra.mxu0 0.0
      %7494 = vmatprep.subr.mxu0 0.0
      %7495 = vmatpush1.msra.mxu0 %v7459
      %7496 = vmatprep.subr.mxu0 0.0
      %7497 = vmatpush2.msra.mxu0 0.0
      %7498 = vmatprep.subr.mxu0 0.0
      %7499 = vmatpush2.msra.mxu0 0.0
      %7500 = vmatprep.subr.mxu0 0.0
      %7501 = vmatpush2.msra.mxu0 0.0
      %7502 = vmatprep.subr.mxu0 0.0
      %7503 = vmatpush2.msra.mxu0 0.0
      %7504 = vmatprep.subr.mxu0 0.0
      %7505 = vmatpush2.msra.mxu0 0.0
      %7506 = vmatprep.subr.mxu0 0.0
      %7507 = vmatpush2.msra.mxu0 0.0
      %7508 = vmatprep.subr.mxu0 0.0
      %7509 = vmatpush2.msra.mxu0 0.0
      %7510 = vmatprep.subr.mxu0 0.0
      %7511 = vmatpush2.msra.mxu0 0.0
      %7512 = vmatprep.subr.mxu0 0.0
      %7513 = vmatpush2.msra.mxu0 0.0
      %7514 = vmatprep.subr.mxu0 0.0
      %7515 = vmatpush2.msra.mxu0 0.0
      %7516 = vmatprep.subr.mxu0 0.0
      %7517 = vmatpush2.msra.mxu0 0.0
      %7518 = vmatprep.subr.mxu0 0.0
      %7519 = vmatpush2.msra.mxu0 0.0
      %7520 = vmatprep.subr.mxu0 0.0
      %7521 = vmatpush2.msra.mxu0 0.0
      %7522 = vmatprep.subr.mxu0 0.0
      %7523 = vmatpush2.msra.mxu0 0.0
      %7524 = vmatprep.subr.mxu0 0.0
      %7525 = vmatpush2.msra.mxu0 0.0
      %7526 = vmatprep.subr.mxu0 0.0
      %7527 = vmatpush2.msra.mxu0 0.0
      %7528 = vmatprep.mubr.f32.mxu0 0.0
      %7529 = vmatmul.mubr.f32.gmra.mxu0 %v7462
      %v7530 = vpop.f32.mrf.mxu0
      %v7531 = vadd.f32 0.0, %v7530
      %v7532 = vpop.f32.mrf.mxu0
      %7533 = vdwg.mxu0
      %7534 = vrot.lane.b32.xlu0 %v5520, 112
      %v7535 = vpop.permute.xlu0 %7534
      %7536 = vrot.lane.b32.xlu0 %v5520, 80
      %v7537 = vpop.permute.xlu0 %7536
      %v7538 = vsel %vm744, %v7535, 0
      %v7540 = vsel %vm744, %v7537, 0
      %7542 = vmatprep.subr.mxu0 0.0
      %7543 = vmatpush1.xpose.msra.mxu0 0.0
      %7544 = vmatprep.subr.mxu0 0.0
      %7545 = vmatpush1.xpose.msra.mxu0 0.0
      %7546 = vmatprep.subr.mxu0 0.0
      %7547 = vmatpush1.xpose.msra.mxu0 0.0
      %7548 = vmatprep.subr.mxu0 0.0
      %7549 = vmatpush1.xpose.msra.mxu0 0.0
      %7550 = vmatprep.subr.mxu0 0.0
      %7551 = vmatpush1.xpose.msra.mxu0 0.0
      %7552 = vmatprep.subr.mxu0 0.0
      %7553 = vmatpush1.xpose.msra.mxu0 0.0
      %7554 = vmatprep.subr.mxu0 0.0
      %7555 = vmatpush1.xpose.msra.mxu0 0.0
      %7556 = vmatprep.subr.mxu0 0.0
      %7557 = vmatpush1.xpose.msra.mxu0 0.0
      %7558 = vmatprep.subr.mxu0 0.0
      %7559 = vmatpush1.xpose.msra.mxu0 0.0
      %7560 = vmatprep.subr.mxu0 0.0
      %7561 = vmatpush1.xpose.msra.mxu0 0.0
      %7562 = vmatprep.subr.mxu0 0.0
      %7563 = vmatpush1.xpose.msra.mxu0 0.0
      %7564 = vmatprep.subr.mxu0 0.0
      %7565 = vmatpush1.xpose.msra.mxu0 0.0
      %7566 = vmatprep.subr.mxu0 0.0
      %7567 = vmatpush1.xpose.msra.mxu0 0.0
      %7568 = vmatprep.subr.mxu0 0.0
      %7569 = vmatpush1.xpose.msra.mxu0 0.0
      %7570 = vmatprep.subr.mxu0 0.0
      %7571 = vmatpush1.xpose.msra.mxu0 0.0
      %7572 = vmatprep.subr.mxu0 0.0
      %7573 = vmatpush1.xpose.msra.mxu0 %v7540
      %7574 = vmatprep.subr.mxu0 0.0
      %7575 = vmatpush2.xpose.msra.mxu0 0.0
      %7576 = vmatprep.subr.mxu0 0.0
      %7577 = vmatpush2.xpose.msra.mxu0 0.0
      %7578 = vmatprep.subr.mxu0 0.0
      %7579 = vmatpush2.xpose.msra.mxu0 0.0
      %7580 = vmatprep.subr.mxu0 0.0
      %7581 = vmatpush2.xpose.msra.mxu0 0.0
      %7582 = vmatprep.subr.mxu0 0.0
      %7583 = vmatpush2.xpose.msra.mxu0 0.0
      %7584 = vmatprep.subr.mxu0 0.0
      %7585 = vmatpush2.xpose.msra.mxu0 0.0
      %7586 = vmatprep.subr.mxu0 0.0
      %7587 = vmatpush2.xpose.msra.mxu0 0.0
      %7588 = vmatprep.subr.mxu0 0.0
      %7589 = vmatpush2.xpose.msra.mxu0 0.0
      %7590 = vmatprep.subr.mxu0 0.0
      %7591 = vmatpush2.xpose.msra.mxu0 0.0
      %7592 = vmatprep.subr.mxu0 0.0
      %7593 = vmatpush2.xpose.msra.mxu0 0.0
      %7594 = vmatprep.subr.mxu0 0.0
      %7595 = vmatpush2.xpose.msra.mxu0 0.0
      %7596 = vmatprep.subr.mxu0 0.0
      %7597 = vmatpush2.xpose.msra.mxu0 0.0
      %7598 = vmatprep.subr.mxu0 0.0
      %7599 = vmatpush2.xpose.msra.mxu0 0.0
      %7600 = vmatprep.subr.mxu0 0.0
      %7601 = vmatpush2.xpose.msra.mxu0 0.0
      %7602 = vmatprep.subr.mxu0 0.0
      %7603 = vmatpush2.xpose.msra.mxu0 0.0
      %7604 = vmatprep.subr.mxu0 0.0
      %7605 = vmatpush2.xpose.msra.mxu0 0.0
      %7606 = vmatprep.mubr.f32.mxu0 0.0
      %7607 = vmatmul.mubr.f32.gmra.mxu0 %v7538
      %v7608 = vpop.f32.mrf.mxu0
      %v7609 = vadd.f32 0.0, %v7608
      %v7610 = vpop.f32.mrf.mxu0
      %7611 = vdwg.mxu0
      %7612 = vrot.lane.b32.xlu0 %v5525, 112
      %v7613 = vpop.permute.xlu0 %7612
      %7614 = vrot.lane.b32.xlu0 %v5525, 80
      %v7615 = vpop.permute.xlu0 %7614
      %v7616 = vsel %vm744, %v7613, 0
      %v7618 = vsel %vm744, %v7615, 0
      %7620 = vmatprep.subr.mxu0 0.0
      %7621 = vmatpush1.xpose.msra.mxu0 0.0
      %7622 = vmatprep.subr.mxu0 0.0
      %7623 = vmatpush1.xpose.msra.mxu0 0.0
      %7624 = vmatprep.subr.mxu0 0.0
      %7625 = vmatpush1.xpose.msra.mxu0 0.0
      %7626 = vmatprep.subr.mxu0 0.0
      %7627 = vmatpush1.xpose.msra.mxu0 0.0
      %7628 = vmatprep.subr.mxu0 0.0
      %7629 = vmatpush1.xpose.msra.mxu0 0.0
      %7630 = vmatprep.subr.mxu0 0.0
      %7631 = vmatpush1.xpose.msra.mxu0 0.0
      %7632 = vmatprep.subr.mxu0 0.0
      %7633 = vmatpush1.xpose.msra.mxu0 0.0
      %7634 = vmatprep.subr.mxu0 0.0
      %7635 = vmatpush1.xpose.msra.mxu0 0.0
      %7636 = vmatprep.subr.mxu0 0.0
      %7637 = vmatpush1.xpose.msra.mxu0 0.0
      %7638 = vmatprep.subr.mxu0 0.0
      %7639 = vmatpush1.xpose.msra.mxu0 0.0
      %7640 = vmatprep.subr.mxu0 0.0
      %7641 = vmatpush1.xpose.msra.mxu0 0.0
      %7642 = vmatprep.subr.mxu0 0.0
      %7643 = vmatpush1.xpose.msra.mxu0 0.0
      %7644 = vmatprep.subr.mxu0 0.0
      %7645 = vmatpush1.xpose.msra.mxu0 0.0
      %7646 = vmatprep.subr.mxu0 0.0
      %7647 = vmatpush1.xpose.msra.mxu0 0.0
      %7648 = vmatprep.subr.mxu0 0.0
      %7649 = vmatpush1.xpose.msra.mxu0 0.0
      %7650 = vmatprep.subr.mxu0 0.0
      %7651 = vmatpush1.xpose.msra.mxu0 %v7618
      %7652 = vmatprep.subr.mxu0 0.0
      %7653 = vmatpush2.xpose.msra.mxu0 0.0
      %7654 = vmatprep.subr.mxu0 0.0
      %7655 = vmatpush2.xpose.msra.mxu0 0.0
      %7656 = vmatprep.subr.mxu0 0.0
      %7657 = vmatpush2.xpose.msra.mxu0 0.0
      %7658 = vmatprep.subr.mxu0 0.0
      %7659 = vmatpush2.xpose.msra.mxu0 0.0
      %7660 = vmatprep.subr.mxu0 0.0
      %7661 = vmatpush2.xpose.msra.mxu0 0.0
      %7662 = vmatprep.subr.mxu0 0.0
      %7663 = vmatpush2.xpose.msra.mxu0 0.0
      %7664 = vmatprep.subr.mxu0 0.0
      %7665 = vmatpush2.xpose.msra.mxu0 0.0
      %7666 = vmatprep.subr.mxu0 0.0
      %7667 = vmatpush2.xpose.msra.mxu0 0.0
      %7668 = vmatprep.subr.mxu0 0.0
      %7669 = vmatpush2.xpose.msra.mxu0 0.0
      %7670 = vmatprep.subr.mxu0 0.0
      %7671 = vmatpush2.xpose.msra.mxu0 0.0
      %7672 = vmatprep.subr.mxu0 0.0
      %7673 = vmatpush2.xpose.msra.mxu0 0.0
      %7674 = vmatprep.subr.mxu0 0.0
      %7675 = vmatpush2.xpose.msra.mxu0 0.0
      %7676 = vmatprep.subr.mxu0 0.0
      %7677 = vmatpush2.xpose.msra.mxu0 0.0
      %7678 = vmatprep.subr.mxu0 0.0
      %7679 = vmatpush2.xpose.msra.mxu0 0.0
      %7680 = vmatprep.subr.mxu0 0.0
      %7681 = vmatpush2.xpose.msra.mxu0 0.0
      %7682 = vmatprep.subr.mxu0 0.0
      %7683 = vmatpush2.xpose.msra.mxu0 0.0
      %7684 = vmatprep.mubr.f32.mxu0 0.0
      %7685 = vmatmul.mubr.f32.gmra.mxu0 %v7616
      %v7686 = vpop.f32.mrf.mxu0
      %v7687 = vadd.f32 0.0, %v7686
      %v7688 = vpop.f32.mrf.mxu0
      %7689 = vdwg.mxu0
      %7690 = vrot.lane.b32.xlu0 %v5530, 112
      %v7691 = vpop.permute.xlu0 %7690
      %7692 = vrot.lane.b32.xlu0 %v5530, 80
      %v7693 = vpop.permute.xlu0 %7692
      %v7694 = vsel %vm744, %v7691, 0
      %v7696 = vsel %vm744, %v7693, 0
      %7698 = vmatprep.subr.mxu0 0.0
      %7699 = vmatpush1.xpose.msra.mxu0 0.0
      %7700 = vmatprep.subr.mxu0 0.0
      %7701 = vmatpush1.xpose.msra.mxu0 0.0
      %7702 = vmatprep.subr.mxu0 0.0
      %7703 = vmatpush1.xpose.msra.mxu0 0.0
      %7704 = vmatprep.subr.mxu0 0.0
      %7705 = vmatpush1.xpose.msra.mxu0 0.0
      %7706 = vmatprep.subr.mxu0 0.0
      %7707 = vmatpush1.xpose.msra.mxu0 0.0
      %7708 = vmatprep.subr.mxu0 0.0
      %7709 = vmatpush1.xpose.msra.mxu0 0.0
      %7710 = vmatprep.subr.mxu0 0.0
      %7711 = vmatpush1.xpose.msra.mxu0 0.0
      %7712 = vmatprep.subr.mxu0 0.0
      %7713 = vmatpush1.xpose.msra.mxu0 0.0
      %7714 = vmatprep.subr.mxu0 0.0
      %7715 = vmatpush1.xpose.msra.mxu0 0.0
      %7716 = vmatprep.subr.mxu0 0.0
      %7717 = vmatpush1.xpose.msra.mxu0 0.0
      %7718 = vmatprep.subr.mxu0 0.0
      %7719 = vmatpush1.xpose.msra.mxu0 0.0
      %7720 = vmatprep.subr.mxu0 0.0
      %7721 = vmatpush1.xpose.msra.mxu0 0.0
      %7722 = vmatprep.subr.mxu0 0.0
      %7723 = vmatpush1.xpose.msra.mxu0 0.0
      %7724 = vmatprep.subr.mxu0 0.0
      %7725 = vmatpush1.xpose.msra.mxu0 0.0
      %7726 = vmatprep.subr.mxu0 0.0
      %7727 = vmatpush1.xpose.msra.mxu0 0.0
      %7728 = vmatprep.subr.mxu0 0.0
      %7729 = vmatpush1.xpose.msra.mxu0 %v7696
      %7730 = vmatprep.subr.mxu0 0.0
      %7731 = vmatpush2.xpose.msra.mxu0 0.0
      %7732 = vmatprep.subr.mxu0 0.0
      %7733 = vmatpush2.xpose.msra.mxu0 0.0
      %7734 = vmatprep.subr.mxu0 0.0
      %7735 = vmatpush2.xpose.msra.mxu0 0.0
      %7736 = vmatprep.subr.mxu0 0.0
      %7737 = vmatpush2.xpose.msra.mxu0 0.0
      %7738 = vmatprep.subr.mxu0 0.0
      %7739 = vmatpush2.xpose.msra.mxu0 0.0
      %7740 = vmatprep.subr.mxu0 0.0
      %7741 = vmatpush2.xpose.msra.mxu0 0.0
      %7742 = vmatprep.subr.mxu0 0.0
      %7743 = vmatpush2.xpose.msra.mxu0 0.0
      %7744 = vmatprep.subr.mxu0 0.0
      %7745 = vmatpush2.xpose.msra.mxu0 0.0
      %7746 = vmatprep.subr.mxu0 0.0
      %7747 = vmatpush2.xpose.msra.mxu0 0.0
      %7748 = vmatprep.subr.mxu0 0.0
      %7749 = vmatpush2.xpose.msra.mxu0 0.0
      %7750 = vmatprep.subr.mxu0 0.0
      %7751 = vmatpush2.xpose.msra.mxu0 0.0
      %7752 = vmatprep.subr.mxu0 0.0
      %7753 = vmatpush2.xpose.msra.mxu0 0.0
      %7754 = vmatprep.subr.mxu0 0.0
      %7755 = vmatpush2.xpose.msra.mxu0 0.0
      %7756 = vmatprep.subr.mxu0 0.0
      %7757 = vmatpush2.xpose.msra.mxu0 0.0
      %7758 = vmatprep.subr.mxu0 0.0
      %7759 = vmatpush2.xpose.msra.mxu0 0.0
      %7760 = vmatprep.subr.mxu0 0.0
      %7761 = vmatpush2.xpose.msra.mxu0 0.0
      %7762 = vmatprep.mubr.f32.mxu0 0.0
      %7763 = vmatmul.mubr.f32.gmra.mxu0 %v7694
      %v7764 = vpop.f32.mrf.mxu0
      %v7765 = vadd.f32 0.0, %v7764
      %v7766 = vpop.f32.mrf.mxu0
      %7767 = vdwg.mxu0
      %7768 = vrot.lane.b32.xlu0 %v5535, 112
      %v7769 = vpop.permute.xlu0 %7768
      %7770 = vrot.lane.b32.xlu0 %v5535, 80
      %v7771 = vpop.permute.xlu0 %7770
      %v7772 = vsel %vm744, %v7769, 0
      %v7774 = vsel %vm744, %v7771, 0
      %7776 = vmatprep.subr.mxu0 0.0
      %7777 = vmatpush1.xpose.msra.mxu0 0.0
      %7778 = vmatprep.subr.mxu0 0.0
      %7779 = vmatpush1.xpose.msra.mxu0 0.0
      %7780 = vmatprep.subr.mxu0 0.0
      %7781 = vmatpush1.xpose.msra.mxu0 0.0
      %7782 = vmatprep.subr.mxu0 0.0
      %7783 = vmatpush1.xpose.msra.mxu0 0.0
      %7784 = vmatprep.subr.mxu0 0.0
      %7785 = vmatpush1.xpose.msra.mxu0 0.0
      %7786 = vmatprep.subr.mxu0 0.0
      %7787 = vmatpush1.xpose.msra.mxu0 0.0
      %7788 = vmatprep.subr.mxu0 0.0
      %7789 = vmatpush1.xpose.msra.mxu0 0.0
      %7790 = vmatprep.subr.mxu0 0.0
      %7791 = vmatpush1.xpose.msra.mxu0 0.0
      %7792 = vmatprep.subr.mxu0 0.0
      %7793 = vmatpush1.xpose.msra.mxu0 0.0
      %7794 = vmatprep.subr.mxu0 0.0
      %7795 = vmatpush1.xpose.msra.mxu0 0.0
      %7796 = vmatprep.subr.mxu0 0.0
      %7797 = vmatpush1.xpose.msra.mxu0 0.0
      %7798 = vmatprep.subr.mxu0 0.0
      %7799 = vmatpush1.xpose.msra.mxu0 0.0
      %7800 = vmatprep.subr.mxu0 0.0
      %7801 = vmatpush1.xpose.msra.mxu0 0.0
      %7802 = vmatprep.subr.mxu0 0.0
      %7803 = vmatpush1.xpose.msra.mxu0 0.0
      %7804 = vmatprep.subr.mxu0 0.0
      %7805 = vmatpush1.xpose.msra.mxu0 0.0
      %7806 = vmatprep.subr.mxu0 0.0
      %7807 = vmatpush1.xpose.msra.mxu0 %v7774
      %7808 = vmatprep.subr.mxu0 0.0
      %7809 = vmatpush2.xpose.msra.mxu0 0.0
      %7810 = vmatprep.subr.mxu0 0.0
      %7811 = vmatpush2.xpose.msra.mxu0 0.0
      %7812 = vmatprep.subr.mxu0 0.0
      %7813 = vmatpush2.xpose.msra.mxu0 0.0
      %7814 = vmatprep.subr.mxu0 0.0
      %7815 = vmatpush2.xpose.msra.mxu0 0.0
      %7816 = vmatprep.subr.mxu0 0.0
      %7817 = vmatpush2.xpose.msra.mxu0 0.0
      %7818 = vmatprep.subr.mxu0 0.0
      %7819 = vmatpush2.xpose.msra.mxu0 0.0
      %7820 = vmatprep.subr.mxu0 0.0
      %7821 = vmatpush2.xpose.msra.mxu0 0.0
      %7822 = vmatprep.subr.mxu0 0.0
      %7823 = vmatpush2.xpose.msra.mxu0 0.0
      %7824 = vmatprep.subr.mxu0 0.0
      %7825 = vmatpush2.xpose.msra.mxu0 0.0
      %7826 = vmatprep.subr.mxu0 0.0
      %7827 = vmatpush2.xpose.msra.mxu0 0.0
      %7828 = vmatprep.subr.mxu0 0.0
      %7829 = vmatpush2.xpose.msra.mxu0 0.0
      %7830 = vmatprep.subr.mxu0 0.0
      %7831 = vmatpush2.xpose.msra.mxu0 0.0
      %7832 = vmatprep.subr.mxu0 0.0
      %7833 = vmatpush2.xpose.msra.mxu0 0.0
      %7834 = vmatprep.subr.mxu0 0.0
      %7835 = vmatpush2.xpose.msra.mxu0 0.0
      %7836 = vmatprep.subr.mxu0 0.0
      %7837 = vmatpush2.xpose.msra.mxu0 0.0
      %7838 = vmatprep.subr.mxu0 0.0
      %7839 = vmatpush2.xpose.msra.mxu0 0.0
      %7840 = vmatprep.mubr.f32.mxu0 0.0
      %7841 = vmatmul.mubr.f32.gmra.mxu0 %v7772
      %v7842 = vpop.f32.mrf.mxu0
      %v7843 = vadd.f32 0.0, %v7842
      %v7844 = vpop.f32.mrf.mxu0
      %7845 = vdwg.mxu0
      %7846 = vrot.lane.b32.xlu0 %v5540, 112
      %v7847 = vpop.permute.xlu0 %7846
      %7848 = vrot.lane.b32.xlu0 %v5540, 80
      %v7849 = vpop.permute.xlu0 %7848
      %v7850 = vsel %vm744, %v7847, 0
      %v7852 = vsel %vm744, %v7849, 0
      %7854 = vmatprep.subr.mxu0 0.0
      %7855 = vmatpush1.xpose.msra.mxu0 0.0
      %7856 = vmatprep.subr.mxu0 0.0
      %7857 = vmatpush1.xpose.msra.mxu0 0.0
      %7858 = vmatprep.subr.mxu0 0.0
      %7859 = vmatpush1.xpose.msra.mxu0 0.0
      %7860 = vmatprep.subr.mxu0 0.0
      %7861 = vmatpush1.xpose.msra.mxu0 0.0
      %7862 = vmatprep.subr.mxu0 0.0
      %7863 = vmatpush1.xpose.msra.mxu0 0.0
      %7864 = vmatprep.subr.mxu0 0.0
      %7865 = vmatpush1.xpose.msra.mxu0 0.0
      %7866 = vmatprep.subr.mxu0 0.0
      %7867 = vmatpush1.xpose.msra.mxu0 0.0
      %7868 = vmatprep.subr.mxu0 0.0
      %7869 = vmatpush1.xpose.msra.mxu0 0.0
      %7870 = vmatprep.subr.mxu0 0.0
      %7871 = vmatpush1.xpose.msra.mxu0 0.0
      %7872 = vmatprep.subr.mxu0 0.0
      %7873 = vmatpush1.xpose.msra.mxu0 0.0
      %7874 = vmatprep.subr.mxu0 0.0
      %7875 = vmatpush1.xpose.msra.mxu0 0.0
      %7876 = vmatprep.subr.mxu0 0.0
      %7877 = vmatpush1.xpose.msra.mxu0 0.0
      %7878 = vmatprep.subr.mxu0 0.0
      %7879 = vmatpush1.xpose.msra.mxu0 0.0
      %7880 = vmatprep.subr.mxu0 0.0
      %7881 = vmatpush1.xpose.msra.mxu0 0.0
      %7882 = vmatprep.subr.mxu0 0.0
      %7883 = vmatpush1.xpose.msra.mxu0 0.0
      %7884 = vmatprep.subr.mxu0 0.0
      %7885 = vmatpush1.xpose.msra.mxu0 %v7852
      %7886 = vmatprep.subr.mxu0 0.0
      %7887 = vmatpush2.xpose.msra.mxu0 0.0
      %7888 = vmatprep.subr.mxu0 0.0
      %7889 = vmatpush2.xpose.msra.mxu0 0.0
      %7890 = vmatprep.subr.mxu0 0.0
      %7891 = vmatpush2.xpose.msra.mxu0 0.0
      %7892 = vmatprep.subr.mxu0 0.0
      %7893 = vmatpush2.xpose.msra.mxu0 0.0
      %7894 = vmatprep.subr.mxu0 0.0
      %7895 = vmatpush2.xpose.msra.mxu0 0.0
      %7896 = vmatprep.subr.mxu0 0.0
      %7897 = vmatpush2.xpose.msra.mxu0 0.0
      %7898 = vmatprep.subr.mxu0 0.0
      %7899 = vmatpush2.xpose.msra.mxu0 0.0
      %7900 = vmatprep.subr.mxu0 0.0
      %7901 = vmatpush2.xpose.msra.mxu0 0.0
      %7902 = vmatprep.subr.mxu0 0.0
      %7903 = vmatpush2.xpose.msra.mxu0 0.0
      %7904 = vmatprep.subr.mxu0 0.0
      %7905 = vmatpush2.xpose.msra.mxu0 0.0
      %7906 = vmatprep.subr.mxu0 0.0
      %7907 = vmatpush2.xpose.msra.mxu0 0.0
      %7908 = vmatprep.subr.mxu0 0.0
      %7909 = vmatpush2.xpose.msra.mxu0 0.0
      %7910 = vmatprep.subr.mxu0 0.0
      %7911 = vmatpush2.xpose.msra.mxu0 0.0
      %7912 = vmatprep.subr.mxu0 0.0
      %7913 = vmatpush2.xpose.msra.mxu0 0.0
      %7914 = vmatprep.subr.mxu0 0.0
      %7915 = vmatpush2.xpose.msra.mxu0 0.0
      %7916 = vmatprep.subr.mxu0 0.0
      %7917 = vmatpush2.xpose.msra.mxu0 0.0
      %7918 = vmatprep.mubr.f32.mxu0 0.0
      %7919 = vmatmul.mubr.f32.gmra.mxu0 %v7850
      %v7920 = vpop.f32.mrf.mxu0
      %v7921 = vadd.f32 0.0, %v7920
      %v7922 = vpop.f32.mrf.mxu0
      %7923 = vdwg.mxu0
      %7924 = vrot.lane.b32.xlu0 %v5545, 112
      %v7925 = vpop.permute.xlu0 %7924
      %7926 = vrot.lane.b32.xlu0 %v5545, 80
      %v7927 = vpop.permute.xlu0 %7926
      %v7928 = vsel %vm744, %v7925, 0
      %v7930 = vsel %vm744, %v7927, 0
      %7932 = vmatprep.subr.mxu0 0.0
      %7933 = vmatpush1.xpose.msra.mxu0 0.0
      %7934 = vmatprep.subr.mxu0 0.0
      %7935 = vmatpush1.xpose.msra.mxu0 0.0
      %7936 = vmatprep.subr.mxu0 0.0
      %7937 = vmatpush1.xpose.msra.mxu0 0.0
      %7938 = vmatprep.subr.mxu0 0.0
      %7939 = vmatpush1.xpose.msra.mxu0 0.0
      %7940 = vmatprep.subr.mxu0 0.0
      %7941 = vmatpush1.xpose.msra.mxu0 0.0
      %7942 = vmatprep.subr.mxu0 0.0
      %7943 = vmatpush1.xpose.msra.mxu0 0.0
      %7944 = vmatprep.subr.mxu0 0.0
      %7945 = vmatpush1.xpose.msra.mxu0 0.0
      %7946 = vmatprep.subr.mxu0 0.0
      %7947 = vmatpush1.xpose.msra.mxu0 0.0
      %7948 = vmatprep.subr.mxu0 0.0
      %7949 = vmatpush1.xpose.msra.mxu0 0.0
      %7950 = vmatprep.subr.mxu0 0.0
      %7951 = vmatpush1.xpose.msra.mxu0 0.0
      %7952 = vmatprep.subr.mxu0 0.0
      %7953 = vmatpush1.xpose.msra.mxu0 0.0
      %7954 = vmatprep.subr.mxu0 0.0
      %7955 = vmatpush1.xpose.msra.mxu0 0.0
      %7956 = vmatprep.subr.mxu0 0.0
      %7957 = vmatpush1.xpose.msra.mxu0 0.0
      %7958 = vmatprep.subr.mxu0 0.0
      %7959 = vmatpush1.xpose.msra.mxu0 0.0
      %7960 = vmatprep.subr.mxu0 0.0
      %7961 = vmatpush1.xpose.msra.mxu0 0.0
      %7962 = vmatprep.subr.mxu0 0.0
      %7963 = vmatpush1.xpose.msra.mxu0 %v7930
      %7964 = vmatprep.subr.mxu0 0.0
      %7965 = vmatpush2.xpose.msra.mxu0 0.0
      %7966 = vmatprep.subr.mxu0 0.0
      %7967 = vmatpush2.xpose.msra.mxu0 0.0
      %7968 = vmatprep.subr.mxu0 0.0
      %7969 = vmatpush2.xpose.msra.mxu0 0.0
      %7970 = vmatprep.subr.mxu0 0.0
      %7971 = vmatpush2.xpose.msra.mxu0 0.0
      %7972 = vmatprep.subr.mxu0 0.0
      %7973 = vmatpush2.xpose.msra.mxu0 0.0
      %7974 = vmatprep.subr.mxu0 0.0
      %7975 = vmatpush2.xpose.msra.mxu0 0.0
      %7976 = vmatprep.subr.mxu0 0.0
      %7977 = vmatpush2.xpose.msra.mxu0 0.0
      %7978 = vmatprep.subr.mxu0 0.0
      %7979 = vmatpush2.xpose.msra.mxu0 0.0
      %7980 = vmatprep.subr.mxu0 0.0
      %7981 = vmatpush2.xpose.msra.mxu0 0.0
      %7982 = vmatprep.subr.mxu0 0.0
      %7983 = vmatpush2.xpose.msra.mxu0 0.0
      %7984 = vmatprep.subr.mxu0 0.0
      %7985 = vmatpush2.xpose.msra.mxu0 0.0
      %7986 = vmatprep.subr.mxu0 0.0
      %7987 = vmatpush2.xpose.msra.mxu0 0.0
      %7988 = vmatprep.subr.mxu0 0.0
      %7989 = vmatpush2.xpose.msra.mxu0 0.0
      %7990 = vmatprep.subr.mxu0 0.0
      %7991 = vmatpush2.xpose.msra.mxu0 0.0
      %7992 = vmatprep.subr.mxu0 0.0
      %7993 = vmatpush2.xpose.msra.mxu0 0.0
      %7994 = vmatprep.subr.mxu0 0.0
      %7995 = vmatpush2.xpose.msra.mxu0 0.0
      %7996 = vmatprep.mubr.f32.mxu0 0.0
      %7997 = vmatmul.mubr.f32.gmra.mxu0 %v7928
      %v7998 = vpop.f32.mrf.mxu0
      %v7999 = vadd.f32 0.0, %v7998
      %v8000 = vpop.f32.mrf.mxu0
      %8001 = vdwg.mxu0
      %v8002 = vmul.f32 %v7609, 0.35355338
      %v8003 = vmul.f32 %v7687, 0.35355338
      %v8004 = vmul.f32 %v7765, 0.35355338
      %v8005 = vmul.f32 %v7843, 0.35355338
      %v8006 = vmul.f32 %v7921, 0.35355338
      %v8007 = vmul.f32 %v7999, 0.35355338
      %v8008 = vsel %vm744, %v8002, -inf
      %8009 = vmax.xlane.f32.xlu0 %v8008
      %v8010 = vpop.xlane.xlu0 %8009
      %v8011 = vsel %vm744, %v8003, -inf
      %8012 = vmax.xlane.f32.xlu0 %v8011
      %v8013 = vpop.xlane.xlu0 %8012
      %v8014 = vsel %vm744, %v8004, -inf
      %8015 = vmax.xlane.f32.xlu0 %v8014
      %v8016 = vpop.xlane.xlu0 %8015
      %v8017 = vsel %vm744, %v8005, -inf
      %8018 = vmax.xlane.f32.xlu0 %v8017
      %v8019 = vpop.xlane.xlu0 %8018
      %v8020 = vsel %vm744, %v8006, -inf
      %8021 = vmax.xlane.f32.xlu0 %v8020
      %v8022 = vpop.xlane.xlu0 %8021
      %v8023 = vsel %vm744, %v8007, -inf
      %8024 = vmax.xlane.f32.xlu0 %v8023
      %v8025 = vpop.xlane.xlu0 %8024
      %v8026 = vsub.f32 %v8002, %v8010
      %v8027 = vsub.f32 %v8003, %v8013
      %v8028 = vsub.f32 %v8004, %v8016
      %v8029 = vsub.f32 %v8005, %v8019
      %v8030 = vsub.f32 %v8006, %v8022
      %v8031 = vsub.f32 %v8007, %v8025
      %v8032 = vmul.f32 %v8026, 1.442695
      %v8033 = vpow.pop %v8032
      %v8034 = vmul.f32 %v8027, 1.442695
      %v8035 = vpow.pop %v8034
      %v8036 = vmul.f32 %v8028, 1.442695
      %v8037 = vpow.pop %v8036
      %v8038 = vmul.f32 %v8029, 1.442695
      %v8039 = vpow.pop %v8038
      %v8040 = vmul.f32 %v8030, 1.442695
      %v8041 = vpow.pop %v8040
      %v8042 = vmul.f32 %v8031, 1.442695
      %v8043 = vpow.pop %v8042
      %v8044 = vsel %vm744, %v8033, 0.0
      %8045 = vadd.xlane.f32.xlu0 %v8044
      %v8046 = vpop.xlane.xlu0 %8045
      %v8047 = vsel %vm744, %v8035, 0.0
      %8048 = vadd.xlane.f32.xlu0 %v8047
      %v8049 = vpop.xlane.xlu0 %8048
      %v8050 = vsel %vm744, %v8037, 0.0
      %8051 = vadd.xlane.f32.xlu0 %v8050
      %v8052 = vpop.xlane.xlu0 %8051
      %v8053 = vsel %vm744, %v8039, 0.0
      %8054 = vadd.xlane.f32.xlu0 %v8053
      %v8055 = vpop.xlane.xlu0 %8054
      %v8056 = vsel %vm744, %v8041, 0.0
      %8057 = vadd.xlane.f32.xlu0 %v8056
      %v8058 = vpop.xlane.xlu0 %8057
      %v8059 = vsel %vm744, %v8043, 0.0
      %8060 = vadd.xlane.f32.xlu0 %v8059
      %v8061 = vpop.xlane.xlu0 %8060
      %v8062 = vrcp.pop %v8046
      %v8063 = vrcp.pop %v8049
      %v8064 = vrcp.pop %v8052
      %v8065 = vrcp.pop %v8055
      %v8066 = vrcp.pop %v8058
      %v8067 = vrcp.pop %v8061
      %v8068 = vmul.f32 %v8033, %v8062
      %v8069 = vmul.f32 %v8035, %v8063
      %v8070 = vmul.f32 %v8037, %v8064
      %v8071 = vmul.f32 %v8039, %v8065
      %v8072 = vmul.f32 %v8041, %v8066
      %v8073 = vmul.f32 %v8043, %v8067
      %8074 = vrot.lane.b32.xlu0 %v5520, 48
      %v8075 = vpop.permute.xlu0 %8074
      %v8078 = vsel %vm744, %v8068, 0
      %8080 = vmatprep.subr.mxu0 0.0
      %8081 = vmatpush1.msra.mxu0 0.0
      %8082 = vmatprep.subr.mxu0 0.0
      %8083 = vmatpush1.msra.mxu0 0.0
      %8084 = vmatprep.subr.mxu0 0.0
      %8085 = vmatpush1.msra.mxu0 0.0
      %8086 = vmatprep.subr.mxu0 0.0
      %8087 = vmatpush1.msra.mxu0 0.0
      %8088 = vmatprep.subr.mxu0 0.0
      %8089 = vmatpush1.msra.mxu0 0.0
      %8090 = vmatprep.subr.mxu0 0.0
      %8091 = vmatpush1.msra.mxu0 0.0
      %8092 = vmatprep.subr.mxu0 0.0
      %8093 = vmatpush1.msra.mxu0 0.0
      %8094 = vmatprep.subr.mxu0 0.0
      %8095 = vmatpush1.msra.mxu0 0.0
      %8096 = vmatprep.subr.mxu0 0.0
      %8097 = vmatpush1.msra.mxu0 0.0
      %8098 = vmatprep.subr.mxu0 0.0
      %8099 = vmatpush1.msra.mxu0 0.0
      %8100 = vmatprep.subr.mxu0 0.0
      %8101 = vmatpush1.msra.mxu0 0.0
      %8102 = vmatprep.subr.mxu0 0.0
      %8103 = vmatpush1.msra.mxu0 0.0
      %8104 = vmatprep.subr.mxu0 0.0
      %8105 = vmatpush1.msra.mxu0 0.0
      %8106 = vmatprep.subr.mxu0 0.0
      %8107 = vmatpush1.msra.mxu0 0.0
      %8108 = vmatprep.subr.mxu0 0.0
      %8109 = vmatpush1.msra.mxu0 0.0
      %8110 = vmatprep.subr.mxu0 0.0
      %8111 = vmatpush1.msra.mxu0 %v8075
      %8112 = vmatprep.subr.mxu0 0.0
      %8113 = vmatpush2.msra.mxu0 0.0
      %8114 = vmatprep.subr.mxu0 0.0
      %8115 = vmatpush2.msra.mxu0 0.0
      %8116 = vmatprep.subr.mxu0 0.0
      %8117 = vmatpush2.msra.mxu0 0.0
      %8118 = vmatprep.subr.mxu0 0.0
      %8119 = vmatpush2.msra.mxu0 0.0
      %8120 = vmatprep.subr.mxu0 0.0
      %8121 = vmatpush2.msra.mxu0 0.0
      %8122 = vmatprep.subr.mxu0 0.0
      %8123 = vmatpush2.msra.mxu0 0.0
      %8124 = vmatprep.subr.mxu0 0.0
      %8125 = vmatpush2.msra.mxu0 0.0
      %8126 = vmatprep.subr.mxu0 0.0
      %8127 = vmatpush2.msra.mxu0 0.0
      %8128 = vmatprep.subr.mxu0 0.0
      %8129 = vmatpush2.msra.mxu0 0.0
      %8130 = vmatprep.subr.mxu0 0.0
      %8131 = vmatpush2.msra.mxu0 0.0
      %8132 = vmatprep.subr.mxu0 0.0
      %8133 = vmatpush2.msra.mxu0 0.0
      %8134 = vmatprep.subr.mxu0 0.0
      %8135 = vmatpush2.msra.mxu0 0.0
      %8136 = vmatprep.subr.mxu0 0.0
      %8137 = vmatpush2.msra.mxu0 0.0
      %8138 = vmatprep.subr.mxu0 0.0
      %8139 = vmatpush2.msra.mxu0 0.0
      %8140 = vmatprep.subr.mxu0 0.0
      %8141 = vmatpush2.msra.mxu0 0.0
      %8142 = vmatprep.subr.mxu0 0.0
      %8143 = vmatpush2.msra.mxu0 0.0
      %8144 = vmatprep.mubr.f32.mxu0 0.0
      %8145 = vmatmul.mubr.f32.gmra.mxu0 %v8078
      %v8146 = vpop.f32.mrf.mxu0
      %v8147 = vadd.f32 0.0, %v8146
      %v8148 = vpop.f32.mrf.mxu0
      %8149 = vdwg.mxu0
      %8150 = vrot.lane.b32.xlu0 %v5525, 48
      %v8151 = vpop.permute.xlu0 %8150
      %v8154 = vsel %vm744, %v8069, 0
      %8156 = vmatprep.subr.mxu0 0.0
      %8157 = vmatpush1.msra.mxu0 0.0
      %8158 = vmatprep.subr.mxu0 0.0
      %8159 = vmatpush1.msra.mxu0 0.0
      %8160 = vmatprep.subr.mxu0 0.0
      %8161 = vmatpush1.msra.mxu0 0.0
      %8162 = vmatprep.subr.mxu0 0.0
      %8163 = vmatpush1.msra.mxu0 0.0
      %8164 = vmatprep.subr.mxu0 0.0
      %8165 = vmatpush1.msra.mxu0 0.0
      %8166 = vmatprep.subr.mxu0 0.0
      %8167 = vmatpush1.msra.mxu0 0.0
      %8168 = vmatprep.subr.mxu0 0.0
      %8169 = vmatpush1.msra.mxu0 0.0
      %8170 = vmatprep.subr.mxu0 0.0
      %8171 = vmatpush1.msra.mxu0 0.0
      %8172 = vmatprep.subr.mxu0 0.0
      %8173 = vmatpush1.msra.mxu0 0.0
      %8174 = vmatprep.subr.mxu0 0.0
      %8175 = vmatpush1.msra.mxu0 0.0
      %8176 = vmatprep.subr.mxu0 0.0
      %8177 = vmatpush1.msra.mxu0 0.0
      %8178 = vmatprep.subr.mxu0 0.0
      %8179 = vmatpush1.msra.mxu0 0.0
      %8180 = vmatprep.subr.mxu0 0.0
      %8181 = vmatpush1.msra.mxu0 0.0
      %8182 = vmatprep.subr.mxu0 0.0
      %8183 = vmatpush1.msra.mxu0 0.0
      %8184 = vmatprep.subr.mxu0 0.0
      %8185 = vmatpush1.msra.mxu0 0.0
      %8186 = vmatprep.subr.mxu0 0.0
      %8187 = vmatpush1.msra.mxu0 %v8151
      %8188 = vmatprep.subr.mxu0 0.0
      %8189 = vmatpush2.msra.mxu0 0.0
      %8190 = vmatprep.subr.mxu0 0.0
      %8191 = vmatpush2.msra.mxu0 0.0
      %8192 = vmatprep.subr.mxu0 0.0
      %8193 = vmatpush2.msra.mxu0 0.0
      %8194 = vmatprep.subr.mxu0 0.0
      %8195 = vmatpush2.msra.mxu0 0.0
      %8196 = vmatprep.subr.mxu0 0.0
      %8197 = vmatpush2.msra.mxu0 0.0
      %8198 = vmatprep.subr.mxu0 0.0
      %8199 = vmatpush2.msra.mxu0 0.0
      %8200 = vmatprep.subr.mxu0 0.0
      %8201 = vmatpush2.msra.mxu0 0.0
      %8202 = vmatprep.subr.mxu0 0.0
      %8203 = vmatpush2.msra.mxu0 0.0
      %8204 = vmatprep.subr.mxu0 0.0
      %8205 = vmatpush2.msra.mxu0 0.0
      %8206 = vmatprep.subr.mxu0 0.0
      %8207 = vmatpush2.msra.mxu0 0.0
      %8208 = vmatprep.subr.mxu0 0.0
      %8209 = vmatpush2.msra.mxu0 0.0
      %8210 = vmatprep.subr.mxu0 0.0
      %8211 = vmatpush2.msra.mxu0 0.0
      %8212 = vmatprep.subr.mxu0 0.0
      %8213 = vmatpush2.msra.mxu0 0.0
      %8214 = vmatprep.subr.mxu0 0.0
      %8215 = vmatpush2.msra.mxu0 0.0
      %8216 = vmatprep.subr.mxu0 0.0
      %8217 = vmatpush2.msra.mxu0 0.0
      %8218 = vmatprep.subr.mxu0 0.0
      %8219 = vmatpush2.msra.mxu0 0.0
      %8220 = vmatprep.mubr.f32.mxu0 0.0
      %8221 = vmatmul.mubr.f32.gmra.mxu0 %v8154
      %v8222 = vpop.f32.mrf.mxu0
      %v8223 = vadd.f32 0.0, %v8222
      %v8224 = vpop.f32.mrf.mxu0
      %8225 = vdwg.mxu0
      %8226 = vrot.lane.b32.xlu0 %v5530, 48
      %v8227 = vpop.permute.xlu0 %8226
      %v8230 = vsel %vm744, %v8070, 0
      %8232 = vmatprep.subr.mxu0 0.0
      %8233 = vmatpush1.msra.mxu0 0.0
      %8234 = vmatprep.subr.mxu0 0.0
      %8235 = vmatpush1.msra.mxu0 0.0
      %8236 = vmatprep.subr.mxu0 0.0
      %8237 = vmatpush1.msra.mxu0 0.0
      %8238 = vmatprep.subr.mxu0 0.0
      %8239 = vmatpush1.msra.mxu0 0.0
      %8240 = vmatprep.subr.mxu0 0.0
      %8241 = vmatpush1.msra.mxu0 0.0
      %8242 = vmatprep.subr.mxu0 0.0
      %8243 = vmatpush1.msra.mxu0 0.0
      %8244 = vmatprep.subr.mxu0 0.0
      %8245 = vmatpush1.msra.mxu0 0.0
      %8246 = vmatprep.subr.mxu0 0.0
      %8247 = vmatpush1.msra.mxu0 0.0
      %8248 = vmatprep.subr.mxu0 0.0
      %8249 = vmatpush1.msra.mxu0 0.0
      %8250 = vmatprep.subr.mxu0 0.0
      %8251 = vmatpush1.msra.mxu0 0.0
      %8252 = vmatprep.subr.mxu0 0.0
      %8253 = vmatpush1.msra.mxu0 0.0
      %8254 = vmatprep.subr.mxu0 0.0
      %8255 = vmatpush1.msra.mxu0 0.0
      %8256 = vmatprep.subr.mxu0 0.0
      %8257 = vmatpush1.msra.mxu0 0.0
      %8258 = vmatprep.subr.mxu0 0.0
      %8259 = vmatpush1.msra.mxu0 0.0
      %8260 = vmatprep.subr.mxu0 0.0
      %8261 = vmatpush1.msra.mxu0 0.0
      %8262 = vmatprep.subr.mxu0 0.0
      %8263 = vmatpush1.msra.mxu0 %v8227
      %8264 = vmatprep.subr.mxu0 0.0
      %8265 = vmatpush2.msra.mxu0 0.0
      %8266 = vmatprep.subr.mxu0 0.0
      %8267 = vmatpush2.msra.mxu0 0.0
      %8268 = vmatprep.subr.mxu0 0.0
      %8269 = vmatpush2.msra.mxu0 0.0
      %8270 = vmatprep.subr.mxu0 0.0
      %8271 = vmatpush2.msra.mxu0 0.0
      %8272 = vmatprep.subr.mxu0 0.0
      %8273 = vmatpush2.msra.mxu0 0.0
      %8274 = vmatprep.subr.mxu0 0.0
      %8275 = vmatpush2.msra.mxu0 0.0
      %8276 = vmatprep.subr.mxu0 0.0
      %8277 = vmatpush2.msra.mxu0 0.0
      %8278 = vmatprep.subr.mxu0 0.0
      %8279 = vmatpush2.msra.mxu0 0.0
      %8280 = vmatprep.subr.mxu0 0.0
      %8281 = vmatpush2.msra.mxu0 0.0
      %8282 = vmatprep.subr.mxu0 0.0
      %8283 = vmatpush2.msra.mxu0 0.0
      %8284 = vmatprep.subr.mxu0 0.0
      %8285 = vmatpush2.msra.mxu0 0.0
      %8286 = vmatprep.subr.mxu0 0.0
      %8287 = vmatpush2.msra.mxu0 0.0
      %8288 = vmatprep.subr.mxu0 0.0
      %8289 = vmatpush2.msra.mxu0 0.0
      %8290 = vmatprep.subr.mxu0 0.0
      %8291 = vmatpush2.msra.mxu0 0.0
      %8292 = vmatprep.subr.mxu0 0.0
      %8293 = vmatpush2.msra.mxu0 0.0
      %8294 = vmatprep.subr.mxu0 0.0
      %8295 = vmatpush2.msra.mxu0 0.0
      %8296 = vmatprep.mubr.f32.mxu0 0.0
      %8297 = vmatmul.mubr.f32.gmra.mxu0 %v8230
      %v8298 = vpop.f32.mrf.mxu0
      %v8299 = vadd.f32 0.0, %v8298
      %v8300 = vpop.f32.mrf.mxu0
      %8301 = vdwg.mxu0
      %8302 = vrot.lane.b32.xlu0 %v5535, 48
      %v8303 = vpop.permute.xlu0 %8302
      %v8306 = vsel %vm744, %v8071, 0
      %8308 = vmatprep.subr.mxu0 0.0
      %8309 = vmatpush1.msra.mxu0 0.0
      %8310 = vmatprep.subr.mxu0 0.0
      %8311 = vmatpush1.msra.mxu0 0.0
      %8312 = vmatprep.subr.mxu0 0.0
      %8313 = vmatpush1.msra.mxu0 0.0
      %8314 = vmatprep.subr.mxu0 0.0
      %8315 = vmatpush1.msra.mxu0 0.0
      %8316 = vmatprep.subr.mxu0 0.0
      %8317 = vmatpush1.msra.mxu0 0.0
      %8318 = vmatprep.subr.mxu0 0.0
      %8319 = vmatpush1.msra.mxu0 0.0
      %8320 = vmatprep.subr.mxu0 0.0
      %8321 = vmatpush1.msra.mxu0 0.0
      %8322 = vmatprep.subr.mxu0 0.0
      %8323 = vmatpush1.msra.mxu0 0.0
      %8324 = vmatprep.subr.mxu0 0.0
      %8325 = vmatpush1.msra.mxu0 0.0
      %8326 = vmatprep.subr.mxu0 0.0
      %8327 = vmatpush1.msra.mxu0 0.0
      %8328 = vmatprep.subr.mxu0 0.0
      %8329 = vmatpush1.msra.mxu0 0.0
      %8330 = vmatprep.subr.mxu0 0.0
      %8331 = vmatpush1.msra.mxu0 0.0
      %8332 = vmatprep.subr.mxu0 0.0
      %8333 = vmatpush1.msra.mxu0 0.0
      %8334 = vmatprep.subr.mxu0 0.0
      %8335 = vmatpush1.msra.mxu0 0.0
      %8336 = vmatprep.subr.mxu0 0.0
      %8337 = vmatpush1.msra.mxu0 0.0
      %8338 = vmatprep.subr.mxu0 0.0
      %8339 = vmatpush1.msra.mxu0 %v8303
      %8340 = vmatprep.subr.mxu0 0.0
      %8341 = vmatpush2.msra.mxu0 0.0
      %8342 = vmatprep.subr.mxu0 0.0
      %8343 = vmatpush2.msra.mxu0 0.0
      %8344 = vmatprep.subr.mxu0 0.0
      %8345 = vmatpush2.msra.mxu0 0.0
      %8346 = vmatprep.subr.mxu0 0.0
      %8347 = vmatpush2.msra.mxu0 0.0
      %8348 = vmatprep.subr.mxu0 0.0
      %8349 = vmatpush2.msra.mxu0 0.0
      %8350 = vmatprep.subr.mxu0 0.0
      %8351 = vmatpush2.msra.mxu0 0.0
      %8352 = vmatprep.subr.mxu0 0.0
      %8353 = vmatpush2.msra.mxu0 0.0
      %8354 = vmatprep.subr.mxu0 0.0
      %8355 = vmatpush2.msra.mxu0 0.0
      %8356 = vmatprep.subr.mxu0 0.0
      %8357 = vmatpush2.msra.mxu0 0.0
      %8358 = vmatprep.subr.mxu0 0.0
      %8359 = vmatpush2.msra.mxu0 0.0
      %8360 = vmatprep.subr.mxu0 0.0
      %8361 = vmatpush2.msra.mxu0 0.0
      %8362 = vmatprep.subr.mxu0 0.0
      %8363 = vmatpush2.msra.mxu0 0.0
      %8364 = vmatprep.subr.mxu0 0.0
      %8365 = vmatpush2.msra.mxu0 0.0
      %8366 = vmatprep.subr.mxu0 0.0
      %8367 = vmatpush2.msra.mxu0 0.0
      %8368 = vmatprep.subr.mxu0 0.0
      %8369 = vmatpush2.msra.mxu0 0.0
      %8370 = vmatprep.subr.mxu0 0.0
      %8371 = vmatpush2.msra.mxu0 0.0
      %8372 = vmatprep.mubr.f32.mxu0 0.0
      %8373 = vmatmul.mubr.f32.gmra.mxu0 %v8306
      %v8374 = vpop.f32.mrf.mxu0
      %v8375 = vadd.f32 0.0, %v8374
      %v8376 = vpop.f32.mrf.mxu0
      %8377 = vdwg.mxu0
      %8378 = vrot.lane.b32.xlu0 %v5540, 48
      %v8379 = vpop.permute.xlu0 %8378
      %v8382 = vsel %vm744, %v8072, 0
      %8384 = vmatprep.subr.mxu0 0.0
      %8385 = vmatpush1.msra.mxu0 0.0
      %8386 = vmatprep.subr.mxu0 0.0
      %8387 = vmatpush1.msra.mxu0 0.0
      %8388 = vmatprep.subr.mxu0 0.0
      %8389 = vmatpush1.msra.mxu0 0.0
      %8390 = vmatprep.subr.mxu0 0.0
      %8391 = vmatpush1.msra.mxu0 0.0
      %8392 = vmatprep.subr.mxu0 0.0
      %8393 = vmatpush1.msra.mxu0 0.0
      %8394 = vmatprep.subr.mxu0 0.0
      %8395 = vmatpush1.msra.mxu0 0.0
      %8396 = vmatprep.subr.mxu0 0.0
      %8397 = vmatpush1.msra.mxu0 0.0
      %8398 = vmatprep.subr.mxu0 0.0
      %8399 = vmatpush1.msra.mxu0 0.0
      %8400 = vmatprep.subr.mxu0 0.0
      %8401 = vmatpush1.msra.mxu0 0.0
      %8402 = vmatprep.subr.mxu0 0.0
      %8403 = vmatpush1.msra.mxu0 0.0
      %8404 = vmatprep.subr.mxu0 0.0
      %8405 = vmatpush1.msra.mxu0 0.0
      %8406 = vmatprep.subr.mxu0 0.0
      %8407 = vmatpush1.msra.mxu0 0.0
      %8408 = vmatprep.subr.mxu0 0.0
      %8409 = vmatpush1.msra.mxu0 0.0
      %8410 = vmatprep.subr.mxu0 0.0
      %8411 = vmatpush1.msra.mxu0 0.0
      %8412 = vmatprep.subr.mxu0 0.0
      %8413 = vmatpush1.msra.mxu0 0.0
      %8414 = vmatprep.subr.mxu0 0.0
      %8415 = vmatpush1.msra.mxu0 %v8379
      %8416 = vmatprep.subr.mxu0 0.0
      %8417 = vmatpush2.msra.mxu0 0.0
      %8418 = vmatprep.subr.mxu0 0.0
      %8419 = vmatpush2.msra.mxu0 0.0
      %8420 = vmatprep.subr.mxu0 0.0
      %8421 = vmatpush2.msra.mxu0 0.0
      %8422 = vmatprep.subr.mxu0 0.0
      %8423 = vmatpush2.msra.mxu0 0.0
      %8424 = vmatprep.subr.mxu0 0.0
      %8425 = vmatpush2.msra.mxu0 0.0
      %8426 = vmatprep.subr.mxu0 0.0
      %8427 = vmatpush2.msra.mxu0 0.0
      %8428 = vmatprep.subr.mxu0 0.0
      %8429 = vmatpush2.msra.mxu0 0.0
      %8430 = vmatprep.subr.mxu0 0.0
      %8431 = vmatpush2.msra.mxu0 0.0
      %8432 = vmatprep.subr.mxu0 0.0
      %8433 = vmatpush2.msra.mxu0 0.0
      %8434 = vmatprep.subr.mxu0 0.0
      %8435 = vmatpush2.msra.mxu0 0.0
      %8436 = vmatprep.subr.mxu0 0.0
      %8437 = vmatpush2.msra.mxu0 0.0
      %8438 = vmatprep.subr.mxu0 0.0
      %8439 = vmatpush2.msra.mxu0 0.0
      %8440 = vmatprep.subr.mxu0 0.0
      %8441 = vmatpush2.msra.mxu0 0.0
      %8442 = vmatprep.subr.mxu0 0.0
      %8443 = vmatpush2.msra.mxu0 0.0
      %8444 = vmatprep.subr.mxu0 0.0
      %8445 = vmatpush2.msra.mxu0 0.0
      %8446 = vmatprep.subr.mxu0 0.0
      %8447 = vmatpush2.msra.mxu0 0.0
      %8448 = vmatprep.mubr.f32.mxu0 0.0
      %8449 = vmatmul.mubr.f32.gmra.mxu0 %v8382
      %v8450 = vpop.f32.mrf.mxu0
      %v8451 = vadd.f32 0.0, %v8450
      %v8452 = vpop.f32.mrf.mxu0
      %8453 = vdwg.mxu0
      %8454 = vrot.lane.b32.xlu0 %v5545, 48
      %v8455 = vpop.permute.xlu0 %8454
      %v8458 = vsel %vm744, %v8073, 0
      %8460 = vmatprep.subr.mxu0 0.0
      %8461 = vmatpush1.msra.mxu0 0.0
      %8462 = vmatprep.subr.mxu0 0.0
      %8463 = vmatpush1.msra.mxu0 0.0
      %8464 = vmatprep.subr.mxu0 0.0
      %8465 = vmatpush1.msra.mxu0 0.0
      %8466 = vmatprep.subr.mxu0 0.0
      %8467 = vmatpush1.msra.mxu0 0.0
      %8468 = vmatprep.subr.mxu0 0.0
      %8469 = vmatpush1.msra.mxu0 0.0
      %8470 = vmatprep.subr.mxu0 0.0
      %8471 = vmatpush1.msra.mxu0 0.0
      %8472 = vmatprep.subr.mxu0 0.0
      %8473 = vmatpush1.msra.mxu0 0.0
      %8474 = vmatprep.subr.mxu0 0.0
      %8475 = vmatpush1.msra.mxu0 0.0
      %8476 = vmatprep.subr.mxu0 0.0
      %8477 = vmatpush1.msra.mxu0 0.0
      %8478 = vmatprep.subr.mxu0 0.0
      %8479 = vmatpush1.msra.mxu0 0.0
      %8480 = vmatprep.subr.mxu0 0.0
      %8481 = vmatpush1.msra.mxu0 0.0
      %8482 = vmatprep.subr.mxu0 0.0
      %8483 = vmatpush1.msra.mxu0 0.0
      %8484 = vmatprep.subr.mxu0 0.0
      %8485 = vmatpush1.msra.mxu0 0.0
      %8486 = vmatprep.subr.mxu0 0.0
      %8487 = vmatpush1.msra.mxu0 0.0
      %8488 = vmatprep.subr.mxu0 0.0
      %8489 = vmatpush1.msra.mxu0 0.0
      %8490 = vmatprep.subr.mxu0 0.0
      %8491 = vmatpush1.msra.mxu0 %v8455
      %8492 = vmatprep.subr.mxu0 0.0
      %8493 = vmatpush2.msra.mxu0 0.0
      %8494 = vmatprep.subr.mxu0 0.0
      %8495 = vmatpush2.msra.mxu0 0.0
      %8496 = vmatprep.subr.mxu0 0.0
      %8497 = vmatpush2.msra.mxu0 0.0
      %8498 = vmatprep.subr.mxu0 0.0
      %8499 = vmatpush2.msra.mxu0 0.0
      %8500 = vmatprep.subr.mxu0 0.0
      %8501 = vmatpush2.msra.mxu0 0.0
      %8502 = vmatprep.subr.mxu0 0.0
      %8503 = vmatpush2.msra.mxu0 0.0
      %8504 = vmatprep.subr.mxu0 0.0
      %8505 = vmatpush2.msra.mxu0 0.0
      %8506 = vmatprep.subr.mxu0 0.0
      %8507 = vmatpush2.msra.mxu0 0.0
      %8508 = vmatprep.subr.mxu0 0.0
      %8509 = vmatpush2.msra.mxu0 0.0
      %8510 = vmatprep.subr.mxu0 0.0
      %8511 = vmatpush2.msra.mxu0 0.0
      %8512 = vmatprep.subr.mxu0 0.0
      %8513 = vmatpush2.msra.mxu0 0.0
      %8514 = vmatprep.subr.mxu0 0.0
      %8515 = vmatpush2.msra.mxu0 0.0
      %8516 = vmatprep.subr.mxu0 0.0
      %8517 = vmatpush2.msra.mxu0 0.0
      %8518 = vmatprep.subr.mxu0 0.0
      %8519 = vmatpush2.msra.mxu0 0.0
      %8520 = vmatprep.subr.mxu0 0.0
      %8521 = vmatpush2.msra.mxu0 0.0
      %8522 = vmatprep.subr.mxu0 0.0
      %8523 = vmatpush2.msra.mxu0 0.0
      %8524 = vmatprep.mubr.f32.mxu0 0.0
      %8525 = vmatmul.mubr.f32.gmra.mxu0 %v8458
      %v8526 = vpop.f32.mrf.mxu0
      %v8527 = vadd.f32 0.0, %v8526
      %v8528 = vpop.f32.mrf.mxu0
      %8529 = vdwg.mxu0
      %8530 = vrot.lane.b32.xlu0 %v5520, 104
      %v8531 = vpop.permute.xlu0 %8530
      %8532 = vrot.lane.b32.xlu0 %v5520, 72
      %v8533 = vpop.permute.xlu0 %8532
      %v8534 = vsel %vm744, %v8531, 0
      %v8536 = vsel %vm744, %v8533, 0
      %8538 = vmatprep.subr.mxu0 0.0
      %8539 = vmatpush1.xpose.msra.mxu0 0.0
      %8540 = vmatprep.subr.mxu0 0.0
      %8541 = vmatpush1.xpose.msra.mxu0 0.0
      %8542 = vmatprep.subr.mxu0 0.0
      %8543 = vmatpush1.xpose.msra.mxu0 0.0
      %8544 = vmatprep.subr.mxu0 0.0
      %8545 = vmatpush1.xpose.msra.mxu0 0.0
      %8546 = vmatprep.subr.mxu0 0.0
      %8547 = vmatpush1.xpose.msra.mxu0 0.0
      %8548 = vmatprep.subr.mxu0 0.0
      %8549 = vmatpush1.xpose.msra.mxu0 0.0
      %8550 = vmatprep.subr.mxu0 0.0
      %8551 = vmatpush1.xpose.msra.mxu0 0.0
      %8552 = vmatprep.subr.mxu0 0.0
      %8553 = vmatpush1.xpose.msra.mxu0 0.0
      %8554 = vmatprep.subr.mxu0 0.0
      %8555 = vmatpush1.xpose.msra.mxu0 0.0
      %8556 = vmatprep.subr.mxu0 0.0
      %8557 = vmatpush1.xpose.msra.mxu0 0.0
      %8558 = vmatprep.subr.mxu0 0.0
      %8559 = vmatpush1.xpose.msra.mxu0 0.0
      %8560 = vmatprep.subr.mxu0 0.0
      %8561 = vmatpush1.xpose.msra.mxu0 0.0
      %8562 = vmatprep.subr.mxu0 0.0
      %8563 = vmatpush1.xpose.msra.mxu0 0.0
      %8564 = vmatprep.subr.mxu0 0.0
      %8565 = vmatpush1.xpose.msra.mxu0 0.0
      %8566 = vmatprep.subr.mxu0 0.0
      %8567 = vmatpush1.xpose.msra.mxu0 0.0
      %8568 = vmatprep.subr.mxu0 0.0
      %8569 = vmatpush1.xpose.msra.mxu0 %v8536
      %8570 = vmatprep.subr.mxu0 0.0
      %8571 = vmatpush2.xpose.msra.mxu0 0.0
      %8572 = vmatprep.subr.mxu0 0.0
      %8573 = vmatpush2.xpose.msra.mxu0 0.0
      %8574 = vmatprep.subr.mxu0 0.0
      %8575 = vmatpush2.xpose.msra.mxu0 0.0
      %8576 = vmatprep.subr.mxu0 0.0
      %8577 = vmatpush2.xpose.msra.mxu0 0.0
      %8578 = vmatprep.subr.mxu0 0.0
      %8579 = vmatpush2.xpose.msra.mxu0 0.0
      %8580 = vmatprep.subr.mxu0 0.0
      %8581 = vmatpush2.xpose.msra.mxu0 0.0
      %8582 = vmatprep.subr.mxu0 0.0
      %8583 = vmatpush2.xpose.msra.mxu0 0.0
      %8584 = vmatprep.subr.mxu0 0.0
      %8585 = vmatpush2.xpose.msra.mxu0 0.0
      %8586 = vmatprep.subr.mxu0 0.0
      %8587 = vmatpush2.xpose.msra.mxu0 0.0
      %8588 = vmatprep.subr.mxu0 0.0
      %8589 = vmatpush2.xpose.msra.mxu0 0.0
      %8590 = vmatprep.subr.mxu0 0.0
      %8591 = vmatpush2.xpose.msra.mxu0 0.0
      %8592 = vmatprep.subr.mxu0 0.0
      %8593 = vmatpush2.xpose.msra.mxu0 0.0
      %8594 = vmatprep.subr.mxu0 0.0
      %8595 = vmatpush2.xpose.msra.mxu0 0.0
      %8596 = vmatprep.subr.mxu0 0.0
      %8597 = vmatpush2.xpose.msra.mxu0 0.0
      %8598 = vmatprep.subr.mxu0 0.0
      %8599 = vmatpush2.xpose.msra.mxu0 0.0
      %8600 = vmatprep.subr.mxu0 0.0
      %8601 = vmatpush2.xpose.msra.mxu0 0.0
      %8602 = vmatprep.mubr.f32.mxu0 0.0
      %8603 = vmatmul.mubr.f32.gmra.mxu0 %v8534
      %v8604 = vpop.f32.mrf.mxu0
      %v8605 = vadd.f32 0.0, %v8604
      %v8606 = vpop.f32.mrf.mxu0
      %8607 = vdwg.mxu0
      %8608 = vrot.lane.b32.xlu0 %v5525, 104
      %v8609 = vpop.permute.xlu0 %8608
      %8610 = vrot.lane.b32.xlu0 %v5525, 72
      %v8611 = vpop.permute.xlu0 %8610
      %v8612 = vsel %vm744, %v8609, 0
      %v8614 = vsel %vm744, %v8611, 0
      %8616 = vmatprep.subr.mxu0 0.0
      %8617 = vmatpush1.xpose.msra.mxu0 0.0
      %8618 = vmatprep.subr.mxu0 0.0
      %8619 = vmatpush1.xpose.msra.mxu0 0.0
      %8620 = vmatprep.subr.mxu0 0.0
      %8621 = vmatpush1.xpose.msra.mxu0 0.0
      %8622 = vmatprep.subr.mxu0 0.0
      %8623 = vmatpush1.xpose.msra.mxu0 0.0
      %8624 = vmatprep.subr.mxu0 0.0
      %8625 = vmatpush1.xpose.msra.mxu0 0.0
      %8626 = vmatprep.subr.mxu0 0.0
      %8627 = vmatpush1.xpose.msra.mxu0 0.0
      %8628 = vmatprep.subr.mxu0 0.0
      %8629 = vmatpush1.xpose.msra.mxu0 0.0
      %8630 = vmatprep.subr.mxu0 0.0
      %8631 = vmatpush1.xpose.msra.mxu0 0.0
      %8632 = vmatprep.subr.mxu0 0.0
      %8633 = vmatpush1.xpose.msra.mxu0 0.0
      %8634 = vmatprep.subr.mxu0 0.0
      %8635 = vmatpush1.xpose.msra.mxu0 0.0
      %8636 = vmatprep.subr.mxu0 0.0
      %8637 = vmatpush1.xpose.msra.mxu0 0.0
      %8638 = vmatprep.subr.mxu0 0.0
      %8639 = vmatpush1.xpose.msra.mxu0 0.0
      %8640 = vmatprep.subr.mxu0 0.0
      %8641 = vmatpush1.xpose.msra.mxu0 0.0
      %8642 = vmatprep.subr.mxu0 0.0
      %8643 = vmatpush1.xpose.msra.mxu0 0.0
      %8644 = vmatprep.subr.mxu0 0.0
      %8645 = vmatpush1.xpose.msra.mxu0 0.0
      %8646 = vmatprep.subr.mxu0 0.0
      %8647 = vmatpush1.xpose.msra.mxu0 %v8614
      %8648 = vmatprep.subr.mxu0 0.0
      %8649 = vmatpush2.xpose.msra.mxu0 0.0
      %8650 = vmatprep.subr.mxu0 0.0
      %8651 = vmatpush2.xpose.msra.mxu0 0.0
      %8652 = vmatprep.subr.mxu0 0.0
      %8653 = vmatpush2.xpose.msra.mxu0 0.0
      %8654 = vmatprep.subr.mxu0 0.0
      %8655 = vmatpush2.xpose.msra.mxu0 0.0
      %8656 = vmatprep.subr.mxu0 0.0
      %8657 = vmatpush2.xpose.msra.mxu0 0.0
      %8658 = vmatprep.subr.mxu0 0.0
      %8659 = vmatpush2.xpose.msra.mxu0 0.0
      %8660 = vmatprep.subr.mxu0 0.0
      %8661 = vmatpush2.xpose.msra.mxu0 0.0
      %8662 = vmatprep.subr.mxu0 0.0
      %8663 = vmatpush2.xpose.msra.mxu0 0.0
      %8664 = vmatprep.subr.mxu0 0.0
      %8665 = vmatpush2.xpose.msra.mxu0 0.0
      %8666 = vmatprep.subr.mxu0 0.0
      %8667 = vmatpush2.xpose.msra.mxu0 0.0
      %8668 = vmatprep.subr.mxu0 0.0
      %8669 = vmatpush2.xpose.msra.mxu0 0.0
      %8670 = vmatprep.subr.mxu0 0.0
      %8671 = vmatpush2.xpose.msra.mxu0 0.0
      %8672 = vmatprep.subr.mxu0 0.0
      %8673 = vmatpush2.xpose.msra.mxu0 0.0
      %8674 = vmatprep.subr.mxu0 0.0
      %8675 = vmatpush2.xpose.msra.mxu0 0.0
      %8676 = vmatprep.subr.mxu0 0.0
      %8677 = vmatpush2.xpose.msra.mxu0 0.0
      %8678 = vmatprep.subr.mxu0 0.0
      %8679 = vmatpush2.xpose.msra.mxu0 0.0
      %8680 = vmatprep.mubr.f32.mxu0 0.0
      %8681 = vmatmul.mubr.f32.gmra.mxu0 %v8612
      %v8682 = vpop.f32.mrf.mxu0
      %v8683 = vadd.f32 0.0, %v8682
      %v8684 = vpop.f32.mrf.mxu0
      %8685 = vdwg.mxu0
      %8686 = vrot.lane.b32.xlu0 %v5530, 104
      %v8687 = vpop.permute.xlu0 %8686
      %8688 = vrot.lane.b32.xlu0 %v5530, 72
      %v8689 = vpop.permute.xlu0 %8688
      %v8690 = vsel %vm744, %v8687, 0
      %v8692 = vsel %vm744, %v8689, 0
      %8694 = vmatprep.subr.mxu0 0.0
      %8695 = vmatpush1.xpose.msra.mxu0 0.0
      %8696 = vmatprep.subr.mxu0 0.0
      %8697 = vmatpush1.xpose.msra.mxu0 0.0
      %8698 = vmatprep.subr.mxu0 0.0
      %8699 = vmatpush1.xpose.msra.mxu0 0.0
      %8700 = vmatprep.subr.mxu0 0.0
      %8701 = vmatpush1.xpose.msra.mxu0 0.0
      %8702 = vmatprep.subr.mxu0 0.0
      %8703 = vmatpush1.xpose.msra.mxu0 0.0
      %8704 = vmatprep.subr.mxu0 0.0
      %8705 = vmatpush1.xpose.msra.mxu0 0.0
      %8706 = vmatprep.subr.mxu0 0.0
      %8707 = vmatpush1.xpose.msra.mxu0 0.0
      %8708 = vmatprep.subr.mxu0 0.0
      %8709 = vmatpush1.xpose.msra.mxu0 0.0
      %8710 = vmatprep.subr.mxu0 0.0
      %8711 = vmatpush1.xpose.msra.mxu0 0.0
      %8712 = vmatprep.subr.mxu0 0.0
      %8713 = vmatpush1.xpose.msra.mxu0 0.0
      %8714 = vmatprep.subr.mxu0 0.0
      %8715 = vmatpush1.xpose.msra.mxu0 0.0
      %8716 = vmatprep.subr.mxu0 0.0
      %8717 = vmatpush1.xpose.msra.mxu0 0.0
      %8718 = vmatprep.subr.mxu0 0.0
      %8719 = vmatpush1.xpose.msra.mxu0 0.0
      %8720 = vmatprep.subr.mxu0 0.0
      %8721 = vmatpush1.xpose.msra.mxu0 0.0
      %8722 = vmatprep.subr.mxu0 0.0
      %8723 = vmatpush1.xpose.msra.mxu0 0.0
      %8724 = vmatprep.subr.mxu0 0.0
      %8725 = vmatpush1.xpose.msra.mxu0 %v8692
      %8726 = vmatprep.subr.mxu0 0.0
      %8727 = vmatpush2.xpose.msra.mxu0 0.0
      %8728 = vmatprep.subr.mxu0 0.0
      %8729 = vmatpush2.xpose.msra.mxu0 0.0
      %8730 = vmatprep.subr.mxu0 0.0
      %8731 = vmatpush2.xpose.msra.mxu0 0.0
      %8732 = vmatprep.subr.mxu0 0.0
      %8733 = vmatpush2.xpose.msra.mxu0 0.0
      %8734 = vmatprep.subr.mxu0 0.0
      %8735 = vmatpush2.xpose.msra.mxu0 0.0
      %8736 = vmatprep.subr.mxu0 0.0
      %8737 = vmatpush2.xpose.msra.mxu0 0.0
      %8738 = vmatprep.subr.mxu0 0.0
      %8739 = vmatpush2.xpose.msra.mxu0 0.0
      %8740 = vmatprep.subr.mxu0 0.0
      %8741 = vmatpush2.xpose.msra.mxu0 0.0
      %8742 = vmatprep.subr.mxu0 0.0
      %8743 = vmatpush2.xpose.msra.mxu0 0.0
      %8744 = vmatprep.subr.mxu0 0.0
      %8745 = vmatpush2.xpose.msra.mxu0 0.0
      %8746 = vmatprep.subr.mxu0 0.0
      %8747 = vmatpush2.xpose.msra.mxu0 0.0
      %8748 = vmatprep.subr.mxu0 0.0
      %8749 = vmatpush2.xpose.msra.mxu0 0.0
      %8750 = vmatprep.subr.mxu0 0.0
      %8751 = vmatpush2.xpose.msra.mxu0 0.0
      %8752 = vmatprep.subr.mxu0 0.0
      %8753 = vmatpush2.xpose.msra.mxu0 0.0
      %8754 = vmatprep.subr.mxu0 0.0
      %8755 = vmatpush2.xpose.msra.mxu0 0.0
      %8756 = vmatprep.subr.mxu0 0.0
      %8757 = vmatpush2.xpose.msra.mxu0 0.0
      %8758 = vmatprep.mubr.f32.mxu0 0.0
      %8759 = vmatmul.mubr.f32.gmra.mxu0 %v8690
      %v8760 = vpop.f32.mrf.mxu0
      %v8761 = vadd.f32 0.0, %v8760
      %v8762 = vpop.f32.mrf.mxu0
      %8763 = vdwg.mxu0
      %8764 = vrot.lane.b32.xlu0 %v5535, 104
      %v8765 = vpop.permute.xlu0 %8764
      %8766 = vrot.lane.b32.xlu0 %v5535, 72
      %v8767 = vpop.permute.xlu0 %8766
      %v8768 = vsel %vm744, %v8765, 0
      %v8770 = vsel %vm744, %v8767, 0
      %8772 = vmatprep.subr.mxu0 0.0
      %8773 = vmatpush1.xpose.msra.mxu0 0.0
      %8774 = vmatprep.subr.mxu0 0.0
      %8775 = vmatpush1.xpose.msra.mxu0 0.0
      %8776 = vmatprep.subr.mxu0 0.0
      %8777 = vmatpush1.xpose.msra.mxu0 0.0
      %8778 = vmatprep.subr.mxu0 0.0
      %8779 = vmatpush1.xpose.msra.mxu0 0.0
      %8780 = vmatprep.subr.mxu0 0.0
      %8781 = vmatpush1.xpose.msra.mxu0 0.0
      %8782 = vmatprep.subr.mxu0 0.0
      %8783 = vmatpush1.xpose.msra.mxu0 0.0
      %8784 = vmatprep.subr.mxu0 0.0
      %8785 = vmatpush1.xpose.msra.mxu0 0.0
      %8786 = vmatprep.subr.mxu0 0.0
      %8787 = vmatpush1.xpose.msra.mxu0 0.0
      %8788 = vmatprep.subr.mxu0 0.0
      %8789 = vmatpush1.xpose.msra.mxu0 0.0
      %8790 = vmatprep.subr.mxu0 0.0
      %8791 = vmatpush1.xpose.msra.mxu0 0.0
      %8792 = vmatprep.subr.mxu0 0.0
      %8793 = vmatpush1.xpose.msra.mxu0 0.0
      %8794 = vmatprep.subr.mxu0 0.0
      %8795 = vmatpush1.xpose.msra.mxu0 0.0
      %8796 = vmatprep.subr.mxu0 0.0
      %8797 = vmatpush1.xpose.msra.mxu0 0.0
      %8798 = vmatprep.subr.mxu0 0.0
      %8799 = vmatpush1.xpose.msra.mxu0 0.0
      %8800 = vmatprep.subr.mxu0 0.0
      %8801 = vmatpush1.xpose.msra.mxu0 0.0
      %8802 = vmatprep.subr.mxu0 0.0
      %8803 = vmatpush1.xpose.msra.mxu0 %v8770
      %8804 = vmatprep.subr.mxu0 0.0
      %8805 = vmatpush2.xpose.msra.mxu0 0.0
      %8806 = vmatprep.subr.mxu0 0.0
      %8807 = vmatpush2.xpose.msra.mxu0 0.0
      %8808 = vmatprep.subr.mxu0 0.0
      %8809 = vmatpush2.xpose.msra.mxu0 0.0
      %8810 = vmatprep.subr.mxu0 0.0
      %8811 = vmatpush2.xpose.msra.mxu0 0.0
      %8812 = vmatprep.subr.mxu0 0.0
      %8813 = vmatpush2.xpose.msra.mxu0 0.0
      %8814 = vmatprep.subr.mxu0 0.0
      %8815 = vmatpush2.xpose.msra.mxu0 0.0
      %8816 = vmatprep.subr.mxu0 0.0
      %8817 = vmatpush2.xpose.msra.mxu0 0.0
      %8818 = vmatprep.subr.mxu0 0.0
      %8819 = vmatpush2.xpose.msra.mxu0 0.0
      %8820 = vmatprep.subr.mxu0 0.0
      %8821 = vmatpush2.xpose.msra.mxu0 0.0
      %8822 = vmatprep.subr.mxu0 0.0
      %8823 = vmatpush2.xpose.msra.mxu0 0.0
      %8824 = vmatprep.subr.mxu0 0.0
      %8825 = vmatpush2.xpose.msra.mxu0 0.0
      %8826 = vmatprep.subr.mxu0 0.0
      %8827 = vmatpush2.xpose.msra.mxu0 0.0
      %8828 = vmatprep.subr.mxu0 0.0
      %8829 = vmatpush2.xpose.msra.mxu0 0.0
      %8830 = vmatprep.subr.mxu0 0.0
      %8831 = vmatpush2.xpose.msra.mxu0 0.0
      %8832 = vmatprep.subr.mxu0 0.0
      %8833 = vmatpush2.xpose.msra.mxu0 0.0
      %8834 = vmatprep.subr.mxu0 0.0
      %8835 = vmatpush2.xpose.msra.mxu0 0.0
      %8836 = vmatprep.mubr.f32.mxu0 0.0
      %8837 = vmatmul.mubr.f32.gmra.mxu0 %v8768
      %v8838 = vpop.f32.mrf.mxu0
      %v8839 = vadd.f32 0.0, %v8838
      %v8840 = vpop.f32.mrf.mxu0
      %8841 = vdwg.mxu0
      %8842 = vrot.lane.b32.xlu0 %v5540, 104
      %v8843 = vpop.permute.xlu0 %8842
      %8844 = vrot.lane.b32.xlu0 %v5540, 72
      %v8845 = vpop.permute.xlu0 %8844
      %v8846 = vsel %vm744, %v8843, 0
      %v8848 = vsel %vm744, %v8845, 0
      %8850 = vmatprep.subr.mxu0 0.0
      %8851 = vmatpush1.xpose.msra.mxu0 0.0
      %8852 = vmatprep.subr.mxu0 0.0
      %8853 = vmatpush1.xpose.msra.mxu0 0.0
      %8854 = vmatprep.subr.mxu0 0.0
      %8855 = vmatpush1.xpose.msra.mxu0 0.0
      %8856 = vmatprep.subr.mxu0 0.0
      %8857 = vmatpush1.xpose.msra.mxu0 0.0
      %8858 = vmatprep.subr.mxu0 0.0
      %8859 = vmatpush1.xpose.msra.mxu0 0.0
      %8860 = vmatprep.subr.mxu0 0.0
      %8861 = vmatpush1.xpose.msra.mxu0 0.0
      %8862 = vmatprep.subr.mxu0 0.0
      %8863 = vmatpush1.xpose.msra.mxu0 0.0
      %8864 = vmatprep.subr.mxu0 0.0
      %8865 = vmatpush1.xpose.msra.mxu0 0.0
      %8866 = vmatprep.subr.mxu0 0.0
      %8867 = vmatpush1.xpose.msra.mxu0 0.0
      %8868 = vmatprep.subr.mxu0 0.0
      %8869 = vmatpush1.xpose.msra.mxu0 0.0
      %8870 = vmatprep.subr.mxu0 0.0
      %8871 = vmatpush1.xpose.msra.mxu0 0.0
      %8872 = vmatprep.subr.mxu0 0.0
      %8873 = vmatpush1.xpose.msra.mxu0 0.0
      %8874 = vmatprep.subr.mxu0 0.0
      %8875 = vmatpush1.xpose.msra.mxu0 0.0
      %8876 = vmatprep.subr.mxu0 0.0
      %8877 = vmatpush1.xpose.msra.mxu0 0.0
      %8878 = vmatprep.subr.mxu0 0.0
      %8879 = vmatpush1.xpose.msra.mxu0 0.0
      %8880 = vmatprep.subr.mxu0 0.0
      %8881 = vmatpush1.xpose.msra.mxu0 %v8848
      %8882 = vmatprep.subr.mxu0 0.0
      %8883 = vmatpush2.xpose.msra.mxu0 0.0
      %8884 = vmatprep.subr.mxu0 0.0
      %8885 = vmatpush2.xpose.msra.mxu0 0.0
      %8886 = vmatprep.subr.mxu0 0.0
      %8887 = vmatpush2.xpose.msra.mxu0 0.0
      %8888 = vmatprep.subr.mxu0 0.0
      %8889 = vmatpush2.xpose.msra.mxu0 0.0
      %8890 = vmatprep.subr.mxu0 0.0
      %8891 = vmatpush2.xpose.msra.mxu0 0.0
      %8892 = vmatprep.subr.mxu0 0.0
      %8893 = vmatpush2.xpose.msra.mxu0 0.0
      %8894 = vmatprep.subr.mxu0 0.0
      %8895 = vmatpush2.xpose.msra.mxu0 0.0
      %8896 = vmatprep.subr.mxu0 0.0
      %8897 = vmatpush2.xpose.msra.mxu0 0.0
      %8898 = vmatprep.subr.mxu0 0.0
      %8899 = vmatpush2.xpose.msra.mxu0 0.0
      %8900 = vmatprep.subr.mxu0 0.0
      %8901 = vmatpush2.xpose.msra.mxu0 0.0
      %8902 = vmatprep.subr.mxu0 0.0
      %8903 = vmatpush2.xpose.msra.mxu0 0.0
      %8904 = vmatprep.subr.mxu0 0.0
      %8905 = vmatpush2.xpose.msra.mxu0 0.0
      %8906 = vmatprep.subr.mxu0 0.0
      %8907 = vmatpush2.xpose.msra.mxu0 0.0
      %8908 = vmatprep.subr.mxu0 0.0
      %8909 = vmatpush2.xpose.msra.mxu0 0.0
      %8910 = vmatprep.subr.mxu0 0.0
      %8911 = vmatpush2.xpose.msra.mxu0 0.0
      %8912 = vmatprep.subr.mxu0 0.0
      %8913 = vmatpush2.xpose.msra.mxu0 0.0
      %8914 = vmatprep.mubr.f32.mxu0 0.0
      %8915 = vmatmul.mubr.f32.gmra.mxu0 %v8846
      %v8916 = vpop.f32.mrf.mxu0
      %v8917 = vadd.f32 0.0, %v8916
      %v8918 = vpop.f32.mrf.mxu0
      %8919 = vdwg.mxu0
      %8920 = vrot.lane.b32.xlu0 %v5545, 104
      %v8921 = vpop.permute.xlu0 %8920
      %8922 = vrot.lane.b32.xlu0 %v5545, 72
      %v8923 = vpop.permute.xlu0 %8922
      %v8924 = vsel %vm744, %v8921, 0
      %v8926 = vsel %vm744, %v8923, 0
      %8928 = vmatprep.subr.mxu0 0.0
      %8929 = vmatpush1.xpose.msra.mxu0 0.0
      %8930 = vmatprep.subr.mxu0 0.0
      %8931 = vmatpush1.xpose.msra.mxu0 0.0
      %8932 = vmatprep.subr.mxu0 0.0
      %8933 = vmatpush1.xpose.msra.mxu0 0.0
      %8934 = vmatprep.subr.mxu0 0.0
      %8935 = vmatpush1.xpose.msra.mxu0 0.0
      %8936 = vmatprep.subr.mxu0 0.0
      %8937 = vmatpush1.xpose.msra.mxu0 0.0
      %8938 = vmatprep.subr.mxu0 0.0
      %8939 = vmatpush1.xpose.msra.mxu0 0.0
      %8940 = vmatprep.subr.mxu0 0.0
      %8941 = vmatpush1.xpose.msra.mxu0 0.0
      %8942 = vmatprep.subr.mxu0 0.0
      %8943 = vmatpush1.xpose.msra.mxu0 0.0
      %8944 = vmatprep.subr.mxu0 0.0
      %8945 = vmatpush1.xpose.msra.mxu0 0.0
      %8946 = vmatprep.subr.mxu0 0.0
      %8947 = vmatpush1.xpose.msra.mxu0 0.0
      %8948 = vmatprep.subr.mxu0 0.0
      %8949 = vmatpush1.xpose.msra.mxu0 0.0
      %8950 = vmatprep.subr.mxu0 0.0
      %8951 = vmatpush1.xpose.msra.mxu0 0.0
      %8952 = vmatprep.subr.mxu0 0.0
      %8953 = vmatpush1.xpose.msra.mxu0 0.0
      %8954 = vmatprep.subr.mxu0 0.0
      %8955 = vmatpush1.xpose.msra.mxu0 0.0
      %8956 = vmatprep.subr.mxu0 0.0
      %8957 = vmatpush1.xpose.msra.mxu0 0.0
      %8958 = vmatprep.subr.mxu0 0.0
      %8959 = vmatpush1.xpose.msra.mxu0 %v8926
      %8960 = vmatprep.subr.mxu0 0.0
      %8961 = vmatpush2.xpose.msra.mxu0 0.0
      %8962 = vmatprep.subr.mxu0 0.0
      %8963 = vmatpush2.xpose.msra.mxu0 0.0
      %8964 = vmatprep.subr.mxu0 0.0
      %8965 = vmatpush2.xpose.msra.mxu0 0.0
      %8966 = vmatprep.subr.mxu0 0.0
      %8967 = vmatpush2.xpose.msra.mxu0 0.0
      %8968 = vmatprep.subr.mxu0 0.0
      %8969 = vmatpush2.xpose.msra.mxu0 0.0
      %8970 = vmatprep.subr.mxu0 0.0
      %8971 = vmatpush2.xpose.msra.mxu0 0.0
      %8972 = vmatprep.subr.mxu0 0.0
      %8973 = vmatpush2.xpose.msra.mxu0 0.0
      %8974 = vmatprep.subr.mxu0 0.0
      %8975 = vmatpush2.xpose.msra.mxu0 0.0
      %8976 = vmatprep.subr.mxu0 0.0
      %8977 = vmatpush2.xpose.msra.mxu0 0.0
      %8978 = vmatprep.subr.mxu0 0.0
      %8979 = vmatpush2.xpose.msra.mxu0 0.0
      %8980 = vmatprep.subr.mxu0 0.0
      %8981 = vmatpush2.xpose.msra.mxu0 0.0
      %8982 = vmatprep.subr.mxu0 0.0
      %8983 = vmatpush2.xpose.msra.mxu0 0.0
      %8984 = vmatprep.subr.mxu0 0.0
      %8985 = vmatpush2.xpose.msra.mxu0 0.0
      %8986 = vmatprep.subr.mxu0 0.0
      %8987 = vmatpush2.xpose.msra.mxu0 0.0
      %8988 = vmatprep.subr.mxu0 0.0
      %8989 = vmatpush2.xpose.msra.mxu0 0.0
      %8990 = vmatprep.subr.mxu0 0.0
      %8991 = vmatpush2.xpose.msra.mxu0 0.0
      %8992 = vmatprep.mubr.f32.mxu0 0.0
      %8993 = vmatmul.mubr.f32.gmra.mxu0 %v8924
      %v8994 = vpop.f32.mrf.mxu0
      %v8995 = vadd.f32 0.0, %v8994
      %v8996 = vpop.f32.mrf.mxu0
      %8997 = vdwg.mxu0
      %v8998 = vmul.f32 %v8605, 0.35355338
      %v8999 = vmul.f32 %v8683, 0.35355338
      %v9000 = vmul.f32 %v8761, 0.35355338
      %v9001 = vmul.f32 %v8839, 0.35355338
      %v9002 = vmul.f32 %v8917, 0.35355338
      %v9003 = vmul.f32 %v8995, 0.35355338
      %v9004 = vsel %vm744, %v8998, -inf
      %9005 = vmax.xlane.f32.xlu0 %v9004
      %v9006 = vpop.xlane.xlu0 %9005
      %v9007 = vsel %vm744, %v8999, -inf
      %9008 = vmax.xlane.f32.xlu0 %v9007
      %v9009 = vpop.xlane.xlu0 %9008
      %v9010 = vsel %vm744, %v9000, -inf
      %9011 = vmax.xlane.f32.xlu0 %v9010
      %v9012 = vpop.xlane.xlu0 %9011
      %v9013 = vsel %vm744, %v9001, -inf
      %9014 = vmax.xlane.f32.xlu0 %v9013
      %v9015 = vpop.xlane.xlu0 %9014
      %v9016 = vsel %vm744, %v9002, -inf
      %9017 = vmax.xlane.f32.xlu0 %v9016
      %v9018 = vpop.xlane.xlu0 %9017
      %v9019 = vsel %vm744, %v9003, -inf
      %9020 = vmax.xlane.f32.xlu0 %v9019
      %v9021 = vpop.xlane.xlu0 %9020
      %v9022 = vsub.f32 %v8998, %v9006
      %v9023 = vsub.f32 %v8999, %v9009
      %v9024 = vsub.f32 %v9000, %v9012
      %v9025 = vsub.f32 %v9001, %v9015
      %v9026 = vsub.f32 %v9002, %v9018
      %v9027 = vsub.f32 %v9003, %v9021
      %v9028 = vmul.f32 %v9022, 1.442695
      %v9029 = vpow.pop %v9028
      %v9030 = vmul.f32 %v9023, 1.442695
      %v9031 = vpow.pop %v9030
      %v9032 = vmul.f32 %v9024, 1.442695
      %v9033 = vpow.pop %v9032
      %v9034 = vmul.f32 %v9025, 1.442695
      %v9035 = vpow.pop %v9034
      %v9036 = vmul.f32 %v9026, 1.442695
      %v9037 = vpow.pop %v9036
      %v9038 = vmul.f32 %v9027, 1.442695
      %v9039 = vpow.pop %v9038
      %v9040 = vsel %vm744, %v9029, 0.0
      %9041 = vadd.xlane.f32.xlu0 %v9040
      %v9042 = vpop.xlane.xlu0 %9041
      %v9043 = vsel %vm744, %v9031, 0.0
      %9044 = vadd.xlane.f32.xlu0 %v9043
      %v9045 = vpop.xlane.xlu0 %9044
      %v9046 = vsel %vm744, %v9033, 0.0
      %9047 = vadd.xlane.f32.xlu0 %v9046
      %v9048 = vpop.xlane.xlu0 %9047
      %v9049 = vsel %vm744, %v9035, 0.0
      %9050 = vadd.xlane.f32.xlu0 %v9049
      %v9051 = vpop.xlane.xlu0 %9050
      %v9052 = vsel %vm744, %v9037, 0.0
      %9053 = vadd.xlane.f32.xlu0 %v9052
      %v9054 = vpop.xlane.xlu0 %9053
      %v9055 = vsel %vm744, %v9039, 0.0
      %9056 = vadd.xlane.f32.xlu0 %v9055
      %v9057 = vpop.xlane.xlu0 %9056
      %v9058 = vrcp.pop %v9042
      %v9059 = vrcp.pop %v9045
      %v9060 = vrcp.pop %v9048
      %v9061 = vrcp.pop %v9051
      %v9062 = vrcp.pop %v9054
      %v9063 = vrcp.pop %v9057
      %v9064 = vmul.f32 %v9029, %v9058
      %v9065 = vmul.f32 %v9031, %v9059
      %v9066 = vmul.f32 %v9033, %v9060
      %v9067 = vmul.f32 %v9035, %v9061
      %v9068 = vmul.f32 %v9037, %v9062
      %v9069 = vmul.f32 %v9039, %v9063
      %9070 = vrot.lane.b32.xlu0 %v5520, 40
      %v9071 = vpop.permute.xlu0 %9070
      %v9074 = vsel %vm744, %v9064, 0
      %9076 = vmatprep.subr.mxu0 0.0
      %9077 = vmatpush1.msra.mxu0 0.0
      %9078 = vmatprep.subr.mxu0 0.0
      %9079 = vmatpush1.msra.mxu0 0.0
      %9080 = vmatprep.subr.mxu0 0.0
      %9081 = vmatpush1.msra.mxu0 0.0
      %9082 = vmatprep.subr.mxu0 0.0
      %9083 = vmatpush1.msra.mxu0 0.0
      %9084 = vmatprep.subr.mxu0 0.0
      %9085 = vmatpush1.msra.mxu0 0.0
      %9086 = vmatprep.subr.mxu0 0.0
      %9087 = vmatpush1.msra.mxu0 0.0
      %9088 = vmatprep.subr.mxu0 0.0
      %9089 = vmatpush1.msra.mxu0 0.0
      %9090 = vmatprep.subr.mxu0 0.0
      %9091 = vmatpush1.msra.mxu0 0.0
      %9092 = vmatprep.subr.mxu0 0.0
      %9093 = vmatpush1.msra.mxu0 0.0
      %9094 = vmatprep.subr.mxu0 0.0
      %9095 = vmatpush1.msra.mxu0 0.0
      %9096 = vmatprep.subr.mxu0 0.0
      %9097 = vmatpush1.msra.mxu0 0.0
      %9098 = vmatprep.subr.mxu0 0.0
      %9099 = vmatpush1.msra.mxu0 0.0
      %9100 = vmatprep.subr.mxu0 0.0
      %9101 = vmatpush1.msra.mxu0 0.0
      %9102 = vmatprep.subr.mxu0 0.0
      %9103 = vmatpush1.msra.mxu0 0.0
      %9104 = vmatprep.subr.mxu0 0.0
      %9105 = vmatpush1.msra.mxu0 0.0
      %9106 = vmatprep.subr.mxu0 0.0
      %9107 = vmatpush1.msra.mxu0 %v9071
      %9108 = vmatprep.subr.mxu0 0.0
      %9109 = vmatpush2.msra.mxu0 0.0
      %9110 = vmatprep.subr.mxu0 0.0
      %9111 = vmatpush2.msra.mxu0 0.0
      %9112 = vmatprep.subr.mxu0 0.0
      %9113 = vmatpush2.msra.mxu0 0.0
      %9114 = vmatprep.subr.mxu0 0.0
      %9115 = vmatpush2.msra.mxu0 0.0
      %9116 = vmatprep.subr.mxu0 0.0
      %9117 = vmatpush2.msra.mxu0 0.0
      %9118 = vmatprep.subr.mxu0 0.0
      %9119 = vmatpush2.msra.mxu0 0.0
      %9120 = vmatprep.subr.mxu0 0.0
      %9121 = vmatpush2.msra.mxu0 0.0
      %9122 = vmatprep.subr.mxu0 0.0
      %9123 = vmatpush2.msra.mxu0 0.0
      %9124 = vmatprep.subr.mxu0 0.0
      %9125 = vmatpush2.msra.mxu0 0.0
      %9126 = vmatprep.subr.mxu0 0.0
      %9127 = vmatpush2.msra.mxu0 0.0
      %9128 = vmatprep.subr.mxu0 0.0
      %9129 = vmatpush2.msra.mxu0 0.0
      %9130 = vmatprep.subr.mxu0 0.0
      %9131 = vmatpush2.msra.mxu0 0.0
      %9132 = vmatprep.subr.mxu0 0.0
      %9133 = vmatpush2.msra.mxu0 0.0
      %9134 = vmatprep.subr.mxu0 0.0
      %9135 = vmatpush2.msra.mxu0 0.0
      %9136 = vmatprep.subr.mxu0 0.0
      %9137 = vmatpush2.msra.mxu0 0.0
      %9138 = vmatprep.subr.mxu0 0.0
      %9139 = vmatpush2.msra.mxu0 0.0
      %9140 = vmatprep.mubr.f32.mxu0 0.0
      %9141 = vmatmul.mubr.f32.gmra.mxu0 %v9074
      %v9142 = vpop.f32.mrf.mxu0
      %v9143 = vadd.f32 0.0, %v9142
      %v9144 = vpop.f32.mrf.mxu0
      %9145 = vdwg.mxu0
      %9146 = vrot.lane.b32.xlu0 %v5525, 40
      %v9147 = vpop.permute.xlu0 %9146
      %v9150 = vsel %vm744, %v9065, 0
      %9152 = vmatprep.subr.mxu0 0.0
      %9153 = vmatpush1.msra.mxu0 0.0
      %9154 = vmatprep.subr.mxu0 0.0
      %9155 = vmatpush1.msra.mxu0 0.0
      %9156 = vmatprep.subr.mxu0 0.0
      %9157 = vmatpush1.msra.mxu0 0.0
      %9158 = vmatprep.subr.mxu0 0.0
      %9159 = vmatpush1.msra.mxu0 0.0
      %9160 = vmatprep.subr.mxu0 0.0
      %9161 = vmatpush1.msra.mxu0 0.0
      %9162 = vmatprep.subr.mxu0 0.0
      %9163 = vmatpush1.msra.mxu0 0.0
      %9164 = vmatprep.subr.mxu0 0.0
      %9165 = vmatpush1.msra.mxu0 0.0
      %9166 = vmatprep.subr.mxu0 0.0
      %9167 = vmatpush1.msra.mxu0 0.0
      %9168 = vmatprep.subr.mxu0 0.0
      %9169 = vmatpush1.msra.mxu0 0.0
      %9170 = vmatprep.subr.mxu0 0.0
      %9171 = vmatpush1.msra.mxu0 0.0
      %9172 = vmatprep.subr.mxu0 0.0
      %9173 = vmatpush1.msra.mxu0 0.0
      %9174 = vmatprep.subr.mxu0 0.0
      %9175 = vmatpush1.msra.mxu0 0.0
      %9176 = vmatprep.subr.mxu0 0.0
      %9177 = vmatpush1.msra.mxu0 0.0
      %9178 = vmatprep.subr.mxu0 0.0
      %9179 = vmatpush1.msra.mxu0 0.0
      %9180 = vmatprep.subr.mxu0 0.0
      %9181 = vmatpush1.msra.mxu0 0.0
      %9182 = vmatprep.subr.mxu0 0.0
      %9183 = vmatpush1.msra.mxu0 %v9147
      %9184 = vmatprep.subr.mxu0 0.0
      %9185 = vmatpush2.msra.mxu0 0.0
      %9186 = vmatprep.subr.mxu0 0.0
      %9187 = vmatpush2.msra.mxu0 0.0
      %9188 = vmatprep.subr.mxu0 0.0
      %9189 = vmatpush2.msra.mxu0 0.0
      %9190 = vmatprep.subr.mxu0 0.0
      %9191 = vmatpush2.msra.mxu0 0.0
      %9192 = vmatprep.subr.mxu0 0.0
      %9193 = vmatpush2.msra.mxu0 0.0
      %9194 = vmatprep.subr.mxu0 0.0
      %9195 = vmatpush2.msra.mxu0 0.0
      %9196 = vmatprep.subr.mxu0 0.0
      %9197 = vmatpush2.msra.mxu0 0.0
      %9198 = vmatprep.subr.mxu0 0.0
      %9199 = vmatpush2.msra.mxu0 0.0
      %9200 = vmatprep.subr.mxu0 0.0
      %9201 = vmatpush2.msra.mxu0 0.0
      %9202 = vmatprep.subr.mxu0 0.0
      %9203 = vmatpush2.msra.mxu0 0.0
      %9204 = vmatprep.subr.mxu0 0.0
      %9205 = vmatpush2.msra.mxu0 0.0
      %9206 = vmatprep.subr.mxu0 0.0
      %9207 = vmatpush2.msra.mxu0 0.0
      %9208 = vmatprep.subr.mxu0 0.0
      %9209 = vmatpush2.msra.mxu0 0.0
      %9210 = vmatprep.subr.mxu0 0.0
      %9211 = vmatpush2.msra.mxu0 0.0
      %9212 = vmatprep.subr.mxu0 0.0
      %9213 = vmatpush2.msra.mxu0 0.0
      %9214 = vmatprep.subr.mxu0 0.0
      %9215 = vmatpush2.msra.mxu0 0.0
      %9216 = vmatprep.mubr.f32.mxu0 0.0
      %9217 = vmatmul.mubr.f32.gmra.mxu0 %v9150
      %v9218 = vpop.f32.mrf.mxu0
      %v9219 = vadd.f32 0.0, %v9218
      %v9220 = vpop.f32.mrf.mxu0
      %9221 = vdwg.mxu0
      %9222 = vrot.lane.b32.xlu0 %v5530, 40
      %v9223 = vpop.permute.xlu0 %9222
      %v9226 = vsel %vm744, %v9066, 0
      %9228 = vmatprep.subr.mxu0 0.0
      %9229 = vmatpush1.msra.mxu0 0.0
      %9230 = vmatprep.subr.mxu0 0.0
      %9231 = vmatpush1.msra.mxu0 0.0
      %9232 = vmatprep.subr.mxu0 0.0
      %9233 = vmatpush1.msra.mxu0 0.0
      %9234 = vmatprep.subr.mxu0 0.0
      %9235 = vmatpush1.msra.mxu0 0.0
      %9236 = vmatprep.subr.mxu0 0.0
      %9237 = vmatpush1.msra.mxu0 0.0
      %9238 = vmatprep.subr.mxu0 0.0
      %9239 = vmatpush1.msra.mxu0 0.0
      %9240 = vmatprep.subr.mxu0 0.0
      %9241 = vmatpush1.msra.mxu0 0.0
      %9242 = vmatprep.subr.mxu0 0.0
      %9243 = vmatpush1.msra.mxu0 0.0
      %9244 = vmatprep.subr.mxu0 0.0
      %9245 = vmatpush1.msra.mxu0 0.0
      %9246 = vmatprep.subr.mxu0 0.0
      %9247 = vmatpush1.msra.mxu0 0.0
      %9248 = vmatprep.subr.mxu0 0.0
      %9249 = vmatpush1.msra.mxu0 0.0
      %9250 = vmatprep.subr.mxu0 0.0
      %9251 = vmatpush1.msra.mxu0 0.0
      %9252 = vmatprep.subr.mxu0 0.0
      %9253 = vmatpush1.msra.mxu0 0.0
      %9254 = vmatprep.subr.mxu0 0.0
      %9255 = vmatpush1.msra.mxu0 0.0
      %9256 = vmatprep.subr.mxu0 0.0
      %9257 = vmatpush1.msra.mxu0 0.0
      %9258 = vmatprep.subr.mxu0 0.0
      %9259 = vmatpush1.msra.mxu0 %v9223
      %9260 = vmatprep.subr.mxu0 0.0
      %9261 = vmatpush2.msra.mxu0 0.0
      %9262 = vmatprep.subr.mxu0 0.0
      %9263 = vmatpush2.msra.mxu0 0.0
      %9264 = vmatprep.subr.mxu0 0.0
      %9265 = vmatpush2.msra.mxu0 0.0
      %9266 = vmatprep.subr.mxu0 0.0
      %9267 = vmatpush2.msra.mxu0 0.0
      %9268 = vmatprep.subr.mxu0 0.0
      %9269 = vmatpush2.msra.mxu0 0.0
      %9270 = vmatprep.subr.mxu0 0.0
      %9271 = vmatpush2.msra.mxu0 0.0
      %9272 = vmatprep.subr.mxu0 0.0
      %9273 = vmatpush2.msra.mxu0 0.0
      %9274 = vmatprep.subr.mxu0 0.0
      %9275 = vmatpush2.msra.mxu0 0.0
      %9276 = vmatprep.subr.mxu0 0.0
      %9277 = vmatpush2.msra.mxu0 0.0
      %9278 = vmatprep.subr.mxu0 0.0
      %9279 = vmatpush2.msra.mxu0 0.0
      %9280 = vmatprep.subr.mxu0 0.0
      %9281 = vmatpush2.msra.mxu0 0.0
      %9282 = vmatprep.subr.mxu0 0.0
      %9283 = vmatpush2.msra.mxu0 0.0
      %9284 = vmatprep.subr.mxu0 0.0
      %9285 = vmatpush2.msra.mxu0 0.0
      %9286 = vmatprep.subr.mxu0 0.0
      %9287 = vmatpush2.msra.mxu0 0.0
      %9288 = vmatprep.subr.mxu0 0.0
      %9289 = vmatpush2.msra.mxu0 0.0
      %9290 = vmatprep.subr.mxu0 0.0
      %9291 = vmatpush2.msra.mxu0 0.0
      %9292 = vmatprep.mubr.f32.mxu0 0.0
      %9293 = vmatmul.mubr.f32.gmra.mxu0 %v9226
      %v9294 = vpop.f32.mrf.mxu0
      %v9295 = vadd.f32 0.0, %v9294
      %v9296 = vpop.f32.mrf.mxu0
      %9297 = vdwg.mxu0
      %9298 = vrot.lane.b32.xlu0 %v5535, 40
      %v9299 = vpop.permute.xlu0 %9298
      %v9302 = vsel %vm744, %v9067, 0
      %9304 = vmatprep.subr.mxu0 0.0
      %9305 = vmatpush1.msra.mxu0 0.0
      %9306 = vmatprep.subr.mxu0 0.0
      %9307 = vmatpush1.msra.mxu0 0.0
      %9308 = vmatprep.subr.mxu0 0.0
      %9309 = vmatpush1.msra.mxu0 0.0
      %9310 = vmatprep.subr.mxu0 0.0
      %9311 = vmatpush1.msra.mxu0 0.0
      %9312 = vmatprep.subr.mxu0 0.0
      %9313 = vmatpush1.msra.mxu0 0.0
      %9314 = vmatprep.subr.mxu0 0.0
      %9315 = vmatpush1.msra.mxu0 0.0
      %9316 = vmatprep.subr.mxu0 0.0
      %9317 = vmatpush1.msra.mxu0 0.0
      %9318 = vmatprep.subr.mxu0 0.0
      %9319 = vmatpush1.msra.mxu0 0.0
      %9320 = vmatprep.subr.mxu0 0.0
      %9321 = vmatpush1.msra.mxu0 0.0
      %9322 = vmatprep.subr.mxu0 0.0
      %9323 = vmatpush1.msra.mxu0 0.0
      %9324 = vmatprep.subr.mxu0 0.0
      %9325 = vmatpush1.msra.mxu0 0.0
      %9326 = vmatprep.subr.mxu0 0.0
      %9327 = vmatpush1.msra.mxu0 0.0
      %9328 = vmatprep.subr.mxu0 0.0
      %9329 = vmatpush1.msra.mxu0 0.0
      %9330 = vmatprep.subr.mxu0 0.0
      %9331 = vmatpush1.msra.mxu0 0.0
      %9332 = vmatprep.subr.mxu0 0.0
      %9333 = vmatpush1.msra.mxu0 0.0
      %9334 = vmatprep.subr.mxu0 0.0
      %9335 = vmatpush1.msra.mxu0 %v9299
      %9336 = vmatprep.subr.mxu0 0.0
      %9337 = vmatpush2.msra.mxu0 0.0
      %9338 = vmatprep.subr.mxu0 0.0
      %9339 = vmatpush2.msra.mxu0 0.0
      %9340 = vmatprep.subr.mxu0 0.0
      %9341 = vmatpush2.msra.mxu0 0.0
      %9342 = vmatprep.subr.mxu0 0.0
      %9343 = vmatpush2.msra.mxu0 0.0
      %9344 = vmatprep.subr.mxu0 0.0
      %9345 = vmatpush2.msra.mxu0 0.0
      %9346 = vmatprep.subr.mxu0 0.0
      %9347 = vmatpush2.msra.mxu0 0.0
      %9348 = vmatprep.subr.mxu0 0.0
      %9349 = vmatpush2.msra.mxu0 0.0
      %9350 = vmatprep.subr.mxu0 0.0
      %9351 = vmatpush2.msra.mxu0 0.0
      %9352 = vmatprep.subr.mxu0 0.0
      %9353 = vmatpush2.msra.mxu0 0.0
      %9354 = vmatprep.subr.mxu0 0.0
      %9355 = vmatpush2.msra.mxu0 0.0
      %9356 = vmatprep.subr.mxu0 0.0
      %9357 = vmatpush2.msra.mxu0 0.0
      %9358 = vmatprep.subr.mxu0 0.0
      %9359 = vmatpush2.msra.mxu0 0.0
      %9360 = vmatprep.subr.mxu0 0.0
      %9361 = vmatpush2.msra.mxu0 0.0
      %9362 = vmatprep.subr.mxu0 0.0
      %9363 = vmatpush2.msra.mxu0 0.0
      %9364 = vmatprep.subr.mxu0 0.0
      %9365 = vmatpush2.msra.mxu0 0.0
      %9366 = vmatprep.subr.mxu0 0.0
      %9367 = vmatpush2.msra.mxu0 0.0
      %9368 = vmatprep.mubr.f32.mxu0 0.0
      %9369 = vmatmul.mubr.f32.gmra.mxu0 %v9302
      %v9370 = vpop.f32.mrf.mxu0
      %v9371 = vadd.f32 0.0, %v9370
      %v9372 = vpop.f32.mrf.mxu0
      %9373 = vdwg.mxu0
      %9374 = vrot.lane.b32.xlu0 %v5540, 40
      %v9375 = vpop.permute.xlu0 %9374
      %v9378 = vsel %vm744, %v9068, 0
      %9380 = vmatprep.subr.mxu0 0.0
      %9381 = vmatpush1.msra.mxu0 0.0
      %9382 = vmatprep.subr.mxu0 0.0
      %9383 = vmatpush1.msra.mxu0 0.0
      %9384 = vmatprep.subr.mxu0 0.0
      %9385 = vmatpush1.msra.mxu0 0.0
      %9386 = vmatprep.subr.mxu0 0.0
      %9387 = vmatpush1.msra.mxu0 0.0
      %9388 = vmatprep.subr.mxu0 0.0
      %9389 = vmatpush1.msra.mxu0 0.0
      %9390 = vmatprep.subr.mxu0 0.0
      %9391 = vmatpush1.msra.mxu0 0.0
      %9392 = vmatprep.subr.mxu0 0.0
      %9393 = vmatpush1.msra.mxu0 0.0
      %9394 = vmatprep.subr.mxu0 0.0
      %9395 = vmatpush1.msra.mxu0 0.0
      %9396 = vmatprep.subr.mxu0 0.0
      %9397 = vmatpush1.msra.mxu0 0.0
      %9398 = vmatprep.subr.mxu0 0.0
      %9399 = vmatpush1.msra.mxu0 0.0
      %9400 = vmatprep.subr.mxu0 0.0
      %9401 = vmatpush1.msra.mxu0 0.0
      %9402 = vmatprep.subr.mxu0 0.0
      %9403 = vmatpush1.msra.mxu0 0.0
      %9404 = vmatprep.subr.mxu0 0.0
      %9405 = vmatpush1.msra.mxu0 0.0
      %9406 = vmatprep.subr.mxu0 0.0
      %9407 = vmatpush1.msra.mxu0 0.0
      %9408 = vmatprep.subr.mxu0 0.0
      %9409 = vmatpush1.msra.mxu0 0.0
      %9410 = vmatprep.subr.mxu0 0.0
      %9411 = vmatpush1.msra.mxu0 %v9375
      %9412 = vmatprep.subr.mxu0 0.0
      %9413 = vmatpush2.msra.mxu0 0.0
      %9414 = vmatprep.subr.mxu0 0.0
      %9415 = vmatpush2.msra.mxu0 0.0
      %9416 = vmatprep.subr.mxu0 0.0
      %9417 = vmatpush2.msra.mxu0 0.0
      %9418 = vmatprep.subr.mxu0 0.0
      %9419 = vmatpush2.msra.mxu0 0.0
      %9420 = vmatprep.subr.mxu0 0.0
      %9421 = vmatpush2.msra.mxu0 0.0
      %9422 = vmatprep.subr.mxu0 0.0
      %9423 = vmatpush2.msra.mxu0 0.0
      %9424 = vmatprep.subr.mxu0 0.0
      %9425 = vmatpush2.msra.mxu0 0.0
      %9426 = vmatprep.subr.mxu0 0.0
      %9427 = vmatpush2.msra.mxu0 0.0
      %9428 = vmatprep.subr.mxu0 0.0
      %9429 = vmatpush2.msra.mxu0 0.0
      %9430 = vmatprep.subr.mxu0 0.0
      %9431 = vmatpush2.msra.mxu0 0.0
      %9432 = vmatprep.subr.mxu0 0.0
      %9433 = vmatpush2.msra.mxu0 0.0
      %9434 = vmatprep.subr.mxu0 0.0
      %9435 = vmatpush2.msra.mxu0 0.0
      %9436 = vmatprep.subr.mxu0 0.0
      %9437 = vmatpush2.msra.mxu0 0.0
      %9438 = vmatprep.subr.mxu0 0.0
      %9439 = vmatpush2.msra.mxu0 0.0
      %9440 = vmatprep.subr.mxu0 0.0
      %9441 = vmatpush2.msra.mxu0 0.0
      %9442 = vmatprep.subr.mxu0 0.0
      %9443 = vmatpush2.msra.mxu0 0.0
      %9444 = vmatprep.mubr.f32.mxu0 0.0
      %9445 = vmatmul.mubr.f32.gmra.mxu0 %v9378
      %v9446 = vpop.f32.mrf.mxu0
      %v9447 = vadd.f32 0.0, %v9446
      %v9448 = vpop.f32.mrf.mxu0
      %9449 = vdwg.mxu0
      %9450 = vrot.lane.b32.xlu0 %v5545, 40
      %v9451 = vpop.permute.xlu0 %9450
      %v9454 = vsel %vm744, %v9069, 0
      %9456 = vmatprep.subr.mxu0 0.0
      %9457 = vmatpush1.msra.mxu0 0.0
      %9458 = vmatprep.subr.mxu0 0.0
      %9459 = vmatpush1.msra.mxu0 0.0
      %9460 = vmatprep.subr.mxu0 0.0
      %9461 = vmatpush1.msra.mxu0 0.0
      %9462 = vmatprep.subr.mxu0 0.0
      %9463 = vmatpush1.msra.mxu0 0.0
      %9464 = vmatprep.subr.mxu0 0.0
      %9465 = vmatpush1.msra.mxu0 0.0
      %9466 = vmatprep.subr.mxu0 0.0
      %9467 = vmatpush1.msra.mxu0 0.0
      %9468 = vmatprep.subr.mxu0 0.0
      %9469 = vmatpush1.msra.mxu0 0.0
      %9470 = vmatprep.subr.mxu0 0.0
      %9471 = vmatpush1.msra.mxu0 0.0
      %9472 = vmatprep.subr.mxu0 0.0
      %9473 = vmatpush1.msra.mxu0 0.0
      %9474 = vmatprep.subr.mxu0 0.0
      %9475 = vmatpush1.msra.mxu0 0.0
      %9476 = vmatprep.subr.mxu0 0.0
      %9477 = vmatpush1.msra.mxu0 0.0
      %9478 = vmatprep.subr.mxu0 0.0
      %9479 = vmatpush1.msra.mxu0 0.0
      %9480 = vmatprep.subr.mxu0 0.0
      %9481 = vmatpush1.msra.mxu0 0.0
      %9482 = vmatprep.subr.mxu0 0.0
      %9483 = vmatpush1.msra.mxu0 0.0
      %9484 = vmatprep.subr.mxu0 0.0
      %9485 = vmatpush1.msra.mxu0 0.0
      %9486 = vmatprep.subr.mxu0 0.0
      %9487 = vmatpush1.msra.mxu0 %v9451
      %9488 = vmatprep.subr.mxu0 0.0
      %9489 = vmatpush2.msra.mxu0 0.0
      %9490 = vmatprep.subr.mxu0 0.0
      %9491 = vmatpush2.msra.mxu0 0.0
      %9492 = vmatprep.subr.mxu0 0.0
      %9493 = vmatpush2.msra.mxu0 0.0
      %9494 = vmatprep.subr.mxu0 0.0
      %9495 = vmatpush2.msra.mxu0 0.0
      %9496 = vmatprep.subr.mxu0 0.0
      %9497 = vmatpush2.msra.mxu0 0.0
      %9498 = vmatprep.subr.mxu0 0.0
      %9499 = vmatpush2.msra.mxu0 0.0
      %9500 = vmatprep.subr.mxu0 0.0
      %9501 = vmatpush2.msra.mxu0 0.0
      %9502 = vmatprep.subr.mxu0 0.0
      %9503 = vmatpush2.msra.mxu0 0.0
      %9504 = vmatprep.subr.mxu0 0.0
      %9505 = vmatpush2.msra.mxu0 0.0
      %9506 = vmatprep.subr.mxu0 0.0
      %9507 = vmatpush2.msra.mxu0 0.0
      %9508 = vmatprep.subr.mxu0 0.0
      %9509 = vmatpush2.msra.mxu0 0.0
      %9510 = vmatprep.subr.mxu0 0.0
      %9511 = vmatpush2.msra.mxu0 0.0
      %9512 = vmatprep.subr.mxu0 0.0
      %9513 = vmatpush2.msra.mxu0 0.0
      %9514 = vmatprep.subr.mxu0 0.0
      %9515 = vmatpush2.msra.mxu0 0.0
      %9516 = vmatprep.subr.mxu0 0.0
      %9517 = vmatpush2.msra.mxu0 0.0
      %9518 = vmatprep.subr.mxu0 0.0
      %9519 = vmatpush2.msra.mxu0 0.0
      %9520 = vmatprep.mubr.f32.mxu0 0.0
      %9521 = vmatmul.mubr.f32.gmra.mxu0 %v9454
      %v9522 = vpop.f32.mrf.mxu0
      %v9523 = vadd.f32 0.0, %v9522
      %v9524 = vpop.f32.mrf.mxu0
      %9525 = vdwg.mxu0
      %9532 = vrot.lane.b32.xlu0 %v7151, 8
      %v9533 = vpop.permute.xlu0 %9532
      %9534 = vrot.lane.b32.xlu0 %v7227, 8
      %v9535 = vpop.permute.xlu0 %9534
      %9536 = vrot.lane.b32.xlu0 %v7303, 8
      %v9537 = vpop.permute.xlu0 %9536
      %9538 = vrot.lane.b32.xlu0 %v7379, 8
      %v9539 = vpop.permute.xlu0 %9538
      %9540 = vrot.lane.b32.xlu0 %v7455, 8
      %v9541 = vpop.permute.xlu0 %9540
      %9542 = vrot.lane.b32.xlu0 %v7531, 8
      %v9543 = vpop.permute.xlu0 %9542
      %9556 = vrot.lane.b32.xlu0 %v8147, 16
      %v9557 = vpop.permute.xlu0 %9556
      %9558 = vrot.lane.b32.xlu0 %v8223, 16
      %v9559 = vpop.permute.xlu0 %9558
      %9560 = vrot.lane.b32.xlu0 %v8299, 16
      %v9561 = vpop.permute.xlu0 %9560
      %9562 = vrot.lane.b32.xlu0 %v8375, 16
      %v9563 = vpop.permute.xlu0 %9562
      %9564 = vrot.lane.b32.xlu0 %v8451, 16
      %v9565 = vpop.permute.xlu0 %9564
      %9566 = vrot.lane.b32.xlu0 %v8527, 16
      %v9567 = vpop.permute.xlu0 %9566
      %9580 = vrot.lane.b32.xlu0 %v9143, 24
      %v9581 = vpop.permute.xlu0 %9580
      %9582 = vrot.lane.b32.xlu0 %v9219, 24
      %v9583 = vpop.permute.xlu0 %9582
      %9584 = vrot.lane.b32.xlu0 %v9295, 24
      %v9585 = vpop.permute.xlu0 %9584
      %9586 = vrot.lane.b32.xlu0 %v9371, 24
      %v9587 = vpop.permute.xlu0 %9586
      %9588 = vrot.lane.b32.xlu0 %v9447, 24
      %v9589 = vpop.permute.xlu0 %9588
      %9590 = vrot.lane.b32.xlu0 %v9523, 24
      %v9591 = vpop.permute.xlu0 %9590
      %v9598 = vsel %vm744, %v6155, %v9533
      %v9599 = vsel %vm744, %v6231, %v9535
      %v9600 = vsel %vm744, %v6307, %v9537
      %v9601 = vsel %vm744, %v6383, %v9539
      %v9602 = vsel %vm744, %v6459, %v9541
      %v9603 = vsel %vm744, %v6535, %v9543
      %v9604 = vsel %vm4804, %v9598, %v9557
      %v9605 = vsel %vm4804, %v9599, %v9559
      %v9606 = vsel %vm4804, %v9600, %v9561
      %v9607 = vsel %vm4804, %v9601, %v9563
      %v9608 = vsel %vm4804, %v9602, %v9565
      %v9609 = vsel %vm4804, %v9603, %v9567
      %v9610 = vsel %vm4811, %v9604, %v9581
      %v9611 = vsel %vm4811, %v9605, %v9583
      %v9612 = vsel %vm4811, %v9606, %v9585
      %v9613 = vsel %vm4811, %v9607, %v9587
      %v9614 = vsel %vm4811, %v9608, %v9589
      %v9615 = vsel %vm4811, %v9609, %v9591
      %s9616 = scalar_lea.vmem %s4, 32
      %v9617 = vld [vmem:[%s9616] sm:$0xff]
      %v9618 = vld [vmem:[%s9616 + $0x8] sm:$0xff]
      %v9619 = vld [vmem:[%s9616 + $0x10] sm:$0xff]
      %v9620 = vld [vmem:[%s9616 + $0x18] sm:$0xff]
      %s9621 = scalar_lea.vmem %s5, 1
      %v9622 = vld [vmem:[%s9621] sm:$0x1]
      %v9624 = vlaneseq
      %v9625 = vshrl.u32 %v9624, 7
      %v9626 = vsub.s32 0, %v9625
      %v9627 = vrot.slane %v9622, %v9626
      %v9630 = vsel %vm514, %v9610, 0
      %v9633 = vsel %vm514, %v9611, 0
      %v9636 = vsel %vm514, %v9612, 0
      %v9639 = vsel %vm514, %v9613, 0
      %v9642 = vsel %vm514, %v9614, 0
      %v9645 = vsel %vm514, %v9615, 0
      %9647 = vmatprep.subr.mxu0 0.0
      %9648 = vmatpush1.msra.mxu0 0.0
      %9649 = vmatprep.subr.mxu0 0.0
      %9650 = vmatpush1.msra.mxu0 0.0
      %9651 = vmatprep.subr.mxu0 0.0
      %9652 = vmatpush1.msra.mxu0 0.0
      %9653 = vmatprep.subr.mxu0 0.0
      %9654 = vmatpush1.msra.mxu0 0.0
      %9655 = vmatprep.subr.mxu0 0.0
      %9656 = vmatpush1.msra.mxu0 0.0
      %9657 = vmatprep.subr.mxu0 0.0
      %9658 = vmatpush1.msra.mxu0 0.0
      %9659 = vmatprep.subr.mxu0 0.0
      %9660 = vmatpush1.msra.mxu0 0.0
      %9661 = vmatprep.subr.mxu0 0.0
      %9662 = vmatpush1.msra.mxu0 0.0
      %9663 = vmatprep.subr.mxu0 0.0
      %9664 = vmatpush1.msra.mxu0 0.0
      %9665 = vmatprep.subr.mxu0 0.0
      %9666 = vmatpush1.msra.mxu0 0.0
      %9667 = vmatprep.subr.mxu0 0.0
      %9668 = vmatpush1.msra.mxu0 0.0
      %9669 = vmatprep.subr.mxu0 0.0
      %9670 = vmatpush1.msra.mxu0 0.0
      %9671 = vmatprep.subr.mxu0 0.0
      %9672 = vmatpush1.msra.mxu0 %v9620
      %9673 = vmatprep.subr.mxu0 0.0
      %9674 = vmatpush1.msra.mxu0 %v9619
      %9675 = vmatprep.subr.mxu0 0.0
      %9676 = vmatpush1.msra.mxu0 %v9618
      %9677 = vmatprep.subr.mxu0 0.0
      %9678 = vmatpush1.msra.mxu0 %v9617
      %9679 = vmatprep.subr.mxu0 0.0
      %9680 = vmatpush2.msra.mxu0 0.0
      %9681 = vmatprep.subr.mxu0 0.0
      %9682 = vmatpush2.msra.mxu0 0.0
      %9683 = vmatprep.subr.mxu0 0.0
      %9684 = vmatpush2.msra.mxu0 0.0
      %9685 = vmatprep.subr.mxu0 0.0
      %9686 = vmatpush2.msra.mxu0 0.0
      %9687 = vmatprep.subr.mxu0 0.0
      %9688 = vmatpush2.msra.mxu0 0.0
      %9689 = vmatprep.subr.mxu0 0.0
      %9690 = vmatpush2.msra.mxu0 0.0
      %9691 = vmatprep.subr.mxu0 0.0
      %9692 = vmatpush2.msra.mxu0 0.0
      %9693 = vmatprep.subr.mxu0 0.0
      %9694 = vmatpush2.msra.mxu0 0.0
      %9695 = vmatprep.subr.mxu0 0.0
      %9696 = vmatpush2.msra.mxu0 0.0
      %9697 = vmatprep.subr.mxu0 0.0
      %9698 = vmatpush2.msra.mxu0 0.0
      %9699 = vmatprep.subr.mxu0 0.0
      %9700 = vmatpush2.msra.mxu0 0.0
      %9701 = vmatprep.subr.mxu0 0.0
      %9702 = vmatpush2.msra.mxu0 0.0
      %9703 = vmatprep.subr.mxu0 0.0
      %9704 = vmatpush2.msra.mxu0 0.0
      %9705 = vmatprep.subr.mxu0 0.0
      %9706 = vmatpush2.msra.mxu0 0.0
      %9707 = vmatprep.subr.mxu0 0.0
      %9708 = vmatpush2.msra.mxu0 0.0
      %9709 = vmatprep.subr.mxu0 0.0
      %9710 = vmatpush2.msra.mxu0 0.0
      %9711 = vmatprep.mubr.f32.mxu0 0.0
      %9712 = vmatmul.mubr.f32.gmra.mxu0 %v9630
      %v9713 = vpop.f32.mrf.mxu0
      %v9714 = vadd.f32 %v9627, %v9713
      %v9715 = vpop.f32.mrf.mxu0
      %9716 = vmatprep.mubr.f32.mxu0 0.0
      %9717 = vmatmul.mubr.f32.gmra.mxu0 %v9633
      %v9718 = vpop.f32.mrf.mxu0
      %v9719 = vadd.f32 %v9627, %v9718
      %v9720 = vpop.f32.mrf.mxu0
      %9721 = vmatprep.mubr.f32.mxu0 0.0
      %9722 = vmatmul.mubr.f32.gmra.mxu0 %v9636
      %v9723 = vpop.f32.mrf.mxu0
      %v9724 = vadd.f32 %v9627, %v9723
      %v9725 = vpop.f32.mrf.mxu0
      %9726 = vmatprep.mubr.f32.mxu0 0.0
      %9727 = vmatmul.mubr.f32.gmra.mxu0 %v9639
      %v9728 = vpop.f32.mrf.mxu0
      %v9729 = vadd.f32 %v9627, %v9728
      %v9730 = vpop.f32.mrf.mxu0
      %9731 = vmatprep.mubr.f32.mxu0 0.0
      %9732 = vmatmul.mubr.f32.gmra.mxu0 %v9642
      %v9733 = vpop.f32.mrf.mxu0
      %v9734 = vadd.f32 %v9627, %v9733
      %v9735 = vpop.f32.mrf.mxu0
      %9736 = vmatprep.mubr.f32.mxu0 0.0
      %9737 = vmatmul.mubr.f32.gmra.mxu0 %v9645
      %v9738 = vpop.f32.mrf.mxu0
      %v9739 = vadd.f32 %v9627, %v9738
      %v9740 = vpop.f32.mrf.mxu0
      %9741 = vdwg.mxu0
      %v9742 = vadd.f32 %v5416, %v9714
      %v9743 = vadd.f32 %v5417, %v9719
      %v9744 = vadd.f32 %v5418, %v9724
      %v9745 = vadd.f32 %v5419, %v9729
      %v9746 = vadd.f32 %v5420, %v9734
      %v9747 = vadd.f32 %v5421, %v9739
      %s9748 = scalar_lea.vmem %s10, 1
      %v9749 = vld [vmem:[%s9748] sm:$0x1]
      %s9750 = scalar_lea.vmem %s11, 1
      %v9751 = vld [vmem:[%s9750] sm:$0x1]
      %v9752 = vsel %vm514, %v9742, 0.0
      %9753 = vadd.xlane.f32.xlu0 %v9752
      %v9754 = vpop.xlane.xlu0 %9753
      %v9755 = vsel %vm514, %v9743, 0.0
      %9756 = vadd.xlane.f32.xlu0 %v9755
      %v9757 = vpop.xlane.xlu0 %9756
      %v9758 = vsel %vm514, %v9744, 0.0
      %9759 = vadd.xlane.f32.xlu0 %v9758
      %v9760 = vpop.xlane.xlu0 %9759
      %v9761 = vsel %vm514, %v9745, 0.0
      %9762 = vadd.xlane.f32.xlu0 %v9761
      %v9763 = vpop.xlane.xlu0 %9762
      %v9764 = vsel %vm514, %v9746, 0.0
      %9765 = vadd.xlane.f32.xlu0 %v9764
      %v9766 = vpop.xlane.xlu0 %9765
      %v9767 = vsel %vm514, %v9747, 0.0
      %9768 = vadd.xlane.f32.xlu0 %v9767
      %v9769 = vpop.xlane.xlu0 %9768
      %v9770 = vmul.f32 %v9754, %v4968
      %v9771 = vmul.f32 %v9757, %v4968
      %v9772 = vmul.f32 %v9760, %v4968
      %v9773 = vmul.f32 %v9763, %v4968
      %v9774 = vmul.f32 %v9766, %v4968
      %v9775 = vmul.f32 %v9769, %v4968
      %v9776 = vsub.f32 %v9742, %v9770
      %v9777 = vsub.f32 %v9743, %v9771
      %v9778 = vsub.f32 %v9744, %v9772
      %v9779 = vsub.f32 %v9745, %v9773
      %v9780 = vsub.f32 %v9746, %v9774
      %v9781 = vsub.f32 %v9747, %v9775
      %v9782 = vmul.f32 %v9776, %v9776
      %v9783 = vmul.f32 %v9777, %v9777
      %v9784 = vmul.f32 %v9778, %v9778
      %v9785 = vmul.f32 %v9779, %v9779
      %v9786 = vmul.f32 %v9780, %v9780
      %v9787 = vmul.f32 %v9781, %v9781
      %v9788 = vsel %vm514, %v9782, 0.0
      %9789 = vadd.xlane.f32.xlu0 %v9788
      %v9790 = vpop.xlane.xlu0 %9789
      %v9791 = vsel %vm514, %v9783, 0.0
      %9792 = vadd.xlane.f32.xlu0 %v9791
      %v9793 = vpop.xlane.xlu0 %9792
      %v9794 = vsel %vm514, %v9784, 0.0
      %9795 = vadd.xlane.f32.xlu0 %v9794
      %v9796 = vpop.xlane.xlu0 %9795
      %v9797 = vsel %vm514, %v9785, 0.0
      %9798 = vadd.xlane.f32.xlu0 %v9797
      %v9799 = vpop.xlane.xlu0 %9798
      %v9800 = vsel %vm514, %v9786, 0.0
      %9801 = vadd.xlane.f32.xlu0 %v9800
      %v9802 = vpop.xlane.xlu0 %9801
      %v9803 = vsel %vm514, %v9787, 0.0
      %9804 = vadd.xlane.f32.xlu0 %v9803
      %v9805 = vpop.xlane.xlu0 %9804
      %v9806 = vmul.f32 %v9790, %v4968
      %v9807 = vmul.f32 %v9793, %v4968
      %v9808 = vmul.f32 %v9796, %v4968
      %v9809 = vmul.f32 %v9799, %v4968
      %v9810 = vmul.f32 %v9802, %v4968
      %v9811 = vmul.f32 %v9805, %v4968
      %v9812 = vadd.f32 %v9806, 1e-05
      %v9813 = vadd.f32 %v9807, 1e-05
      %v9814 = vadd.f32 %v9808, 1e-05
      %v9815 = vadd.f32 %v9809, 1e-05
      %v9816 = vadd.f32 %v9810, 1e-05
      %v9817 = vadd.f32 %v9811, 1e-05
      %v9818 = vrsqrt.pop %v9812
      %v9819 = vrsqrt.pop %v9813
      %v9820 = vrsqrt.pop %v9814
      %v9821 = vrsqrt.pop %v9815
      %v9822 = vrsqrt.pop %v9816
      %v9823 = vrsqrt.pop %v9817
      %v9824 = vmul.f32 %v9776, %v9818
      %v9825 = vmul.f32 %v9777, %v9819
      %v9826 = vmul.f32 %v9778, %v9820
      %v9827 = vmul.f32 %v9779, %v9821
      %v9828 = vmul.f32 %v9780, %v9822
      %v9829 = vmul.f32 %v9781, %v9823
      %v9831 = vlaneseq
      %v9832 = vshrl.u32 %v9831, 7
      %v9833 = vsub.s32 0, %v9832
      %v9834 = vrot.slane %v9749, %v9833
      %v9836 = vmul.f32 %v9824, %v9834
      %v9837 = vmul.f32 %v9825, %v9834
      %v9838 = vmul.f32 %v9826, %v9834
      %v9839 = vmul.f32 %v9827, %v9834
      %v9840 = vmul.f32 %v9828, %v9834
      %v9841 = vmul.f32 %v9829, %v9834
      %v9843 = vlaneseq
      %v9844 = vshrl.u32 %v9843, 7
      %v9845 = vsub.s32 0, %v9844
      %v9846 = vrot.slane %v9751, %v9845
      %v9848 = vadd.f32 %v9836, %v9846
      %v9849 = vadd.f32 %v9837, %v9846
      %v9850 = vadd.f32 %v9838, %v9846
      %v9851 = vadd.f32 %v9839, %v9846
      %v9852 = vadd.f32 %v9840, %v9846
      %v9853 = vadd.f32 %v9841, %v9846
      %s9854 = scalar_lea.vmem %s6, 32
      %v9855 = vld [vmem:[%s9854] sm:$0xff]
      %v9856 = vld [vmem:[%s9854 + $0x8] sm:$0xff]
      %v9857 = vld [vmem:[%s9854 + $0x10] sm:$0xff]
      %v9858 = vld [vmem:[%s9854 + $0x18] sm:$0xff]
      %s9859 = scalar_lea.vmem %s7, 1
      %v9860 = vld [vmem:[%s9859] sm:$0x1]
      %v9862 = vlaneseq
      %v9863 = vshrl.u32 %v9862, 7
      %v9864 = vsub.s32 0, %v9863
      %v9865 = vrot.slane %v9860, %v9864
      %v9868 = vsel %vm514, %v9848, 0
      %v9871 = vsel %vm514, %v9849, 0
      %v9874 = vsel %vm514, %v9850, 0
      %v9877 = vsel %vm514, %v9851, 0
      %v9880 = vsel %vm514, %v9852, 0
      %v9883 = vsel %vm514, %v9853, 0
      %9885 = vmatprep.subr.mxu0 0.0
      %9886 = vmatpush1.msra.mxu0 0.0
      %9887 = vmatprep.subr.mxu0 0.0
      %9888 = vmatpush1.msra.mxu0 0.0
      %9889 = vmatprep.subr.mxu0 0.0
      %9890 = vmatpush1.msra.mxu0 0.0
      %9891 = vmatprep.subr.mxu0 0.0
      %9892 = vmatpush1.msra.mxu0 0.0
      %9893 = vmatprep.subr.mxu0 0.0
      %9894 = vmatpush1.msra.mxu0 0.0
      %9895 = vmatprep.subr.mxu0 0.0
      %9896 = vmatpush1.msra.mxu0 0.0
      %9897 = vmatprep.subr.mxu0 0.0
      %9898 = vmatpush1.msra.mxu0 0.0
      %9899 = vmatprep.subr.mxu0 0.0
      %9900 = vmatpush1.msra.mxu0 0.0
      %9901 = vmatprep.subr.mxu0 0.0
      %9902 = vmatpush1.msra.mxu0 0.0
      %9903 = vmatprep.subr.mxu0 0.0
      %9904 = vmatpush1.msra.mxu0 0.0
      %9905 = vmatprep.subr.mxu0 0.0
      %9906 = vmatpush1.msra.mxu0 0.0
      %9907 = vmatprep.subr.mxu0 0.0
      %9908 = vmatpush1.msra.mxu0 0.0
      %9909 = vmatprep.subr.mxu0 0.0
      %9910 = vmatpush1.msra.mxu0 %v9858
      %9911 = vmatprep.subr.mxu0 0.0
      %9912 = vmatpush1.msra.mxu0 %v9857
      %9913 = vmatprep.subr.mxu0 0.0
      %9914 = vmatpush1.msra.mxu0 %v9856
      %9915 = vmatprep.subr.mxu0 0.0
      %9916 = vmatpush1.msra.mxu0 %v9855
      %9917 = vmatprep.subr.mxu0 0.0
      %9918 = vmatpush2.msra.mxu0 0.0
      %9919 = vmatprep.subr.mxu0 0.0
      %9920 = vmatpush2.msra.mxu0 0.0
      %9921 = vmatprep.subr.mxu0 0.0
      %9922 = vmatpush2.msra.mxu0 0.0
      %9923 = vmatprep.subr.mxu0 0.0
      %9924 = vmatpush2.msra.mxu0 0.0
      %9925 = vmatprep.subr.mxu0 0.0
      %9926 = vmatpush2.msra.mxu0 0.0
      %9927 = vmatprep.subr.mxu0 0.0
      %9928 = vmatpush2.msra.mxu0 0.0
      %9929 = vmatprep.subr.mxu0 0.0
      %9930 = vmatpush2.msra.mxu0 0.0
      %9931 = vmatprep.subr.mxu0 0.0
      %9932 = vmatpush2.msra.mxu0 0.0
      %9933 = vmatprep.subr.mxu0 0.0
      %9934 = vmatpush2.msra.mxu0 0.0
      %9935 = vmatprep.subr.mxu0 0.0
      %9936 = vmatpush2.msra.mxu0 0.0
      %9937 = vmatprep.subr.mxu0 0.0
      %9938 = vmatpush2.msra.mxu0 0.0
      %9939 = vmatprep.subr.mxu0 0.0
      %9940 = vmatpush2.msra.mxu0 0.0
      %9941 = vmatprep.subr.mxu0 0.0
      %9942 = vmatpush2.msra.mxu0 0.0
      %9943 = vmatprep.subr.mxu0 0.0
      %9944 = vmatpush2.msra.mxu0 0.0
      %9945 = vmatprep.subr.mxu0 0.0
      %9946 = vmatpush2.msra.mxu0 0.0
      %9947 = vmatprep.subr.mxu0 0.0
      %9948 = vmatpush2.msra.mxu0 0.0
      %9949 = vmatprep.mubr.f32.mxu0 0.0
      %9950 = vmatmul.mubr.f32.gmra.mxu0 %v9868
      %v9951 = vpop.f32.mrf.mxu0
      %v9952 = vadd.f32 %v9865, %v9951
      %v9953 = vpop.f32.mrf.mxu0
      %9954 = vmatprep.mubr.f32.mxu0 0.0
      %9955 = vmatmul.mubr.f32.gmra.mxu0 %v9871
      %v9956 = vpop.f32.mrf.mxu0
      %v9957 = vadd.f32 %v9865, %v9956
      %v9958 = vpop.f32.mrf.mxu0
      %9959 = vmatprep.mubr.f32.mxu0 0.0
      %9960 = vmatmul.mubr.f32.gmra.mxu0 %v9874
      %v9961 = vpop.f32.mrf.mxu0
      %v9962 = vadd.f32 %v9865, %v9961
      %v9963 = vpop.f32.mrf.mxu0
      %9964 = vmatprep.mubr.f32.mxu0 0.0
      %9965 = vmatmul.mubr.f32.gmra.mxu0 %v9877
      %v9966 = vpop.f32.mrf.mxu0
      %v9967 = vadd.f32 %v9865, %v9966
      %v9968 = vpop.f32.mrf.mxu0
      %9969 = vmatprep.mubr.f32.mxu0 0.0
      %9970 = vmatmul.mubr.f32.gmra.mxu0 %v9880
      %v9971 = vpop.f32.mrf.mxu0
      %v9972 = vadd.f32 %v9865, %v9971
      %v9973 = vpop.f32.mrf.mxu0
      %9974 = vmatprep.mubr.f32.mxu0 0.0
      %9975 = vmatmul.mubr.f32.gmra.mxu0 %v9883
      %v9976 = vpop.f32.mrf.mxu0
      %v9977 = vadd.f32 %v9865, %v9976
      %v9978 = vpop.f32.mrf.mxu0
      %9979 = vdwg.mxu0
      %v9980 = vmax.f32 %v9952, 0.0
      %v9981 = vmax.f32 %v9957, 0.0
      %v9982 = vmax.f32 %v9962, 0.0
      %v9983 = vmax.f32 %v9967, 0.0
      %v9984 = vmax.f32 %v9972, 0.0
      %v9985 = vmax.f32 %v9977, 0.0
      %s9986 = scalar_lea.vmem %s8, 64
      %v9987 = vld [vmem:[%s9986] sm:$0xff]
      %v9988 = vld [vmem:[%s9986 + $0x8] sm:$0xff]
      %v9989 = vld [vmem:[%s9986 + $0x10] sm:$0xff]
      %v9990 = vld [vmem:[%s9986 + $0x18] sm:$0xff]
      %v9991 = vld [vmem:[%s9986 + $0x20] sm:$0xff]
      %v9992 = vld [vmem:[%s9986 + $0x28] sm:$0xff]
      %v9993 = vld [vmem:[%s9986 + $0x30] sm:$0xff]
      %v9994 = vld [vmem:[%s9986 + $0x38] sm:$0xff]
      %s9995 = scalar_lea.vmem %s9, 1
      %v9996 = vld [vmem:[%s9995] sm:$0x1]
      %v9998 = vlaneseq
      %v9999 = vshrl.u32 %v9998, 7
      %v10000 = vsub.s32 0, %v9999
      %v10001 = vrot.slane %v9996, %v10000
      %v10004 = vsel %vm5198, %v9980, 0
      %v10007 = vsel %vm5198, %v9981, 0
      %v10010 = vsel %vm5198, %v9982, 0
      %v10013 = vsel %vm5198, %v9983, 0
      %v10016 = vsel %vm5198, %v9984, 0
      %v10019 = vsel %vm5198, %v9985, 0
      %10021 = vmatprep.subr.mxu0 0.0
      %10022 = vmatpush1.msra.mxu0 0.0
      %10023 = vmatprep.subr.mxu0 0.0
      %10024 = vmatpush1.msra.mxu0 0.0
      %10025 = vmatprep.subr.mxu0 0.0
      %10026 = vmatpush1.msra.mxu0 0.0
      %10027 = vmatprep.subr.mxu0 0.0
      %10028 = vmatpush1.msra.mxu0 0.0
      %10029 = vmatprep.subr.mxu0 0.0
      %10030 = vmatpush1.msra.mxu0 0.0
      %10031 = vmatprep.subr.mxu0 0.0
      %10032 = vmatpush1.msra.mxu0 0.0
      %10033 = vmatprep.subr.mxu0 0.0
      %10034 = vmatpush1.msra.mxu0 0.0
      %10035 = vmatprep.subr.mxu0 0.0
      %10036 = vmatpush1.msra.mxu0 0.0
      %10037 = vmatprep.subr.mxu0 0.0
      %10038 = vmatpush1.msra.mxu0 %v9994
      %10039 = vmatprep.subr.mxu0 0.0
      %10040 = vmatpush1.msra.mxu0 %v9993
      %10041 = vmatprep.subr.mxu0 0.0
      %10042 = vmatpush1.msra.mxu0 %v9992
      %10043 = vmatprep.subr.mxu0 0.0
      %10044 = vmatpush1.msra.mxu0 %v9991
      %10045 = vmatprep.subr.mxu0 0.0
      %10046 = vmatpush1.msra.mxu0 %v9990
      %10047 = vmatprep.subr.mxu0 0.0
      %10048 = vmatpush1.msra.mxu0 %v9989
      %10049 = vmatprep.subr.mxu0 0.0
      %10050 = vmatpush1.msra.mxu0 %v9988
      %10051 = vmatprep.subr.mxu0 0.0
      %10052 = vmatpush1.msra.mxu0 %v9987
      %10053 = vmatprep.subr.mxu0 0.0
      %10054 = vmatpush2.msra.mxu0 0.0
      %10055 = vmatprep.subr.mxu0 0.0
      %10056 = vmatpush2.msra.mxu0 0.0
      %10057 = vmatprep.subr.mxu0 0.0
      %10058 = vmatpush2.msra.mxu0 0.0
      %10059 = vmatprep.subr.mxu0 0.0
      %10060 = vmatpush2.msra.mxu0 0.0
      %10061 = vmatprep.subr.mxu0 0.0
      %10062 = vmatpush2.msra.mxu0 0.0
      %10063 = vmatprep.subr.mxu0 0.0
      %10064 = vmatpush2.msra.mxu0 0.0
      %10065 = vmatprep.subr.mxu0 0.0
      %10066 = vmatpush2.msra.mxu0 0.0
      %10067 = vmatprep.subr.mxu0 0.0
      %10068 = vmatpush2.msra.mxu0 0.0
      %10069 = vmatprep.subr.mxu0 0.0
      %10070 = vmatpush2.msra.mxu0 0.0
      %10071 = vmatprep.subr.mxu0 0.0
      %10072 = vmatpush2.msra.mxu0 0.0
      %10073 = vmatprep.subr.mxu0 0.0
      %10074 = vmatpush2.msra.mxu0 0.0
      %10075 = vmatprep.subr.mxu0 0.0
      %10076 = vmatpush2.msra.mxu0 0.0
      %10077 = vmatprep.subr.mxu0 0.0
      %10078 = vmatpush2.msra.mxu0 0.0
      %10079 = vmatprep.subr.mxu0 0.0
      %10080 = vmatpush2.msra.mxu0 0.0
      %10081 = vmatprep.subr.mxu0 0.0
      %10082 = vmatpush2.msra.mxu0 0.0
      %10083 = vmatprep.subr.mxu0 0.0
      %10084 = vmatpush2.msra.mxu0 0.0
      %10085 = vmatprep.mubr.f32.mxu0 0.0
      %10086 = vmatmul.mubr.f32.gmra.mxu0 %v10004
      %v10087 = vpop.f32.mrf.mxu0
      %v10088 = vadd.f32 %v10001, %v10087
      %v10089 = vpop.f32.mrf.mxu0
      %10090 = vmatprep.mubr.f32.mxu0 0.0
      %10091 = vmatmul.mubr.f32.gmra.mxu0 %v10007
      %v10092 = vpop.f32.mrf.mxu0
      %v10093 = vadd.f32 %v10001, %v10092
      %v10094 = vpop.f32.mrf.mxu0
      %10095 = vmatprep.mubr.f32.mxu0 0.0
      %10096 = vmatmul.mubr.f32.gmra.mxu0 %v10010
      %v10097 = vpop.f32.mrf.mxu0
      %v10098 = vadd.f32 %v10001, %v10097
      %v10099 = vpop.f32.mrf.mxu0
      %10100 = vmatprep.mubr.f32.mxu0 0.0
      %10101 = vmatmul.mubr.f32.gmra.mxu0 %v10013
      %v10102 = vpop.f32.mrf.mxu0
      %v10103 = vadd.f32 %v10001, %v10102
      %v10104 = vpop.f32.mrf.mxu0
      %10105 = vmatprep.mubr.f32.mxu0 0.0
      %10106 = vmatmul.mubr.f32.gmra.mxu0 %v10016
      %v10107 = vpop.f32.mrf.mxu0
      %v10108 = vadd.f32 %v10001, %v10107
      %v10109 = vpop.f32.mrf.mxu0
      %10110 = vmatprep.mubr.f32.mxu0 0.0
      %10111 = vmatmul.mubr.f32.gmra.mxu0 %v10019
      %v10112 = vpop.f32.mrf.mxu0
      %v10113 = vadd.f32 %v10001, %v10112
      %v10114 = vpop.f32.mrf.mxu0
      %10115 = vdwg.mxu0
      %v10116 = vadd.f32 %v9848, %v10088
      %v10117 = vadd.f32 %v9849, %v10093
      %v10118 = vadd.f32 %v9850, %v10098
      %v10119 = vadd.f32 %v9851, %v10103
      %v10120 = vadd.f32 %v9852, %v10108
      %v10121 = vadd.f32 %v9853, %v10113
      %s10122 = scalar_lea.vmem %s12, 1
      %v10123 = vld [vmem:[%s10122] sm:$0x1]
      %s10124 = scalar_lea.vmem %s13, 1
      %v10125 = vld [vmem:[%s10124] sm:$0x1]
      %v10126 = vsel %vm514, %v10116, 0.0
      %10127 = vadd.xlane.f32.xlu0 %v10126
      %v10128 = vpop.xlane.xlu0 %10127
      %v10129 = vsel %vm514, %v10117, 0.0
      %10130 = vadd.xlane.f32.xlu0 %v10129
      %v10131 = vpop.xlane.xlu0 %10130
      %v10132 = vsel %vm514, %v10118, 0.0
      %10133 = vadd.xlane.f32.xlu0 %v10132
      %v10134 = vpop.xlane.xlu0 %10133
      %v10135 = vsel %vm514, %v10119, 0.0
      %10136 = vadd.xlane.f32.xlu0 %v10135
      %v10137 = vpop.xlane.xlu0 %10136
      %v10138 = vsel %vm514, %v10120, 0.0
      %10139 = vadd.xlane.f32.xlu0 %v10138
      %v10140 = vpop.xlane.xlu0 %10139
      %v10141 = vsel %vm514, %v10121, 0.0
      %10142 = vadd.xlane.f32.xlu0 %v10141
      %v10143 = vpop.xlane.xlu0 %10142
      %v10144 = vmul.f32 %v10128, %v4968
      %v10145 = vmul.f32 %v10131, %v4968
      %v10146 = vmul.f32 %v10134, %v4968
      %v10147 = vmul.f32 %v10137, %v4968
      %v10148 = vmul.f32 %v10140, %v4968
      %v10149 = vmul.f32 %v10143, %v4968
      %v10150 = vsub.f32 %v10116, %v10144
      %v10151 = vsub.f32 %v10117, %v10145
      %v10152 = vsub.f32 %v10118, %v10146
      %v10153 = vsub.f32 %v10119, %v10147
      %v10154 = vsub.f32 %v10120, %v10148
      %v10155 = vsub.f32 %v10121, %v10149
      %v10156 = vmul.f32 %v10150, %v10150
      %v10157 = vmul.f32 %v10151, %v10151
      %v10158 = vmul.f32 %v10152, %v10152
      %v10159 = vmul.f32 %v10153, %v10153
      %v10160 = vmul.f32 %v10154, %v10154
      %v10161 = vmul.f32 %v10155, %v10155
      %v10162 = vsel %vm514, %v10156, 0.0
      %10163 = vadd.xlane.f32.xlu0 %v10162
      %v10164 = vpop.xlane.xlu0 %10163
      %v10165 = vsel %vm514, %v10157, 0.0
      %10166 = vadd.xlane.f32.xlu0 %v10165
      %v10167 = vpop.xlane.xlu0 %10166
      %v10168 = vsel %vm514, %v10158, 0.0
      %10169 = vadd.xlane.f32.xlu0 %v10168
      %v10170 = vpop.xlane.xlu0 %10169
      %v10171 = vsel %vm514, %v10159, 0.0
      %10172 = vadd.xlane.f32.xlu0 %v10171
      %v10173 = vpop.xlane.xlu0 %10172
      %v10174 = vsel %vm514, %v10160, 0.0
      %10175 = vadd.xlane.f32.xlu0 %v10174
      %v10176 = vpop.xlane.xlu0 %10175
      %v10177 = vsel %vm514, %v10161, 0.0
      %10178 = vadd.xlane.f32.xlu0 %v10177
      %v10179 = vpop.xlane.xlu0 %10178
      %v10180 = vmul.f32 %v10164, %v4968
      %v10181 = vmul.f32 %v10167, %v4968
      %v10182 = vmul.f32 %v10170, %v4968
      %v10183 = vmul.f32 %v10173, %v4968
      %v10184 = vmul.f32 %v10176, %v4968
      %v10185 = vmul.f32 %v10179, %v4968
      %v10186 = vadd.f32 %v10180, 1e-05
      %v10187 = vadd.f32 %v10181, 1e-05
      %v10188 = vadd.f32 %v10182, 1e-05
      %v10189 = vadd.f32 %v10183, 1e-05
      %v10190 = vadd.f32 %v10184, 1e-05
      %v10191 = vadd.f32 %v10185, 1e-05
      %v10192 = vrsqrt.pop %v10186
      %v10193 = vrsqrt.pop %v10187
      %v10194 = vrsqrt.pop %v10188
      %v10195 = vrsqrt.pop %v10189
      %v10196 = vrsqrt.pop %v10190
      %v10197 = vrsqrt.pop %v10191
      %v10198 = vmul.f32 %v10150, %v10192
      %v10199 = vmul.f32 %v10151, %v10193
      %v10200 = vmul.f32 %v10152, %v10194
      %v10201 = vmul.f32 %v10153, %v10195
      %v10202 = vmul.f32 %v10154, %v10196
      %v10203 = vmul.f32 %v10155, %v10197
      %v10205 = vlaneseq
      %v10206 = vshrl.u32 %v10205, 7
      %v10207 = vsub.s32 0, %v10206
      %v10208 = vrot.slane %v10123, %v10207
      %v10210 = vmul.f32 %v10198, %v10208
      %v10211 = vmul.f32 %v10199, %v10208
      %v10212 = vmul.f32 %v10200, %v10208
      %v10213 = vmul.f32 %v10201, %v10208
      %v10214 = vmul.f32 %v10202, %v10208
      %v10215 = vmul.f32 %v10203, %v10208
      %v10217 = vlaneseq
      %v10218 = vshrl.u32 %v10217, 7
      %v10219 = vsub.s32 0, %v10218
      %v10220 = vrot.slane %v10125, %v10219
      %v10222 = vadd.f32 %v10210, %v10220
      %v10223 = vadd.f32 %v10211, %v10220
      %v10224 = vadd.f32 %v10212, %v10220
      %v10225 = vadd.f32 %v10213, %v10220
      %v10226 = vadd.f32 %v10214, %v10220
      %v10227 = vadd.f32 %v10215, %v10220
      %v10228 = vsel %vm514, %v10222, -inf
      %v10229 = vrot.slane %v10228, 4
      %v10230 = vmax.f32 %v10228, %v10229
      %v10231 = vrot.slane %v10230, 2
      %v10232 = vmax.f32 %v10230, %v10231
      %v10233 = vrot.slane %v10232, 1
      %v10234 = vmax.f32 %v10232, %v10233
      %v10235 = vsel %vm514, %v10223, -inf
      %v10236 = vrot.slane %v10235, 4
      %v10237 = vmax.f32 %v10235, %v10236
      %v10238 = vrot.slane %v10237, 2
      %v10239 = vmax.f32 %v10237, %v10238
      %v10240 = vrot.slane %v10239, 1
      %v10241 = vmax.f32 %v10239, %v10240
      %v10242 = vsel %vm514, %v10224, -inf
      %v10243 = vrot.slane %v10242, 4
      %v10244 = vmax.f32 %v10242, %v10243
      %v10245 = vrot.slane %v10244, 2
      %v10246 = vmax.f32 %v10244, %v10245
      %v10247 = vrot.slane %v10246, 1
      %v10248 = vmax.f32 %v10246, %v10247
      %v10249 = vsel %vm514, %v10225, -inf
      %v10250 = vrot.slane %v10249, 4
      %v10251 = vmax.f32 %v10249, %v10250
      %v10252 = vrot.slane %v10251, 2
      %v10253 = vmax.f32 %v10251, %v10252
      %v10254 = vrot.slane %v10253, 1
      %v10255 = vmax.f32 %v10253, %v10254
      %v10256 = vsel %vm514, %v10226, -inf
      %v10257 = vrot.slane %v10256, 4
      %v10258 = vmax.f32 %v10256, %v10257
      %v10259 = vrot.slane %v10258, 2
      %v10260 = vmax.f32 %v10258, %v10259
      %v10261 = vrot.slane %v10260, 1
      %v10262 = vmax.f32 %v10260, %v10261
      %v10263 = vsel %vm514, %v10227, -inf
      %v10264 = vrot.slane %v10263, 4
      %v10265 = vmax.f32 %v10263, %v10264
      %v10266 = vrot.slane %v10265, 2
      %v10267 = vmax.f32 %v10265, %v10266
      %v10268 = vrot.slane %v10267, 1
      %v10269 = vmax.f32 %v10267, %v10268
      %vm10270 = vcmask 253952
      %10271 = vst.msk [vmem:[%s489] sm:$0x1] %vm10270, %v10234
      %10272 = vst.msk [vmem:[%s489 + $0x1] sm:$0x1] %vm10270, %v10241
      %10273 = vst.msk [vmem:[%s489 + $0x2] sm:$0x1] %vm10270, %v10248
      %10274 = vst.msk [vmem:[%s489 + $0x3] sm:$0x1] %vm10270, %v10255
      %10275 = vst.msk [vmem:[%s489 + $0x4] sm:$0x1] %vm10270, %v10262
      %10276 = vst.msk [vmem:[%s489 + $0x5] sm:$0x1] %vm10270, %v10269
      %s10277 = smul.u32 6, %s25
      %p10278 = scmp.lt.s32.totalorder %s10277, 11
      %s10279 = scalar_select %p10278, %s10277, 11
      %s10280 = scalar_lea.vmem %s14, %s10279
      // Predicated region
      $region77: #{core.4} parent=75 // pred_check
        %p10281 = pneg %p347
      $region78: #{core.4} parent=75 // pred_check_branch
        %10283 = sbr.rel (%p10281) target = $region80
      $region79: #{core.4} parent=75 // pred_region
        %s10284 = smul.u32 6, %s25
      $region80: #{core.4} parent=75 // pred_fallthru
        _
    $region76: #{core.4} parent=5 // pred_fallthru
      _
    %p10285 = scmp.le.s32.totalorder 2, %s20
    // Predicated region
    $region81: #{core.4} parent=5 // pred_check
      %p10286 = pneg %p10285
    $region82: #{core.4} parent=5 // pred_check_branch
      %10288 = sbr.rel (%p10286) target = $region84
    $region83: #{core.4} parent=5 // pred_region
      %s10289 = ssub.s32 %s20, 2
      // Predicated region
      $region85: #{core.4} parent=83 // pred_check
        %p10290 = pneg %p353
      $region86: #{core.4} parent=83 // pred_check_branch
        %10292 = sbr.rel (%p10290) target = $region88
      $region87: #{core.4} parent=83 // pred_region
        %s10293 = smul.u32 6, %s26
        %p10294 = scmp.lt.s32.totalorder %s10293, 11
        %s10295 = scalar_select %p10294, %s10293, 11
        %s10296 = scalar_lea.vmem %s14, %s10295
      $region88: #{core.4} parent=83 // pred_fallthru
        _
    $region84: #{core.4} parent=5 // pred_fallthru
      _
  $region6: #{core.4} parent=0 // loop_footer
    %s24 = sadd.s32 1, %s20
  $region7: #{core.4} parent=0 // loop_footer_branch
    %19 = sbr.rel target = $region3
  $region8: #{core.4} parent=0 // loop_exit
    _

</llo_original>
